<compile_context>
chip_gen: v5e
topology: v5e:2x2
jax: 0.10.0
libtpu: 0.0.40
codegen_flags: <defaults>
</compile_context>

<pallas_src>
import functools

import jax
import jax.numpy as jnp
import numpy as np
from jax.experimental import pallas as pl
from jax.experimental.pallas import tpu as pltpu

# ----------------------------- module hyperparams -----------------------------
D = 8                          # depth (PyTorch default)
HIDDEN_W = 256                 # hidden width (PyTorch default)
INPUT_CH = 27
INPUT_CH_TIME = 9
IN_PACKED = INPUT_CH + INPUT_CH_TIME   # 36 — logical layer-0 fan-in
NUM_HIDDEN = D - 2                      # hidden W->W layers (skips = [])
OUT_PAD = 128                           # lane-dense output width (real output is 3)

TILE_N = 2048                  # max rows per grid step (sweepable)
MIN_TILE = 512                 # don't shrink below this when chasing grid steps
TARGET_STEPS = 4               # aim for >=4 grid steps (v7x: 2 TCs, pipelined)


# --------------------------------- the kernel ---------------------------------
def deformation_kernel(pts_ref, ts_ref, w0p_ref, w0t_ref, b0_ref,
                       hw_ref, hb_ref, wo_ref, bo_ref, out_ref):
    pts = pts_ref[...]                               # (tile, 27) f32

    # layer 0: Linear([pts | ts], 36 -> W) + ReLU, fused as two partial matmuls
    # (bf16 MXU inputs, f32 accumulate)
    acc = jnp.dot(pts.astype(jnp.bfloat16), w0p_ref[...],
                  preferred_element_type=jnp.float32)
    acc += jnp.dot(ts_ref[...].astype(jnp.bfloat16), w0t_ref[...],
                   preferred_element_type=jnp.float32)
    # fused bias + ReLU + cast: only the bf16 activation is materialized
    h = jnp.maximum(acc + b0_ref[...], 0.0).astype(jnp.bfloat16)

    # layers 1 .. D-2: Linear(W -> W) + ReLU (static unrolled, bf16 MXU matmuls)
    for i in range(NUM_HIDDEN):
        acc = jnp.dot(h, hw_ref[i], preferred_element_type=jnp.float32)
        h = jnp.maximum(acc + hb_ref[i], 0.0).astype(jnp.bfloat16)

    # final: Linear(W -> 3), zero-padded to 128 lanes -> unmasked slab store
    dx = jnp.dot(h, wo_ref[...], preferred_element_type=jnp.float32) + bo_ref[...]
    out_ref[...] = dx

    # residual: out[:, :3] = input_pts[:, :3] + dx[:, :3]
    # exact f32 VPU add + 3-lane masked store (padding lanes keep dx; sliced off outside)
    out_ref[:, :3] = dx[:, :3] + pts[:, :3]


# --------------------------------- wrapper ------------------------------------
def _choose_tile(n, max_tile, min_tile=MIN_TILE, target_steps=TARGET_STEPS):
    """Largest power-of-two tile <= max_tile; shrink (floor min_tile) until the
    grid has >= target_steps steps so both v7x TensorCores stay pipelined."""
    tile = max_tile
    while tile > min_tile and pl.cdiv(n, tile) < target_steps:
        tile //= 2
    return max(tile, 8)


@functools.partial(jax.jit, static_argnames=("tile_n",))
def deformation_forward(input_pts, ts, kparams, *, tile_n=TILE_N):
    (w0p, w0t, b0, hw, hb, wo_pad, bo_pad) = kparams
    n = input_pts.shape[0]

    tile = _choose_tile(n, tile_n)
    grid_n = pl.cdiv(n, tile)
    n_pad = grid_n * tile

    pts = input_pts.astype(jnp.float32)
    t = ts.astype(jnp.float32)
    if n_pad != n:
        # only the small raw inputs (27 + 9 f32 columns) are padded, and only the tail
        pts = jnp.pad(pts, ((0, n_pad - n), (0, 0)))
        t = jnp.pad(t, ((0, n_pad - n), (0, 0)))

    weight_bytes = (2 * IN_PACKED * HIDDEN_W + 4 * HIDDEN_W
                    + 2 * NUM_HIDDEN * HIDDEN_W * HIDDEN_W + 4 * NUM_HIDDEN * HIDDEN_W
                    + 2 * HIDDEN_W * OUT_PAD + 4 * OUT_PAD)
    cost = pl.CostEstimate(
        flops=2 * n_pad * (IN_PACKED * HIDDEN_W
                           + NUM_HIDDEN * HIDDEN_W * HIDDEN_W
                           + HIDDEN_W * OUT_PAD),
        transcendentals=0,
        bytes_accessed=n_pad * 4 * (INPUT_CH + INPUT_CH_TIME + OUT_PAD) + weight_bytes)

    out_pad = pl.pallas_call(
        deformation_kernel,
        out_shape=jax.ShapeDtypeStruct((n_pad, OUT_PAD), jnp.float32),
        grid_spec=pltpu.PrefetchScalarGridSpec(
            num_scalar_prefetch=0,
            grid=(grid_n,),
            in_specs=[
                pl.BlockSpec((tile, INPUT_CH), lambda i: (i, 0)),               # pts (f32)
                pl.BlockSpec((tile, INPUT_CH_TIME), lambda i: (i, 0)),          # ts  (f32)
                pl.BlockSpec((INPUT_CH, HIDDEN_W), lambda i: (0, 0)),           # W0[pts part] (bf16)
                pl.BlockSpec((INPUT_CH_TIME, HIDDEN_W), lambda i: (0, 0)),      # W0[ts part]  (bf16)
                pl.BlockSpec((1, HIDDEN_W), lambda i: (0, 0)),                  # b0 (f32)
                pl.BlockSpec((NUM_HIDDEN, HIDDEN_W, HIDDEN_W),                  # hidden W (bf16)
                             lambda i: (0, 0, 0)),
                pl.BlockSpec((NUM_HIDDEN, 1, HIDDEN_W), lambda i: (0, 0, 0)),   # hidden b (f32)
                pl.BlockSpec((HIDDEN_W, OUT_PAD), lambda i: (0, 0)),            # out W, lane-padded (bf16)
                pl.BlockSpec((1, OUT_PAD), lambda i: (0, 0)),                   # out b, lane-padded (f32)
            ],
            out_specs=pl.BlockSpec((tile, OUT_PAD), lambda i: (i, 0)),          # lane-dense output
        ),
        compiler_params=pltpu.CompilerParams(
            dimension_semantics=("parallel",),
            vmem_limit_bytes=32 * 1024 * 1024),
        cost_estimate=cost,
    )(pts, t, w0p, w0t, b0, hw, hb, wo_pad, bo_pad)

    return out_pad[:n, :3]


# ------------------------- deterministic parameter init -----------------------
def init_params(key):
    """Raw f32 params matching the torch module layout (weights as (in, out))."""
    ks = jax.random.split(key, 6)
    s0 = 1.0 / np.sqrt(IN_PACKED)
    w0 = jax.random.uniform(ks[0], (IN_PACKED, HIDDEN_W), jnp.float32, -s0, s0)
    b0 = jax.random.uniform(ks[1], (1, HIDDEN_W), jnp.float32, -s0, s0)

    sh = 1.0 / np.sqrt(HIDDEN_W)
    hw = jax.random.uniform(ks[2], (NUM_HIDDEN, HIDDEN_W, HIDDEN_W), jnp.float32, -sh, sh)
    hb = jax.random.uniform(ks[3], (NUM_HIDDEN, HIDDEN_W), jnp.float32, -sh, sh)

    wo = jax.random.uniform(ks[4], (HIDDEN_W, 3), jnp.float32, -sh, sh)
    bo = jax.random.uniform(ks[5], (1, 3), jnp.float32, -sh, sh)
    return (w0, b0, hw, hb, wo, bo)


def prepare_params(params):
    """One-time: split W0 (pts/ts halves), bf16 weights, lane-padded final layer."""
    (w0, b0, hw, hb, wo, bo) = params
    w0p = w0[:INPUT_CH].astype(jnp.bfloat16)               # (27, W)
    w0t = w0[INPUT_CH:].astype(jnp.bfloat16)               # (9, W)
    wo_pad = (jnp.zeros((HIDDEN_W, OUT_PAD), jnp.float32)
              .at[:, :3].set(wo).astype(jnp.bfloat16))     # (W, 128)
    bo_pad = jnp.zeros((1, OUT_PAD), jnp.float32).at[:, :3].set(bo)
    return (w0p, w0t, b0,
            hw.astype(jnp.bfloat16),
            hb.reshape(NUM_HIDDEN, 1, HIDDEN_W),
            wo_pad, bo_pad)


# ------------------------------ pure-JAX reference -----------------------------
def deformation_ref(input_pts, ts, params, *, bf16=False):
    (w0, b0, hw, hb, wo, bo) = params
    cast = (lambda a: a.astype(jnp.bfloat16)) if bf16 else (lambda a: a)
    h = jnp.concatenate([input_pts, ts], axis=-1)
    h = jnp.dot(cast(h), cast(w0), preferred_element_type=jnp.float32) + b0
    h = jnp.maximum(h, 0.0)
    for i in range(NUM_HIDDEN):
        h = jnp.dot(cast(h), cast(hw[i]), preferred_element_type=jnp.float32) + hb[i]
        h = jnp.maximum(h, 0.0)
    dx = jnp.dot(cast(h), cast(wo), preferred_element_type=jnp.float32) + bo
    return input_pts[:, :3] + dx


# ------------------------------------ main -------------------------------------
if __name__ == "__main__":
    key = jax.random.PRNGKey(0)
    k_pts, k_ts, k_par = jax.random.split(key, 3)

    N = 2048   # small demo shape; with the tile policy this yields a 4-step grid
    input_pts = jax.random.normal(k_pts, (N, INPUT_CH), jnp.float32)
    ts = jax.random.normal(k_ts, (N, INPUT_CH_TIME), jnp.float32)

    params = init_params(k_par)
    kparams = prepare_params(params)

    out = deformation_forward(input_pts, ts, kparams)
    out = jax.block_until_ready(out)
    assert out.shape == (N, 3)

    # tight check against a reference that emulates the kernel's bf16-in / f32-acc dots
    ref_bf16 = deformation_ref(input_pts, ts, params, bf16=True)
    np.testing.assert_allclose(np.asarray(out), np.asarray(ref_bf16),
                               rtol=5e-3, atol=5e-3)
    # loose sanity check against the full-f32 torch-equivalent reference
    ref_f32 = deformation_ref(input_pts, ts, params, bf16=False)
    np.testing.assert_allclose(np.asarray(out), np.asarray(ref_f32),
                               rtol=5e-2, atol=5e-2)

    print("KERNEL_OK")
</pallas_src>

<mosaic_0001>
module attributes {stable_mosaic.version = 11 : i64} {
  func.func @deformation_kernel(%arg0: i32, %arg1: memref<512x27xf32, #tpu.memory_space<vmem>>, %arg2: memref<512x9xf32, #tpu.memory_space<vmem>>, %arg3: memref<27x256xbf16, #tpu.memory_space<vmem>>, %arg4: memref<9x256xbf16, #tpu.memory_space<vmem>>, %arg5: memref<1x256xf32, #tpu.memory_space<vmem>>, %arg6: memref<6x256x256xbf16, #tpu.memory_space<vmem>>, %arg7: memref<6x1x256xf32, #tpu.memory_space<vmem>>, %arg8: memref<256x128xbf16, #tpu.memory_space<vmem>>, %arg9: memref<1x128xf32, #tpu.memory_space<vmem>>, %arg10: memref<512x128xf32, #tpu.memory_space<vmem>>) attributes {dimension_semantics = [#tpu.dimension_semantics<parallel>], iteration_bounds = array<i64: 4>, scalar_prefetch = 0 : i64, scratch_operands = 0 : i64, tpu.core_type = #tpu.core_type<tc>, window_params = [{transform_indices = @transform_0, window_bounds = array<i64: 512, 27>}, {transform_indices = @transform_1, window_bounds = array<i64: 512, 9>}, {pipeline_mode = #tpu.pipeline_mode<synchronous>, transform_indices = @transform_2, window_bounds = array<i64: 27, 256>}, {pipeline_mode = #tpu.pipeline_mode<synchronous>, transform_indices = @transform_3, window_bounds = array<i64: 9, 256>}, {pipeline_mode = #tpu.pipeline_mode<synchronous>, transform_indices = @transform_4, window_bounds = array<i64: 1, 256>}, {pipeline_mode = #tpu.pipeline_mode<synchronous>, transform_indices = @transform_5, window_bounds = array<i64: 6, 256, 256>}, {pipeline_mode = #tpu.pipeline_mode<synchronous>, transform_indices = @transform_6, window_bounds = array<i64: 6, 1, 256>}, {pipeline_mode = #tpu.pipeline_mode<synchronous>, transform_indices = @transform_7, window_bounds = array<i64: 256, 128>}, {pipeline_mode = #tpu.pipeline_mode<synchronous>, transform_indices = @transform_8, window_bounds = array<i64: 1, 128>}, {transform_indices = @transform_9, window_bounds = array<i64: 512, 128>}]} {
    %c0 = arith.constant 0 : index
    %c0_0 = arith.constant 0 : index
    %0 = vector.load %arg1[%c0, %c0_0] : memref<512x27xf32, #tpu.memory_space<vmem>>, vector<512x27xf32>
    %1 = arith.truncf %0 : vector<512x27xf32> to vector<512x27xbf16>
    %c0_1 = arith.constant 0 : index
    %c0_2 = arith.constant 0 : index
    %2 = vector.load %arg3[%c0_1, %c0_2] : memref<27x256xbf16, #tpu.memory_space<vmem>>, vector<27x256xbf16>
    %cst = arith.constant dense<0.000000e+00> : vector<512x256xf32>
    %3 = tpu.matmul %1, %2, %cst {dimension_numbers = #tpu.dot_dimension_numbers<[1], [0], [0], [1], [0, 0, 1, 1], [], []>} : vector<512x27xbf16>, vector<27x256xbf16>, vector<512x256xf32> -> vector<512x256xf32>
    %c0_3 = arith.constant 0 : index
    %c0_4 = arith.constant 0 : index
    %4 = vector.load %arg2[%c0_3, %c0_4] : memref<512x9xf32, #tpu.memory_space<vmem>>, vector<512x9xf32>
    %5 = arith.truncf %4 : vector<512x9xf32> to vector<512x9xbf16>
    %c0_5 = arith.constant 0 : index
    %c0_6 = arith.constant 0 : index
    %6 = vector.load %arg4[%c0_5, %c0_6] : memref<9x256xbf16, #tpu.memory_space<vmem>>, vector<9x256xbf16>
    %cst_7 = arith.constant dense<0.000000e+00> : vector<512x256xf32>
    %7 = tpu.matmul %5, %6, %cst_7 {dimension_numbers = #tpu.dot_dimension_numbers<[1], [0], [0], [1], [0, 0, 1, 1], [], []>} : vector<512x9xbf16>, vector<9x256xbf16>, vector<512x256xf32> -> vector<512x256xf32>
    %8 = arith.addf %3, %7 : vector<512x256xf32>
    %c0_8 = arith.constant 0 : index
    %c0_9 = arith.constant 0 : index
    %9 = vector.load %arg5[%c0_8, %c0_9] : memref<1x256xf32, #tpu.memory_space<vmem>>, vector<1x256xf32>
    %10 = vector.broadcast %9 : vector<1x256xf32> to vector<512x256xf32>
    %11 = arith.addf %8, %10 : vector<512x256xf32>
    %cst_10 = arith.constant 0.000000e+00 : f32
    %12 = vector.broadcast %cst_10 : f32 to vector<512x256xf32>
    %13 = arith.maximumf %11, %12 : vector<512x256xf32>
    %14 = arith.truncf %13 : vector<512x256xf32> to vector<512x256xbf16>
    %c0_11 = arith.constant 0 : index
    %c0_12 = arith.constant 0 : index
    %c0_13 = arith.constant 0 : index
    %15 = vector.load %arg6[%c0_11, %c0_12, %c0_13] : memref<6x256x256xbf16, #tpu.memory_space<vmem>>, vector<1x256x256xbf16>
    %16 = vector.shape_cast %15 : vector<1x256x256xbf16> to vector<256x256xbf16>
    %cst_14 = arith.constant dense<0.000000e+00> : vector<512x256xf32>
    %17 = tpu.matmul %14, %16, %cst_14 {dimension_numbers = #tpu.dot_dimension_numbers<[1], [0], [0], [1], [0, 0, 1, 1], [], []>} : vector<512x256xbf16>, vector<256x256xbf16>, vector<512x256xf32> -> vector<512x256xf32>
    %c0_15 = arith.constant 0 : index
    %c0_16 = arith.constant 0 : index
    %c0_17 = arith.constant 0 : index
    %18 = vector.load %arg7[%c0_15, %c0_16, %c0_17] : memref<6x1x256xf32, #tpu.memory_space<vmem>>, vector<1x1x256xf32>
    %19 = vector.shape_cast %18 : vector<1x1x256xf32> to vector<1x256xf32>
    %20 = vector.broadcast %19 : vector<1x256xf32> to vector<512x256xf32>
    %21 = arith.addf %17, %20 : vector<512x256xf32>
    %cst_18 = arith.constant 0.000000e+00 : f32
    %22 = vector.broadcast %cst_18 : f32 to vector<512x256xf32>
    %23 = arith.maximumf %21, %22 : vector<512x256xf32>
    %24 = arith.truncf %23 : vector<512x256xf32> to vector<512x256xbf16>
    %c1 = arith.constant 1 : index
    %c0_19 = arith.constant 0 : index
    %c0_20 = arith.constant 0 : index
    %25 = vector.load %arg6[%c1, %c0_19, %c0_20] : memref<6x256x256xbf16, #tpu.memory_space<vmem>>, vector<1x256x256xbf16>
    %26 = vector.shape_cast %25 : vector<1x256x256xbf16> to vector<256x256xbf16>
    %cst_21 = arith.constant dense<0.000000e+00> : vector<512x256xf32>
    %27 = tpu.matmul %24, %26, %cst_21 {dimension_numbers = #tpu.dot_dimension_numbers<[1], [0], [0], [1], [0, 0, 1, 1], [], []>} : vector<512x256xbf16>, vector<256x256xbf16>, vector<512x256xf32> -> vector<512x256xf32>
    %c1_22 = arith.constant 1 : index
    %c0_23 = arith.constant 0 : index
    %c0_24 = arith.constant 0 : index
    %28 = vector.load %arg7[%c1_22, %c0_23, %c0_24] : memref<6x1x256xf32, #tpu.memory_space<vmem>>, vector<1x1x256xf32>
    %29 = vector.shape_cast %28 : vector<1x1x256xf32> to vector<1x256xf32>
    %30 = vector.broadcast %29 : vector<1x256xf32> to vector<512x256xf32>
    %31 = arith.addf %27, %30 : vector<512x256xf32>
    %cst_25 = arith.constant 0.000000e+00 : f32
    %32 = vector.broadcast %cst_25 : f32 to vector<512x256xf32>
    %33 = arith.maximumf %31, %32 : vector<512x256xf32>
    %34 = arith.truncf %33 : vector<512x256xf32> to vector<512x256xbf16>
    %c2 = arith.constant 2 : index
    %c0_26 = arith.constant 0 : index
    %c0_27 = arith.constant 0 : index
    %35 = vector.load %arg6[%c2, %c0_26, %c0_27] : memref<6x256x256xbf16, #tpu.memory_space<vmem>>, vector<1x256x256xbf16>
    %36 = vector.shape_cast %35 : vector<1x256x256xbf16> to vector<256x256xbf16>
    %cst_28 = arith.constant dense<0.000000e+00> : vector<512x256xf32>
    %37 = tpu.matmul %34, %36, %cst_28 {dimension_numbers = #tpu.dot_dimension_numbers<[1], [0], [0], [1], [0, 0, 1, 1], [], []>} : vector<512x256xbf16>, vector<256x256xbf16>, vector<512x256xf32> -> vector<512x256xf32>
    %c2_29 = arith.constant 2 : index
    %c0_30 = arith.constant 0 : index
    %c0_31 = arith.constant 0 : index
    %38 = vector.load %arg7[%c2_29, %c0_30, %c0_31] : memref<6x1x256xf32, #tpu.memory_space<vmem>>, vector<1x1x256xf32>
    %39 = vector.shape_cast %38 : vector<1x1x256xf32> to vector<1x256xf32>
    %40 = vector.broadcast %39 : vector<1x256xf32> to vector<512x256xf32>
    %41 = arith.addf %37, %40 : vector<512x256xf32>
    %cst_32 = arith.constant 0.000000e+00 : f32
    %42 = vector.broadcast %cst_32 : f32 to vector<512x256xf32>
    %43 = arith.maximumf %41, %42 : vector<512x256xf32>
    %44 = arith.truncf %43 : vector<512x256xf32> to vector<512x256xbf16>
    %c3 = arith.constant 3 : index
    %c0_33 = arith.constant 0 : index
    %c0_34 = arith.constant 0 : index
    %45 = vector.load %arg6[%c3, %c0_33, %c0_34] : memref<6x256x256xbf16, #tpu.memory_space<vmem>>, vector<1x256x256xbf16>
    %46 = vector.shape_cast %45 : vector<1x256x256xbf16> to vector<256x256xbf16>
    %cst_35 = arith.constant dense<0.000000e+00> : vector<512x256xf32>
    %47 = tpu.matmul %44, %46, %cst_35 {dimension_numbers = #tpu.dot_dimension_numbers<[1], [0], [0], [1], [0, 0, 1, 1], [], []>} : vector<512x256xbf16>, vector<256x256xbf16>, vector<512x256xf32> -> vector<512x256xf32>
    %c3_36 = arith.constant 3 : index
    %c0_37 = arith.constant 0 : index
    %c0_38 = arith.constant 0 : index
    %48 = vector.load %arg7[%c3_36, %c0_37, %c0_38] : memref<6x1x256xf32, #tpu.memory_space<vmem>>, vector<1x1x256xf32>
    %49 = vector.shape_cast %48 : vector<1x1x256xf32> to vector<1x256xf32>
    %50 = vector.broadcast %49 : vector<1x256xf32> to vector<512x256xf32>
    %51 = arith.addf %47, %50 : vector<512x256xf32>
    %cst_39 = arith.constant 0.000000e+00 : f32
    %52 = vector.broadcast %cst_39 : f32 to vector<512x256xf32>
    %53 = arith.maximumf %51, %52 : vector<512x256xf32>
    %54 = arith.truncf %53 : vector<512x256xf32> to vector<512x256xbf16>
    %c4 = arith.constant 4 : index
    %c0_40 = arith.constant 0 : index
    %c0_41 = arith.constant 0 : index
    %55 = vector.load %arg6[%c4, %c0_40, %c0_41] : memref<6x256x256xbf16, #tpu.memory_space<vmem>>, vector<1x256x256xbf16>
    %56 = vector.shape_cast %55 : vector<1x256x256xbf16> to vector<256x256xbf16>
    %cst_42 = arith.constant dense<0.000000e+00> : vector<512x256xf32>
    %57 = tpu.matmul %54, %56, %cst_42 {dimension_numbers = #tpu.dot_dimension_numbers<[1], [0], [0], [1], [0, 0, 1, 1], [], []>} : vector<512x256xbf16>, vector<256x256xbf16>, vector<512x256xf32> -> vector<512x256xf32>
    %c4_43 = arith.constant 4 : index
    %c0_44 = arith.constant 0 : index
    %c0_45 = arith.constant 0 : index
    %58 = vector.load %arg7[%c4_43, %c0_44, %c0_45] : memref<6x1x256xf32, #tpu.memory_space<vmem>>, vector<1x1x256xf32>
    %59 = vector.shape_cast %58 : vector<1x1x256xf32> to vector<1x256xf32>
    %60 = vector.broadcast %59 : vector<1x256xf32> to vector<512x256xf32>
    %61 = arith.addf %57, %60 : vector<512x256xf32>
    %cst_46 = arith.constant 0.000000e+00 : f32
    %62 = vector.broadcast %cst_46 : f32 to vector<512x256xf32>
    %63 = arith.maximumf %61, %62 : vector<512x256xf32>
    %64 = arith.truncf %63 : vector<512x256xf32> to vector<512x256xbf16>
    %c5 = arith.constant 5 : index
    %c0_47 = arith.constant 0 : index
    %c0_48 = arith.constant 0 : index
    %65 = vector.load %arg6[%c5, %c0_47, %c0_48] : memref<6x256x256xbf16, #tpu.memory_space<vmem>>, vector<1x256x256xbf16>
    %66 = vector.shape_cast %65 : vector<1x256x256xbf16> to vector<256x256xbf16>
    %cst_49 = arith.constant dense<0.000000e+00> : vector<512x256xf32>
    %67 = tpu.matmul %64, %66, %cst_49 {dimension_numbers = #tpu.dot_dimension_numbers<[1], [0], [0], [1], [0, 0, 1, 1], [], []>} : vector<512x256xbf16>, vector<256x256xbf16>, vector<512x256xf32> -> vector<512x256xf32>
    %c5_50 = arith.constant 5 : index
    %c0_51 = arith.constant 0 : index
    %c0_52 = arith.constant 0 : index
    %68 = vector.load %arg7[%c5_50, %c0_51, %c0_52] : memref<6x1x256xf32, #tpu.memory_space<vmem>>, vector<1x1x256xf32>
    %69 = vector.shape_cast %68 : vector<1x1x256xf32> to vector<1x256xf32>
    %70 = vector.broadcast %69 : vector<1x256xf32> to vector<512x256xf32>
    %71 = arith.addf %67, %70 : vector<512x256xf32>
    %cst_53 = arith.constant 0.000000e+00 : f32
    %72 = vector.broadcast %cst_53 : f32 to vector<512x256xf32>
    %73 = arith.maximumf %71, %72 : vector<512x256xf32>
    %74 = arith.truncf %73 : vector<512x256xf32> to vector<512x256xbf16>
    %c0_54 = arith.constant 0 : index
    %c0_55 = arith.constant 0 : index
    %75 = vector.load %arg8[%c0_54, %c0_55] : memref<256x128xbf16, #tpu.memory_space<vmem>>, vector<256x128xbf16>
    %cst_56 = arith.constant dense<0.000000e+00> : vector<512x128xf32>
    %76 = tpu.matmul %74, %75, %cst_56 {dimension_numbers = #tpu.dot_dimension_numbers<[1], [0], [0], [1], [0, 0, 1, 1], [], []>} : vector<512x256xbf16>, vector<256x128xbf16>, vector<512x128xf32> -> vector<512x128xf32>
    %c0_57 = arith.constant 0 : index
    %c0_58 = arith.constant 0 : index
    %77 = vector.load %arg9[%c0_57, %c0_58] : memref<1x128xf32, #tpu.memory_space<vmem>>, vector<1x128xf32>
    %78 = vector.broadcast %77 : vector<1x128xf32> to vector<512x128xf32>
    %79 = arith.addf %76, %78 : vector<512x128xf32>
    %c0_59 = arith.constant 0 : index
    %c0_60 = arith.constant 0 : index
    %80 = vector.load %arg10[%c0_59, %c0_60] : memref<512x128xf32, #tpu.memory_space<vmem>>, vector<512x128xf32>
    tpu.vector_store %arg10[%c0_59, %c0_60], %79 {strides = array<i32>} : memref<512x128xf32, #tpu.memory_space<vmem>>, vector<512x128xf32>,
    %81 = vector.extract_strided_slice %79 {offsets = [0, 0], sizes = [512, 3], strides = [1, 1]} : vector<512x128xf32> to vector<512x3xf32>
    %82 = vector.extract_strided_slice %0 {offsets = [0, 0], sizes = [512, 3], strides = [1, 1]} : vector<512x27xf32> to vector<512x3xf32>
    %83 = arith.addf %81, %82 : vector<512x3xf32>
    %c0_61 = arith.constant 0 : index
    %c0_62 = arith.constant 0 : index
    %84 = vector.load %arg10[%c0_61, %c0_62] : memref<512x128xf32, #tpu.memory_space<vmem>>, vector<512x3xf32>
    tpu.vector_store %arg10[%c0_61, %c0_62], %83 {strides = array<i32>} : memref<512x128xf32, #tpu.memory_space<vmem>>, vector<512x3xf32>,
    return
  }
  func.func @transform_0(%arg0: i32) -> (i32, i32) {
    %c0_i32 = arith.constant 0 : i32
    %c0_i32_0 = arith.constant 0 : i32
    return %arg0, %c0_i32 : i32, i32
  }
  func.func @transform_1(%arg0: i32) -> (i32, i32) {
    %c0_i32 = arith.constant 0 : i32
    %c0_i32_0 = arith.constant 0 : i32
    return %arg0, %c0_i32 : i32, i32
  }
  func.func @transform_2(%arg0: i32) -> (i32, i32) {
    %c0_i32 = arith.constant 0 : i32
    %c0_i32_0 = arith.constant 0 : i32
    %c0_i32_1 = arith.constant 0 : i32
    return %c0_i32, %c0_i32_0 : i32, i32
  }
  func.func @transform_3(%arg0: i32) -> (i32, i32) {
    %c0_i32 = arith.constant 0 : i32
    %c0_i32_0 = arith.constant 0 : i32
    %c0_i32_1 = arith.constant 0 : i32
    return %c0_i32, %c0_i32_0 : i32, i32
  }
  func.func @transform_4(%arg0: i32) -> (i32, i32) {
    %c0_i32 = arith.constant 0 : i32
    %c0_i32_0 = arith.constant 0 : i32
    %c0_i32_1 = arith.constant 0 : i32
    return %c0_i32, %c0_i32_0 : i32, i32
  }
  func.func @transform_5(%arg0: i32) -> (i32, i32, i32) {
    %c0_i32 = arith.constant 0 : i32
    %c0_i32_0 = arith.constant 0 : i32
    %c0_i32_1 = arith.constant 0 : i32
    %c0_i32_2 = arith.constant 0 : i32
    return %c0_i32, %c0_i32_0, %c0_i32_1 : i32, i32, i32
  }
  func.func @transform_6(%arg0: i32) -> (i32, i32, i32) {
    %c0_i32 = arith.constant 0 : i32
    %c0_i32_0 = arith.constant 0 : i32
    %c0_i32_1 = arith.constant 0 : i32
    %c0_i32_2 = arith.constant 0 : i32
    return %c0_i32, %c0_i32_0, %c0_i32_1 : i32, i32, i32
  }
  func.func @transform_7(%arg0: i32) -> (i32, i32) {
    %c0_i32 = arith.constant 0 : i32
    %c0_i32_0 = arith.constant 0 : i32
    %c0_i32_1 = arith.constant 0 : i32
    return %c0_i32, %c0_i32_0 : i32, i32
  }
  func.func @transform_8(%arg0: i32) -> (i32, i32) {
    %c0_i32 = arith.constant 0 : i32
    %c0_i32_0 = arith.constant 0 : i32
    %c0_i32_1 = arith.constant 0 : i32
    return %c0_i32, %c0_i32_0 : i32, i32
  }
  func.func @transform_9(%arg0: i32) -> (i32, i32) {
    %c0_i32 = arith.constant 0 : i32
    %c0_i32_0 = arith.constant 0 : i32
    return %arg0, %c0_i32 : i32, i32
  }
}

</mosaic_0001>

<llo_original>
// kernel: deformation_forward.1
$region0: #{deformation_forward.1}
  #allocation0 [shape = 'u32[]', space=smem, size = 0x4, offset = 0x4, fixed_abs, tag = 'smem constant byte address 0x4 - core index']
  #allocation1 [shape = 'u32[72,128]{1,0:T(1,128)}', space=vmem, size = 0x9000, scoped, tag = 'internal scratch']
  %s0 = inlined_call_operand.vmem [shape: f32[2048,27], index: 0, kind: input, shape index: {}]
  %s1 = inlined_call_operand.vmem [shape: f32[2048,9], index: 1, kind: input, shape index: {}]
  %s2 = inlined_call_operand.vmem [shape: bf16[27,256], index: 2, kind: input, shape index: {}]
  %s3 = inlined_call_operand.vmem [shape: bf16[9,256], index: 3, kind: input, shape index: {}]
  %s4 = inlined_call_operand.vmem [shape: f32[1,256], index: 4, kind: input, shape index: {}]
  %s5 = inlined_call_operand.vmem [shape: bf16[6,256,256], index: 5, kind: input, shape index: {}]
  %s6 = inlined_call_operand.vmem [shape: f32[6,1,256], index: 6, kind: input, shape index: {}]
  %s7 = inlined_call_operand.vmem [shape: bf16[256,128], index: 7, kind: input, shape index: {}]
  %s8 = inlined_call_operand.vmem [shape: f32[1,128], index: 8, kind: input, shape index: {}]
  %s9 = inlined_call_operand.vmem [shape: f32[2048,128], index: 9, kind: output, shape index: {}]
  %s10 = sld [smem:[#allocation0]]
  $region69: #{deformation_forward.1} parent=0
    _
  %s12 = ssub.s32 1, %s10
  %s13 = scalar_select 0, %s12, %s10
  loop: start=0, step=1, limit=6
  $region2: #{deformation_forward.1} parent=0 // loop_pre_header
    _
  $region3: #{deformation_forward.1} parent=0 // loop_header
    %s15 = sphi 0, %s19
    %p16 = scmp.ge.s32.totalorder %s15, 6
    %s25 = sphi 0, %s27
    %s28 = sphi 0, %s25
    %s29 = sphi 0, %s28
    %s45 = sphi 0, %s29
    %s51 = sphi 0, %s53
    %s54 = sphi 0, %s51
    %s55 = sphi 0, %s54
    %s71 = sphi 0, %s55
    %s75 = sphi 0, %s75
    %s77 = sphi 0, %s75
    %s78 = sphi 0, %s77
    %s92 = sphi 0, %s78
    %s96 = sphi 0, %s96
    %s98 = sphi 0, %s96
    %s99 = sphi 0, %s98
    %s113 = sphi 0, %s99
    %s117 = sphi 0, %s117
    %s119 = sphi 0, %s117
    %s120 = sphi 0, %s119
    %s134 = sphi 0, %s120
    %s138 = sphi 0, %s138
    %s140 = sphi 0, %s138
    %s141 = sphi 0, %s140
    %s155 = sphi 0, %s141
    %s159 = sphi 0, %s159
    %s161 = sphi 0, %s159
    %s162 = sphi 0, %s161
    %s176 = sphi 0, %s162
    %s180 = sphi 0, %s180
    %s182 = sphi 0, %s180
    %s183 = sphi 0, %s182
    %s197 = sphi 0, %s183
    %s201 = sphi 0, %s201
    %s203 = sphi 0, %s201
    %s204 = sphi 0, %s203
    %s218 = sphi 0, %s204
    %s224 = sphi 0, %s226
    %s227 = sphi 0, %s224
    %s228 = sphi 0, %s227
    %s244 = sphi 0, %s228
  $region4: #{deformation_forward.1} parent=0 // loop_header_branch
    %18 = sbr.rel (%p16) target = $region8
  $region5: #{deformation_forward.1} parent=0 // loop_body
    %s20 = ssub.s32 %s15, 1
    %s21 = ssub.s32 %s15, 2
    %s22 = sadd.s32 %s15, 1
    %s23 = ssub.s32 %s15, %s22
    %p24 = scmp.eq.s32.totalorder %s23, 0
    %s26 = sadd.s32 %s25, 1
    %s27 = scalar_select %p24, %s25, %s26
    %p30 = pneg %p24
    %p31 = scmp.eq.s32.totalorder %s15, 3
    %p32 = por %p30, %p31
    %p33 = scmp.ne.s32.totalorder %s25, %s28
    %p34 = scmp.eq.s32.totalorder %s15, 0
    %p35 = por %p33, %p34
    %p36 = scmp.ne.s32.totalorder %s25, %s28
    %p37 = scmp.eq.s32.totalorder %s20, 3
    %p38 = por %p36, %p37
    %p39 = scmp.ne.s32.totalorder %s28, %s29
    %p40 = scmp.eq.s32.totalorder %s20, 0
    %p41 = por %p39, %p40
    %p42 = scmp.ne.s32.totalorder %s28, %s29
    %p43 = scmp.eq.s32.totalorder %s21, 3
    %p44 = por %p42, %p43
    %p46 = scmp.ne.s32.totalorder %s29, %s45
    %p47 = scmp.eq.s32.totalorder %s21, 0
    %p48 = por %p46, %p47
    %s49 = ssub.s32 %s15, %s22
    %p50 = scmp.eq.s32.totalorder %s49, 0
    %s52 = sadd.s32 %s51, 1
    %s53 = scalar_select %p50, %s51, %s52
    %p56 = pneg %p50
    %p57 = scmp.eq.s32.totalorder %s15, 3
    %p58 = por %p56, %p57
    %p59 = scmp.ne.s32.totalorder %s51, %s54
    %p60 = scmp.eq.s32.totalorder %s15, 0
    %p61 = por %p59, %p60
    %p62 = scmp.ne.s32.totalorder %s51, %s54
    %p63 = scmp.eq.s32.totalorder %s20, 3
    %p64 = por %p62, %p63
    %p65 = scmp.ne.s32.totalorder %s54, %s55
    %p66 = scmp.eq.s32.totalorder %s20, 0
    %p67 = por %p65, %p66
    %p68 = scmp.ne.s32.totalorder %s54, %s55
    %p69 = scmp.eq.s32.totalorder %s21, 3
    %p70 = por %p68, %p69
    %p72 = scmp.ne.s32.totalorder %s55, %s71
    %p73 = scmp.eq.s32.totalorder %s21, 0
    %p74 = por %p72, %p73
    %s76 = sadd.s32 %s75, 1
    %p79 = scmp.eq.s32.totalorder %s15, 3
    %p80 = scmp.ne.s32.totalorder %s75, %s77
    %p81 = scmp.eq.s32.totalorder %s15, 0
    %p82 = por %p80, %p81
    %p83 = scmp.ne.s32.totalorder %s75, %s77
    %p84 = scmp.eq.s32.totalorder %s20, 3
    %p85 = por %p83, %p84
    %p86 = scmp.ne.s32.totalorder %s77, %s78
    %p87 = scmp.eq.s32.totalorder %s20, 0
    %p88 = por %p86, %p87
    %p89 = scmp.ne.s32.totalorder %s77, %s78
    %p90 = scmp.eq.s32.totalorder %s21, 3
    %p91 = por %p89, %p90
    %p93 = scmp.ne.s32.totalorder %s78, %s92
    %p94 = scmp.eq.s32.totalorder %s21, 0
    %p95 = por %p93, %p94
    %s97 = sadd.s32 %s96, 1
    %p100 = scmp.eq.s32.totalorder %s15, 3
    %p101 = scmp.ne.s32.totalorder %s96, %s98
    %p102 = scmp.eq.s32.totalorder %s15, 0
    %p103 = por %p101, %p102
    %p104 = scmp.ne.s32.totalorder %s96, %s98
    %p105 = scmp.eq.s32.totalorder %s20, 3
    %p106 = por %p104, %p105
    %p107 = scmp.ne.s32.totalorder %s98, %s99
    %p108 = scmp.eq.s32.totalorder %s20, 0
    %p109 = por %p107, %p108
    %p110 = scmp.ne.s32.totalorder %s98, %s99
    %p111 = scmp.eq.s32.totalorder %s21, 3
    %p112 = por %p110, %p111
    %p114 = scmp.ne.s32.totalorder %s99, %s113
    %p115 = scmp.eq.s32.totalorder %s21, 0
    %p116 = por %p114, %p115
    %s118 = sadd.s32 %s117, 1
    %p121 = scmp.eq.s32.totalorder %s15, 3
    %p122 = scmp.ne.s32.totalorder %s117, %s119
    %p123 = scmp.eq.s32.totalorder %s15, 0
    %p124 = por %p122, %p123
    %p125 = scmp.ne.s32.totalorder %s117, %s119
    %p126 = scmp.eq.s32.totalorder %s20, 3
    %p127 = por %p125, %p126
    %p128 = scmp.ne.s32.totalorder %s119, %s120
    %p129 = scmp.eq.s32.totalorder %s20, 0
    %p130 = por %p128, %p129
    %p131 = scmp.ne.s32.totalorder %s119, %s120
    %p132 = scmp.eq.s32.totalorder %s21, 3
    %p133 = por %p131, %p132
    %p135 = scmp.ne.s32.totalorder %s120, %s134
    %p136 = scmp.eq.s32.totalorder %s21, 0
    %p137 = por %p135, %p136
    %s139 = sadd.s32 %s138, 1
    %p142 = scmp.eq.s32.totalorder %s15, 3
    %p143 = scmp.ne.s32.totalorder %s138, %s140
    %p144 = scmp.eq.s32.totalorder %s15, 0
    %p145 = por %p143, %p144
    %p146 = scmp.ne.s32.totalorder %s138, %s140
    %p147 = scmp.eq.s32.totalorder %s20, 3
    %p148 = por %p146, %p147
    %p149 = scmp.ne.s32.totalorder %s140, %s141
    %p150 = scmp.eq.s32.totalorder %s20, 0
    %p151 = por %p149, %p150
    %p152 = scmp.ne.s32.totalorder %s140, %s141
    %p153 = scmp.eq.s32.totalorder %s21, 3
    %p154 = por %p152, %p153
    %p156 = scmp.ne.s32.totalorder %s141, %s155
    %p157 = scmp.eq.s32.totalorder %s21, 0
    %p158 = por %p156, %p157
    %s160 = sadd.s32 %s159, 1
    %p163 = scmp.eq.s32.totalorder %s15, 3
    %p164 = scmp.ne.s32.totalorder %s159, %s161
    %p165 = scmp.eq.s32.totalorder %s15, 0
    %p166 = por %p164, %p165
    %p167 = scmp.ne.s32.totalorder %s159, %s161
    %p168 = scmp.eq.s32.totalorder %s20, 3
    %p169 = por %p167, %p168
    %p170 = scmp.ne.s32.totalorder %s161, %s162
    %p171 = scmp.eq.s32.totalorder %s20, 0
    %p172 = por %p170, %p171
    %p173 = scmp.ne.s32.totalorder %s161, %s162
    %p174 = scmp.eq.s32.totalorder %s21, 3
    %p175 = por %p173, %p174
    %p177 = scmp.ne.s32.totalorder %s162, %s176
    %p178 = scmp.eq.s32.totalorder %s21, 0
    %p179 = por %p177, %p178
    %s181 = sadd.s32 %s180, 1
    %p184 = scmp.eq.s32.totalorder %s15, 3
    %p185 = scmp.ne.s32.totalorder %s180, %s182
    %p186 = scmp.eq.s32.totalorder %s15, 0
    %p187 = por %p185, %p186
    %p188 = scmp.ne.s32.totalorder %s180, %s182
    %p189 = scmp.eq.s32.totalorder %s20, 3
    %p190 = por %p188, %p189
    %p191 = scmp.ne.s32.totalorder %s182, %s183
    %p192 = scmp.eq.s32.totalorder %s20, 0
    %p193 = por %p191, %p192
    %p194 = scmp.ne.s32.totalorder %s182, %s183
    %p195 = scmp.eq.s32.totalorder %s21, 3
    %p196 = por %p194, %p195
    %p198 = scmp.ne.s32.totalorder %s183, %s197
    %p199 = scmp.eq.s32.totalorder %s21, 0
    %p200 = por %p198, %p199
    %s202 = sadd.s32 %s201, 1
    %p205 = scmp.eq.s32.totalorder %s15, 3
    %p206 = scmp.ne.s32.totalorder %s201, %s203
    %p207 = scmp.eq.s32.totalorder %s15, 0
    %p208 = por %p206, %p207
    %p209 = scmp.ne.s32.totalorder %s201, %s203
    %p210 = scmp.eq.s32.totalorder %s20, 3
    %p211 = por %p209, %p210
    %p212 = scmp.ne.s32.totalorder %s203, %s204
    %p213 = scmp.eq.s32.totalorder %s20, 0
    %p214 = por %p212, %p213
    %p215 = scmp.ne.s32.totalorder %s203, %s204
    %p216 = scmp.eq.s32.totalorder %s21, 3
    %p217 = por %p215, %p216
    %p219 = scmp.ne.s32.totalorder %s204, %s218
    %p220 = scmp.eq.s32.totalorder %s21, 0
    %p221 = por %p219, %p220
    %s222 = ssub.s32 %s15, %s22
    %p223 = scmp.eq.s32.totalorder %s222, 0
    %s225 = sadd.s32 %s224, 1
    %s226 = scalar_select %p223, %s224, %s225
    %p229 = pneg %p223
    %p230 = scmp.eq.s32.totalorder %s15, 3
    %p231 = por %p229, %p230
    %p232 = scmp.ne.s32.totalorder %s224, %s227
    %p233 = scmp.eq.s32.totalorder %s15, 0
    %p234 = por %p232, %p233
    %p235 = scmp.ne.s32.totalorder %s224, %s227
    %p236 = scmp.eq.s32.totalorder %s20, 3
    %p237 = por %p235, %p236
    %p238 = scmp.ne.s32.totalorder %s227, %s228
    %p239 = scmp.eq.s32.totalorder %s20, 0
    %p240 = por %p238, %p239
    %p241 = scmp.ne.s32.totalorder %s227, %s228
    %p242 = scmp.eq.s32.totalorder %s21, 3
    %p243 = por %p241, %p242
    %p245 = scmp.ne.s32.totalorder %s228, %s244
    %p246 = scmp.eq.s32.totalorder %s21, 0
    %p247 = por %p245, %p246
    %p248 = scmp.le.s32.totalorder 1, %s15
    %p249 = scmp.lt.s32.totalorder %s15, 5
    %p250 = pnand %p248, %p249
    %p251 = pneg %p250
    // Predicated region
    $region9: #{deformation_forward.1} parent=5 // pred_check
      _
    $region10: #{deformation_forward.1} parent=5 // pred_check_branch
      %253 = sbr.rel (%p250) target = $region12
    $region11: #{deformation_forward.1} parent=5 // pred_region
      %s254 = ssub.s32 %s15, 1
      // Predicated region
      $region13: #{deformation_forward.1} parent=11 // pred_check
        %p255 = pneg %p88
      $region14: #{deformation_forward.1} parent=11 // pred_check_branch
        %257 = sbr.rel (%p255) target = $region16
      $region15: #{deformation_forward.1} parent=11 // pred_region
        _
      $region16: #{deformation_forward.1} parent=11 // pred_fallthru
        _
      // Predicated region
      $region17: #{deformation_forward.1} parent=11 // pred_check
        %p258 = pneg %p109
      $region18: #{deformation_forward.1} parent=11 // pred_check_branch
        %260 = sbr.rel (%p258) target = $region20
      $region19: #{deformation_forward.1} parent=11 // pred_region
        _
      $region20: #{deformation_forward.1} parent=11 // pred_fallthru
        _
      // Predicated region
      $region21: #{deformation_forward.1} parent=11 // pred_check
        %p261 = pneg %p130
      $region22: #{deformation_forward.1} parent=11 // pred_check_branch
        %263 = sbr.rel (%p261) target = $region24
      $region23: #{deformation_forward.1} parent=11 // pred_region
        _
      $region24: #{deformation_forward.1} parent=11 // pred_fallthru
        _
      // Predicated region
      $region25: #{deformation_forward.1} parent=11 // pred_check
        %p264 = pneg %p151
      $region26: #{deformation_forward.1} parent=11 // pred_check_branch
        %266 = sbr.rel (%p264) target = $region28
      $region27: #{deformation_forward.1} parent=11 // pred_region
        _
      $region28: #{deformation_forward.1} parent=11 // pred_fallthru
        _
      // Predicated region
      $region29: #{deformation_forward.1} parent=11 // pred_check
        %p267 = pneg %p172
      $region30: #{deformation_forward.1} parent=11 // pred_check_branch
        %269 = sbr.rel (%p267) target = $region32
      $region31: #{deformation_forward.1} parent=11 // pred_region
        _
      $region32: #{deformation_forward.1} parent=11 // pred_fallthru
        _
      // Predicated region
      $region33: #{deformation_forward.1} parent=11 // pred_check
        %p270 = pneg %p193
      $region34: #{deformation_forward.1} parent=11 // pred_check_branch
        %272 = sbr.rel (%p270) target = $region36
      $region35: #{deformation_forward.1} parent=11 // pred_region
        _
      $region36: #{deformation_forward.1} parent=11 // pred_fallthru
        _
      // Predicated region
      $region37: #{deformation_forward.1} parent=11 // pred_check
        %p273 = pneg %p214
      $region38: #{deformation_forward.1} parent=11 // pred_check_branch
        %275 = sbr.rel (%p273) target = $region40
      $region39: #{deformation_forward.1} parent=11 // pred_region
        _
      $region40: #{deformation_forward.1} parent=11 // pred_fallthru
        _
    $region12: #{deformation_forward.1} parent=5 // pred_fallthru
      _
    %p276 = scmp.lt.s32.totalorder %s15, 4
    // Predicated region
    $region41: #{deformation_forward.1} parent=5 // pred_check
      %p277 = pneg %p276
    $region42: #{deformation_forward.1} parent=5 // pred_check_branch
      %279 = sbr.rel (%p277) target = $region44
    $region43: #{deformation_forward.1} parent=5 // pred_region
      // Predicated region
      $region45: #{deformation_forward.1} parent=43 // pred_check
        %p280 = pneg %p35
      $region46: #{deformation_forward.1} parent=43 // pred_check_branch
        %282 = sbr.rel (%p280) target = $region48
      $region47: #{deformation_forward.1} parent=43 // pred_region
        %s283 = smul.u32 64, %s15
        %p284 = scmp.lt.s32.totalorder %s283, 255
        %s285 = scalar_select %p284, %s283, 255
        %s286 = smul.addr %s285, 8
        %s287 = scalar_lea.vmem %s0, %s286
        %s288 = smul.u32 64, %s15
      $region48: #{deformation_forward.1} parent=43 // pred_fallthru
        _
      // Predicated region
      $region49: #{deformation_forward.1} parent=43 // pred_check
        %p289 = pneg %p61
      $region50: #{deformation_forward.1} parent=43 // pred_check_branch
        %291 = sbr.rel (%p289) target = $region52
      $region51: #{deformation_forward.1} parent=43 // pred_region
        %s292 = smul.u32 64, %s15
        %p293 = scmp.lt.s32.totalorder %s292, 255
        %s294 = scalar_select %p293, %s292, 255
        %s295 = smul.addr %s294, 8
        %s296 = scalar_lea.vmem %s1, %s295
        %s297 = smul.u32 64, %s15
      $region52: #{deformation_forward.1} parent=43 // pred_fallthru
        _
    $region44: #{deformation_forward.1} parent=5 // pred_fallthru
      _
    %p298 = scmp.le.s32.totalorder 1, %s15
    %p299 = scmp.lt.s32.totalorder %s15, 5
    %p300 = pnand %p298, %p299
    %p301 = pneg %p300
    // Predicated region
    $region53: #{deformation_forward.1} parent=5 // pred_check
      _
    $region54: #{deformation_forward.1} parent=5 // pred_check_branch
      %303 = sbr.rel (%p300) target = $region56
    $region55: #{deformation_forward.1} parent=5 // pred_region
      %s304 = ssub.s32 %s15, 1
      %s305 = smul.u32 64, %s20
      %p306 = scmp.lt.s32.totalorder %s305, 255
      %s307 = scalar_select %p306, %s305, 255
      %s308 = smul.addr %s307, 8
      %s309 = scalar_lea.vmem %s0, %s308
      %p310 = pneg %p41
      %p311 = pneg %p38
      %s312 = smul.u32 64, %s20
      %p313 = scmp.lt.s32.totalorder %s312, 255
      %s314 = scalar_select %p313, %s312, 255
      %s315 = smul.addr %s314, 8
      %s316 = scalar_lea.vmem %s1, %s315
      %p317 = pneg %p67
      %p318 = pneg %p64
      %p319 = pneg %p88
      %p320 = pneg %p85
      %p321 = pneg %p109
      %p322 = pneg %p106
      %p323 = pneg %p130
      %p324 = pneg %p127
      %p325 = pneg %p151
      %p326 = pneg %p148
      %p327 = pneg %p172
      %p328 = pneg %p169
      %p329 = pneg %p193
      %p330 = pneg %p190
      %p331 = pneg %p214
      %p332 = pneg %p211
      %p333 = pneg %p240
      %p334 = pneg %p237
      %s335 = smul.u32 64, %s20
      %p336 = scmp.lt.s32.totalorder %s335, 255
      %s337 = scalar_select %p336, %s335, 255
      %s338 = smul.addr %s337, 8
      %s339 = scalar_lea.vmem %s9, %s338
      %s340 = smul.u32 64, %s20
      %p341 = scmp.lt.s32.totalorder %s340, 255
      %s342 = scalar_select %p341, %s340, 255
      %s343 = smul.addr %s342, 8
      %s344 = scalar_lea.vmem %s0, %s343
      %s345 = smul.u32 64, %s20
      %s346 = smul.u32 64, %s20
      %p347 = scmp.lt.s32.totalorder %s346, 255
      %s348 = scalar_select %p347, %s346, 255
      %s349 = smul.addr %s348, 8
      %s350 = scalar_lea.vmem %s1, %s349
      %s351 = smul.u32 64, %s20
      %s352 = smul.u32 64, %s20
      %p353 = scmp.lt.s32.totalorder %s352, 255
      %s354 = scalar_select %p353, %s352, 255
      %s355 = smul.addr %s354, 8
      %s356 = scalar_lea.vmem %s9, %s355
      %s357 = smul.u32 64, %s20
      %v359 = vld [vmem:[%s344] sm:$0xff]
      %v360 = vld [vmem:[%s344 + $0x8] sm:$0xff]
      %v361 = vld [vmem:[%s344 + $0x10] sm:$0xff]
      %v362 = vld [vmem:[%s344 + $0x18] sm:$0xff]
      %v363 = vld [vmem:[%s344 + $0x20] sm:$0xff]
      %v364 = vld [vmem:[%s344 + $0x28] sm:$0xff]
      %v365 = vld [vmem:[%s344 + $0x30] sm:$0xff]
      %v366 = vld [vmem:[%s344 + $0x38] sm:$0xff]
      %v367 = vld [vmem:[%s344 + $0x40] sm:$0xff]
      %v368 = vld [vmem:[%s344 + $0x48] sm:$0xff]
      %v369 = vld [vmem:[%s344 + $0x50] sm:$0xff]
      %v370 = vld [vmem:[%s344 + $0x58] sm:$0xff]
      %v371 = vld [vmem:[%s344 + $0x60] sm:$0xff]
      %v372 = vld [vmem:[%s344 + $0x68] sm:$0xff]
      %v373 = vld [vmem:[%s344 + $0x70] sm:$0xff]
      %v374 = vld [vmem:[%s344 + $0x78] sm:$0xff]
      %v375 = vld [vmem:[%s344 + $0x80] sm:$0xff]
      %v376 = vld [vmem:[%s344 + $0x88] sm:$0xff]
      %v377 = vld [vmem:[%s344 + $0x90] sm:$0xff]
      %v378 = vld [vmem:[%s344 + $0x98] sm:$0xff]
      %v379 = vld [vmem:[%s344 + $0xa0] sm:$0xff]
      %v380 = vld [vmem:[%s344 + $0xa8] sm:$0xff]
      %v381 = vld [vmem:[%s344 + $0xb0] sm:$0xff]
      %v382 = vld [vmem:[%s344 + $0xb8] sm:$0xff]
      %v383 = vld [vmem:[%s344 + $0xc0] sm:$0xff]
      %v384 = vld [vmem:[%s344 + $0xc8] sm:$0xff]
      %v385 = vld [vmem:[%s344 + $0xd0] sm:$0xff]
      %v386 = vld [vmem:[%s344 + $0xd8] sm:$0xff]
      %v387 = vld [vmem:[%s344 + $0xe0] sm:$0xff]
      %v388 = vld [vmem:[%s344 + $0xe8] sm:$0xff]
      %v389 = vld [vmem:[%s344 + $0xf0] sm:$0xff]
      %v390 = vld [vmem:[%s344 + $0xf8] sm:$0xff]
      %v391 = vld [vmem:[%s344 + $0x100] sm:$0xff]
      %v392 = vld [vmem:[%s344 + $0x108] sm:$0xff]
      %v393 = vld [vmem:[%s344 + $0x110] sm:$0xff]
      %v394 = vld [vmem:[%s344 + $0x118] sm:$0xff]
      %v395 = vld [vmem:[%s344 + $0x120] sm:$0xff]
      %v396 = vld [vmem:[%s344 + $0x128] sm:$0xff]
      %v397 = vld [vmem:[%s344 + $0x130] sm:$0xff]
      %v398 = vld [vmem:[%s344 + $0x138] sm:$0xff]
      %v399 = vld [vmem:[%s344 + $0x140] sm:$0xff]
      %v400 = vld [vmem:[%s344 + $0x148] sm:$0xff]
      %v401 = vld [vmem:[%s344 + $0x150] sm:$0xff]
      %v402 = vld [vmem:[%s344 + $0x158] sm:$0xff]
      %v403 = vld [vmem:[%s344 + $0x160] sm:$0xff]
      %v404 = vld [vmem:[%s344 + $0x168] sm:$0xff]
      %v405 = vld [vmem:[%s344 + $0x170] sm:$0xff]
      %v406 = vld [vmem:[%s344 + $0x178] sm:$0xff]
      %v407 = vld [vmem:[%s344 + $0x180] sm:$0xff]
      %v408 = vld [vmem:[%s344 + $0x188] sm:$0xff]
      %v409 = vld [vmem:[%s344 + $0x190] sm:$0xff]
      %v410 = vld [vmem:[%s344 + $0x198] sm:$0xff]
      %v411 = vld [vmem:[%s344 + $0x1a0] sm:$0xff]
      %v412 = vld [vmem:[%s344 + $0x1a8] sm:$0xff]
      %v413 = vld [vmem:[%s344 + $0x1b0] sm:$0xff]
      %v414 = vld [vmem:[%s344 + $0x1b8] sm:$0xff]
      %v415 = vld [vmem:[%s344 + $0x1c0] sm:$0xff]
      %v416 = vld [vmem:[%s344 + $0x1c8] sm:$0xff]
      %v417 = vld [vmem:[%s344 + $0x1d0] sm:$0xff]
      %v418 = vld [vmem:[%s344 + $0x1d8] sm:$0xff]
      %v419 = vld [vmem:[%s344 + $0x1e0] sm:$0xff]
      %v420 = vld [vmem:[%s344 + $0x1e8] sm:$0xff]
      %v421 = vld [vmem:[%s344 + $0x1f0] sm:$0xff]
      %v422 = vld [vmem:[%s344 + $0x1f8] sm:$0xff]
      %v423 = vpack.c.bf16 %v360, %v359
      %v424 = vpack.c.bf16 %v362, %v361
      %v425 = vpack.c.bf16 %v364, %v363
      %v426 = vpack.c.bf16 %v366, %v365
      %v427 = vpack.c.bf16 %v368, %v367
      %v428 = vpack.c.bf16 %v370, %v369
      %v429 = vpack.c.bf16 %v372, %v371
      %v430 = vpack.c.bf16 %v374, %v373
      %v431 = vpack.c.bf16 %v376, %v375
      %v432 = vpack.c.bf16 %v378, %v377
      %v433 = vpack.c.bf16 %v380, %v379
      %v434 = vpack.c.bf16 %v382, %v381
      %v435 = vpack.c.bf16 %v384, %v383
      %v436 = vpack.c.bf16 %v386, %v385
      %v437 = vpack.c.bf16 %v388, %v387
      %v438 = vpack.c.bf16 %v390, %v389
      %v439 = vpack.c.bf16 %v392, %v391
      %v440 = vpack.c.bf16 %v394, %v393
      %v441 = vpack.c.bf16 %v396, %v395
      %v442 = vpack.c.bf16 %v398, %v397
      %v443 = vpack.c.bf16 %v400, %v399
      %v444 = vpack.c.bf16 %v402, %v401
      %v445 = vpack.c.bf16 %v404, %v403
      %v446 = vpack.c.bf16 %v406, %v405
      %v447 = vpack.c.bf16 %v408, %v407
      %v448 = vpack.c.bf16 %v410, %v409
      %v449 = vpack.c.bf16 %v412, %v411
      %v450 = vpack.c.bf16 %v414, %v413
      %v451 = vpack.c.bf16 %v416, %v415
      %v452 = vpack.c.bf16 %v418, %v417
      %v453 = vpack.c.bf16 %v420, %v419
      %v454 = vpack.c.bf16 %v422, %v421
      %v455 = vld [vmem:[%s2] sm:$0xff]
      %v456 = vld [vmem:[%s2 + $0x8] sm:$0xff]
      %v457 = vld [vmem:[%s2 + $0x10] sm:$0xff]
      %v458 = vld [vmem:[%s2 + $0x18] sm:$0x33]
      %v459 = vld [vmem:[%s350] sm:$0xff]
      %v460 = vld [vmem:[%s350 + $0x8] sm:$0xff]
      %v461 = vld [vmem:[%s350 + $0x10] sm:$0xff]
      %v462 = vld [vmem:[%s350 + $0x18] sm:$0xff]
      %v463 = vld [vmem:[%s350 + $0x20] sm:$0xff]
      %v464 = vld [vmem:[%s350 + $0x28] sm:$0xff]
      %v465 = vld [vmem:[%s350 + $0x30] sm:$0xff]
      %v466 = vld [vmem:[%s350 + $0x38] sm:$0xff]
      %v467 = vld [vmem:[%s350 + $0x40] sm:$0xff]
      %v468 = vld [vmem:[%s350 + $0x48] sm:$0xff]
      %v469 = vld [vmem:[%s350 + $0x50] sm:$0xff]
      %v470 = vld [vmem:[%s350 + $0x58] sm:$0xff]
      %v471 = vld [vmem:[%s350 + $0x60] sm:$0xff]
      %v472 = vld [vmem:[%s350 + $0x68] sm:$0xff]
      %v473 = vld [vmem:[%s350 + $0x70] sm:$0xff]
      %v474 = vld [vmem:[%s350 + $0x78] sm:$0xff]
      %v475 = vld [vmem:[%s350 + $0x80] sm:$0xff]
      %v476 = vld [vmem:[%s350 + $0x88] sm:$0xff]
      %v477 = vld [vmem:[%s350 + $0x90] sm:$0xff]
      %v478 = vld [vmem:[%s350 + $0x98] sm:$0xff]
      %v479 = vld [vmem:[%s350 + $0xa0] sm:$0xff]
      %v480 = vld [vmem:[%s350 + $0xa8] sm:$0xff]
      %v481 = vld [vmem:[%s350 + $0xb0] sm:$0xff]
      %v482 = vld [vmem:[%s350 + $0xb8] sm:$0xff]
      %v483 = vld [vmem:[%s350 + $0xc0] sm:$0xff]
      %v484 = vld [vmem:[%s350 + $0xc8] sm:$0xff]
      %v485 = vld [vmem:[%s350 + $0xd0] sm:$0xff]
      %v486 = vld [vmem:[%s350 + $0xd8] sm:$0xff]
      %v487 = vld [vmem:[%s350 + $0xe0] sm:$0xff]
      %v488 = vld [vmem:[%s350 + $0xe8] sm:$0xff]
      %v489 = vld [vmem:[%s350 + $0xf0] sm:$0xff]
      %v490 = vld [vmem:[%s350 + $0xf8] sm:$0xff]
      %v491 = vld [vmem:[%s350 + $0x100] sm:$0xff]
      %v492 = vld [vmem:[%s350 + $0x108] sm:$0xff]
      %v493 = vld [vmem:[%s350 + $0x110] sm:$0xff]
      %v494 = vld [vmem:[%s350 + $0x118] sm:$0xff]
      %v495 = vld [vmem:[%s350 + $0x120] sm:$0xff]
      %v496 = vld [vmem:[%s350 + $0x128] sm:$0xff]
      %v497 = vld [vmem:[%s350 + $0x130] sm:$0xff]
      %v498 = vld [vmem:[%s350 + $0x138] sm:$0xff]
      %v499 = vld [vmem:[%s350 + $0x140] sm:$0xff]
      %v500 = vld [vmem:[%s350 + $0x148] sm:$0xff]
      %v501 = vld [vmem:[%s350 + $0x150] sm:$0xff]
      %v502 = vld [vmem:[%s350 + $0x158] sm:$0xff]
      %v503 = vld [vmem:[%s350 + $0x160] sm:$0xff]
      %v504 = vld [vmem:[%s350 + $0x168] sm:$0xff]
      %v505 = vld [vmem:[%s350 + $0x170] sm:$0xff]
      %v506 = vld [vmem:[%s350 + $0x178] sm:$0xff]
      %v507 = vld [vmem:[%s350 + $0x180] sm:$0xff]
      %v508 = vld [vmem:[%s350 + $0x188] sm:$0xff]
      %v509 = vld [vmem:[%s350 + $0x190] sm:$0xff]
      %v510 = vld [vmem:[%s350 + $0x198] sm:$0xff]
      %v511 = vld [vmem:[%s350 + $0x1a0] sm:$0xff]
      %v512 = vld [vmem:[%s350 + $0x1a8] sm:$0xff]
      %v513 = vld [vmem:[%s350 + $0x1b0] sm:$0xff]
      %v514 = vld [vmem:[%s350 + $0x1b8] sm:$0xff]
      %v515 = vld [vmem:[%s350 + $0x1c0] sm:$0xff]
      %v516 = vld [vmem:[%s350 + $0x1c8] sm:$0xff]
      %v517 = vld [vmem:[%s350 + $0x1d0] sm:$0xff]
      %v518 = vld [vmem:[%s350 + $0x1d8] sm:$0xff]
      %v519 = vld [vmem:[%s350 + $0x1e0] sm:$0xff]
      %v520 = vld [vmem:[%s350 + $0x1e8] sm:$0xff]
      %v521 = vld [vmem:[%s350 + $0x1f0] sm:$0xff]
      %v522 = vld [vmem:[%s350 + $0x1f8] sm:$0xff]
      %v523 = vpack.c.bf16 %v460, %v459
      %v524 = vpack.c.bf16 %v462, %v461
      %v525 = vpack.c.bf16 %v464, %v463
      %v526 = vpack.c.bf16 %v466, %v465
      %v527 = vpack.c.bf16 %v468, %v467
      %v528 = vpack.c.bf16 %v470, %v469
      %v529 = vpack.c.bf16 %v472, %v471
      %v530 = vpack.c.bf16 %v474, %v473
      %v531 = vpack.c.bf16 %v476, %v475
      %v532 = vpack.c.bf16 %v478, %v477
      %v533 = vpack.c.bf16 %v480, %v479
      %v534 = vpack.c.bf16 %v482, %v481
      %v535 = vpack.c.bf16 %v484, %v483
      %v536 = vpack.c.bf16 %v486, %v485
      %v537 = vpack.c.bf16 %v488, %v487
      %v538 = vpack.c.bf16 %v490, %v489
      %v539 = vpack.c.bf16 %v492, %v491
      %v540 = vpack.c.bf16 %v494, %v493
      %v541 = vpack.c.bf16 %v496, %v495
      %v542 = vpack.c.bf16 %v498, %v497
      %v543 = vpack.c.bf16 %v500, %v499
      %v544 = vpack.c.bf16 %v502, %v501
      %v545 = vpack.c.bf16 %v504, %v503
      %v546 = vpack.c.bf16 %v506, %v505
      %v547 = vpack.c.bf16 %v508, %v507
      %v548 = vpack.c.bf16 %v510, %v509
      %v549 = vpack.c.bf16 %v512, %v511
      %v550 = vpack.c.bf16 %v514, %v513
      %v551 = vpack.c.bf16 %v516, %v515
      %v552 = vpack.c.bf16 %v518, %v517
      %v553 = vpack.c.bf16 %v520, %v519
      %v554 = vpack.c.bf16 %v522, %v521
      %v555 = vld [vmem:[%s3] sm:$0xff]
      %v556 = vld [vmem:[%s3 + $0x8] sm:$0x11]
      %v559 = vunpack.c.l.b16 %v555
      %v560 = vunpack.c.h.b16 %v555
      %v561 = vunpack.c.l.b16 %v556
      %v562 = vunpack.c.h.b16 %v556
      %v563 = vpack.c.b16 %v561, %v559
      %v564 = vpack.c.b16 %v562, %v560
      %vm565 = vcmask 72704
      %v567 = vsel %vm565, %v523, 0
      %v570 = vsel %vm565, %v524, 0
      %v573 = vsel %vm565, %v525, 0
      %v576 = vsel %vm565, %v526, 0
      %v579 = vsel %vm565, %v527, 0
      %v582 = vsel %vm565, %v528, 0
      %v585 = vsel %vm565, %v529, 0
      %v588 = vsel %vm565, %v530, 0
      %v591 = vsel %vm565, %v531, 0
      %v594 = vsel %vm565, %v532, 0
      %v597 = vsel %vm565, %v533, 0
      %v600 = vsel %vm565, %v534, 0
      %v603 = vsel %vm565, %v535, 0
      %v606 = vsel %vm565, %v536, 0
      %v609 = vsel %vm565, %v537, 0
      %v612 = vsel %vm565, %v538, 0
      %v615 = vsel %vm565, %v539, 0
      %v618 = vsel %vm565, %v540, 0
      %v621 = vsel %vm565, %v541, 0
      %v624 = vsel %vm565, %v542, 0
      %v627 = vsel %vm565, %v543, 0
      %v630 = vsel %vm565, %v544, 0
      %v633 = vsel %vm565, %v545, 0
      %v636 = vsel %vm565, %v546, 0
      %v639 = vsel %vm565, %v547, 0
      %v642 = vsel %vm565, %v548, 0
      %v645 = vsel %vm565, %v549, 0
      %v648 = vsel %vm565, %v550, 0
      %v651 = vsel %vm565, %v551, 0
      %v654 = vsel %vm565, %v552, 0
      %v657 = vsel %vm565, %v553, 0
      %v660 = vsel %vm565, %v554, 0
      %vm662 = vcmask 1043456
      %vm663 = vcmask 1044480
      %v664 = vsel %vm662, 4294967295, 65535
      %v665 = vsel %vm663, %v664, 0
      %v667 = vand.u32 %v563, %v665
      %v670 = vand.u32 %v564, %v665
      %672 = vmatpush.bf16.msra.mxu0 0
      %673 = vmatpush.bf16.msra.mxu0 0
      %674 = vmatpush.bf16.msra.mxu0 0
      %675 = vmatpush.bf16.msra.mxu0 0
      %676 = vmatpush.bf16.msra.mxu0 0
      %677 = vmatpush.bf16.msra.mxu0 0
      %678 = vmatpush.bf16.msra.mxu0 0
      %679 = vmatpush.bf16.msra.mxu0 %v667
      %680 = vmatmul.bf16.gmra.mxu0 %v567
      %v681 = vpop.f32.mrf.mxu0
      %v682 = vadd.f32 0.0, %v681
      %v683 = vpop.f32.mrf.mxu0
      %v684 = vadd.f32 0.0, %v683
      %685 = vmatmul.bf16.gmra.mxu0 %v570
      %v686 = vpop.f32.mrf.mxu0
      %v687 = vadd.f32 0.0, %v686
      %v688 = vpop.f32.mrf.mxu0
      %v689 = vadd.f32 0.0, %v688
      %690 = vmatmul.bf16.gmra.mxu0 %v573
      %v691 = vpop.f32.mrf.mxu0
      %v692 = vadd.f32 0.0, %v691
      %v693 = vpop.f32.mrf.mxu0
      %v694 = vadd.f32 0.0, %v693
      %695 = vmatmul.bf16.gmra.mxu0 %v576
      %v696 = vpop.f32.mrf.mxu0
      %v697 = vadd.f32 0.0, %v696
      %v698 = vpop.f32.mrf.mxu0
      %v699 = vadd.f32 0.0, %v698
      %700 = vmatmul.bf16.gmra.mxu0 %v579
      %v701 = vpop.f32.mrf.mxu0
      %v702 = vadd.f32 0.0, %v701
      %v703 = vpop.f32.mrf.mxu0
      %v704 = vadd.f32 0.0, %v703
      %705 = vmatmul.bf16.gmra.mxu0 %v582
      %v706 = vpop.f32.mrf.mxu0
      %v707 = vadd.f32 0.0, %v706
      %v708 = vpop.f32.mrf.mxu0
      %v709 = vadd.f32 0.0, %v708
      %710 = vmatmul.bf16.gmra.mxu0 %v585
      %v711 = vpop.f32.mrf.mxu0
      %v712 = vadd.f32 0.0, %v711
      %v713 = vpop.f32.mrf.mxu0
      %v714 = vadd.f32 0.0, %v713
      %715 = vmatmul.bf16.gmra.mxu0 %v588
      %v716 = vpop.f32.mrf.mxu0
      %v717 = vadd.f32 0.0, %v716
      %v718 = vpop.f32.mrf.mxu0
      %v719 = vadd.f32 0.0, %v718
      %720 = vmatmul.bf16.gmra.mxu0 %v591
      %v721 = vpop.f32.mrf.mxu0
      %v722 = vadd.f32 0.0, %v721
      %v723 = vpop.f32.mrf.mxu0
      %v724 = vadd.f32 0.0, %v723
      %725 = vmatmul.bf16.gmra.mxu0 %v594
      %v726 = vpop.f32.mrf.mxu0
      %v727 = vadd.f32 0.0, %v726
      %v728 = vpop.f32.mrf.mxu0
      %v729 = vadd.f32 0.0, %v728
      %730 = vmatmul.bf16.gmra.mxu0 %v597
      %v731 = vpop.f32.mrf.mxu0
      %v732 = vadd.f32 0.0, %v731
      %v733 = vpop.f32.mrf.mxu0
      %v734 = vadd.f32 0.0, %v733
      %735 = vmatmul.bf16.gmra.mxu0 %v600
      %v736 = vpop.f32.mrf.mxu0
      %v737 = vadd.f32 0.0, %v736
      %v738 = vpop.f32.mrf.mxu0
      %v739 = vadd.f32 0.0, %v738
      %740 = vmatmul.bf16.gmra.mxu0 %v603
      %v741 = vpop.f32.mrf.mxu0
      %v742 = vadd.f32 0.0, %v741
      %v743 = vpop.f32.mrf.mxu0
      %v744 = vadd.f32 0.0, %v743
      %745 = vmatmul.bf16.gmra.mxu0 %v606
      %v746 = vpop.f32.mrf.mxu0
      %v747 = vadd.f32 0.0, %v746
      %v748 = vpop.f32.mrf.mxu0
      %v749 = vadd.f32 0.0, %v748
      %750 = vmatmul.bf16.gmra.mxu0 %v609
      %v751 = vpop.f32.mrf.mxu0
      %v752 = vadd.f32 0.0, %v751
      %v753 = vpop.f32.mrf.mxu0
      %v754 = vadd.f32 0.0, %v753
      %755 = vmatmul.bf16.gmra.mxu0 %v612
      %v756 = vpop.f32.mrf.mxu0
      %v757 = vadd.f32 0.0, %v756
      %v758 = vpop.f32.mrf.mxu0
      %v759 = vadd.f32 0.0, %v758
      %760 = vmatmul.bf16.gmra.mxu0 %v615
      %v761 = vpop.f32.mrf.mxu0
      %v762 = vadd.f32 0.0, %v761
      %v763 = vpop.f32.mrf.mxu0
      %v764 = vadd.f32 0.0, %v763
      %765 = vmatmul.bf16.gmra.mxu0 %v618
      %v766 = vpop.f32.mrf.mxu0
      %v767 = vadd.f32 0.0, %v766
      %v768 = vpop.f32.mrf.mxu0
      %v769 = vadd.f32 0.0, %v768
      %770 = vmatmul.bf16.gmra.mxu0 %v621
      %v771 = vpop.f32.mrf.mxu0
      %v772 = vadd.f32 0.0, %v771
      %v773 = vpop.f32.mrf.mxu0
      %v774 = vadd.f32 0.0, %v773
      %775 = vmatmul.bf16.gmra.mxu0 %v624
      %v776 = vpop.f32.mrf.mxu0
      %v777 = vadd.f32 0.0, %v776
      %v778 = vpop.f32.mrf.mxu0
      %v779 = vadd.f32 0.0, %v778
      %780 = vmatmul.bf16.gmra.mxu0 %v627
      %v781 = vpop.f32.mrf.mxu0
      %v782 = vadd.f32 0.0, %v781
      %v783 = vpop.f32.mrf.mxu0
      %v784 = vadd.f32 0.0, %v783
      %785 = vmatmul.bf16.gmra.mxu0 %v630
      %v786 = vpop.f32.mrf.mxu0
      %v787 = vadd.f32 0.0, %v786
      %v788 = vpop.f32.mrf.mxu0
      %v789 = vadd.f32 0.0, %v788
      %790 = vmatmul.bf16.gmra.mxu0 %v633
      %v791 = vpop.f32.mrf.mxu0
      %v792 = vadd.f32 0.0, %v791
      %v793 = vpop.f32.mrf.mxu0
      %v794 = vadd.f32 0.0, %v793
      %795 = vmatmul.bf16.gmra.mxu0 %v636
      %v796 = vpop.f32.mrf.mxu0
      %v797 = vadd.f32 0.0, %v796
      %v798 = vpop.f32.mrf.mxu0
      %v799 = vadd.f32 0.0, %v798
      %800 = vmatmul.bf16.gmra.mxu0 %v639
      %v801 = vpop.f32.mrf.mxu0
      %v802 = vadd.f32 0.0, %v801
      %v803 = vpop.f32.mrf.mxu0
      %v804 = vadd.f32 0.0, %v803
      %805 = vmatmul.bf16.gmra.mxu0 %v642
      %v806 = vpop.f32.mrf.mxu0
      %v807 = vadd.f32 0.0, %v806
      %v808 = vpop.f32.mrf.mxu0
      %v809 = vadd.f32 0.0, %v808
      %810 = vmatmul.bf16.gmra.mxu0 %v645
      %v811 = vpop.f32.mrf.mxu0
      %v812 = vadd.f32 0.0, %v811
      %v813 = vpop.f32.mrf.mxu0
      %v814 = vadd.f32 0.0, %v813
      %815 = vmatmul.bf16.gmra.mxu0 %v648
      %v816 = vpop.f32.mrf.mxu0
      %v817 = vadd.f32 0.0, %v816
      %v818 = vpop.f32.mrf.mxu0
      %v819 = vadd.f32 0.0, %v818
      %820 = vmatmul.bf16.gmra.mxu0 %v651
      %v821 = vpop.f32.mrf.mxu0
      %v822 = vadd.f32 0.0, %v821
      %v823 = vpop.f32.mrf.mxu0
      %v824 = vadd.f32 0.0, %v823
      %825 = vmatmul.bf16.gmra.mxu0 %v654
      %v826 = vpop.f32.mrf.mxu0
      %v827 = vadd.f32 0.0, %v826
      %v828 = vpop.f32.mrf.mxu0
      %v829 = vadd.f32 0.0, %v828
      %830 = vmatmul.bf16.gmra.mxu0 %v657
      %v831 = vpop.f32.mrf.mxu0
      %v832 = vadd.f32 0.0, %v831
      %v833 = vpop.f32.mrf.mxu0
      %v834 = vadd.f32 0.0, %v833
      %835 = vmatmul.bf16.gmra.mxu0 %v660
      %v836 = vpop.f32.mrf.mxu0
      %v837 = vadd.f32 0.0, %v836
      %v838 = vpop.f32.mrf.mxu0
      %v839 = vadd.f32 0.0, %v838
      %840 = vdwg.mxu0
      %841 = vmatpush.bf16.msra.mxu0 0
      %842 = vmatpush.bf16.msra.mxu0 0
      %843 = vmatpush.bf16.msra.mxu0 0
      %844 = vmatpush.bf16.msra.mxu0 0
      %845 = vmatpush.bf16.msra.mxu0 0
      %846 = vmatpush.bf16.msra.mxu0 0
      %847 = vmatpush.bf16.msra.mxu0 0
      %848 = vmatpush.bf16.msra.mxu0 %v670
      %849 = vmatmul.bf16.gmra.mxu0 %v567
      %v850 = vpop.f32.mrf.mxu0
      %v851 = vadd.f32 0.0, %v850
      %v852 = vpop.f32.mrf.mxu0
      %v853 = vadd.f32 0.0, %v852
      %854 = vmatmul.bf16.gmra.mxu0 %v570
      %v855 = vpop.f32.mrf.mxu0
      %v856 = vadd.f32 0.0, %v855
      %v857 = vpop.f32.mrf.mxu0
      %v858 = vadd.f32 0.0, %v857
      %859 = vmatmul.bf16.gmra.mxu0 %v573
      %v860 = vpop.f32.mrf.mxu0
      %v861 = vadd.f32 0.0, %v860
      %v862 = vpop.f32.mrf.mxu0
      %v863 = vadd.f32 0.0, %v862
      %864 = vmatmul.bf16.gmra.mxu0 %v576
      %v865 = vpop.f32.mrf.mxu0
      %v866 = vadd.f32 0.0, %v865
      %v867 = vpop.f32.mrf.mxu0
      %v868 = vadd.f32 0.0, %v867
      %869 = vmatmul.bf16.gmra.mxu0 %v579
      %v870 = vpop.f32.mrf.mxu0
      %v871 = vadd.f32 0.0, %v870
      %v872 = vpop.f32.mrf.mxu0
      %v873 = vadd.f32 0.0, %v872
      %874 = vmatmul.bf16.gmra.mxu0 %v582
      %v875 = vpop.f32.mrf.mxu0
      %v876 = vadd.f32 0.0, %v875
      %v877 = vpop.f32.mrf.mxu0
      %v878 = vadd.f32 0.0, %v877
      %879 = vmatmul.bf16.gmra.mxu0 %v585
      %v880 = vpop.f32.mrf.mxu0
      %v881 = vadd.f32 0.0, %v880
      %v882 = vpop.f32.mrf.mxu0
      %v883 = vadd.f32 0.0, %v882
      %884 = vmatmul.bf16.gmra.mxu0 %v588
      %v885 = vpop.f32.mrf.mxu0
      %v886 = vadd.f32 0.0, %v885
      %v887 = vpop.f32.mrf.mxu0
      %v888 = vadd.f32 0.0, %v887
      %889 = vmatmul.bf16.gmra.mxu0 %v591
      %v890 = vpop.f32.mrf.mxu0
      %v891 = vadd.f32 0.0, %v890
      %v892 = vpop.f32.mrf.mxu0
      %v893 = vadd.f32 0.0, %v892
      %894 = vmatmul.bf16.gmra.mxu0 %v594
      %v895 = vpop.f32.mrf.mxu0
      %v896 = vadd.f32 0.0, %v895
      %v897 = vpop.f32.mrf.mxu0
      %v898 = vadd.f32 0.0, %v897
      %899 = vmatmul.bf16.gmra.mxu0 %v597
      %v900 = vpop.f32.mrf.mxu0
      %v901 = vadd.f32 0.0, %v900
      %v902 = vpop.f32.mrf.mxu0
      %v903 = vadd.f32 0.0, %v902
      %904 = vmatmul.bf16.gmra.mxu0 %v600
      %v905 = vpop.f32.mrf.mxu0
      %v906 = vadd.f32 0.0, %v905
      %v907 = vpop.f32.mrf.mxu0
      %v908 = vadd.f32 0.0, %v907
      %909 = vmatmul.bf16.gmra.mxu0 %v603
      %v910 = vpop.f32.mrf.mxu0
      %v911 = vadd.f32 0.0, %v910
      %v912 = vpop.f32.mrf.mxu0
      %v913 = vadd.f32 0.0, %v912
      %914 = vmatmul.bf16.gmra.mxu0 %v606
      %v915 = vpop.f32.mrf.mxu0
      %v916 = vadd.f32 0.0, %v915
      %v917 = vpop.f32.mrf.mxu0
      %v918 = vadd.f32 0.0, %v917
      %919 = vmatmul.bf16.gmra.mxu0 %v609
      %v920 = vpop.f32.mrf.mxu0
      %v921 = vadd.f32 0.0, %v920
      %v922 = vpop.f32.mrf.mxu0
      %v923 = vadd.f32 0.0, %v922
      %924 = vmatmul.bf16.gmra.mxu0 %v612
      %v925 = vpop.f32.mrf.mxu0
      %v926 = vadd.f32 0.0, %v925
      %v927 = vpop.f32.mrf.mxu0
      %v928 = vadd.f32 0.0, %v927
      %929 = vmatmul.bf16.gmra.mxu0 %v615
      %v930 = vpop.f32.mrf.mxu0
      %v931 = vadd.f32 0.0, %v930
      %v932 = vpop.f32.mrf.mxu0
      %v933 = vadd.f32 0.0, %v932
      %934 = vmatmul.bf16.gmra.mxu0 %v618
      %v935 = vpop.f32.mrf.mxu0
      %v936 = vadd.f32 0.0, %v935
      %v937 = vpop.f32.mrf.mxu0
      %v938 = vadd.f32 0.0, %v937
      %939 = vmatmul.bf16.gmra.mxu0 %v621
      %v940 = vpop.f32.mrf.mxu0
      %v941 = vadd.f32 0.0, %v940
      %v942 = vpop.f32.mrf.mxu0
      %v943 = vadd.f32 0.0, %v942
      %944 = vmatmul.bf16.gmra.mxu0 %v624
      %v945 = vpop.f32.mrf.mxu0
      %v946 = vadd.f32 0.0, %v945
      %v947 = vpop.f32.mrf.mxu0
      %v948 = vadd.f32 0.0, %v947
      %949 = vmatmul.bf16.gmra.mxu0 %v627
      %v950 = vpop.f32.mrf.mxu0
      %v951 = vadd.f32 0.0, %v950
      %v952 = vpop.f32.mrf.mxu0
      %v953 = vadd.f32 0.0, %v952
      %954 = vmatmul.bf16.gmra.mxu0 %v630
      %v955 = vpop.f32.mrf.mxu0
      %v956 = vadd.f32 0.0, %v955
      %v957 = vpop.f32.mrf.mxu0
      %v958 = vadd.f32 0.0, %v957
      %959 = vmatmul.bf16.gmra.mxu0 %v633
      %v960 = vpop.f32.mrf.mxu0
      %v961 = vadd.f32 0.0, %v960
      %v962 = vpop.f32.mrf.mxu0
      %v963 = vadd.f32 0.0, %v962
      %964 = vmatmul.bf16.gmra.mxu0 %v636
      %v965 = vpop.f32.mrf.mxu0
      %v966 = vadd.f32 0.0, %v965
      %v967 = vpop.f32.mrf.mxu0
      %v968 = vadd.f32 0.0, %v967
      %969 = vmatmul.bf16.gmra.mxu0 %v639
      %v970 = vpop.f32.mrf.mxu0
      %v971 = vadd.f32 0.0, %v970
      %v972 = vpop.f32.mrf.mxu0
      %v973 = vadd.f32 0.0, %v972
      %974 = vmatmul.bf16.gmra.mxu0 %v642
      %v975 = vpop.f32.mrf.mxu0
      %v976 = vadd.f32 0.0, %v975
      %v977 = vpop.f32.mrf.mxu0
      %v978 = vadd.f32 0.0, %v977
      %979 = vmatmul.bf16.gmra.mxu0 %v645
      %v980 = vpop.f32.mrf.mxu0
      %v981 = vadd.f32 0.0, %v980
      %v982 = vpop.f32.mrf.mxu0
      %v983 = vadd.f32 0.0, %v982
      %984 = vmatmul.bf16.gmra.mxu0 %v648
      %v985 = vpop.f32.mrf.mxu0
      %v986 = vadd.f32 0.0, %v985
      %v987 = vpop.f32.mrf.mxu0
      %v988 = vadd.f32 0.0, %v987
      %989 = vmatmul.bf16.gmra.mxu0 %v651
      %v990 = vpop.f32.mrf.mxu0
      %v991 = vadd.f32 0.0, %v990
      %v992 = vpop.f32.mrf.mxu0
      %v993 = vadd.f32 0.0, %v992
      %994 = vmatmul.bf16.gmra.mxu0 %v654
      %v995 = vpop.f32.mrf.mxu0
      %v996 = vadd.f32 0.0, %v995
      %v997 = vpop.f32.mrf.mxu0
      %v998 = vadd.f32 0.0, %v997
      %999 = vmatmul.bf16.gmra.mxu0 %v657
      %v1000 = vpop.f32.mrf.mxu0
      %v1001 = vadd.f32 0.0, %v1000
      %v1002 = vpop.f32.mrf.mxu0
      %v1003 = vadd.f32 0.0, %v1002
      %1004 = vmatmul.bf16.gmra.mxu0 %v660
      %v1005 = vpop.f32.mrf.mxu0
      %v1006 = vadd.f32 0.0, %v1005
      %v1007 = vpop.f32.mrf.mxu0
      %v1008 = vadd.f32 0.0, %v1007
      %1009 = vdwg.mxu0
      %v1014 = vunpack.c.l.b16 %v455
      %v1015 = vunpack.c.h.b16 %v455
      %v1016 = vunpack.c.l.b16 %v456
      %v1017 = vunpack.c.h.b16 %v456
      %v1018 = vunpack.c.l.b16 %v457
      %v1019 = vunpack.c.h.b16 %v457
      %v1020 = vunpack.c.l.b16 %v458
      %v1021 = vunpack.c.h.b16 %v458
      %v1022 = vpack.c.b16 %v1016, %v1014
      %v1023 = vpack.c.b16 %v1017, %v1015
      %v1024 = vpack.c.b16 %v1020, %v1018
      %v1025 = vpack.c.b16 %v1021, %v1019
      %vm1028 = vcmask 220160
      %v1030 = vsel %vm1028, %v423, 0
      %v1033 = vsel %vm1028, %v424, 0
      %v1036 = vsel %vm1028, %v425, 0
      %v1039 = vsel %vm1028, %v426, 0
      %v1042 = vsel %vm1028, %v427, 0
      %v1045 = vsel %vm1028, %v428, 0
      %v1048 = vsel %vm1028, %v429, 0
      %v1051 = vsel %vm1028, %v430, 0
      %v1054 = vsel %vm1028, %v431, 0
      %v1057 = vsel %vm1028, %v432, 0
      %v1060 = vsel %vm1028, %v433, 0
      %v1063 = vsel %vm1028, %v434, 0
      %v1066 = vsel %vm1028, %v435, 0
      %v1069 = vsel %vm1028, %v436, 0
      %v1072 = vsel %vm1028, %v437, 0
      %v1075 = vsel %vm1028, %v438, 0
      %v1078 = vsel %vm1028, %v439, 0
      %v1081 = vsel %vm1028, %v440, 0
      %v1084 = vsel %vm1028, %v441, 0
      %v1087 = vsel %vm1028, %v442, 0
      %v1090 = vsel %vm1028, %v443, 0
      %v1093 = vsel %vm1028, %v444, 0
      %v1096 = vsel %vm1028, %v445, 0
      %v1099 = vsel %vm1028, %v446, 0
      %v1102 = vsel %vm1028, %v447, 0
      %v1105 = vsel %vm1028, %v448, 0
      %v1108 = vsel %vm1028, %v449, 0
      %v1111 = vsel %vm1028, %v450, 0
      %v1114 = vsel %vm1028, %v451, 0
      %v1117 = vsel %vm1028, %v452, 0
      %v1120 = vsel %vm1028, %v453, 0
      %v1123 = vsel %vm1028, %v454, 0
      %vm1125 = vcmask 1045504
      %v1126 = vsel %vm663, 4294967295, 65535
      %v1127 = vsel %vm1125, %v1126, 0
      %v1129 = vand.u32 %v1024, %v1127
      %v1132 = vand.u32 %v1025, %v1127
      %1134 = vmatpush.bf16.msra.mxu0 0
      %1135 = vmatpush.bf16.msra.mxu0 0
      %1136 = vmatpush.bf16.msra.mxu0 0
      %1137 = vmatpush.bf16.msra.mxu0 0
      %1138 = vmatpush.bf16.msra.mxu0 0
      %1139 = vmatpush.bf16.msra.mxu0 0
      %1140 = vmatpush.bf16.msra.mxu0 %v1129
      %1141 = vmatpush.bf16.msra.mxu0 %v1022
      %1142 = vmatmul.bf16.gmra.mxu0 %v1030
      %v1143 = vpop.f32.mrf.mxu0
      %v1144 = vadd.f32 %v682, %v1143
      %v1145 = vpop.f32.mrf.mxu0
      %v1146 = vadd.f32 %v684, %v1145
      %1147 = vmatmul.bf16.gmra.mxu0 %v1033
      %v1148 = vpop.f32.mrf.mxu0
      %v1149 = vadd.f32 %v687, %v1148
      %v1150 = vpop.f32.mrf.mxu0
      %v1151 = vadd.f32 %v689, %v1150
      %1152 = vmatmul.bf16.gmra.mxu0 %v1036
      %v1153 = vpop.f32.mrf.mxu0
      %v1154 = vadd.f32 %v692, %v1153
      %v1155 = vpop.f32.mrf.mxu0
      %v1156 = vadd.f32 %v694, %v1155
      %1157 = vmatmul.bf16.gmra.mxu0 %v1039
      %v1158 = vpop.f32.mrf.mxu0
      %v1159 = vadd.f32 %v697, %v1158
      %v1160 = vpop.f32.mrf.mxu0
      %v1161 = vadd.f32 %v699, %v1160
      %1162 = vmatmul.bf16.gmra.mxu0 %v1042
      %v1163 = vpop.f32.mrf.mxu0
      %v1164 = vadd.f32 %v702, %v1163
      %v1165 = vpop.f32.mrf.mxu0
      %v1166 = vadd.f32 %v704, %v1165
      %1167 = vmatmul.bf16.gmra.mxu0 %v1045
      %v1168 = vpop.f32.mrf.mxu0
      %v1169 = vadd.f32 %v707, %v1168
      %v1170 = vpop.f32.mrf.mxu0
      %v1171 = vadd.f32 %v709, %v1170
      %1172 = vmatmul.bf16.gmra.mxu0 %v1048
      %v1173 = vpop.f32.mrf.mxu0
      %v1174 = vadd.f32 %v712, %v1173
      %v1175 = vpop.f32.mrf.mxu0
      %v1176 = vadd.f32 %v714, %v1175
      %1177 = vmatmul.bf16.gmra.mxu0 %v1051
      %v1178 = vpop.f32.mrf.mxu0
      %v1179 = vadd.f32 %v717, %v1178
      %v1180 = vpop.f32.mrf.mxu0
      %v1181 = vadd.f32 %v719, %v1180
      %1182 = vmatmul.bf16.gmra.mxu0 %v1054
      %v1183 = vpop.f32.mrf.mxu0
      %v1184 = vadd.f32 %v722, %v1183
      %v1185 = vpop.f32.mrf.mxu0
      %v1186 = vadd.f32 %v724, %v1185
      %1187 = vmatmul.bf16.gmra.mxu0 %v1057
      %v1188 = vpop.f32.mrf.mxu0
      %v1189 = vadd.f32 %v727, %v1188
      %v1190 = vpop.f32.mrf.mxu0
      %v1191 = vadd.f32 %v729, %v1190
      %1192 = vmatmul.bf16.gmra.mxu0 %v1060
      %v1193 = vpop.f32.mrf.mxu0
      %v1194 = vadd.f32 %v732, %v1193
      %v1195 = vpop.f32.mrf.mxu0
      %v1196 = vadd.f32 %v734, %v1195
      %1197 = vmatmul.bf16.gmra.mxu0 %v1063
      %v1198 = vpop.f32.mrf.mxu0
      %v1199 = vadd.f32 %v737, %v1198
      %v1200 = vpop.f32.mrf.mxu0
      %v1201 = vadd.f32 %v739, %v1200
      %1202 = vmatmul.bf16.gmra.mxu0 %v1066
      %v1203 = vpop.f32.mrf.mxu0
      %v1204 = vadd.f32 %v742, %v1203
      %v1205 = vpop.f32.mrf.mxu0
      %v1206 = vadd.f32 %v744, %v1205
      %1207 = vmatmul.bf16.gmra.mxu0 %v1069
      %v1208 = vpop.f32.mrf.mxu0
      %v1209 = vadd.f32 %v747, %v1208
      %v1210 = vpop.f32.mrf.mxu0
      %v1211 = vadd.f32 %v749, %v1210
      %1212 = vmatmul.bf16.gmra.mxu0 %v1072
      %v1213 = vpop.f32.mrf.mxu0
      %v1214 = vadd.f32 %v752, %v1213
      %v1215 = vpop.f32.mrf.mxu0
      %v1216 = vadd.f32 %v754, %v1215
      %1217 = vmatmul.bf16.gmra.mxu0 %v1075
      %v1218 = vpop.f32.mrf.mxu0
      %v1219 = vadd.f32 %v757, %v1218
      %v1220 = vpop.f32.mrf.mxu0
      %v1221 = vadd.f32 %v759, %v1220
      %1222 = vmatmul.bf16.gmra.mxu0 %v1078
      %v1223 = vpop.f32.mrf.mxu0
      %v1224 = vadd.f32 %v762, %v1223
      %v1225 = vpop.f32.mrf.mxu0
      %v1226 = vadd.f32 %v764, %v1225
      %1227 = vmatmul.bf16.gmra.mxu0 %v1081
      %v1228 = vpop.f32.mrf.mxu0
      %v1229 = vadd.f32 %v767, %v1228
      %v1230 = vpop.f32.mrf.mxu0
      %v1231 = vadd.f32 %v769, %v1230
      %1232 = vmatmul.bf16.gmra.mxu0 %v1084
      %v1233 = vpop.f32.mrf.mxu0
      %v1234 = vadd.f32 %v772, %v1233
      %v1235 = vpop.f32.mrf.mxu0
      %v1236 = vadd.f32 %v774, %v1235
      %1237 = vmatmul.bf16.gmra.mxu0 %v1087
      %v1238 = vpop.f32.mrf.mxu0
      %v1239 = vadd.f32 %v777, %v1238
      %v1240 = vpop.f32.mrf.mxu0
      %v1241 = vadd.f32 %v779, %v1240
      %1242 = vmatmul.bf16.gmra.mxu0 %v1090
      %v1243 = vpop.f32.mrf.mxu0
      %v1244 = vadd.f32 %v782, %v1243
      %v1245 = vpop.f32.mrf.mxu0
      %v1246 = vadd.f32 %v784, %v1245
      %1247 = vmatmul.bf16.gmra.mxu0 %v1093
      %v1248 = vpop.f32.mrf.mxu0
      %v1249 = vadd.f32 %v787, %v1248
      %v1250 = vpop.f32.mrf.mxu0
      %v1251 = vadd.f32 %v789, %v1250
      %1252 = vmatmul.bf16.gmra.mxu0 %v1096
      %v1253 = vpop.f32.mrf.mxu0
      %v1254 = vadd.f32 %v792, %v1253
      %v1255 = vpop.f32.mrf.mxu0
      %v1256 = vadd.f32 %v794, %v1255
      %1257 = vmatmul.bf16.gmra.mxu0 %v1099
      %v1258 = vpop.f32.mrf.mxu0
      %v1259 = vadd.f32 %v797, %v1258
      %v1260 = vpop.f32.mrf.mxu0
      %v1261 = vadd.f32 %v799, %v1260
      %1262 = vmatmul.bf16.gmra.mxu0 %v1102
      %v1263 = vpop.f32.mrf.mxu0
      %v1264 = vadd.f32 %v802, %v1263
      %v1265 = vpop.f32.mrf.mxu0
      %v1266 = vadd.f32 %v804, %v1265
      %1267 = vmatmul.bf16.gmra.mxu0 %v1105
      %v1268 = vpop.f32.mrf.mxu0
      %v1269 = vadd.f32 %v807, %v1268
      %v1270 = vpop.f32.mrf.mxu0
      %v1271 = vadd.f32 %v809, %v1270
      %1272 = vmatmul.bf16.gmra.mxu0 %v1108
      %v1273 = vpop.f32.mrf.mxu0
      %v1274 = vadd.f32 %v812, %v1273
      %v1275 = vpop.f32.mrf.mxu0
      %v1276 = vadd.f32 %v814, %v1275
      %1277 = vmatmul.bf16.gmra.mxu0 %v1111
      %v1278 = vpop.f32.mrf.mxu0
      %v1279 = vadd.f32 %v817, %v1278
      %v1280 = vpop.f32.mrf.mxu0
      %v1281 = vadd.f32 %v819, %v1280
      %1282 = vmatmul.bf16.gmra.mxu0 %v1114
      %v1283 = vpop.f32.mrf.mxu0
      %v1284 = vadd.f32 %v822, %v1283
      %v1285 = vpop.f32.mrf.mxu0
      %v1286 = vadd.f32 %v824, %v1285
      %1287 = vmatmul.bf16.gmra.mxu0 %v1117
      %v1288 = vpop.f32.mrf.mxu0
      %v1289 = vadd.f32 %v827, %v1288
      %v1290 = vpop.f32.mrf.mxu0
      %v1291 = vadd.f32 %v829, %v1290
      %1292 = vmatmul.bf16.gmra.mxu0 %v1120
      %v1293 = vpop.f32.mrf.mxu0
      %v1294 = vadd.f32 %v832, %v1293
      %v1295 = vpop.f32.mrf.mxu0
      %v1296 = vadd.f32 %v834, %v1295
      %1297 = vmatmul.bf16.gmra.mxu0 %v1123
      %v1298 = vpop.f32.mrf.mxu0
      %v1299 = vadd.f32 %v837, %v1298
      %v1300 = vpop.f32.mrf.mxu0
      %v1301 = vadd.f32 %v839, %v1300
      %1302 = vdwg.mxu0
      %1303 = vmatpush.bf16.msra.mxu0 0
      %1304 = vmatpush.bf16.msra.mxu0 0
      %1305 = vmatpush.bf16.msra.mxu0 0
      %1306 = vmatpush.bf16.msra.mxu0 0
      %1307 = vmatpush.bf16.msra.mxu0 0
      %1308 = vmatpush.bf16.msra.mxu0 0
      %1309 = vmatpush.bf16.msra.mxu0 %v1132
      %1310 = vmatpush.bf16.msra.mxu0 %v1023
      %1311 = vmatmul.bf16.gmra.mxu0 %v1030
      %v1312 = vpop.f32.mrf.mxu0
      %v1313 = vadd.f32 %v851, %v1312
      %v1314 = vpop.f32.mrf.mxu0
      %v1315 = vadd.f32 %v853, %v1314
      %1316 = vmatmul.bf16.gmra.mxu0 %v1033
      %v1317 = vpop.f32.mrf.mxu0
      %v1318 = vadd.f32 %v856, %v1317
      %v1319 = vpop.f32.mrf.mxu0
      %v1320 = vadd.f32 %v858, %v1319
      %1321 = vmatmul.bf16.gmra.mxu0 %v1036
      %v1322 = vpop.f32.mrf.mxu0
      %v1323 = vadd.f32 %v861, %v1322
      %v1324 = vpop.f32.mrf.mxu0
      %v1325 = vadd.f32 %v863, %v1324
      %1326 = vmatmul.bf16.gmra.mxu0 %v1039
      %v1327 = vpop.f32.mrf.mxu0
      %v1328 = vadd.f32 %v866, %v1327
      %v1329 = vpop.f32.mrf.mxu0
      %v1330 = vadd.f32 %v868, %v1329
      %1331 = vmatmul.bf16.gmra.mxu0 %v1042
      %v1332 = vpop.f32.mrf.mxu0
      %v1333 = vadd.f32 %v871, %v1332
      %v1334 = vpop.f32.mrf.mxu0
      %v1335 = vadd.f32 %v873, %v1334
      %1336 = vmatmul.bf16.gmra.mxu0 %v1045
      %v1337 = vpop.f32.mrf.mxu0
      %v1338 = vadd.f32 %v876, %v1337
      %v1339 = vpop.f32.mrf.mxu0
      %v1340 = vadd.f32 %v878, %v1339
      %1341 = vmatmul.bf16.gmra.mxu0 %v1048
      %v1342 = vpop.f32.mrf.mxu0
      %v1343 = vadd.f32 %v881, %v1342
      %v1344 = vpop.f32.mrf.mxu0
      %v1345 = vadd.f32 %v883, %v1344
      %1346 = vmatmul.bf16.gmra.mxu0 %v1051
      %v1347 = vpop.f32.mrf.mxu0
      %v1348 = vadd.f32 %v886, %v1347
      %v1349 = vpop.f32.mrf.mxu0
      %v1350 = vadd.f32 %v888, %v1349
      %1351 = vmatmul.bf16.gmra.mxu0 %v1054
      %v1352 = vpop.f32.mrf.mxu0
      %v1353 = vadd.f32 %v891, %v1352
      %v1354 = vpop.f32.mrf.mxu0
      %v1355 = vadd.f32 %v893, %v1354
      %1356 = vmatmul.bf16.gmra.mxu0 %v1057
      %v1357 = vpop.f32.mrf.mxu0
      %v1358 = vadd.f32 %v896, %v1357
      %v1359 = vpop.f32.mrf.mxu0
      %v1360 = vadd.f32 %v898, %v1359
      %1361 = vmatmul.bf16.gmra.mxu0 %v1060
      %v1362 = vpop.f32.mrf.mxu0
      %v1363 = vadd.f32 %v901, %v1362
      %v1364 = vpop.f32.mrf.mxu0
      %v1365 = vadd.f32 %v903, %v1364
      %1366 = vmatmul.bf16.gmra.mxu0 %v1063
      %v1367 = vpop.f32.mrf.mxu0
      %v1368 = vadd.f32 %v906, %v1367
      %v1369 = vpop.f32.mrf.mxu0
      %v1370 = vadd.f32 %v908, %v1369
      %1371 = vmatmul.bf16.gmra.mxu0 %v1066
      %v1372 = vpop.f32.mrf.mxu0
      %v1373 = vadd.f32 %v911, %v1372
      %v1374 = vpop.f32.mrf.mxu0
      %v1375 = vadd.f32 %v913, %v1374
      %1376 = vmatmul.bf16.gmra.mxu0 %v1069
      %v1377 = vpop.f32.mrf.mxu0
      %v1378 = vadd.f32 %v916, %v1377
      %v1379 = vpop.f32.mrf.mxu0
      %v1380 = vadd.f32 %v918, %v1379
      %1381 = vmatmul.bf16.gmra.mxu0 %v1072
      %v1382 = vpop.f32.mrf.mxu0
      %v1383 = vadd.f32 %v921, %v1382
      %v1384 = vpop.f32.mrf.mxu0
      %v1385 = vadd.f32 %v923, %v1384
      %1386 = vmatmul.bf16.gmra.mxu0 %v1075
      %v1387 = vpop.f32.mrf.mxu0
      %v1388 = vadd.f32 %v926, %v1387
      %v1389 = vpop.f32.mrf.mxu0
      %v1390 = vadd.f32 %v928, %v1389
      %1391 = vmatmul.bf16.gmra.mxu0 %v1078
      %v1392 = vpop.f32.mrf.mxu0
      %v1393 = vadd.f32 %v931, %v1392
      %v1394 = vpop.f32.mrf.mxu0
      %v1395 = vadd.f32 %v933, %v1394
      %1396 = vmatmul.bf16.gmra.mxu0 %v1081
      %v1397 = vpop.f32.mrf.mxu0
      %v1398 = vadd.f32 %v936, %v1397
      %v1399 = vpop.f32.mrf.mxu0
      %v1400 = vadd.f32 %v938, %v1399
      %1401 = vmatmul.bf16.gmra.mxu0 %v1084
      %v1402 = vpop.f32.mrf.mxu0
      %v1403 = vadd.f32 %v941, %v1402
      %v1404 = vpop.f32.mrf.mxu0
      %v1405 = vadd.f32 %v943, %v1404
      %1406 = vmatmul.bf16.gmra.mxu0 %v1087
      %v1407 = vpop.f32.mrf.mxu0
      %v1408 = vadd.f32 %v946, %v1407
      %v1409 = vpop.f32.mrf.mxu0
      %v1410 = vadd.f32 %v948, %v1409
      %1411 = vmatmul.bf16.gmra.mxu0 %v1090
      %v1412 = vpop.f32.mrf.mxu0
      %v1413 = vadd.f32 %v951, %v1412
      %v1414 = vpop.f32.mrf.mxu0
      %v1415 = vadd.f32 %v953, %v1414
      %1416 = vmatmul.bf16.gmra.mxu0 %v1093
      %v1417 = vpop.f32.mrf.mxu0
      %v1418 = vadd.f32 %v956, %v1417
      %v1419 = vpop.f32.mrf.mxu0
      %v1420 = vadd.f32 %v958, %v1419
      %1421 = vmatmul.bf16.gmra.mxu0 %v1096
      %v1422 = vpop.f32.mrf.mxu0
      %v1423 = vadd.f32 %v961, %v1422
      %v1424 = vpop.f32.mrf.mxu0
      %v1425 = vadd.f32 %v963, %v1424
      %1426 = vmatmul.bf16.gmra.mxu0 %v1099
      %v1427 = vpop.f32.mrf.mxu0
      %v1428 = vadd.f32 %v966, %v1427
      %v1429 = vpop.f32.mrf.mxu0
      %v1430 = vadd.f32 %v968, %v1429
      %1431 = vmatmul.bf16.gmra.mxu0 %v1102
      %v1432 = vpop.f32.mrf.mxu0
      %v1433 = vadd.f32 %v971, %v1432
      %v1434 = vpop.f32.mrf.mxu0
      %v1435 = vadd.f32 %v973, %v1434
      %1436 = vmatmul.bf16.gmra.mxu0 %v1105
      %v1437 = vpop.f32.mrf.mxu0
      %v1438 = vadd.f32 %v976, %v1437
      %v1439 = vpop.f32.mrf.mxu0
      %v1440 = vadd.f32 %v978, %v1439
      %1441 = vmatmul.bf16.gmra.mxu0 %v1108
      %v1442 = vpop.f32.mrf.mxu0
      %v1443 = vadd.f32 %v981, %v1442
      %v1444 = vpop.f32.mrf.mxu0
      %v1445 = vadd.f32 %v983, %v1444
      %1446 = vmatmul.bf16.gmra.mxu0 %v1111
      %v1447 = vpop.f32.mrf.mxu0
      %v1448 = vadd.f32 %v986, %v1447
      %v1449 = vpop.f32.mrf.mxu0
      %v1450 = vadd.f32 %v988, %v1449
      %1451 = vmatmul.bf16.gmra.mxu0 %v1114
      %v1452 = vpop.f32.mrf.mxu0
      %v1453 = vadd.f32 %v991, %v1452
      %v1454 = vpop.f32.mrf.mxu0
      %v1455 = vadd.f32 %v993, %v1454
      %1456 = vmatmul.bf16.gmra.mxu0 %v1117
      %v1457 = vpop.f32.mrf.mxu0
      %v1458 = vadd.f32 %v996, %v1457
      %v1459 = vpop.f32.mrf.mxu0
      %v1460 = vadd.f32 %v998, %v1459
      %1461 = vmatmul.bf16.gmra.mxu0 %v1120
      %v1462 = vpop.f32.mrf.mxu0
      %v1463 = vadd.f32 %v1001, %v1462
      %v1464 = vpop.f32.mrf.mxu0
      %v1465 = vadd.f32 %v1003, %v1464
      %1466 = vmatmul.bf16.gmra.mxu0 %v1123
      %v1467 = vpop.f32.mrf.mxu0
      %v1468 = vadd.f32 %v1006, %v1467
      %v1469 = vpop.f32.mrf.mxu0
      %v1470 = vadd.f32 %v1008, %v1469
      %1471 = vdwg.mxu0
      %v1472 = vld [vmem:[%s4] sm:$0x3]
      %v1474 = vperm.slane %v1472, 0
      %v1475 = vperm.slane %v1472, 1
      %v1478 = vadd.f32 %v1144, %v1474
      %v1479 = vadd.f32 %v1313, %v1475
      %v1480 = vadd.f32 %v1146, %v1474
      %v1481 = vadd.f32 %v1315, %v1475
      %v1482 = vadd.f32 %v1149, %v1474
      %v1483 = vadd.f32 %v1318, %v1475
      %v1484 = vadd.f32 %v1151, %v1474
      %v1485 = vadd.f32 %v1320, %v1475
      %v1486 = vadd.f32 %v1154, %v1474
      %v1487 = vadd.f32 %v1323, %v1475
      %v1488 = vadd.f32 %v1156, %v1474
      %v1489 = vadd.f32 %v1325, %v1475
      %v1490 = vadd.f32 %v1159, %v1474
      %v1491 = vadd.f32 %v1328, %v1475
      %v1492 = vadd.f32 %v1161, %v1474
      %v1493 = vadd.f32 %v1330, %v1475
      %v1494 = vadd.f32 %v1164, %v1474
      %v1495 = vadd.f32 %v1333, %v1475
      %v1496 = vadd.f32 %v1166, %v1474
      %v1497 = vadd.f32 %v1335, %v1475
      %v1498 = vadd.f32 %v1169, %v1474
      %v1499 = vadd.f32 %v1338, %v1475
      %v1500 = vadd.f32 %v1171, %v1474
      %v1501 = vadd.f32 %v1340, %v1475
      %v1502 = vadd.f32 %v1174, %v1474
      %v1503 = vadd.f32 %v1343, %v1475
      %v1504 = vadd.f32 %v1176, %v1474
      %v1505 = vadd.f32 %v1345, %v1475
      %v1506 = vadd.f32 %v1179, %v1474
      %v1507 = vadd.f32 %v1348, %v1475
      %v1508 = vadd.f32 %v1181, %v1474
      %v1509 = vadd.f32 %v1350, %v1475
      %v1510 = vadd.f32 %v1184, %v1474
      %v1511 = vadd.f32 %v1353, %v1475
      %v1512 = vadd.f32 %v1186, %v1474
      %v1513 = vadd.f32 %v1355, %v1475
      %v1514 = vadd.f32 %v1189, %v1474
      %v1515 = vadd.f32 %v1358, %v1475
      %v1516 = vadd.f32 %v1191, %v1474
      %v1517 = vadd.f32 %v1360, %v1475
      %v1518 = vadd.f32 %v1194, %v1474
      %v1519 = vadd.f32 %v1363, %v1475
      %v1520 = vadd.f32 %v1196, %v1474
      %v1521 = vadd.f32 %v1365, %v1475
      %v1522 = vadd.f32 %v1199, %v1474
      %v1523 = vadd.f32 %v1368, %v1475
      %v1524 = vadd.f32 %v1201, %v1474
      %v1525 = vadd.f32 %v1370, %v1475
      %v1526 = vadd.f32 %v1204, %v1474
      %v1527 = vadd.f32 %v1373, %v1475
      %v1528 = vadd.f32 %v1206, %v1474
      %v1529 = vadd.f32 %v1375, %v1475
      %v1530 = vadd.f32 %v1209, %v1474
      %v1531 = vadd.f32 %v1378, %v1475
      %v1532 = vadd.f32 %v1211, %v1474
      %v1533 = vadd.f32 %v1380, %v1475
      %v1534 = vadd.f32 %v1214, %v1474
      %v1535 = vadd.f32 %v1383, %v1475
      %v1536 = vadd.f32 %v1216, %v1474
      %v1537 = vadd.f32 %v1385, %v1475
      %v1538 = vadd.f32 %v1219, %v1474
      %v1539 = vadd.f32 %v1388, %v1475
      %v1540 = vadd.f32 %v1221, %v1474
      %v1541 = vadd.f32 %v1390, %v1475
      %v1542 = vadd.f32 %v1224, %v1474
      %v1543 = vadd.f32 %v1393, %v1475
      %v1544 = vadd.f32 %v1226, %v1474
      %v1545 = vadd.f32 %v1395, %v1475
      %v1546 = vadd.f32 %v1229, %v1474
      %v1547 = vadd.f32 %v1398, %v1475
      %v1548 = vadd.f32 %v1231, %v1474
      %v1549 = vadd.f32 %v1400, %v1475
      %v1550 = vadd.f32 %v1234, %v1474
      %v1551 = vadd.f32 %v1403, %v1475
      %v1552 = vadd.f32 %v1236, %v1474
      %v1553 = vadd.f32 %v1405, %v1475
      %v1554 = vadd.f32 %v1239, %v1474
      %v1555 = vadd.f32 %v1408, %v1475
      %v1556 = vadd.f32 %v1241, %v1474
      %v1557 = vadd.f32 %v1410, %v1475
      %v1558 = vadd.f32 %v1244, %v1474
      %v1559 = vadd.f32 %v1413, %v1475
      %v1560 = vadd.f32 %v1246, %v1474
      %v1561 = vadd.f32 %v1415, %v1475
      %v1562 = vadd.f32 %v1249, %v1474
      %v1563 = vadd.f32 %v1418, %v1475
      %v1564 = vadd.f32 %v1251, %v1474
      %v1565 = vadd.f32 %v1420, %v1475
      %v1566 = vadd.f32 %v1254, %v1474
      %v1567 = vadd.f32 %v1423, %v1475
      %v1568 = vadd.f32 %v1256, %v1474
      %v1569 = vadd.f32 %v1425, %v1475
      %v1570 = vadd.f32 %v1259, %v1474
      %v1571 = vadd.f32 %v1428, %v1475
      %v1572 = vadd.f32 %v1261, %v1474
      %v1573 = vadd.f32 %v1430, %v1475
      %v1574 = vadd.f32 %v1264, %v1474
      %v1575 = vadd.f32 %v1433, %v1475
      %v1576 = vadd.f32 %v1266, %v1474
      %v1577 = vadd.f32 %v1435, %v1475
      %v1578 = vadd.f32 %v1269, %v1474
      %v1579 = vadd.f32 %v1438, %v1475
      %v1580 = vadd.f32 %v1271, %v1474
      %v1581 = vadd.f32 %v1440, %v1475
      %v1582 = vadd.f32 %v1274, %v1474
      %v1583 = vadd.f32 %v1443, %v1475
      %v1584 = vadd.f32 %v1276, %v1474
      %v1585 = vadd.f32 %v1445, %v1475
      %v1586 = vadd.f32 %v1279, %v1474
      %v1587 = vadd.f32 %v1448, %v1475
      %v1588 = vadd.f32 %v1281, %v1474
      %v1589 = vadd.f32 %v1450, %v1475
      %v1590 = vadd.f32 %v1284, %v1474
      %v1591 = vadd.f32 %v1453, %v1475
      %v1592 = vadd.f32 %v1286, %v1474
      %v1593 = vadd.f32 %v1455, %v1475
      %v1594 = vadd.f32 %v1289, %v1474
      %v1595 = vadd.f32 %v1458, %v1475
      %v1596 = vadd.f32 %v1291, %v1474
      %v1597 = vadd.f32 %v1460, %v1475
      %v1598 = vadd.f32 %v1294, %v1474
      %v1599 = vadd.f32 %v1463, %v1475
      %v1600 = vadd.f32 %v1296, %v1474
      %v1601 = vadd.f32 %v1465, %v1475
      %v1602 = vadd.f32 %v1299, %v1474
      %v1603 = vadd.f32 %v1468, %v1475
      %v1604 = vadd.f32 %v1301, %v1474
      %v1605 = vadd.f32 %v1470, %v1475
      %v1606 = vmax.f32 %v1478, 0.0
      %v1607 = vmax.f32 %v1479, 0.0
      %v1608 = vmax.f32 %v1480, 0.0
      %v1609 = vmax.f32 %v1481, 0.0
      %v1610 = vmax.f32 %v1482, 0.0
      %v1611 = vmax.f32 %v1483, 0.0
      %v1612 = vmax.f32 %v1484, 0.0
      %v1613 = vmax.f32 %v1485, 0.0
      %v1614 = vmax.f32 %v1486, 0.0
      %v1615 = vmax.f32 %v1487, 0.0
      %v1616 = vmax.f32 %v1488, 0.0
      %v1617 = vmax.f32 %v1489, 0.0
      %v1618 = vmax.f32 %v1490, 0.0
      %v1619 = vmax.f32 %v1491, 0.0
      %v1620 = vmax.f32 %v1492, 0.0
      %v1621 = vmax.f32 %v1493, 0.0
      %v1622 = vmax.f32 %v1494, 0.0
      %v1623 = vmax.f32 %v1495, 0.0
      %v1624 = vmax.f32 %v1496, 0.0
      %v1625 = vmax.f32 %v1497, 0.0
      %v1626 = vmax.f32 %v1498, 0.0
      %v1627 = vmax.f32 %v1499, 0.0
      %v1628 = vmax.f32 %v1500, 0.0
      %v1629 = vmax.f32 %v1501, 0.0
      %v1630 = vmax.f32 %v1502, 0.0
      %v1631 = vmax.f32 %v1503, 0.0
      %v1632 = vmax.f32 %v1504, 0.0
      %v1633 = vmax.f32 %v1505, 0.0
      %v1634 = vmax.f32 %v1506, 0.0
      %v1635 = vmax.f32 %v1507, 0.0
      %v1636 = vmax.f32 %v1508, 0.0
      %v1637 = vmax.f32 %v1509, 0.0
      %v1638 = vmax.f32 %v1510, 0.0
      %v1639 = vmax.f32 %v1511, 0.0
      %v1640 = vmax.f32 %v1512, 0.0
      %v1641 = vmax.f32 %v1513, 0.0
      %v1642 = vmax.f32 %v1514, 0.0
      %v1643 = vmax.f32 %v1515, 0.0
      %v1644 = vmax.f32 %v1516, 0.0
      %v1645 = vmax.f32 %v1517, 0.0
      %v1646 = vmax.f32 %v1518, 0.0
      %v1647 = vmax.f32 %v1519, 0.0
      %v1648 = vmax.f32 %v1520, 0.0
      %v1649 = vmax.f32 %v1521, 0.0
      %v1650 = vmax.f32 %v1522, 0.0
      %v1651 = vmax.f32 %v1523, 0.0
      %v1652 = vmax.f32 %v1524, 0.0
      %v1653 = vmax.f32 %v1525, 0.0
      %v1654 = vmax.f32 %v1526, 0.0
      %v1655 = vmax.f32 %v1527, 0.0
      %v1656 = vmax.f32 %v1528, 0.0
      %v1657 = vmax.f32 %v1529, 0.0
      %v1658 = vmax.f32 %v1530, 0.0
      %v1659 = vmax.f32 %v1531, 0.0
      %v1660 = vmax.f32 %v1532, 0.0
      %v1661 = vmax.f32 %v1533, 0.0
      %v1662 = vmax.f32 %v1534, 0.0
      %v1663 = vmax.f32 %v1535, 0.0
      %v1664 = vmax.f32 %v1536, 0.0
      %v1665 = vmax.f32 %v1537, 0.0
      %v1666 = vmax.f32 %v1538, 0.0
      %v1667 = vmax.f32 %v1539, 0.0
      %v1668 = vmax.f32 %v1540, 0.0
      %v1669 = vmax.f32 %v1541, 0.0
      %v1670 = vmax.f32 %v1542, 0.0
      %v1671 = vmax.f32 %v1543, 0.0
      %v1672 = vmax.f32 %v1544, 0.0
      %v1673 = vmax.f32 %v1545, 0.0
      %v1674 = vmax.f32 %v1546, 0.0
      %v1675 = vmax.f32 %v1547, 0.0
      %v1676 = vmax.f32 %v1548, 0.0
      %v1677 = vmax.f32 %v1549, 0.0
      %v1678 = vmax.f32 %v1550, 0.0
      %v1679 = vmax.f32 %v1551, 0.0
      %v1680 = vmax.f32 %v1552, 0.0
      %v1681 = vmax.f32 %v1553, 0.0
      %v1682 = vmax.f32 %v1554, 0.0
      %v1683 = vmax.f32 %v1555, 0.0
      %v1684 = vmax.f32 %v1556, 0.0
      %v1685 = vmax.f32 %v1557, 0.0
      %v1686 = vmax.f32 %v1558, 0.0
      %v1687 = vmax.f32 %v1559, 0.0
      %v1688 = vmax.f32 %v1560, 0.0
      %v1689 = vmax.f32 %v1561, 0.0
      %v1690 = vmax.f32 %v1562, 0.0
      %v1691 = vmax.f32 %v1563, 0.0
      %v1692 = vmax.f32 %v1564, 0.0
      %v1693 = vmax.f32 %v1565, 0.0
      %v1694 = vmax.f32 %v1566, 0.0
      %v1695 = vmax.f32 %v1567, 0.0
      %v1696 = vmax.f32 %v1568, 0.0
      %v1697 = vmax.f32 %v1569, 0.0
      %v1698 = vmax.f32 %v1570, 0.0
      %v1699 = vmax.f32 %v1571, 0.0
      %v1700 = vmax.f32 %v1572, 0.0
      %v1701 = vmax.f32 %v1573, 0.0
      %v1702 = vmax.f32 %v1574, 0.0
      %v1703 = vmax.f32 %v1575, 0.0
      %v1704 = vmax.f32 %v1576, 0.0
      %v1705 = vmax.f32 %v1577, 0.0
      %v1706 = vmax.f32 %v1578, 0.0
      %v1707 = vmax.f32 %v1579, 0.0
      %v1708 = vmax.f32 %v1580, 0.0
      %v1709 = vmax.f32 %v1581, 0.0
      %v1710 = vmax.f32 %v1582, 0.0
      %v1711 = vmax.f32 %v1583, 0.0
      %v1712 = vmax.f32 %v1584, 0.0
      %v1713 = vmax.f32 %v1585, 0.0
      %v1714 = vmax.f32 %v1586, 0.0
      %v1715 = vmax.f32 %v1587, 0.0
      %v1716 = vmax.f32 %v1588, 0.0
      %v1717 = vmax.f32 %v1589, 0.0
      %v1718 = vmax.f32 %v1590, 0.0
      %v1719 = vmax.f32 %v1591, 0.0
      %v1720 = vmax.f32 %v1592, 0.0
      %v1721 = vmax.f32 %v1593, 0.0
      %v1722 = vmax.f32 %v1594, 0.0
      %v1723 = vmax.f32 %v1595, 0.0
      %v1724 = vmax.f32 %v1596, 0.0
      %v1725 = vmax.f32 %v1597, 0.0
      %v1726 = vmax.f32 %v1598, 0.0
      %v1727 = vmax.f32 %v1599, 0.0
      %v1728 = vmax.f32 %v1600, 0.0
      %v1729 = vmax.f32 %v1601, 0.0
      %v1730 = vmax.f32 %v1602, 0.0
      %v1731 = vmax.f32 %v1603, 0.0
      %v1732 = vmax.f32 %v1604, 0.0
      %v1733 = vmax.f32 %v1605, 0.0
      %v1734 = vpack.c.bf16 %v1608, %v1606
      %v1735 = vpack.c.bf16 %v1609, %v1607
      %v1736 = vpack.c.bf16 %v1612, %v1610
      %v1737 = vpack.c.bf16 %v1613, %v1611
      %v1738 = vpack.c.bf16 %v1616, %v1614
      %v1739 = vpack.c.bf16 %v1617, %v1615
      %v1740 = vpack.c.bf16 %v1620, %v1618
      %v1741 = vpack.c.bf16 %v1621, %v1619
      %v1742 = vpack.c.bf16 %v1624, %v1622
      %v1743 = vpack.c.bf16 %v1625, %v1623
      %v1744 = vpack.c.bf16 %v1628, %v1626
      %v1745 = vpack.c.bf16 %v1629, %v1627
      %v1746 = vpack.c.bf16 %v1632, %v1630
      %v1747 = vpack.c.bf16 %v1633, %v1631
      %v1748 = vpack.c.bf16 %v1636, %v1634
      %v1749 = vpack.c.bf16 %v1637, %v1635
      %v1750 = vpack.c.bf16 %v1640, %v1638
      %v1751 = vpack.c.bf16 %v1641, %v1639
      %v1752 = vpack.c.bf16 %v1644, %v1642
      %v1753 = vpack.c.bf16 %v1645, %v1643
      %v1754 = vpack.c.bf16 %v1648, %v1646
      %v1755 = vpack.c.bf16 %v1649, %v1647
      %v1756 = vpack.c.bf16 %v1652, %v1650
      %v1757 = vpack.c.bf16 %v1653, %v1651
      %v1758 = vpack.c.bf16 %v1656, %v1654
      %v1759 = vpack.c.bf16 %v1657, %v1655
      %v1760 = vpack.c.bf16 %v1660, %v1658
      %v1761 = vpack.c.bf16 %v1661, %v1659
      %v1762 = vpack.c.bf16 %v1664, %v1662
      %v1763 = vpack.c.bf16 %v1665, %v1663
      %v1764 = vpack.c.bf16 %v1668, %v1666
      %v1765 = vpack.c.bf16 %v1669, %v1667
      %v1766 = vpack.c.bf16 %v1672, %v1670
      %v1767 = vpack.c.bf16 %v1673, %v1671
      %v1768 = vpack.c.bf16 %v1676, %v1674
      %v1769 = vpack.c.bf16 %v1677, %v1675
      %v1770 = vpack.c.bf16 %v1680, %v1678
      %v1771 = vpack.c.bf16 %v1681, %v1679
      %v1772 = vpack.c.bf16 %v1684, %v1682
      %v1773 = vpack.c.bf16 %v1685, %v1683
      %v1774 = vpack.c.bf16 %v1688, %v1686
      %v1775 = vpack.c.bf16 %v1689, %v1687
      %v1776 = vpack.c.bf16 %v1692, %v1690
      %v1777 = vpack.c.bf16 %v1693, %v1691
      %v1778 = vpack.c.bf16 %v1696, %v1694
      %v1779 = vpack.c.bf16 %v1697, %v1695
      %v1780 = vpack.c.bf16 %v1700, %v1698
      %v1781 = vpack.c.bf16 %v1701, %v1699
      %v1782 = vpack.c.bf16 %v1704, %v1702
      %v1783 = vpack.c.bf16 %v1705, %v1703
      %v1784 = vpack.c.bf16 %v1708, %v1706
      %v1785 = vpack.c.bf16 %v1709, %v1707
      %v1786 = vpack.c.bf16 %v1712, %v1710
      %v1787 = vpack.c.bf16 %v1713, %v1711
      %v1788 = vpack.c.bf16 %v1716, %v1714
      %v1789 = vpack.c.bf16 %v1717, %v1715
      %v1790 = vpack.c.bf16 %v1720, %v1718
      %v1791 = vpack.c.bf16 %v1721, %v1719
      %v1792 = vpack.c.bf16 %v1724, %v1722
      %v1793 = vpack.c.bf16 %v1725, %v1723
      %v1794 = vpack.c.bf16 %v1728, %v1726
      %v1795 = vpack.c.bf16 %v1729, %v1727
      %v1796 = vpack.c.bf16 %v1732, %v1730
      %v1797 = vpack.c.bf16 %v1733, %v1731
      %v1798 = vld [vmem:[%s5] sm:$0xff]
      %v1799 = vld [vmem:[%s5 + $0x8] sm:$0xff]
      %v1800 = vld [vmem:[%s5 + $0x10] sm:$0xff]
      %v1801 = vld [vmem:[%s5 + $0x18] sm:$0xff]
      %v1802 = vld [vmem:[%s5 + $0x20] sm:$0xff]
      %v1803 = vld [vmem:[%s5 + $0x28] sm:$0xff]
      %v1804 = vld [vmem:[%s5 + $0x30] sm:$0xff]
      %v1805 = vld [vmem:[%s5 + $0x38] sm:$0xff]
      %v1806 = vld [vmem:[%s5 + $0x40] sm:$0xff]
      %v1807 = vld [vmem:[%s5 + $0x48] sm:$0xff]
      %v1808 = vld [vmem:[%s5 + $0x50] sm:$0xff]
      %v1809 = vld [vmem:[%s5 + $0x58] sm:$0xff]
      %v1810 = vld [vmem:[%s5 + $0x60] sm:$0xff]
      %v1811 = vld [vmem:[%s5 + $0x68] sm:$0xff]
      %v1812 = vld [vmem:[%s5 + $0x70] sm:$0xff]
      %v1813 = vld [vmem:[%s5 + $0x78] sm:$0xff]
      %v1814 = vld [vmem:[%s5 + $0x80] sm:$0xff]
      %v1815 = vld [vmem:[%s5 + $0x88] sm:$0xff]
      %v1816 = vld [vmem:[%s5 + $0x90] sm:$0xff]
      %v1817 = vld [vmem:[%s5 + $0x98] sm:$0xff]
      %v1818 = vld [vmem:[%s5 + $0xa0] sm:$0xff]
      %v1819 = vld [vmem:[%s5 + $0xa8] sm:$0xff]
      %v1820 = vld [vmem:[%s5 + $0xb0] sm:$0xff]
      %v1821 = vld [vmem:[%s5 + $0xb8] sm:$0xff]
      %v1822 = vld [vmem:[%s5 + $0xc0] sm:$0xff]
      %v1823 = vld [vmem:[%s5 + $0xc8] sm:$0xff]
      %v1824 = vld [vmem:[%s5 + $0xd0] sm:$0xff]
      %v1825 = vld [vmem:[%s5 + $0xd8] sm:$0xff]
      %v1826 = vld [vmem:[%s5 + $0xe0] sm:$0xff]
      %v1827 = vld [vmem:[%s5 + $0xe8] sm:$0xff]
      %v1828 = vld [vmem:[%s5 + $0xf0] sm:$0xff]
      %v1829 = vld [vmem:[%s5 + $0xf8] sm:$0xff]
      %v1830 = vld [vmem:[%s6] sm:$0x3]
      %v1832 = vperm.slane %v1830, 0
      %v1833 = vperm.slane %v1830, 1
      %v1868 = vunpack.c.l.b16 %v1798
      %v1869 = vunpack.c.h.b16 %v1798
      %v1870 = vunpack.c.l.b16 %v1799
      %v1871 = vunpack.c.h.b16 %v1799
      %v1872 = vunpack.c.l.b16 %v1800
      %v1873 = vunpack.c.h.b16 %v1800
      %v1874 = vunpack.c.l.b16 %v1801
      %v1875 = vunpack.c.h.b16 %v1801
      %v1876 = vunpack.c.l.b16 %v1802
      %v1877 = vunpack.c.h.b16 %v1802
      %v1878 = vunpack.c.l.b16 %v1803
      %v1879 = vunpack.c.h.b16 %v1803
      %v1880 = vunpack.c.l.b16 %v1804
      %v1881 = vunpack.c.h.b16 %v1804
      %v1882 = vunpack.c.l.b16 %v1805
      %v1883 = vunpack.c.h.b16 %v1805
      %v1884 = vunpack.c.l.b16 %v1806
      %v1885 = vunpack.c.h.b16 %v1806
      %v1886 = vunpack.c.l.b16 %v1807
      %v1887 = vunpack.c.h.b16 %v1807
      %v1888 = vunpack.c.l.b16 %v1808
      %v1889 = vunpack.c.h.b16 %v1808
      %v1890 = vunpack.c.l.b16 %v1809
      %v1891 = vunpack.c.h.b16 %v1809
      %v1892 = vunpack.c.l.b16 %v1810
      %v1893 = vunpack.c.h.b16 %v1810
      %v1894 = vunpack.c.l.b16 %v1811
      %v1895 = vunpack.c.h.b16 %v1811
      %v1896 = vunpack.c.l.b16 %v1812
      %v1897 = vunpack.c.h.b16 %v1812
      %v1898 = vunpack.c.l.b16 %v1813
      %v1899 = vunpack.c.h.b16 %v1813
      %v1900 = vunpack.c.l.b16 %v1814
      %v1901 = vunpack.c.h.b16 %v1814
      %v1902 = vunpack.c.l.b16 %v1815
      %v1903 = vunpack.c.h.b16 %v1815
      %v1904 = vunpack.c.l.b16 %v1816
      %v1905 = vunpack.c.h.b16 %v1816
      %v1906 = vunpack.c.l.b16 %v1817
      %v1907 = vunpack.c.h.b16 %v1817
      %v1908 = vunpack.c.l.b16 %v1818
      %v1909 = vunpack.c.h.b16 %v1818
      %v1910 = vunpack.c.l.b16 %v1819
      %v1911 = vunpack.c.h.b16 %v1819
      %v1912 = vunpack.c.l.b16 %v1820
      %v1913 = vunpack.c.h.b16 %v1820
      %v1914 = vunpack.c.l.b16 %v1821
      %v1915 = vunpack.c.h.b16 %v1821
      %v1916 = vunpack.c.l.b16 %v1822
      %v1917 = vunpack.c.h.b16 %v1822
      %v1918 = vunpack.c.l.b16 %v1823
      %v1919 = vunpack.c.h.b16 %v1823
      %v1920 = vunpack.c.l.b16 %v1824
      %v1921 = vunpack.c.h.b16 %v1824
      %v1922 = vunpack.c.l.b16 %v1825
      %v1923 = vunpack.c.h.b16 %v1825
      %v1924 = vunpack.c.l.b16 %v1826
      %v1925 = vunpack.c.h.b16 %v1826
      %v1926 = vunpack.c.l.b16 %v1827
      %v1927 = vunpack.c.h.b16 %v1827
      %v1928 = vunpack.c.l.b16 %v1828
      %v1929 = vunpack.c.h.b16 %v1828
      %v1930 = vunpack.c.l.b16 %v1829
      %v1931 = vunpack.c.h.b16 %v1829
      %v1932 = vpack.c.b16 %v1870, %v1868
      %v1933 = vpack.c.b16 %v1871, %v1869
      %v1934 = vpack.c.b16 %v1874, %v1872
      %v1935 = vpack.c.b16 %v1875, %v1873
      %v1936 = vpack.c.b16 %v1878, %v1876
      %v1937 = vpack.c.b16 %v1879, %v1877
      %v1938 = vpack.c.b16 %v1882, %v1880
      %v1939 = vpack.c.b16 %v1883, %v1881
      %v1940 = vpack.c.b16 %v1886, %v1884
      %v1941 = vpack.c.b16 %v1887, %v1885
      %v1942 = vpack.c.b16 %v1890, %v1888
      %v1943 = vpack.c.b16 %v1891, %v1889
      %v1944 = vpack.c.b16 %v1894, %v1892
      %v1945 = vpack.c.b16 %v1895, %v1893
      %v1946 = vpack.c.b16 %v1898, %v1896
      %v1947 = vpack.c.b16 %v1899, %v1897
      %v1948 = vpack.c.b16 %v1902, %v1900
      %v1949 = vpack.c.b16 %v1903, %v1901
      %v1950 = vpack.c.b16 %v1906, %v1904
      %v1951 = vpack.c.b16 %v1907, %v1905
      %v1952 = vpack.c.b16 %v1910, %v1908
      %v1953 = vpack.c.b16 %v1911, %v1909
      %v1954 = vpack.c.b16 %v1914, %v1912
      %v1955 = vpack.c.b16 %v1915, %v1913
      %v1956 = vpack.c.b16 %v1918, %v1916
      %v1957 = vpack.c.b16 %v1919, %v1917
      %v1958 = vpack.c.b16 %v1922, %v1920
      %v1959 = vpack.c.b16 %v1923, %v1921
      %v1960 = vpack.c.b16 %v1926, %v1924
      %v1961 = vpack.c.b16 %v1927, %v1925
      %v1962 = vpack.c.b16 %v1930, %v1928
      %v1963 = vpack.c.b16 %v1931, %v1929
      %1996 = vmatpush.bf16.msra.mxu0 %v1946
      %1997 = vmatpush.bf16.msra.mxu0 %v1944
      %1998 = vmatpush.bf16.msra.mxu0 %v1942
      %1999 = vmatpush.bf16.msra.mxu0 %v1940
      %2000 = vmatpush.bf16.msra.mxu0 %v1938
      %2001 = vmatpush.bf16.msra.mxu0 %v1936
      %2002 = vmatpush.bf16.msra.mxu0 %v1934
      %2003 = vmatpush.bf16.msra.mxu0 %v1932
      %2004 = vmatmul.bf16.gmra.mxu0 %v1734
      %v2005 = vpop.f32.mrf.mxu0
      %v2006 = vadd.f32 %v1832, %v2005
      %v2007 = vpop.f32.mrf.mxu0
      %v2008 = vadd.f32 %v1832, %v2007
      %2009 = vmatmul.bf16.gmra.mxu0 %v1736
      %v2010 = vpop.f32.mrf.mxu0
      %v2011 = vadd.f32 %v1832, %v2010
      %v2012 = vpop.f32.mrf.mxu0
      %v2013 = vadd.f32 %v1832, %v2012
      %2014 = vmatmul.bf16.gmra.mxu0 %v1738
      %v2015 = vpop.f32.mrf.mxu0
      %v2016 = vadd.f32 %v1832, %v2015
      %v2017 = vpop.f32.mrf.mxu0
      %v2018 = vadd.f32 %v1832, %v2017
      %2019 = vmatmul.bf16.gmra.mxu0 %v1740
      %v2020 = vpop.f32.mrf.mxu0
      %v2021 = vadd.f32 %v1832, %v2020
      %v2022 = vpop.f32.mrf.mxu0
      %v2023 = vadd.f32 %v1832, %v2022
      %2024 = vmatmul.bf16.gmra.mxu0 %v1742
      %v2025 = vpop.f32.mrf.mxu0
      %v2026 = vadd.f32 %v1832, %v2025
      %v2027 = vpop.f32.mrf.mxu0
      %v2028 = vadd.f32 %v1832, %v2027
      %2029 = vmatmul.bf16.gmra.mxu0 %v1744
      %v2030 = vpop.f32.mrf.mxu0
      %v2031 = vadd.f32 %v1832, %v2030
      %v2032 = vpop.f32.mrf.mxu0
      %v2033 = vadd.f32 %v1832, %v2032
      %2034 = vmatmul.bf16.gmra.mxu0 %v1746
      %v2035 = vpop.f32.mrf.mxu0
      %v2036 = vadd.f32 %v1832, %v2035
      %v2037 = vpop.f32.mrf.mxu0
      %v2038 = vadd.f32 %v1832, %v2037
      %2039 = vmatmul.bf16.gmra.mxu0 %v1748
      %v2040 = vpop.f32.mrf.mxu0
      %v2041 = vadd.f32 %v1832, %v2040
      %v2042 = vpop.f32.mrf.mxu0
      %v2043 = vadd.f32 %v1832, %v2042
      %2044 = vmatmul.bf16.gmra.mxu0 %v1750
      %v2045 = vpop.f32.mrf.mxu0
      %v2046 = vadd.f32 %v1832, %v2045
      %v2047 = vpop.f32.mrf.mxu0
      %v2048 = vadd.f32 %v1832, %v2047
      %2049 = vmatmul.bf16.gmra.mxu0 %v1752
      %v2050 = vpop.f32.mrf.mxu0
      %v2051 = vadd.f32 %v1832, %v2050
      %v2052 = vpop.f32.mrf.mxu0
      %v2053 = vadd.f32 %v1832, %v2052
      %2054 = vmatmul.bf16.gmra.mxu0 %v1754
      %v2055 = vpop.f32.mrf.mxu0
      %v2056 = vadd.f32 %v1832, %v2055
      %v2057 = vpop.f32.mrf.mxu0
      %v2058 = vadd.f32 %v1832, %v2057
      %2059 = vmatmul.bf16.gmra.mxu0 %v1756
      %v2060 = vpop.f32.mrf.mxu0
      %v2061 = vadd.f32 %v1832, %v2060
      %v2062 = vpop.f32.mrf.mxu0
      %v2063 = vadd.f32 %v1832, %v2062
      %2064 = vmatmul.bf16.gmra.mxu0 %v1758
      %v2065 = vpop.f32.mrf.mxu0
      %v2066 = vadd.f32 %v1832, %v2065
      %v2067 = vpop.f32.mrf.mxu0
      %v2068 = vadd.f32 %v1832, %v2067
      %2069 = vmatmul.bf16.gmra.mxu0 %v1760
      %v2070 = vpop.f32.mrf.mxu0
      %v2071 = vadd.f32 %v1832, %v2070
      %v2072 = vpop.f32.mrf.mxu0
      %v2073 = vadd.f32 %v1832, %v2072
      %2074 = vmatmul.bf16.gmra.mxu0 %v1762
      %v2075 = vpop.f32.mrf.mxu0
      %v2076 = vadd.f32 %v1832, %v2075
      %v2077 = vpop.f32.mrf.mxu0
      %v2078 = vadd.f32 %v1832, %v2077
      %2079 = vmatmul.bf16.gmra.mxu0 %v1764
      %v2080 = vpop.f32.mrf.mxu0
      %v2081 = vadd.f32 %v1832, %v2080
      %v2082 = vpop.f32.mrf.mxu0
      %v2083 = vadd.f32 %v1832, %v2082
      %2084 = vmatmul.bf16.gmra.mxu0 %v1766
      %v2085 = vpop.f32.mrf.mxu0
      %v2086 = vadd.f32 %v1832, %v2085
      %v2087 = vpop.f32.mrf.mxu0
      %v2088 = vadd.f32 %v1832, %v2087
      %2089 = vmatmul.bf16.gmra.mxu0 %v1768
      %v2090 = vpop.f32.mrf.mxu0
      %v2091 = vadd.f32 %v1832, %v2090
      %v2092 = vpop.f32.mrf.mxu0
      %v2093 = vadd.f32 %v1832, %v2092
      %2094 = vmatmul.bf16.gmra.mxu0 %v1770
      %v2095 = vpop.f32.mrf.mxu0
      %v2096 = vadd.f32 %v1832, %v2095
      %v2097 = vpop.f32.mrf.mxu0
      %v2098 = vadd.f32 %v1832, %v2097
      %2099 = vmatmul.bf16.gmra.mxu0 %v1772
      %v2100 = vpop.f32.mrf.mxu0
      %v2101 = vadd.f32 %v1832, %v2100
      %v2102 = vpop.f32.mrf.mxu0
      %v2103 = vadd.f32 %v1832, %v2102
      %2104 = vmatmul.bf16.gmra.mxu0 %v1774
      %v2105 = vpop.f32.mrf.mxu0
      %v2106 = vadd.f32 %v1832, %v2105
      %v2107 = vpop.f32.mrf.mxu0
      %v2108 = vadd.f32 %v1832, %v2107
      %2109 = vmatmul.bf16.gmra.mxu0 %v1776
      %v2110 = vpop.f32.mrf.mxu0
      %v2111 = vadd.f32 %v1832, %v2110
      %v2112 = vpop.f32.mrf.mxu0
      %v2113 = vadd.f32 %v1832, %v2112
      %2114 = vmatmul.bf16.gmra.mxu0 %v1778
      %v2115 = vpop.f32.mrf.mxu0
      %v2116 = vadd.f32 %v1832, %v2115
      %v2117 = vpop.f32.mrf.mxu0
      %v2118 = vadd.f32 %v1832, %v2117
      %2119 = vmatmul.bf16.gmra.mxu0 %v1780
      %v2120 = vpop.f32.mrf.mxu0
      %v2121 = vadd.f32 %v1832, %v2120
      %v2122 = vpop.f32.mrf.mxu0
      %v2123 = vadd.f32 %v1832, %v2122
      %2124 = vmatmul.bf16.gmra.mxu0 %v1782
      %v2125 = vpop.f32.mrf.mxu0
      %v2126 = vadd.f32 %v1832, %v2125
      %v2127 = vpop.f32.mrf.mxu0
      %v2128 = vadd.f32 %v1832, %v2127
      %2129 = vmatmul.bf16.gmra.mxu0 %v1784
      %v2130 = vpop.f32.mrf.mxu0
      %v2131 = vadd.f32 %v1832, %v2130
      %v2132 = vpop.f32.mrf.mxu0
      %v2133 = vadd.f32 %v1832, %v2132
      %2134 = vmatmul.bf16.gmra.mxu0 %v1786
      %v2135 = vpop.f32.mrf.mxu0
      %v2136 = vadd.f32 %v1832, %v2135
      %v2137 = vpop.f32.mrf.mxu0
      %v2138 = vadd.f32 %v1832, %v2137
      %2139 = vmatmul.bf16.gmra.mxu0 %v1788
      %v2140 = vpop.f32.mrf.mxu0
      %v2141 = vadd.f32 %v1832, %v2140
      %v2142 = vpop.f32.mrf.mxu0
      %v2143 = vadd.f32 %v1832, %v2142
      %2144 = vmatmul.bf16.gmra.mxu0 %v1790
      %v2145 = vpop.f32.mrf.mxu0
      %v2146 = vadd.f32 %v1832, %v2145
      %v2147 = vpop.f32.mrf.mxu0
      %v2148 = vadd.f32 %v1832, %v2147
      %2149 = vmatmul.bf16.gmra.mxu0 %v1792
      %v2150 = vpop.f32.mrf.mxu0
      %v2151 = vadd.f32 %v1832, %v2150
      %v2152 = vpop.f32.mrf.mxu0
      %v2153 = vadd.f32 %v1832, %v2152
      %2154 = vmatmul.bf16.gmra.mxu0 %v1794
      %v2155 = vpop.f32.mrf.mxu0
      %v2156 = vadd.f32 %v1832, %v2155
      %v2157 = vpop.f32.mrf.mxu0
      %v2158 = vadd.f32 %v1832, %v2157
      %2159 = vmatmul.bf16.gmra.mxu0 %v1796
      %v2160 = vpop.f32.mrf.mxu0
      %v2161 = vadd.f32 %v1832, %v2160
      %v2162 = vpop.f32.mrf.mxu0
      %v2163 = vadd.f32 %v1832, %v2162
      %2164 = vdwg.mxu0
      %2165 = vmatpush.bf16.msra.mxu0 %v1962
      %2166 = vmatpush.bf16.msra.mxu0 %v1960
      %2167 = vmatpush.bf16.msra.mxu0 %v1958
      %2168 = vmatpush.bf16.msra.mxu0 %v1956
      %2169 = vmatpush.bf16.msra.mxu0 %v1954
      %2170 = vmatpush.bf16.msra.mxu0 %v1952
      %2171 = vmatpush.bf16.msra.mxu0 %v1950
      %2172 = vmatpush.bf16.msra.mxu0 %v1948
      %2173 = vmatmul.bf16.gmra.mxu0 %v1735
      %v2174 = vpop.f32.mrf.mxu0
      %v2175 = vadd.f32 %v2006, %v2174
      %v2176 = vpop.f32.mrf.mxu0
      %v2177 = vadd.f32 %v2008, %v2176
      %2178 = vmatmul.bf16.gmra.mxu0 %v1737
      %v2179 = vpop.f32.mrf.mxu0
      %v2180 = vadd.f32 %v2011, %v2179
      %v2181 = vpop.f32.mrf.mxu0
      %v2182 = vadd.f32 %v2013, %v2181
      %2183 = vmatmul.bf16.gmra.mxu0 %v1739
      %v2184 = vpop.f32.mrf.mxu0
      %v2185 = vadd.f32 %v2016, %v2184
      %v2186 = vpop.f32.mrf.mxu0
      %v2187 = vadd.f32 %v2018, %v2186
      %2188 = vmatmul.bf16.gmra.mxu0 %v1741
      %v2189 = vpop.f32.mrf.mxu0
      %v2190 = vadd.f32 %v2021, %v2189
      %v2191 = vpop.f32.mrf.mxu0
      %v2192 = vadd.f32 %v2023, %v2191
      %2193 = vmatmul.bf16.gmra.mxu0 %v1743
      %v2194 = vpop.f32.mrf.mxu0
      %v2195 = vadd.f32 %v2026, %v2194
      %v2196 = vpop.f32.mrf.mxu0
      %v2197 = vadd.f32 %v2028, %v2196
      %2198 = vmatmul.bf16.gmra.mxu0 %v1745
      %v2199 = vpop.f32.mrf.mxu0
      %v2200 = vadd.f32 %v2031, %v2199
      %v2201 = vpop.f32.mrf.mxu0
      %v2202 = vadd.f32 %v2033, %v2201
      %2203 = vmatmul.bf16.gmra.mxu0 %v1747
      %v2204 = vpop.f32.mrf.mxu0
      %v2205 = vadd.f32 %v2036, %v2204
      %v2206 = vpop.f32.mrf.mxu0
      %v2207 = vadd.f32 %v2038, %v2206
      %2208 = vmatmul.bf16.gmra.mxu0 %v1749
      %v2209 = vpop.f32.mrf.mxu0
      %v2210 = vadd.f32 %v2041, %v2209
      %v2211 = vpop.f32.mrf.mxu0
      %v2212 = vadd.f32 %v2043, %v2211
      %2213 = vmatmul.bf16.gmra.mxu0 %v1751
      %v2214 = vpop.f32.mrf.mxu0
      %v2215 = vadd.f32 %v2046, %v2214
      %v2216 = vpop.f32.mrf.mxu0
      %v2217 = vadd.f32 %v2048, %v2216
      %2218 = vmatmul.bf16.gmra.mxu0 %v1753
      %v2219 = vpop.f32.mrf.mxu0
      %v2220 = vadd.f32 %v2051, %v2219
      %v2221 = vpop.f32.mrf.mxu0
      %v2222 = vadd.f32 %v2053, %v2221
      %2223 = vmatmul.bf16.gmra.mxu0 %v1755
      %v2224 = vpop.f32.mrf.mxu0
      %v2225 = vadd.f32 %v2056, %v2224
      %v2226 = vpop.f32.mrf.mxu0
      %v2227 = vadd.f32 %v2058, %v2226
      %2228 = vmatmul.bf16.gmra.mxu0 %v1757
      %v2229 = vpop.f32.mrf.mxu0
      %v2230 = vadd.f32 %v2061, %v2229
      %v2231 = vpop.f32.mrf.mxu0
      %v2232 = vadd.f32 %v2063, %v2231
      %2233 = vmatmul.bf16.gmra.mxu0 %v1759
      %v2234 = vpop.f32.mrf.mxu0
      %v2235 = vadd.f32 %v2066, %v2234
      %v2236 = vpop.f32.mrf.mxu0
      %v2237 = vadd.f32 %v2068, %v2236
      %2238 = vmatmul.bf16.gmra.mxu0 %v1761
      %v2239 = vpop.f32.mrf.mxu0
      %v2240 = vadd.f32 %v2071, %v2239
      %v2241 = vpop.f32.mrf.mxu0
      %v2242 = vadd.f32 %v2073, %v2241
      %2243 = vmatmul.bf16.gmra.mxu0 %v1763
      %v2244 = vpop.f32.mrf.mxu0
      %v2245 = vadd.f32 %v2076, %v2244
      %v2246 = vpop.f32.mrf.mxu0
      %v2247 = vadd.f32 %v2078, %v2246
      %2248 = vmatmul.bf16.gmra.mxu0 %v1765
      %v2249 = vpop.f32.mrf.mxu0
      %v2250 = vadd.f32 %v2081, %v2249
      %v2251 = vpop.f32.mrf.mxu0
      %v2252 = vadd.f32 %v2083, %v2251
      %2253 = vmatmul.bf16.gmra.mxu0 %v1767
      %v2254 = vpop.f32.mrf.mxu0
      %v2255 = vadd.f32 %v2086, %v2254
      %v2256 = vpop.f32.mrf.mxu0
      %v2257 = vadd.f32 %v2088, %v2256
      %2258 = vmatmul.bf16.gmra.mxu0 %v1769
      %v2259 = vpop.f32.mrf.mxu0
      %v2260 = vadd.f32 %v2091, %v2259
      %v2261 = vpop.f32.mrf.mxu0
      %v2262 = vadd.f32 %v2093, %v2261
      %2263 = vmatmul.bf16.gmra.mxu0 %v1771
      %v2264 = vpop.f32.mrf.mxu0
      %v2265 = vadd.f32 %v2096, %v2264
      %v2266 = vpop.f32.mrf.mxu0
      %v2267 = vadd.f32 %v2098, %v2266
      %2268 = vmatmul.bf16.gmra.mxu0 %v1773
      %v2269 = vpop.f32.mrf.mxu0
      %v2270 = vadd.f32 %v2101, %v2269
      %v2271 = vpop.f32.mrf.mxu0
      %v2272 = vadd.f32 %v2103, %v2271
      %2273 = vmatmul.bf16.gmra.mxu0 %v1775
      %v2274 = vpop.f32.mrf.mxu0
      %v2275 = vadd.f32 %v2106, %v2274
      %v2276 = vpop.f32.mrf.mxu0
      %v2277 = vadd.f32 %v2108, %v2276
      %2278 = vmatmul.bf16.gmra.mxu0 %v1777
      %v2279 = vpop.f32.mrf.mxu0
      %v2280 = vadd.f32 %v2111, %v2279
      %v2281 = vpop.f32.mrf.mxu0
      %v2282 = vadd.f32 %v2113, %v2281
      %2283 = vmatmul.bf16.gmra.mxu0 %v1779
      %v2284 = vpop.f32.mrf.mxu0
      %v2285 = vadd.f32 %v2116, %v2284
      %v2286 = vpop.f32.mrf.mxu0
      %v2287 = vadd.f32 %v2118, %v2286
      %2288 = vmatmul.bf16.gmra.mxu0 %v1781
      %v2289 = vpop.f32.mrf.mxu0
      %v2290 = vadd.f32 %v2121, %v2289
      %v2291 = vpop.f32.mrf.mxu0
      %v2292 = vadd.f32 %v2123, %v2291
      %2293 = vmatmul.bf16.gmra.mxu0 %v1783
      %v2294 = vpop.f32.mrf.mxu0
      %v2295 = vadd.f32 %v2126, %v2294
      %v2296 = vpop.f32.mrf.mxu0
      %v2297 = vadd.f32 %v2128, %v2296
      %2298 = vmatmul.bf16.gmra.mxu0 %v1785
      %v2299 = vpop.f32.mrf.mxu0
      %v2300 = vadd.f32 %v2131, %v2299
      %v2301 = vpop.f32.mrf.mxu0
      %v2302 = vadd.f32 %v2133, %v2301
      %2303 = vmatmul.bf16.gmra.mxu0 %v1787
      %v2304 = vpop.f32.mrf.mxu0
      %v2305 = vadd.f32 %v2136, %v2304
      %v2306 = vpop.f32.mrf.mxu0
      %v2307 = vadd.f32 %v2138, %v2306
      %2308 = vmatmul.bf16.gmra.mxu0 %v1789
      %v2309 = vpop.f32.mrf.mxu0
      %v2310 = vadd.f32 %v2141, %v2309
      %v2311 = vpop.f32.mrf.mxu0
      %v2312 = vadd.f32 %v2143, %v2311
      %2313 = vmatmul.bf16.gmra.mxu0 %v1791
      %v2314 = vpop.f32.mrf.mxu0
      %v2315 = vadd.f32 %v2146, %v2314
      %v2316 = vpop.f32.mrf.mxu0
      %v2317 = vadd.f32 %v2148, %v2316
      %2318 = vmatmul.bf16.gmra.mxu0 %v1793
      %v2319 = vpop.f32.mrf.mxu0
      %v2320 = vadd.f32 %v2151, %v2319
      %v2321 = vpop.f32.mrf.mxu0
      %v2322 = vadd.f32 %v2153, %v2321
      %2323 = vmatmul.bf16.gmra.mxu0 %v1795
      %v2324 = vpop.f32.mrf.mxu0
      %v2325 = vadd.f32 %v2156, %v2324
      %v2326 = vpop.f32.mrf.mxu0
      %v2327 = vadd.f32 %v2158, %v2326
      %2328 = vmatmul.bf16.gmra.mxu0 %v1797
      %v2329 = vpop.f32.mrf.mxu0
      %v2330 = vadd.f32 %v2161, %v2329
      %v2331 = vpop.f32.mrf.mxu0
      %v2332 = vadd.f32 %v2163, %v2331
      %2333 = vdwg.mxu0
      %2334 = vmatpush.bf16.msra.mxu0 %v1947
      %2335 = vmatpush.bf16.msra.mxu0 %v1945
      %2336 = vmatpush.bf16.msra.mxu0 %v1943
      %2337 = vmatpush.bf16.msra.mxu0 %v1941
      %2338 = vmatpush.bf16.msra.mxu0 %v1939
      %2339 = vmatpush.bf16.msra.mxu0 %v1937
      %2340 = vmatpush.bf16.msra.mxu0 %v1935
      %2341 = vmatpush.bf16.msra.mxu0 %v1933
      %2342 = vmatmul.bf16.gmra.mxu0 %v1734
      %v2343 = vpop.f32.mrf.mxu0
      %v2344 = vadd.f32 %v1833, %v2343
      %v2345 = vpop.f32.mrf.mxu0
      %v2346 = vadd.f32 %v1833, %v2345
      %2347 = vmatmul.bf16.gmra.mxu0 %v1736
      %v2348 = vpop.f32.mrf.mxu0
      %v2349 = vadd.f32 %v1833, %v2348
      %v2350 = vpop.f32.mrf.mxu0
      %v2351 = vadd.f32 %v1833, %v2350
      %2352 = vmatmul.bf16.gmra.mxu0 %v1738
      %v2353 = vpop.f32.mrf.mxu0
      %v2354 = vadd.f32 %v1833, %v2353
      %v2355 = vpop.f32.mrf.mxu0
      %v2356 = vadd.f32 %v1833, %v2355
      %2357 = vmatmul.bf16.gmra.mxu0 %v1740
      %v2358 = vpop.f32.mrf.mxu0
      %v2359 = vadd.f32 %v1833, %v2358
      %v2360 = vpop.f32.mrf.mxu0
      %v2361 = vadd.f32 %v1833, %v2360
      %2362 = vmatmul.bf16.gmra.mxu0 %v1742
      %v2363 = vpop.f32.mrf.mxu0
      %v2364 = vadd.f32 %v1833, %v2363
      %v2365 = vpop.f32.mrf.mxu0
      %v2366 = vadd.f32 %v1833, %v2365
      %2367 = vmatmul.bf16.gmra.mxu0 %v1744
      %v2368 = vpop.f32.mrf.mxu0
      %v2369 = vadd.f32 %v1833, %v2368
      %v2370 = vpop.f32.mrf.mxu0
      %v2371 = vadd.f32 %v1833, %v2370
      %2372 = vmatmul.bf16.gmra.mxu0 %v1746
      %v2373 = vpop.f32.mrf.mxu0
      %v2374 = vadd.f32 %v1833, %v2373
      %v2375 = vpop.f32.mrf.mxu0
      %v2376 = vadd.f32 %v1833, %v2375
      %2377 = vmatmul.bf16.gmra.mxu0 %v1748
      %v2378 = vpop.f32.mrf.mxu0
      %v2379 = vadd.f32 %v1833, %v2378
      %v2380 = vpop.f32.mrf.mxu0
      %v2381 = vadd.f32 %v1833, %v2380
      %2382 = vmatmul.bf16.gmra.mxu0 %v1750
      %v2383 = vpop.f32.mrf.mxu0
      %v2384 = vadd.f32 %v1833, %v2383
      %v2385 = vpop.f32.mrf.mxu0
      %v2386 = vadd.f32 %v1833, %v2385
      %2387 = vmatmul.bf16.gmra.mxu0 %v1752
      %v2388 = vpop.f32.mrf.mxu0
      %v2389 = vadd.f32 %v1833, %v2388
      %v2390 = vpop.f32.mrf.mxu0
      %v2391 = vadd.f32 %v1833, %v2390
      %2392 = vmatmul.bf16.gmra.mxu0 %v1754
      %v2393 = vpop.f32.mrf.mxu0
      %v2394 = vadd.f32 %v1833, %v2393
      %v2395 = vpop.f32.mrf.mxu0
      %v2396 = vadd.f32 %v1833, %v2395
      %2397 = vmatmul.bf16.gmra.mxu0 %v1756
      %v2398 = vpop.f32.mrf.mxu0
      %v2399 = vadd.f32 %v1833, %v2398
      %v2400 = vpop.f32.mrf.mxu0
      %v2401 = vadd.f32 %v1833, %v2400
      %2402 = vmatmul.bf16.gmra.mxu0 %v1758
      %v2403 = vpop.f32.mrf.mxu0
      %v2404 = vadd.f32 %v1833, %v2403
      %v2405 = vpop.f32.mrf.mxu0
      %v2406 = vadd.f32 %v1833, %v2405
      %2407 = vmatmul.bf16.gmra.mxu0 %v1760
      %v2408 = vpop.f32.mrf.mxu0
      %v2409 = vadd.f32 %v1833, %v2408
      %v2410 = vpop.f32.mrf.mxu0
      %v2411 = vadd.f32 %v1833, %v2410
      %2412 = vmatmul.bf16.gmra.mxu0 %v1762
      %v2413 = vpop.f32.mrf.mxu0
      %v2414 = vadd.f32 %v1833, %v2413
      %v2415 = vpop.f32.mrf.mxu0
      %v2416 = vadd.f32 %v1833, %v2415
      %2417 = vmatmul.bf16.gmra.mxu0 %v1764
      %v2418 = vpop.f32.mrf.mxu0
      %v2419 = vadd.f32 %v1833, %v2418
      %v2420 = vpop.f32.mrf.mxu0
      %v2421 = vadd.f32 %v1833, %v2420
      %2422 = vmatmul.bf16.gmra.mxu0 %v1766
      %v2423 = vpop.f32.mrf.mxu0
      %v2424 = vadd.f32 %v1833, %v2423
      %v2425 = vpop.f32.mrf.mxu0
      %v2426 = vadd.f32 %v1833, %v2425
      %2427 = vmatmul.bf16.gmra.mxu0 %v1768
      %v2428 = vpop.f32.mrf.mxu0
      %v2429 = vadd.f32 %v1833, %v2428
      %v2430 = vpop.f32.mrf.mxu0
      %v2431 = vadd.f32 %v1833, %v2430
      %2432 = vmatmul.bf16.gmra.mxu0 %v1770
      %v2433 = vpop.f32.mrf.mxu0
      %v2434 = vadd.f32 %v1833, %v2433
      %v2435 = vpop.f32.mrf.mxu0
      %v2436 = vadd.f32 %v1833, %v2435
      %2437 = vmatmul.bf16.gmra.mxu0 %v1772
      %v2438 = vpop.f32.mrf.mxu0
      %v2439 = vadd.f32 %v1833, %v2438
      %v2440 = vpop.f32.mrf.mxu0
      %v2441 = vadd.f32 %v1833, %v2440
      %2442 = vmatmul.bf16.gmra.mxu0 %v1774
      %v2443 = vpop.f32.mrf.mxu0
      %v2444 = vadd.f32 %v1833, %v2443
      %v2445 = vpop.f32.mrf.mxu0
      %v2446 = vadd.f32 %v1833, %v2445
      %2447 = vmatmul.bf16.gmra.mxu0 %v1776
      %v2448 = vpop.f32.mrf.mxu0
      %v2449 = vadd.f32 %v1833, %v2448
      %v2450 = vpop.f32.mrf.mxu0
      %v2451 = vadd.f32 %v1833, %v2450
      %2452 = vmatmul.bf16.gmra.mxu0 %v1778
      %v2453 = vpop.f32.mrf.mxu0
      %v2454 = vadd.f32 %v1833, %v2453
      %v2455 = vpop.f32.mrf.mxu0
      %v2456 = vadd.f32 %v1833, %v2455
      %2457 = vmatmul.bf16.gmra.mxu0 %v1780
      %v2458 = vpop.f32.mrf.mxu0
      %v2459 = vadd.f32 %v1833, %v2458
      %v2460 = vpop.f32.mrf.mxu0
      %v2461 = vadd.f32 %v1833, %v2460
      %2462 = vmatmul.bf16.gmra.mxu0 %v1782
      %v2463 = vpop.f32.mrf.mxu0
      %v2464 = vadd.f32 %v1833, %v2463
      %v2465 = vpop.f32.mrf.mxu0
      %v2466 = vadd.f32 %v1833, %v2465
      %2467 = vmatmul.bf16.gmra.mxu0 %v1784
      %v2468 = vpop.f32.mrf.mxu0
      %v2469 = vadd.f32 %v1833, %v2468
      %v2470 = vpop.f32.mrf.mxu0
      %v2471 = vadd.f32 %v1833, %v2470
      %2472 = vmatmul.bf16.gmra.mxu0 %v1786
      %v2473 = vpop.f32.mrf.mxu0
      %v2474 = vadd.f32 %v1833, %v2473
      %v2475 = vpop.f32.mrf.mxu0
      %v2476 = vadd.f32 %v1833, %v2475
      %2477 = vmatmul.bf16.gmra.mxu0 %v1788
      %v2478 = vpop.f32.mrf.mxu0
      %v2479 = vadd.f32 %v1833, %v2478
      %v2480 = vpop.f32.mrf.mxu0
      %v2481 = vadd.f32 %v1833, %v2480
      %2482 = vmatmul.bf16.gmra.mxu0 %v1790
      %v2483 = vpop.f32.mrf.mxu0
      %v2484 = vadd.f32 %v1833, %v2483
      %v2485 = vpop.f32.mrf.mxu0
      %v2486 = vadd.f32 %v1833, %v2485
      %2487 = vmatmul.bf16.gmra.mxu0 %v1792
      %v2488 = vpop.f32.mrf.mxu0
      %v2489 = vadd.f32 %v1833, %v2488
      %v2490 = vpop.f32.mrf.mxu0
      %v2491 = vadd.f32 %v1833, %v2490
      %2492 = vmatmul.bf16.gmra.mxu0 %v1794
      %v2493 = vpop.f32.mrf.mxu0
      %v2494 = vadd.f32 %v1833, %v2493
      %v2495 = vpop.f32.mrf.mxu0
      %v2496 = vadd.f32 %v1833, %v2495
      %2497 = vmatmul.bf16.gmra.mxu0 %v1796
      %v2498 = vpop.f32.mrf.mxu0
      %v2499 = vadd.f32 %v1833, %v2498
      %v2500 = vpop.f32.mrf.mxu0
      %v2501 = vadd.f32 %v1833, %v2500
      %2502 = vdwg.mxu0
      %2503 = vmatpush.bf16.msra.mxu0 %v1963
      %2504 = vmatpush.bf16.msra.mxu0 %v1961
      %2505 = vmatpush.bf16.msra.mxu0 %v1959
      %2506 = vmatpush.bf16.msra.mxu0 %v1957
      %2507 = vmatpush.bf16.msra.mxu0 %v1955
      %2508 = vmatpush.bf16.msra.mxu0 %v1953
      %2509 = vmatpush.bf16.msra.mxu0 %v1951
      %2510 = vmatpush.bf16.msra.mxu0 %v1949
      %2511 = vmatmul.bf16.gmra.mxu0 %v1735
      %v2512 = vpop.f32.mrf.mxu0
      %v2513 = vadd.f32 %v2344, %v2512
      %v2514 = vpop.f32.mrf.mxu0
      %v2515 = vadd.f32 %v2346, %v2514
      %2516 = vmatmul.bf16.gmra.mxu0 %v1737
      %v2517 = vpop.f32.mrf.mxu0
      %v2518 = vadd.f32 %v2349, %v2517
      %v2519 = vpop.f32.mrf.mxu0
      %v2520 = vadd.f32 %v2351, %v2519
      %2521 = vmatmul.bf16.gmra.mxu0 %v1739
      %v2522 = vpop.f32.mrf.mxu0
      %v2523 = vadd.f32 %v2354, %v2522
      %v2524 = vpop.f32.mrf.mxu0
      %v2525 = vadd.f32 %v2356, %v2524
      %2526 = vmatmul.bf16.gmra.mxu0 %v1741
      %v2527 = vpop.f32.mrf.mxu0
      %v2528 = vadd.f32 %v2359, %v2527
      %v2529 = vpop.f32.mrf.mxu0
      %v2530 = vadd.f32 %v2361, %v2529
      %2531 = vmatmul.bf16.gmra.mxu0 %v1743
      %v2532 = vpop.f32.mrf.mxu0
      %v2533 = vadd.f32 %v2364, %v2532
      %v2534 = vpop.f32.mrf.mxu0
      %v2535 = vadd.f32 %v2366, %v2534
      %2536 = vmatmul.bf16.gmra.mxu0 %v1745
      %v2537 = vpop.f32.mrf.mxu0
      %v2538 = vadd.f32 %v2369, %v2537
      %v2539 = vpop.f32.mrf.mxu0
      %v2540 = vadd.f32 %v2371, %v2539
      %2541 = vmatmul.bf16.gmra.mxu0 %v1747
      %v2542 = vpop.f32.mrf.mxu0
      %v2543 = vadd.f32 %v2374, %v2542
      %v2544 = vpop.f32.mrf.mxu0
      %v2545 = vadd.f32 %v2376, %v2544
      %2546 = vmatmul.bf16.gmra.mxu0 %v1749
      %v2547 = vpop.f32.mrf.mxu0
      %v2548 = vadd.f32 %v2379, %v2547
      %v2549 = vpop.f32.mrf.mxu0
      %v2550 = vadd.f32 %v2381, %v2549
      %2551 = vmatmul.bf16.gmra.mxu0 %v1751
      %v2552 = vpop.f32.mrf.mxu0
      %v2553 = vadd.f32 %v2384, %v2552
      %v2554 = vpop.f32.mrf.mxu0
      %v2555 = vadd.f32 %v2386, %v2554
      %2556 = vmatmul.bf16.gmra.mxu0 %v1753
      %v2557 = vpop.f32.mrf.mxu0
      %v2558 = vadd.f32 %v2389, %v2557
      %v2559 = vpop.f32.mrf.mxu0
      %v2560 = vadd.f32 %v2391, %v2559
      %2561 = vmatmul.bf16.gmra.mxu0 %v1755
      %v2562 = vpop.f32.mrf.mxu0
      %v2563 = vadd.f32 %v2394, %v2562
      %v2564 = vpop.f32.mrf.mxu0
      %v2565 = vadd.f32 %v2396, %v2564
      %2566 = vmatmul.bf16.gmra.mxu0 %v1757
      %v2567 = vpop.f32.mrf.mxu0
      %v2568 = vadd.f32 %v2399, %v2567
      %v2569 = vpop.f32.mrf.mxu0
      %v2570 = vadd.f32 %v2401, %v2569
      %2571 = vmatmul.bf16.gmra.mxu0 %v1759
      %v2572 = vpop.f32.mrf.mxu0
      %v2573 = vadd.f32 %v2404, %v2572
      %v2574 = vpop.f32.mrf.mxu0
      %v2575 = vadd.f32 %v2406, %v2574
      %2576 = vmatmul.bf16.gmra.mxu0 %v1761
      %v2577 = vpop.f32.mrf.mxu0
      %v2578 = vadd.f32 %v2409, %v2577
      %v2579 = vpop.f32.mrf.mxu0
      %v2580 = vadd.f32 %v2411, %v2579
      %2581 = vmatmul.bf16.gmra.mxu0 %v1763
      %v2582 = vpop.f32.mrf.mxu0
      %v2583 = vadd.f32 %v2414, %v2582
      %v2584 = vpop.f32.mrf.mxu0
      %v2585 = vadd.f32 %v2416, %v2584
      %2586 = vmatmul.bf16.gmra.mxu0 %v1765
      %v2587 = vpop.f32.mrf.mxu0
      %v2588 = vadd.f32 %v2419, %v2587
      %v2589 = vpop.f32.mrf.mxu0
      %v2590 = vadd.f32 %v2421, %v2589
      %2591 = vmatmul.bf16.gmra.mxu0 %v1767
      %v2592 = vpop.f32.mrf.mxu0
      %v2593 = vadd.f32 %v2424, %v2592
      %v2594 = vpop.f32.mrf.mxu0
      %v2595 = vadd.f32 %v2426, %v2594
      %2596 = vmatmul.bf16.gmra.mxu0 %v1769
      %v2597 = vpop.f32.mrf.mxu0
      %v2598 = vadd.f32 %v2429, %v2597
      %v2599 = vpop.f32.mrf.mxu0
      %v2600 = vadd.f32 %v2431, %v2599
      %2601 = vmatmul.bf16.gmra.mxu0 %v1771
      %v2602 = vpop.f32.mrf.mxu0
      %v2603 = vadd.f32 %v2434, %v2602
      %v2604 = vpop.f32.mrf.mxu0
      %v2605 = vadd.f32 %v2436, %v2604
      %2606 = vmatmul.bf16.gmra.mxu0 %v1773
      %v2607 = vpop.f32.mrf.mxu0
      %v2608 = vadd.f32 %v2439, %v2607
      %v2609 = vpop.f32.mrf.mxu0
      %v2610 = vadd.f32 %v2441, %v2609
      %2611 = vmatmul.bf16.gmra.mxu0 %v1775
      %v2612 = vpop.f32.mrf.mxu0
      %v2613 = vadd.f32 %v2444, %v2612
      %v2614 = vpop.f32.mrf.mxu0
      %v2615 = vadd.f32 %v2446, %v2614
      %2616 = vmatmul.bf16.gmra.mxu0 %v1777
      %v2617 = vpop.f32.mrf.mxu0
      %v2618 = vadd.f32 %v2449, %v2617
      %v2619 = vpop.f32.mrf.mxu0
      %v2620 = vadd.f32 %v2451, %v2619
      %2621 = vmatmul.bf16.gmra.mxu0 %v1779
      %v2622 = vpop.f32.mrf.mxu0
      %v2623 = vadd.f32 %v2454, %v2622
      %v2624 = vpop.f32.mrf.mxu0
      %v2625 = vadd.f32 %v2456, %v2624
      %2626 = vmatmul.bf16.gmra.mxu0 %v1781
      %v2627 = vpop.f32.mrf.mxu0
      %v2628 = vadd.f32 %v2459, %v2627
      %v2629 = vpop.f32.mrf.mxu0
      %v2630 = vadd.f32 %v2461, %v2629
      %2631 = vmatmul.bf16.gmra.mxu0 %v1783
      %v2632 = vpop.f32.mrf.mxu0
      %v2633 = vadd.f32 %v2464, %v2632
      %v2634 = vpop.f32.mrf.mxu0
      %v2635 = vadd.f32 %v2466, %v2634
      %2636 = vmatmul.bf16.gmra.mxu0 %v1785
      %v2637 = vpop.f32.mrf.mxu0
      %v2638 = vadd.f32 %v2469, %v2637
      %v2639 = vpop.f32.mrf.mxu0
      %v2640 = vadd.f32 %v2471, %v2639
      %2641 = vmatmul.bf16.gmra.mxu0 %v1787
      %v2642 = vpop.f32.mrf.mxu0
      %v2643 = vadd.f32 %v2474, %v2642
      %v2644 = vpop.f32.mrf.mxu0
      %v2645 = vadd.f32 %v2476, %v2644
      %2646 = vmatmul.bf16.gmra.mxu0 %v1789
      %v2647 = vpop.f32.mrf.mxu0
      %v2648 = vadd.f32 %v2479, %v2647
      %v2649 = vpop.f32.mrf.mxu0
      %v2650 = vadd.f32 %v2481, %v2649
      %2651 = vmatmul.bf16.gmra.mxu0 %v1791
      %v2652 = vpop.f32.mrf.mxu0
      %v2653 = vadd.f32 %v2484, %v2652
      %v2654 = vpop.f32.mrf.mxu0
      %v2655 = vadd.f32 %v2486, %v2654
      %2656 = vmatmul.bf16.gmra.mxu0 %v1793
      %v2657 = vpop.f32.mrf.mxu0
      %v2658 = vadd.f32 %v2489, %v2657
      %v2659 = vpop.f32.mrf.mxu0
      %v2660 = vadd.f32 %v2491, %v2659
      %2661 = vmatmul.bf16.gmra.mxu0 %v1795
      %v2662 = vpop.f32.mrf.mxu0
      %v2663 = vadd.f32 %v2494, %v2662
      %v2664 = vpop.f32.mrf.mxu0
      %v2665 = vadd.f32 %v2496, %v2664
      %2666 = vmatmul.bf16.gmra.mxu0 %v1797
      %v2667 = vpop.f32.mrf.mxu0
      %v2668 = vadd.f32 %v2499, %v2667
      %v2669 = vpop.f32.mrf.mxu0
      %v2670 = vadd.f32 %v2501, %v2669
      %2671 = vdwg.mxu0
      %v2672 = vmax.f32 %v2175, 0.0
      %v2673 = vmax.f32 %v2513, 0.0
      %v2674 = vmax.f32 %v2177, 0.0
      %v2675 = vmax.f32 %v2515, 0.0
      %v2676 = vmax.f32 %v2180, 0.0
      %v2677 = vmax.f32 %v2518, 0.0
      %v2678 = vmax.f32 %v2182, 0.0
      %v2679 = vmax.f32 %v2520, 0.0
      %v2680 = vmax.f32 %v2185, 0.0
      %v2681 = vmax.f32 %v2523, 0.0
      %v2682 = vmax.f32 %v2187, 0.0
      %v2683 = vmax.f32 %v2525, 0.0
      %v2684 = vmax.f32 %v2190, 0.0
      %v2685 = vmax.f32 %v2528, 0.0
      %v2686 = vmax.f32 %v2192, 0.0
      %v2687 = vmax.f32 %v2530, 0.0
      %v2688 = vmax.f32 %v2195, 0.0
      %v2689 = vmax.f32 %v2533, 0.0
      %v2690 = vmax.f32 %v2197, 0.0
      %v2691 = vmax.f32 %v2535, 0.0
      %v2692 = vmax.f32 %v2200, 0.0
      %v2693 = vmax.f32 %v2538, 0.0
      %v2694 = vmax.f32 %v2202, 0.0
      %v2695 = vmax.f32 %v2540, 0.0
      %v2696 = vmax.f32 %v2205, 0.0
      %v2697 = vmax.f32 %v2543, 0.0
      %v2698 = vmax.f32 %v2207, 0.0
      %v2699 = vmax.f32 %v2545, 0.0
      %v2700 = vmax.f32 %v2210, 0.0
      %v2701 = vmax.f32 %v2548, 0.0
      %v2702 = vmax.f32 %v2212, 0.0
      %v2703 = vmax.f32 %v2550, 0.0
      %v2704 = vmax.f32 %v2215, 0.0
      %v2705 = vmax.f32 %v2553, 0.0
      %v2706 = vmax.f32 %v2217, 0.0
      %v2707 = vmax.f32 %v2555, 0.0
      %v2708 = vmax.f32 %v2220, 0.0
      %v2709 = vmax.f32 %v2558, 0.0
      %v2710 = vmax.f32 %v2222, 0.0
      %v2711 = vmax.f32 %v2560, 0.0
      %v2712 = vmax.f32 %v2225, 0.0
      %v2713 = vmax.f32 %v2563, 0.0
      %v2714 = vmax.f32 %v2227, 0.0
      %v2715 = vmax.f32 %v2565, 0.0
      %v2716 = vmax.f32 %v2230, 0.0
      %v2717 = vmax.f32 %v2568, 0.0
      %v2718 = vmax.f32 %v2232, 0.0
      %v2719 = vmax.f32 %v2570, 0.0
      %v2720 = vmax.f32 %v2235, 0.0
      %v2721 = vmax.f32 %v2573, 0.0
      %v2722 = vmax.f32 %v2237, 0.0
      %v2723 = vmax.f32 %v2575, 0.0
      %v2724 = vmax.f32 %v2240, 0.0
      %v2725 = vmax.f32 %v2578, 0.0
      %v2726 = vmax.f32 %v2242, 0.0
      %v2727 = vmax.f32 %v2580, 0.0
      %v2728 = vmax.f32 %v2245, 0.0
      %v2729 = vmax.f32 %v2583, 0.0
      %v2730 = vmax.f32 %v2247, 0.0
      %v2731 = vmax.f32 %v2585, 0.0
      %v2732 = vmax.f32 %v2250, 0.0
      %v2733 = vmax.f32 %v2588, 0.0
      %v2734 = vmax.f32 %v2252, 0.0
      %v2735 = vmax.f32 %v2590, 0.0
      %v2736 = vmax.f32 %v2255, 0.0
      %v2737 = vmax.f32 %v2593, 0.0
      %v2738 = vmax.f32 %v2257, 0.0
      %v2739 = vmax.f32 %v2595, 0.0
      %v2740 = vmax.f32 %v2260, 0.0
      %v2741 = vmax.f32 %v2598, 0.0
      %v2742 = vmax.f32 %v2262, 0.0
      %v2743 = vmax.f32 %v2600, 0.0
      %v2744 = vmax.f32 %v2265, 0.0
      %v2745 = vmax.f32 %v2603, 0.0
      %v2746 = vmax.f32 %v2267, 0.0
      %v2747 = vmax.f32 %v2605, 0.0
      %v2748 = vmax.f32 %v2270, 0.0
      %v2749 = vmax.f32 %v2608, 0.0
      %v2750 = vmax.f32 %v2272, 0.0
      %v2751 = vmax.f32 %v2610, 0.0
      %v2752 = vmax.f32 %v2275, 0.0
      %v2753 = vmax.f32 %v2613, 0.0
      %v2754 = vmax.f32 %v2277, 0.0
      %v2755 = vmax.f32 %v2615, 0.0
      %v2756 = vmax.f32 %v2280, 0.0
      %v2757 = vmax.f32 %v2618, 0.0
      %v2758 = vmax.f32 %v2282, 0.0
      %v2759 = vmax.f32 %v2620, 0.0
      %v2760 = vmax.f32 %v2285, 0.0
      %v2761 = vmax.f32 %v2623, 0.0
      %v2762 = vmax.f32 %v2287, 0.0
      %v2763 = vmax.f32 %v2625, 0.0
      %v2764 = vmax.f32 %v2290, 0.0
      %v2765 = vmax.f32 %v2628, 0.0
      %v2766 = vmax.f32 %v2292, 0.0
      %v2767 = vmax.f32 %v2630, 0.0
      %v2768 = vmax.f32 %v2295, 0.0
      %v2769 = vmax.f32 %v2633, 0.0
      %v2770 = vmax.f32 %v2297, 0.0
      %v2771 = vmax.f32 %v2635, 0.0
      %v2772 = vmax.f32 %v2300, 0.0
      %v2773 = vmax.f32 %v2638, 0.0
      %v2774 = vmax.f32 %v2302, 0.0
      %v2775 = vmax.f32 %v2640, 0.0
      %v2776 = vmax.f32 %v2305, 0.0
      %v2777 = vmax.f32 %v2643, 0.0
      %v2778 = vmax.f32 %v2307, 0.0
      %v2779 = vmax.f32 %v2645, 0.0
      %v2780 = vmax.f32 %v2310, 0.0
      %v2781 = vmax.f32 %v2648, 0.0
      %v2782 = vmax.f32 %v2312, 0.0
      %v2783 = vmax.f32 %v2650, 0.0
      %v2784 = vmax.f32 %v2315, 0.0
      %v2785 = vmax.f32 %v2653, 0.0
      %v2786 = vmax.f32 %v2317, 0.0
      %v2787 = vmax.f32 %v2655, 0.0
      %v2788 = vmax.f32 %v2320, 0.0
      %v2789 = vmax.f32 %v2658, 0.0
      %v2790 = vmax.f32 %v2322, 0.0
      %v2791 = vmax.f32 %v2660, 0.0
      %v2792 = vmax.f32 %v2325, 0.0
      %v2793 = vmax.f32 %v2663, 0.0
      %v2794 = vmax.f32 %v2327, 0.0
      %v2795 = vmax.f32 %v2665, 0.0
      %v2796 = vmax.f32 %v2330, 0.0
      %v2797 = vmax.f32 %v2668, 0.0
      %v2798 = vmax.f32 %v2332, 0.0
      %v2799 = vmax.f32 %v2670, 0.0
      %v2800 = vpack.c.bf16 %v2674, %v2672
      %v2801 = vpack.c.bf16 %v2675, %v2673
      %v2802 = vpack.c.bf16 %v2678, %v2676
      %v2803 = vpack.c.bf16 %v2679, %v2677
      %v2804 = vpack.c.bf16 %v2682, %v2680
      %v2805 = vpack.c.bf16 %v2683, %v2681
      %v2806 = vpack.c.bf16 %v2686, %v2684
      %v2807 = vpack.c.bf16 %v2687, %v2685
      %v2808 = vpack.c.bf16 %v2690, %v2688
      %v2809 = vpack.c.bf16 %v2691, %v2689
      %v2810 = vpack.c.bf16 %v2694, %v2692
      %v2811 = vpack.c.bf16 %v2695, %v2693
      %v2812 = vpack.c.bf16 %v2698, %v2696
      %v2813 = vpack.c.bf16 %v2699, %v2697
      %v2814 = vpack.c.bf16 %v2702, %v2700
      %v2815 = vpack.c.bf16 %v2703, %v2701
      %v2816 = vpack.c.bf16 %v2706, %v2704
      %v2817 = vpack.c.bf16 %v2707, %v2705
      %v2818 = vpack.c.bf16 %v2710, %v2708
      %v2819 = vpack.c.bf16 %v2711, %v2709
      %v2820 = vpack.c.bf16 %v2714, %v2712
      %v2821 = vpack.c.bf16 %v2715, %v2713
      %v2822 = vpack.c.bf16 %v2718, %v2716
      %v2823 = vpack.c.bf16 %v2719, %v2717
      %v2824 = vpack.c.bf16 %v2722, %v2720
      %v2825 = vpack.c.bf16 %v2723, %v2721
      %v2826 = vpack.c.bf16 %v2726, %v2724
      %v2827 = vpack.c.bf16 %v2727, %v2725
      %v2828 = vpack.c.bf16 %v2730, %v2728
      %v2829 = vpack.c.bf16 %v2731, %v2729
      %v2830 = vpack.c.bf16 %v2734, %v2732
      %v2831 = vpack.c.bf16 %v2735, %v2733
      %v2832 = vpack.c.bf16 %v2738, %v2736
      %v2833 = vpack.c.bf16 %v2739, %v2737
      %v2834 = vpack.c.bf16 %v2742, %v2740
      %v2835 = vpack.c.bf16 %v2743, %v2741
      %v2836 = vpack.c.bf16 %v2746, %v2744
      %v2837 = vpack.c.bf16 %v2747, %v2745
      %v2838 = vpack.c.bf16 %v2750, %v2748
      %v2839 = vpack.c.bf16 %v2751, %v2749
      %v2840 = vpack.c.bf16 %v2754, %v2752
      %v2841 = vpack.c.bf16 %v2755, %v2753
      %v2842 = vpack.c.bf16 %v2758, %v2756
      %v2843 = vpack.c.bf16 %v2759, %v2757
      %v2844 = vpack.c.bf16 %v2762, %v2760
      %v2845 = vpack.c.bf16 %v2763, %v2761
      %v2846 = vpack.c.bf16 %v2766, %v2764
      %v2847 = vpack.c.bf16 %v2767, %v2765
      %v2848 = vpack.c.bf16 %v2770, %v2768
      %v2849 = vpack.c.bf16 %v2771, %v2769
      %v2850 = vpack.c.bf16 %v2774, %v2772
      %v2851 = vpack.c.bf16 %v2775, %v2773
      %v2852 = vpack.c.bf16 %v2778, %v2776
      %v2853 = vpack.c.bf16 %v2779, %v2777
      %v2854 = vpack.c.bf16 %v2782, %v2780
      %v2855 = vpack.c.bf16 %v2783, %v2781
      %v2856 = vpack.c.bf16 %v2786, %v2784
      %v2857 = vpack.c.bf16 %v2787, %v2785
      %v2858 = vpack.c.bf16 %v2790, %v2788
      %v2859 = vpack.c.bf16 %v2791, %v2789
      %v2860 = vpack.c.bf16 %v2794, %v2792
      %v2861 = vpack.c.bf16 %v2795, %v2793
      %v2862 = vpack.c.bf16 %v2798, %v2796
      %v2863 = vpack.c.bf16 %v2799, %v2797
      %s2864 = scalar_lea.vmem %s5, 256
      %v2865 = vld [vmem:[%s2864] sm:$0xff]
      %v2866 = vld [vmem:[%s2864 + $0x8] sm:$0xff]
      %v2867 = vld [vmem:[%s2864 + $0x10] sm:$0xff]
      %v2868 = vld [vmem:[%s2864 + $0x18] sm:$0xff]
      %v2869 = vld [vmem:[%s2864 + $0x20] sm:$0xff]
      %v2870 = vld [vmem:[%s2864 + $0x28] sm:$0xff]
      %v2871 = vld [vmem:[%s2864 + $0x30] sm:$0xff]
      %v2872 = vld [vmem:[%s2864 + $0x38] sm:$0xff]
      %v2873 = vld [vmem:[%s2864 + $0x40] sm:$0xff]
      %v2874 = vld [vmem:[%s2864 + $0x48] sm:$0xff]
      %v2875 = vld [vmem:[%s2864 + $0x50] sm:$0xff]
      %v2876 = vld [vmem:[%s2864 + $0x58] sm:$0xff]
      %v2877 = vld [vmem:[%s2864 + $0x60] sm:$0xff]
      %v2878 = vld [vmem:[%s2864 + $0x68] sm:$0xff]
      %v2879 = vld [vmem:[%s2864 + $0x70] sm:$0xff]
      %v2880 = vld [vmem:[%s2864 + $0x78] sm:$0xff]
      %v2881 = vld [vmem:[%s2864 + $0x80] sm:$0xff]
      %v2882 = vld [vmem:[%s2864 + $0x88] sm:$0xff]
      %v2883 = vld [vmem:[%s2864 + $0x90] sm:$0xff]
      %v2884 = vld [vmem:[%s2864 + $0x98] sm:$0xff]
      %v2885 = vld [vmem:[%s2864 + $0xa0] sm:$0xff]
      %v2886 = vld [vmem:[%s2864 + $0xa8] sm:$0xff]
      %v2887 = vld [vmem:[%s2864 + $0xb0] sm:$0xff]
      %v2888 = vld [vmem:[%s2864 + $0xb8] sm:$0xff]
      %v2889 = vld [vmem:[%s2864 + $0xc0] sm:$0xff]
      %v2890 = vld [vmem:[%s2864 + $0xc8] sm:$0xff]
      %v2891 = vld [vmem:[%s2864 + $0xd0] sm:$0xff]
      %v2892 = vld [vmem:[%s2864 + $0xd8] sm:$0xff]
      %v2893 = vld [vmem:[%s2864 + $0xe0] sm:$0xff]
      %v2894 = vld [vmem:[%s2864 + $0xe8] sm:$0xff]
      %v2895 = vld [vmem:[%s2864 + $0xf0] sm:$0xff]
      %v2896 = vld [vmem:[%s2864 + $0xf8] sm:$0xff]
      %s2897 = scalar_lea.vmem %s6, 2
      %v2898 = vld [vmem:[%s2897] sm:$0x3]
      %v2900 = vperm.slane %v2898, 0
      %v2901 = vperm.slane %v2898, 1
      %v2936 = vunpack.c.l.b16 %v2865
      %v2937 = vunpack.c.h.b16 %v2865
      %v2938 = vunpack.c.l.b16 %v2866
      %v2939 = vunpack.c.h.b16 %v2866
      %v2940 = vunpack.c.l.b16 %v2867
      %v2941 = vunpack.c.h.b16 %v2867
      %v2942 = vunpack.c.l.b16 %v2868
      %v2943 = vunpack.c.h.b16 %v2868
      %v2944 = vunpack.c.l.b16 %v2869
      %v2945 = vunpack.c.h.b16 %v2869
      %v2946 = vunpack.c.l.b16 %v2870
      %v2947 = vunpack.c.h.b16 %v2870
      %v2948 = vunpack.c.l.b16 %v2871
      %v2949 = vunpack.c.h.b16 %v2871
      %v2950 = vunpack.c.l.b16 %v2872
      %v2951 = vunpack.c.h.b16 %v2872
      %v2952 = vunpack.c.l.b16 %v2873
      %v2953 = vunpack.c.h.b16 %v2873
      %v2954 = vunpack.c.l.b16 %v2874
      %v2955 = vunpack.c.h.b16 %v2874
      %v2956 = vunpack.c.l.b16 %v2875
      %v2957 = vunpack.c.h.b16 %v2875
      %v2958 = vunpack.c.l.b16 %v2876
      %v2959 = vunpack.c.h.b16 %v2876
      %v2960 = vunpack.c.l.b16 %v2877
      %v2961 = vunpack.c.h.b16 %v2877
      %v2962 = vunpack.c.l.b16 %v2878
      %v2963 = vunpack.c.h.b16 %v2878
      %v2964 = vunpack.c.l.b16 %v2879
      %v2965 = vunpack.c.h.b16 %v2879
      %v2966 = vunpack.c.l.b16 %v2880
      %v2967 = vunpack.c.h.b16 %v2880
      %v2968 = vunpack.c.l.b16 %v2881
      %v2969 = vunpack.c.h.b16 %v2881
      %v2970 = vunpack.c.l.b16 %v2882
      %v2971 = vunpack.c.h.b16 %v2882
      %v2972 = vunpack.c.l.b16 %v2883
      %v2973 = vunpack.c.h.b16 %v2883
      %v2974 = vunpack.c.l.b16 %v2884
      %v2975 = vunpack.c.h.b16 %v2884
      %v2976 = vunpack.c.l.b16 %v2885
      %v2977 = vunpack.c.h.b16 %v2885
      %v2978 = vunpack.c.l.b16 %v2886
      %v2979 = vunpack.c.h.b16 %v2886
      %v2980 = vunpack.c.l.b16 %v2887
      %v2981 = vunpack.c.h.b16 %v2887
      %v2982 = vunpack.c.l.b16 %v2888
      %v2983 = vunpack.c.h.b16 %v2888
      %v2984 = vunpack.c.l.b16 %v2889
      %v2985 = vunpack.c.h.b16 %v2889
      %v2986 = vunpack.c.l.b16 %v2890
      %v2987 = vunpack.c.h.b16 %v2890
      %v2988 = vunpack.c.l.b16 %v2891
      %v2989 = vunpack.c.h.b16 %v2891
      %v2990 = vunpack.c.l.b16 %v2892
      %v2991 = vunpack.c.h.b16 %v2892
      %v2992 = vunpack.c.l.b16 %v2893
      %v2993 = vunpack.c.h.b16 %v2893
      %v2994 = vunpack.c.l.b16 %v2894
      %v2995 = vunpack.c.h.b16 %v2894
      %v2996 = vunpack.c.l.b16 %v2895
      %v2997 = vunpack.c.h.b16 %v2895
      %v2998 = vunpack.c.l.b16 %v2896
      %v2999 = vunpack.c.h.b16 %v2896
      %v3000 = vpack.c.b16 %v2938, %v2936
      %v3001 = vpack.c.b16 %v2939, %v2937
      %v3002 = vpack.c.b16 %v2942, %v2940
      %v3003 = vpack.c.b16 %v2943, %v2941
      %v3004 = vpack.c.b16 %v2946, %v2944
      %v3005 = vpack.c.b16 %v2947, %v2945
      %v3006 = vpack.c.b16 %v2950, %v2948
      %v3007 = vpack.c.b16 %v2951, %v2949
      %v3008 = vpack.c.b16 %v2954, %v2952
      %v3009 = vpack.c.b16 %v2955, %v2953
      %v3010 = vpack.c.b16 %v2958, %v2956
      %v3011 = vpack.c.b16 %v2959, %v2957
      %v3012 = vpack.c.b16 %v2962, %v2960
      %v3013 = vpack.c.b16 %v2963, %v2961
      %v3014 = vpack.c.b16 %v2966, %v2964
      %v3015 = vpack.c.b16 %v2967, %v2965
      %v3016 = vpack.c.b16 %v2970, %v2968
      %v3017 = vpack.c.b16 %v2971, %v2969
      %v3018 = vpack.c.b16 %v2974, %v2972
      %v3019 = vpack.c.b16 %v2975, %v2973
      %v3020 = vpack.c.b16 %v2978, %v2976
      %v3021 = vpack.c.b16 %v2979, %v2977
      %v3022 = vpack.c.b16 %v2982, %v2980
      %v3023 = vpack.c.b16 %v2983, %v2981
      %v3024 = vpack.c.b16 %v2986, %v2984
      %v3025 = vpack.c.b16 %v2987, %v2985
      %v3026 = vpack.c.b16 %v2990, %v2988
      %v3027 = vpack.c.b16 %v2991, %v2989
      %v3028 = vpack.c.b16 %v2994, %v2992
      %v3029 = vpack.c.b16 %v2995, %v2993
      %v3030 = vpack.c.b16 %v2998, %v2996
      %v3031 = vpack.c.b16 %v2999, %v2997
      %3064 = vmatpush.bf16.msra.mxu0 %v3014
      %3065 = vmatpush.bf16.msra.mxu0 %v3012
      %3066 = vmatpush.bf16.msra.mxu0 %v3010
      %3067 = vmatpush.bf16.msra.mxu0 %v3008
      %3068 = vmatpush.bf16.msra.mxu0 %v3006
      %3069 = vmatpush.bf16.msra.mxu0 %v3004
      %3070 = vmatpush.bf16.msra.mxu0 %v3002
      %3071 = vmatpush.bf16.msra.mxu0 %v3000
      %3072 = vmatmul.bf16.gmra.mxu0 %v2800
      %v3073 = vpop.f32.mrf.mxu0
      %v3074 = vadd.f32 %v2900, %v3073
      %v3075 = vpop.f32.mrf.mxu0
      %v3076 = vadd.f32 %v2900, %v3075
      %3077 = vmatmul.bf16.gmra.mxu0 %v2802
      %v3078 = vpop.f32.mrf.mxu0
      %v3079 = vadd.f32 %v2900, %v3078
      %v3080 = vpop.f32.mrf.mxu0
      %v3081 = vadd.f32 %v2900, %v3080
      %3082 = vmatmul.bf16.gmra.mxu0 %v2804
      %v3083 = vpop.f32.mrf.mxu0
      %v3084 = vadd.f32 %v2900, %v3083
      %v3085 = vpop.f32.mrf.mxu0
      %v3086 = vadd.f32 %v2900, %v3085
      %3087 = vmatmul.bf16.gmra.mxu0 %v2806
      %v3088 = vpop.f32.mrf.mxu0
      %v3089 = vadd.f32 %v2900, %v3088
      %v3090 = vpop.f32.mrf.mxu0
      %v3091 = vadd.f32 %v2900, %v3090
      %3092 = vmatmul.bf16.gmra.mxu0 %v2808
      %v3093 = vpop.f32.mrf.mxu0
      %v3094 = vadd.f32 %v2900, %v3093
      %v3095 = vpop.f32.mrf.mxu0
      %v3096 = vadd.f32 %v2900, %v3095
      %3097 = vmatmul.bf16.gmra.mxu0 %v2810
      %v3098 = vpop.f32.mrf.mxu0
      %v3099 = vadd.f32 %v2900, %v3098
      %v3100 = vpop.f32.mrf.mxu0
      %v3101 = vadd.f32 %v2900, %v3100
      %3102 = vmatmul.bf16.gmra.mxu0 %v2812
      %v3103 = vpop.f32.mrf.mxu0
      %v3104 = vadd.f32 %v2900, %v3103
      %v3105 = vpop.f32.mrf.mxu0
      %v3106 = vadd.f32 %v2900, %v3105
      %3107 = vmatmul.bf16.gmra.mxu0 %v2814
      %v3108 = vpop.f32.mrf.mxu0
      %v3109 = vadd.f32 %v2900, %v3108
      %v3110 = vpop.f32.mrf.mxu0
      %v3111 = vadd.f32 %v2900, %v3110
      %3112 = vmatmul.bf16.gmra.mxu0 %v2816
      %v3113 = vpop.f32.mrf.mxu0
      %v3114 = vadd.f32 %v2900, %v3113
      %v3115 = vpop.f32.mrf.mxu0
      %v3116 = vadd.f32 %v2900, %v3115
      %3117 = vmatmul.bf16.gmra.mxu0 %v2818
      %v3118 = vpop.f32.mrf.mxu0
      %v3119 = vadd.f32 %v2900, %v3118
      %v3120 = vpop.f32.mrf.mxu0
      %v3121 = vadd.f32 %v2900, %v3120
      %3122 = vmatmul.bf16.gmra.mxu0 %v2820
      %v3123 = vpop.f32.mrf.mxu0
      %v3124 = vadd.f32 %v2900, %v3123
      %v3125 = vpop.f32.mrf.mxu0
      %v3126 = vadd.f32 %v2900, %v3125
      %3127 = vmatmul.bf16.gmra.mxu0 %v2822
      %v3128 = vpop.f32.mrf.mxu0
      %v3129 = vadd.f32 %v2900, %v3128
      %v3130 = vpop.f32.mrf.mxu0
      %v3131 = vadd.f32 %v2900, %v3130
      %3132 = vmatmul.bf16.gmra.mxu0 %v2824
      %v3133 = vpop.f32.mrf.mxu0
      %v3134 = vadd.f32 %v2900, %v3133
      %v3135 = vpop.f32.mrf.mxu0
      %v3136 = vadd.f32 %v2900, %v3135
      %3137 = vmatmul.bf16.gmra.mxu0 %v2826
      %v3138 = vpop.f32.mrf.mxu0
      %v3139 = vadd.f32 %v2900, %v3138
      %v3140 = vpop.f32.mrf.mxu0
      %v3141 = vadd.f32 %v2900, %v3140
      %3142 = vmatmul.bf16.gmra.mxu0 %v2828
      %v3143 = vpop.f32.mrf.mxu0
      %v3144 = vadd.f32 %v2900, %v3143
      %v3145 = vpop.f32.mrf.mxu0
      %v3146 = vadd.f32 %v2900, %v3145
      %3147 = vmatmul.bf16.gmra.mxu0 %v2830
      %v3148 = vpop.f32.mrf.mxu0
      %v3149 = vadd.f32 %v2900, %v3148
      %v3150 = vpop.f32.mrf.mxu0
      %v3151 = vadd.f32 %v2900, %v3150
      %3152 = vmatmul.bf16.gmra.mxu0 %v2832
      %v3153 = vpop.f32.mrf.mxu0
      %v3154 = vadd.f32 %v2900, %v3153
      %v3155 = vpop.f32.mrf.mxu0
      %v3156 = vadd.f32 %v2900, %v3155
      %3157 = vmatmul.bf16.gmra.mxu0 %v2834
      %v3158 = vpop.f32.mrf.mxu0
      %v3159 = vadd.f32 %v2900, %v3158
      %v3160 = vpop.f32.mrf.mxu0
      %v3161 = vadd.f32 %v2900, %v3160
      %3162 = vmatmul.bf16.gmra.mxu0 %v2836
      %v3163 = vpop.f32.mrf.mxu0
      %v3164 = vadd.f32 %v2900, %v3163
      %v3165 = vpop.f32.mrf.mxu0
      %v3166 = vadd.f32 %v2900, %v3165
      %3167 = vmatmul.bf16.gmra.mxu0 %v2838
      %v3168 = vpop.f32.mrf.mxu0
      %v3169 = vadd.f32 %v2900, %v3168
      %v3170 = vpop.f32.mrf.mxu0
      %v3171 = vadd.f32 %v2900, %v3170
      %3172 = vmatmul.bf16.gmra.mxu0 %v2840
      %v3173 = vpop.f32.mrf.mxu0
      %v3174 = vadd.f32 %v2900, %v3173
      %v3175 = vpop.f32.mrf.mxu0
      %v3176 = vadd.f32 %v2900, %v3175
      %3177 = vmatmul.bf16.gmra.mxu0 %v2842
      %v3178 = vpop.f32.mrf.mxu0
      %v3179 = vadd.f32 %v2900, %v3178
      %v3180 = vpop.f32.mrf.mxu0
      %v3181 = vadd.f32 %v2900, %v3180
      %3182 = vmatmul.bf16.gmra.mxu0 %v2844
      %v3183 = vpop.f32.mrf.mxu0
      %v3184 = vadd.f32 %v2900, %v3183
      %v3185 = vpop.f32.mrf.mxu0
      %v3186 = vadd.f32 %v2900, %v3185
      %3187 = vmatmul.bf16.gmra.mxu0 %v2846
      %v3188 = vpop.f32.mrf.mxu0
      %v3189 = vadd.f32 %v2900, %v3188
      %v3190 = vpop.f32.mrf.mxu0
      %v3191 = vadd.f32 %v2900, %v3190
      %3192 = vmatmul.bf16.gmra.mxu0 %v2848
      %v3193 = vpop.f32.mrf.mxu0
      %v3194 = vadd.f32 %v2900, %v3193
      %v3195 = vpop.f32.mrf.mxu0
      %v3196 = vadd.f32 %v2900, %v3195
      %3197 = vmatmul.bf16.gmra.mxu0 %v2850
      %v3198 = vpop.f32.mrf.mxu0
      %v3199 = vadd.f32 %v2900, %v3198
      %v3200 = vpop.f32.mrf.mxu0
      %v3201 = vadd.f32 %v2900, %v3200
      %3202 = vmatmul.bf16.gmra.mxu0 %v2852
      %v3203 = vpop.f32.mrf.mxu0
      %v3204 = vadd.f32 %v2900, %v3203
      %v3205 = vpop.f32.mrf.mxu0
      %v3206 = vadd.f32 %v2900, %v3205
      %3207 = vmatmul.bf16.gmra.mxu0 %v2854
      %v3208 = vpop.f32.mrf.mxu0
      %v3209 = vadd.f32 %v2900, %v3208
      %v3210 = vpop.f32.mrf.mxu0
      %v3211 = vadd.f32 %v2900, %v3210
      %3212 = vmatmul.bf16.gmra.mxu0 %v2856
      %v3213 = vpop.f32.mrf.mxu0
      %v3214 = vadd.f32 %v2900, %v3213
      %v3215 = vpop.f32.mrf.mxu0
      %v3216 = vadd.f32 %v2900, %v3215
      %3217 = vmatmul.bf16.gmra.mxu0 %v2858
      %v3218 = vpop.f32.mrf.mxu0
      %v3219 = vadd.f32 %v2900, %v3218
      %v3220 = vpop.f32.mrf.mxu0
      %v3221 = vadd.f32 %v2900, %v3220
      %3222 = vmatmul.bf16.gmra.mxu0 %v2860
      %v3223 = vpop.f32.mrf.mxu0
      %v3224 = vadd.f32 %v2900, %v3223
      %v3225 = vpop.f32.mrf.mxu0
      %v3226 = vadd.f32 %v2900, %v3225
      %3227 = vmatmul.bf16.gmra.mxu0 %v2862
      %v3228 = vpop.f32.mrf.mxu0
      %v3229 = vadd.f32 %v2900, %v3228
      %v3230 = vpop.f32.mrf.mxu0
      %v3231 = vadd.f32 %v2900, %v3230
      %3232 = vdwg.mxu0
      %3233 = vmatpush.bf16.msra.mxu0 %v3030
      %3234 = vmatpush.bf16.msra.mxu0 %v3028
      %3235 = vmatpush.bf16.msra.mxu0 %v3026
      %3236 = vmatpush.bf16.msra.mxu0 %v3024
      %3237 = vmatpush.bf16.msra.mxu0 %v3022
      %3238 = vmatpush.bf16.msra.mxu0 %v3020
      %3239 = vmatpush.bf16.msra.mxu0 %v3018
      %3240 = vmatpush.bf16.msra.mxu0 %v3016
      %3241 = vmatmul.bf16.gmra.mxu0 %v2801
      %v3242 = vpop.f32.mrf.mxu0
      %v3243 = vadd.f32 %v3074, %v3242
      %v3244 = vpop.f32.mrf.mxu0
      %v3245 = vadd.f32 %v3076, %v3244
      %3246 = vmatmul.bf16.gmra.mxu0 %v2803
      %v3247 = vpop.f32.mrf.mxu0
      %v3248 = vadd.f32 %v3079, %v3247
      %v3249 = vpop.f32.mrf.mxu0
      %v3250 = vadd.f32 %v3081, %v3249
      %3251 = vmatmul.bf16.gmra.mxu0 %v2805
      %v3252 = vpop.f32.mrf.mxu0
      %v3253 = vadd.f32 %v3084, %v3252
      %v3254 = vpop.f32.mrf.mxu0
      %v3255 = vadd.f32 %v3086, %v3254
      %3256 = vmatmul.bf16.gmra.mxu0 %v2807
      %v3257 = vpop.f32.mrf.mxu0
      %v3258 = vadd.f32 %v3089, %v3257
      %v3259 = vpop.f32.mrf.mxu0
      %v3260 = vadd.f32 %v3091, %v3259
      %3261 = vmatmul.bf16.gmra.mxu0 %v2809
      %v3262 = vpop.f32.mrf.mxu0
      %v3263 = vadd.f32 %v3094, %v3262
      %v3264 = vpop.f32.mrf.mxu0
      %v3265 = vadd.f32 %v3096, %v3264
      %3266 = vmatmul.bf16.gmra.mxu0 %v2811
      %v3267 = vpop.f32.mrf.mxu0
      %v3268 = vadd.f32 %v3099, %v3267
      %v3269 = vpop.f32.mrf.mxu0
      %v3270 = vadd.f32 %v3101, %v3269
      %3271 = vmatmul.bf16.gmra.mxu0 %v2813
      %v3272 = vpop.f32.mrf.mxu0
      %v3273 = vadd.f32 %v3104, %v3272
      %v3274 = vpop.f32.mrf.mxu0
      %v3275 = vadd.f32 %v3106, %v3274
      %3276 = vmatmul.bf16.gmra.mxu0 %v2815
      %v3277 = vpop.f32.mrf.mxu0
      %v3278 = vadd.f32 %v3109, %v3277
      %v3279 = vpop.f32.mrf.mxu0
      %v3280 = vadd.f32 %v3111, %v3279
      %3281 = vmatmul.bf16.gmra.mxu0 %v2817
      %v3282 = vpop.f32.mrf.mxu0
      %v3283 = vadd.f32 %v3114, %v3282
      %v3284 = vpop.f32.mrf.mxu0
      %v3285 = vadd.f32 %v3116, %v3284
      %3286 = vmatmul.bf16.gmra.mxu0 %v2819
      %v3287 = vpop.f32.mrf.mxu0
      %v3288 = vadd.f32 %v3119, %v3287
      %v3289 = vpop.f32.mrf.mxu0
      %v3290 = vadd.f32 %v3121, %v3289
      %3291 = vmatmul.bf16.gmra.mxu0 %v2821
      %v3292 = vpop.f32.mrf.mxu0
      %v3293 = vadd.f32 %v3124, %v3292
      %v3294 = vpop.f32.mrf.mxu0
      %v3295 = vadd.f32 %v3126, %v3294
      %3296 = vmatmul.bf16.gmra.mxu0 %v2823
      %v3297 = vpop.f32.mrf.mxu0
      %v3298 = vadd.f32 %v3129, %v3297
      %v3299 = vpop.f32.mrf.mxu0
      %v3300 = vadd.f32 %v3131, %v3299
      %3301 = vmatmul.bf16.gmra.mxu0 %v2825
      %v3302 = vpop.f32.mrf.mxu0
      %v3303 = vadd.f32 %v3134, %v3302
      %v3304 = vpop.f32.mrf.mxu0
      %v3305 = vadd.f32 %v3136, %v3304
      %3306 = vmatmul.bf16.gmra.mxu0 %v2827
      %v3307 = vpop.f32.mrf.mxu0
      %v3308 = vadd.f32 %v3139, %v3307
      %v3309 = vpop.f32.mrf.mxu0
      %v3310 = vadd.f32 %v3141, %v3309
      %3311 = vmatmul.bf16.gmra.mxu0 %v2829
      %v3312 = vpop.f32.mrf.mxu0
      %v3313 = vadd.f32 %v3144, %v3312
      %v3314 = vpop.f32.mrf.mxu0
      %v3315 = vadd.f32 %v3146, %v3314
      %3316 = vmatmul.bf16.gmra.mxu0 %v2831
      %v3317 = vpop.f32.mrf.mxu0
      %v3318 = vadd.f32 %v3149, %v3317
      %v3319 = vpop.f32.mrf.mxu0
      %v3320 = vadd.f32 %v3151, %v3319
      %3321 = vmatmul.bf16.gmra.mxu0 %v2833
      %v3322 = vpop.f32.mrf.mxu0
      %v3323 = vadd.f32 %v3154, %v3322
      %v3324 = vpop.f32.mrf.mxu0
      %v3325 = vadd.f32 %v3156, %v3324
      %3326 = vmatmul.bf16.gmra.mxu0 %v2835
      %v3327 = vpop.f32.mrf.mxu0
      %v3328 = vadd.f32 %v3159, %v3327
      %v3329 = vpop.f32.mrf.mxu0
      %v3330 = vadd.f32 %v3161, %v3329
      %3331 = vmatmul.bf16.gmra.mxu0 %v2837
      %v3332 = vpop.f32.mrf.mxu0
      %v3333 = vadd.f32 %v3164, %v3332
      %v3334 = vpop.f32.mrf.mxu0
      %v3335 = vadd.f32 %v3166, %v3334
      %3336 = vmatmul.bf16.gmra.mxu0 %v2839
      %v3337 = vpop.f32.mrf.mxu0
      %v3338 = vadd.f32 %v3169, %v3337
      %v3339 = vpop.f32.mrf.mxu0
      %v3340 = vadd.f32 %v3171, %v3339
      %3341 = vmatmul.bf16.gmra.mxu0 %v2841
      %v3342 = vpop.f32.mrf.mxu0
      %v3343 = vadd.f32 %v3174, %v3342
      %v3344 = vpop.f32.mrf.mxu0
      %v3345 = vadd.f32 %v3176, %v3344
      %3346 = vmatmul.bf16.gmra.mxu0 %v2843
      %v3347 = vpop.f32.mrf.mxu0
      %v3348 = vadd.f32 %v3179, %v3347
      %v3349 = vpop.f32.mrf.mxu0
      %v3350 = vadd.f32 %v3181, %v3349
      %3351 = vmatmul.bf16.gmra.mxu0 %v2845
      %v3352 = vpop.f32.mrf.mxu0
      %v3353 = vadd.f32 %v3184, %v3352
      %v3354 = vpop.f32.mrf.mxu0
      %v3355 = vadd.f32 %v3186, %v3354
      %3356 = vmatmul.bf16.gmra.mxu0 %v2847
      %v3357 = vpop.f32.mrf.mxu0
      %v3358 = vadd.f32 %v3189, %v3357
      %v3359 = vpop.f32.mrf.mxu0
      %v3360 = vadd.f32 %v3191, %v3359
      %3361 = vmatmul.bf16.gmra.mxu0 %v2849
      %v3362 = vpop.f32.mrf.mxu0
      %v3363 = vadd.f32 %v3194, %v3362
      %v3364 = vpop.f32.mrf.mxu0
      %v3365 = vadd.f32 %v3196, %v3364
      %3366 = vmatmul.bf16.gmra.mxu0 %v2851
      %v3367 = vpop.f32.mrf.mxu0
      %v3368 = vadd.f32 %v3199, %v3367
      %v3369 = vpop.f32.mrf.mxu0
      %v3370 = vadd.f32 %v3201, %v3369
      %3371 = vmatmul.bf16.gmra.mxu0 %v2853
      %v3372 = vpop.f32.mrf.mxu0
      %v3373 = vadd.f32 %v3204, %v3372
      %v3374 = vpop.f32.mrf.mxu0
      %v3375 = vadd.f32 %v3206, %v3374
      %3376 = vmatmul.bf16.gmra.mxu0 %v2855
      %v3377 = vpop.f32.mrf.mxu0
      %v3378 = vadd.f32 %v3209, %v3377
      %v3379 = vpop.f32.mrf.mxu0
      %v3380 = vadd.f32 %v3211, %v3379
      %3381 = vmatmul.bf16.gmra.mxu0 %v2857
      %v3382 = vpop.f32.mrf.mxu0
      %v3383 = vadd.f32 %v3214, %v3382
      %v3384 = vpop.f32.mrf.mxu0
      %v3385 = vadd.f32 %v3216, %v3384
      %3386 = vmatmul.bf16.gmra.mxu0 %v2859
      %v3387 = vpop.f32.mrf.mxu0
      %v3388 = vadd.f32 %v3219, %v3387
      %v3389 = vpop.f32.mrf.mxu0
      %v3390 = vadd.f32 %v3221, %v3389
      %3391 = vmatmul.bf16.gmra.mxu0 %v2861
      %v3392 = vpop.f32.mrf.mxu0
      %v3393 = vadd.f32 %v3224, %v3392
      %v3394 = vpop.f32.mrf.mxu0
      %v3395 = vadd.f32 %v3226, %v3394
      %3396 = vmatmul.bf16.gmra.mxu0 %v2863
      %v3397 = vpop.f32.mrf.mxu0
      %v3398 = vadd.f32 %v3229, %v3397
      %v3399 = vpop.f32.mrf.mxu0
      %v3400 = vadd.f32 %v3231, %v3399
      %3401 = vdwg.mxu0
      %3402 = vmatpush.bf16.msra.mxu0 %v3015
      %3403 = vmatpush.bf16.msra.mxu0 %v3013
      %3404 = vmatpush.bf16.msra.mxu0 %v3011
      %3405 = vmatpush.bf16.msra.mxu0 %v3009
      %3406 = vmatpush.bf16.msra.mxu0 %v3007
      %3407 = vmatpush.bf16.msra.mxu0 %v3005
      %3408 = vmatpush.bf16.msra.mxu0 %v3003
      %3409 = vmatpush.bf16.msra.mxu0 %v3001
      %3410 = vmatmul.bf16.gmra.mxu0 %v2800
      %v3411 = vpop.f32.mrf.mxu0
      %v3412 = vadd.f32 %v2901, %v3411
      %v3413 = vpop.f32.mrf.mxu0
      %v3414 = vadd.f32 %v2901, %v3413
      %3415 = vmatmul.bf16.gmra.mxu0 %v2802
      %v3416 = vpop.f32.mrf.mxu0
      %v3417 = vadd.f32 %v2901, %v3416
      %v3418 = vpop.f32.mrf.mxu0
      %v3419 = vadd.f32 %v2901, %v3418
      %3420 = vmatmul.bf16.gmra.mxu0 %v2804
      %v3421 = vpop.f32.mrf.mxu0
      %v3422 = vadd.f32 %v2901, %v3421
      %v3423 = vpop.f32.mrf.mxu0
      %v3424 = vadd.f32 %v2901, %v3423
      %3425 = vmatmul.bf16.gmra.mxu0 %v2806
      %v3426 = vpop.f32.mrf.mxu0
      %v3427 = vadd.f32 %v2901, %v3426
      %v3428 = vpop.f32.mrf.mxu0
      %v3429 = vadd.f32 %v2901, %v3428
      %3430 = vmatmul.bf16.gmra.mxu0 %v2808
      %v3431 = vpop.f32.mrf.mxu0
      %v3432 = vadd.f32 %v2901, %v3431
      %v3433 = vpop.f32.mrf.mxu0
      %v3434 = vadd.f32 %v2901, %v3433
      %3435 = vmatmul.bf16.gmra.mxu0 %v2810
      %v3436 = vpop.f32.mrf.mxu0
      %v3437 = vadd.f32 %v2901, %v3436
      %v3438 = vpop.f32.mrf.mxu0
      %v3439 = vadd.f32 %v2901, %v3438
      %3440 = vmatmul.bf16.gmra.mxu0 %v2812
      %v3441 = vpop.f32.mrf.mxu0
      %v3442 = vadd.f32 %v2901, %v3441
      %v3443 = vpop.f32.mrf.mxu0
      %v3444 = vadd.f32 %v2901, %v3443
      %3445 = vmatmul.bf16.gmra.mxu0 %v2814
      %v3446 = vpop.f32.mrf.mxu0
      %v3447 = vadd.f32 %v2901, %v3446
      %v3448 = vpop.f32.mrf.mxu0
      %v3449 = vadd.f32 %v2901, %v3448
      %3450 = vmatmul.bf16.gmra.mxu0 %v2816
      %v3451 = vpop.f32.mrf.mxu0
      %v3452 = vadd.f32 %v2901, %v3451
      %v3453 = vpop.f32.mrf.mxu0
      %v3454 = vadd.f32 %v2901, %v3453
      %3455 = vmatmul.bf16.gmra.mxu0 %v2818
      %v3456 = vpop.f32.mrf.mxu0
      %v3457 = vadd.f32 %v2901, %v3456
      %v3458 = vpop.f32.mrf.mxu0
      %v3459 = vadd.f32 %v2901, %v3458
      %3460 = vmatmul.bf16.gmra.mxu0 %v2820
      %v3461 = vpop.f32.mrf.mxu0
      %v3462 = vadd.f32 %v2901, %v3461
      %v3463 = vpop.f32.mrf.mxu0
      %v3464 = vadd.f32 %v2901, %v3463
      %3465 = vmatmul.bf16.gmra.mxu0 %v2822
      %v3466 = vpop.f32.mrf.mxu0
      %v3467 = vadd.f32 %v2901, %v3466
      %v3468 = vpop.f32.mrf.mxu0
      %v3469 = vadd.f32 %v2901, %v3468
      %3470 = vmatmul.bf16.gmra.mxu0 %v2824
      %v3471 = vpop.f32.mrf.mxu0
      %v3472 = vadd.f32 %v2901, %v3471
      %v3473 = vpop.f32.mrf.mxu0
      %v3474 = vadd.f32 %v2901, %v3473
      %3475 = vmatmul.bf16.gmra.mxu0 %v2826
      %v3476 = vpop.f32.mrf.mxu0
      %v3477 = vadd.f32 %v2901, %v3476
      %v3478 = vpop.f32.mrf.mxu0
      %v3479 = vadd.f32 %v2901, %v3478
      %3480 = vmatmul.bf16.gmra.mxu0 %v2828
      %v3481 = vpop.f32.mrf.mxu0
      %v3482 = vadd.f32 %v2901, %v3481
      %v3483 = vpop.f32.mrf.mxu0
      %v3484 = vadd.f32 %v2901, %v3483
      %3485 = vmatmul.bf16.gmra.mxu0 %v2830
      %v3486 = vpop.f32.mrf.mxu0
      %v3487 = vadd.f32 %v2901, %v3486
      %v3488 = vpop.f32.mrf.mxu0
      %v3489 = vadd.f32 %v2901, %v3488
      %3490 = vmatmul.bf16.gmra.mxu0 %v2832
      %v3491 = vpop.f32.mrf.mxu0
      %v3492 = vadd.f32 %v2901, %v3491
      %v3493 = vpop.f32.mrf.mxu0
      %v3494 = vadd.f32 %v2901, %v3493
      %3495 = vmatmul.bf16.gmra.mxu0 %v2834
      %v3496 = vpop.f32.mrf.mxu0
      %v3497 = vadd.f32 %v2901, %v3496
      %v3498 = vpop.f32.mrf.mxu0
      %v3499 = vadd.f32 %v2901, %v3498
      %3500 = vmatmul.bf16.gmra.mxu0 %v2836
      %v3501 = vpop.f32.mrf.mxu0
      %v3502 = vadd.f32 %v2901, %v3501
      %v3503 = vpop.f32.mrf.mxu0
      %v3504 = vadd.f32 %v2901, %v3503
      %3505 = vmatmul.bf16.gmra.mxu0 %v2838
      %v3506 = vpop.f32.mrf.mxu0
      %v3507 = vadd.f32 %v2901, %v3506
      %v3508 = vpop.f32.mrf.mxu0
      %v3509 = vadd.f32 %v2901, %v3508
      %3510 = vmatmul.bf16.gmra.mxu0 %v2840
      %v3511 = vpop.f32.mrf.mxu0
      %v3512 = vadd.f32 %v2901, %v3511
      %v3513 = vpop.f32.mrf.mxu0
      %v3514 = vadd.f32 %v2901, %v3513
      %3515 = vmatmul.bf16.gmra.mxu0 %v2842
      %v3516 = vpop.f32.mrf.mxu0
      %v3517 = vadd.f32 %v2901, %v3516
      %v3518 = vpop.f32.mrf.mxu0
      %v3519 = vadd.f32 %v2901, %v3518
      %3520 = vmatmul.bf16.gmra.mxu0 %v2844
      %v3521 = vpop.f32.mrf.mxu0
      %v3522 = vadd.f32 %v2901, %v3521
      %v3523 = vpop.f32.mrf.mxu0
      %v3524 = vadd.f32 %v2901, %v3523
      %3525 = vmatmul.bf16.gmra.mxu0 %v2846
      %v3526 = vpop.f32.mrf.mxu0
      %v3527 = vadd.f32 %v2901, %v3526
      %v3528 = vpop.f32.mrf.mxu0
      %v3529 = vadd.f32 %v2901, %v3528
      %3530 = vmatmul.bf16.gmra.mxu0 %v2848
      %v3531 = vpop.f32.mrf.mxu0
      %v3532 = vadd.f32 %v2901, %v3531
      %v3533 = vpop.f32.mrf.mxu0
      %v3534 = vadd.f32 %v2901, %v3533
      %3535 = vmatmul.bf16.gmra.mxu0 %v2850
      %v3536 = vpop.f32.mrf.mxu0
      %v3537 = vadd.f32 %v2901, %v3536
      %v3538 = vpop.f32.mrf.mxu0
      %v3539 = vadd.f32 %v2901, %v3538
      %3540 = vmatmul.bf16.gmra.mxu0 %v2852
      %v3541 = vpop.f32.mrf.mxu0
      %v3542 = vadd.f32 %v2901, %v3541
      %v3543 = vpop.f32.mrf.mxu0
      %v3544 = vadd.f32 %v2901, %v3543
      %3545 = vmatmul.bf16.gmra.mxu0 %v2854
      %v3546 = vpop.f32.mrf.mxu0
      %v3547 = vadd.f32 %v2901, %v3546
      %v3548 = vpop.f32.mrf.mxu0
      %v3549 = vadd.f32 %v2901, %v3548
      %3550 = vmatmul.bf16.gmra.mxu0 %v2856
      %v3551 = vpop.f32.mrf.mxu0
      %v3552 = vadd.f32 %v2901, %v3551
      %v3553 = vpop.f32.mrf.mxu0
      %v3554 = vadd.f32 %v2901, %v3553
      %3555 = vmatmul.bf16.gmra.mxu0 %v2858
      %v3556 = vpop.f32.mrf.mxu0
      %v3557 = vadd.f32 %v2901, %v3556
      %v3558 = vpop.f32.mrf.mxu0
      %v3559 = vadd.f32 %v2901, %v3558
      %3560 = vmatmul.bf16.gmra.mxu0 %v2860
      %v3561 = vpop.f32.mrf.mxu0
      %v3562 = vadd.f32 %v2901, %v3561
      %v3563 = vpop.f32.mrf.mxu0
      %v3564 = vadd.f32 %v2901, %v3563
      %3565 = vmatmul.bf16.gmra.mxu0 %v2862
      %v3566 = vpop.f32.mrf.mxu0
      %v3567 = vadd.f32 %v2901, %v3566
      %v3568 = vpop.f32.mrf.mxu0
      %v3569 = vadd.f32 %v2901, %v3568
      %3570 = vdwg.mxu0
      %3571 = vmatpush.bf16.msra.mxu0 %v3031
      %3572 = vmatpush.bf16.msra.mxu0 %v3029
      %3573 = vmatpush.bf16.msra.mxu0 %v3027
      %3574 = vmatpush.bf16.msra.mxu0 %v3025
      %3575 = vmatpush.bf16.msra.mxu0 %v3023
      %3576 = vmatpush.bf16.msra.mxu0 %v3021
      %3577 = vmatpush.bf16.msra.mxu0 %v3019
      %3578 = vmatpush.bf16.msra.mxu0 %v3017
      %3579 = vmatmul.bf16.gmra.mxu0 %v2801
      %v3580 = vpop.f32.mrf.mxu0
      %v3581 = vadd.f32 %v3412, %v3580
      %v3582 = vpop.f32.mrf.mxu0
      %v3583 = vadd.f32 %v3414, %v3582
      %3584 = vmatmul.bf16.gmra.mxu0 %v2803
      %v3585 = vpop.f32.mrf.mxu0
      %v3586 = vadd.f32 %v3417, %v3585
      %v3587 = vpop.f32.mrf.mxu0
      %v3588 = vadd.f32 %v3419, %v3587
      %3589 = vmatmul.bf16.gmra.mxu0 %v2805
      %v3590 = vpop.f32.mrf.mxu0
      %v3591 = vadd.f32 %v3422, %v3590
      %v3592 = vpop.f32.mrf.mxu0
      %v3593 = vadd.f32 %v3424, %v3592
      %3594 = vmatmul.bf16.gmra.mxu0 %v2807
      %v3595 = vpop.f32.mrf.mxu0
      %v3596 = vadd.f32 %v3427, %v3595
      %v3597 = vpop.f32.mrf.mxu0
      %v3598 = vadd.f32 %v3429, %v3597
      %3599 = vmatmul.bf16.gmra.mxu0 %v2809
      %v3600 = vpop.f32.mrf.mxu0
      %v3601 = vadd.f32 %v3432, %v3600
      %v3602 = vpop.f32.mrf.mxu0
      %v3603 = vadd.f32 %v3434, %v3602
      %3604 = vmatmul.bf16.gmra.mxu0 %v2811
      %v3605 = vpop.f32.mrf.mxu0
      %v3606 = vadd.f32 %v3437, %v3605
      %v3607 = vpop.f32.mrf.mxu0
      %v3608 = vadd.f32 %v3439, %v3607
      %3609 = vmatmul.bf16.gmra.mxu0 %v2813
      %v3610 = vpop.f32.mrf.mxu0
      %v3611 = vadd.f32 %v3442, %v3610
      %v3612 = vpop.f32.mrf.mxu0
      %v3613 = vadd.f32 %v3444, %v3612
      %3614 = vmatmul.bf16.gmra.mxu0 %v2815
      %v3615 = vpop.f32.mrf.mxu0
      %v3616 = vadd.f32 %v3447, %v3615
      %v3617 = vpop.f32.mrf.mxu0
      %v3618 = vadd.f32 %v3449, %v3617
      %3619 = vmatmul.bf16.gmra.mxu0 %v2817
      %v3620 = vpop.f32.mrf.mxu0
      %v3621 = vadd.f32 %v3452, %v3620
      %v3622 = vpop.f32.mrf.mxu0
      %v3623 = vadd.f32 %v3454, %v3622
      %3624 = vmatmul.bf16.gmra.mxu0 %v2819
      %v3625 = vpop.f32.mrf.mxu0
      %v3626 = vadd.f32 %v3457, %v3625
      %v3627 = vpop.f32.mrf.mxu0
      %v3628 = vadd.f32 %v3459, %v3627
      %3629 = vmatmul.bf16.gmra.mxu0 %v2821
      %v3630 = vpop.f32.mrf.mxu0
      %v3631 = vadd.f32 %v3462, %v3630
      %v3632 = vpop.f32.mrf.mxu0
      %v3633 = vadd.f32 %v3464, %v3632
      %3634 = vmatmul.bf16.gmra.mxu0 %v2823
      %v3635 = vpop.f32.mrf.mxu0
      %v3636 = vadd.f32 %v3467, %v3635
      %v3637 = vpop.f32.mrf.mxu0
      %v3638 = vadd.f32 %v3469, %v3637
      %3639 = vmatmul.bf16.gmra.mxu0 %v2825
      %v3640 = vpop.f32.mrf.mxu0
      %v3641 = vadd.f32 %v3472, %v3640
      %v3642 = vpop.f32.mrf.mxu0
      %v3643 = vadd.f32 %v3474, %v3642
      %3644 = vmatmul.bf16.gmra.mxu0 %v2827
      %v3645 = vpop.f32.mrf.mxu0
      %v3646 = vadd.f32 %v3477, %v3645
      %v3647 = vpop.f32.mrf.mxu0
      %v3648 = vadd.f32 %v3479, %v3647
      %3649 = vmatmul.bf16.gmra.mxu0 %v2829
      %v3650 = vpop.f32.mrf.mxu0
      %v3651 = vadd.f32 %v3482, %v3650
      %v3652 = vpop.f32.mrf.mxu0
      %v3653 = vadd.f32 %v3484, %v3652
      %3654 = vmatmul.bf16.gmra.mxu0 %v2831
      %v3655 = vpop.f32.mrf.mxu0
      %v3656 = vadd.f32 %v3487, %v3655
      %v3657 = vpop.f32.mrf.mxu0
      %v3658 = vadd.f32 %v3489, %v3657
      %3659 = vmatmul.bf16.gmra.mxu0 %v2833
      %v3660 = vpop.f32.mrf.mxu0
      %v3661 = vadd.f32 %v3492, %v3660
      %v3662 = vpop.f32.mrf.mxu0
      %v3663 = vadd.f32 %v3494, %v3662
      %3664 = vmatmul.bf16.gmra.mxu0 %v2835
      %v3665 = vpop.f32.mrf.mxu0
      %v3666 = vadd.f32 %v3497, %v3665
      %v3667 = vpop.f32.mrf.mxu0
      %v3668 = vadd.f32 %v3499, %v3667
      %3669 = vmatmul.bf16.gmra.mxu0 %v2837
      %v3670 = vpop.f32.mrf.mxu0
      %v3671 = vadd.f32 %v3502, %v3670
      %v3672 = vpop.f32.mrf.mxu0
      %v3673 = vadd.f32 %v3504, %v3672
      %3674 = vmatmul.bf16.gmra.mxu0 %v2839
      %v3675 = vpop.f32.mrf.mxu0
      %v3676 = vadd.f32 %v3507, %v3675
      %v3677 = vpop.f32.mrf.mxu0
      %v3678 = vadd.f32 %v3509, %v3677
      %3679 = vmatmul.bf16.gmra.mxu0 %v2841
      %v3680 = vpop.f32.mrf.mxu0
      %v3681 = vadd.f32 %v3512, %v3680
      %v3682 = vpop.f32.mrf.mxu0
      %v3683 = vadd.f32 %v3514, %v3682
      %3684 = vmatmul.bf16.gmra.mxu0 %v2843
      %v3685 = vpop.f32.mrf.mxu0
      %v3686 = vadd.f32 %v3517, %v3685
      %v3687 = vpop.f32.mrf.mxu0
      %v3688 = vadd.f32 %v3519, %v3687
      %3689 = vmatmul.bf16.gmra.mxu0 %v2845
      %v3690 = vpop.f32.mrf.mxu0
      %v3691 = vadd.f32 %v3522, %v3690
      %v3692 = vpop.f32.mrf.mxu0
      %v3693 = vadd.f32 %v3524, %v3692
      %3694 = vmatmul.bf16.gmra.mxu0 %v2847
      %v3695 = vpop.f32.mrf.mxu0
      %v3696 = vadd.f32 %v3527, %v3695
      %v3697 = vpop.f32.mrf.mxu0
      %v3698 = vadd.f32 %v3529, %v3697
      %3699 = vmatmul.bf16.gmra.mxu0 %v2849
      %v3700 = vpop.f32.mrf.mxu0
      %v3701 = vadd.f32 %v3532, %v3700
      %v3702 = vpop.f32.mrf.mxu0
      %v3703 = vadd.f32 %v3534, %v3702
      %3704 = vmatmul.bf16.gmra.mxu0 %v2851
      %v3705 = vpop.f32.mrf.mxu0
      %v3706 = vadd.f32 %v3537, %v3705
      %v3707 = vpop.f32.mrf.mxu0
      %v3708 = vadd.f32 %v3539, %v3707
      %3709 = vmatmul.bf16.gmra.mxu0 %v2853
      %v3710 = vpop.f32.mrf.mxu0
      %v3711 = vadd.f32 %v3542, %v3710
      %v3712 = vpop.f32.mrf.mxu0
      %v3713 = vadd.f32 %v3544, %v3712
      %3714 = vmatmul.bf16.gmra.mxu0 %v2855
      %v3715 = vpop.f32.mrf.mxu0
      %v3716 = vadd.f32 %v3547, %v3715
      %v3717 = vpop.f32.mrf.mxu0
      %v3718 = vadd.f32 %v3549, %v3717
      %3719 = vmatmul.bf16.gmra.mxu0 %v2857
      %v3720 = vpop.f32.mrf.mxu0
      %v3721 = vadd.f32 %v3552, %v3720
      %v3722 = vpop.f32.mrf.mxu0
      %v3723 = vadd.f32 %v3554, %v3722
      %3724 = vmatmul.bf16.gmra.mxu0 %v2859
      %v3725 = vpop.f32.mrf.mxu0
      %v3726 = vadd.f32 %v3557, %v3725
      %v3727 = vpop.f32.mrf.mxu0
      %v3728 = vadd.f32 %v3559, %v3727
      %3729 = vmatmul.bf16.gmra.mxu0 %v2861
      %v3730 = vpop.f32.mrf.mxu0
      %v3731 = vadd.f32 %v3562, %v3730
      %v3732 = vpop.f32.mrf.mxu0
      %v3733 = vadd.f32 %v3564, %v3732
      %3734 = vmatmul.bf16.gmra.mxu0 %v2863
      %v3735 = vpop.f32.mrf.mxu0
      %v3736 = vadd.f32 %v3567, %v3735
      %v3737 = vpop.f32.mrf.mxu0
      %v3738 = vadd.f32 %v3569, %v3737
      %3739 = vdwg.mxu0
      %v3740 = vmax.f32 %v3243, 0.0
      %v3741 = vmax.f32 %v3581, 0.0
      %v3742 = vmax.f32 %v3245, 0.0
      %v3743 = vmax.f32 %v3583, 0.0
      %v3744 = vmax.f32 %v3248, 0.0
      %v3745 = vmax.f32 %v3586, 0.0
      %v3746 = vmax.f32 %v3250, 0.0
      %v3747 = vmax.f32 %v3588, 0.0
      %v3748 = vmax.f32 %v3253, 0.0
      %v3749 = vmax.f32 %v3591, 0.0
      %v3750 = vmax.f32 %v3255, 0.0
      %v3751 = vmax.f32 %v3593, 0.0
      %v3752 = vmax.f32 %v3258, 0.0
      %v3753 = vmax.f32 %v3596, 0.0
      %v3754 = vmax.f32 %v3260, 0.0
      %v3755 = vmax.f32 %v3598, 0.0
      %v3756 = vmax.f32 %v3263, 0.0
      %v3757 = vmax.f32 %v3601, 0.0
      %v3758 = vmax.f32 %v3265, 0.0
      %v3759 = vmax.f32 %v3603, 0.0
      %v3760 = vmax.f32 %v3268, 0.0
      %v3761 = vmax.f32 %v3606, 0.0
      %v3762 = vmax.f32 %v3270, 0.0
      %v3763 = vmax.f32 %v3608, 0.0
      %v3764 = vmax.f32 %v3273, 0.0
      %v3765 = vmax.f32 %v3611, 0.0
      %v3766 = vmax.f32 %v3275, 0.0
      %v3767 = vmax.f32 %v3613, 0.0
      %v3768 = vmax.f32 %v3278, 0.0
      %v3769 = vmax.f32 %v3616, 0.0
      %v3770 = vmax.f32 %v3280, 0.0
      %v3771 = vmax.f32 %v3618, 0.0
      %v3772 = vmax.f32 %v3283, 0.0
      %v3773 = vmax.f32 %v3621, 0.0
      %v3774 = vmax.f32 %v3285, 0.0
      %v3775 = vmax.f32 %v3623, 0.0
      %v3776 = vmax.f32 %v3288, 0.0
      %v3777 = vmax.f32 %v3626, 0.0
      %v3778 = vmax.f32 %v3290, 0.0
      %v3779 = vmax.f32 %v3628, 0.0
      %v3780 = vmax.f32 %v3293, 0.0
      %v3781 = vmax.f32 %v3631, 0.0
      %v3782 = vmax.f32 %v3295, 0.0
      %v3783 = vmax.f32 %v3633, 0.0
      %v3784 = vmax.f32 %v3298, 0.0
      %v3785 = vmax.f32 %v3636, 0.0
      %v3786 = vmax.f32 %v3300, 0.0
      %v3787 = vmax.f32 %v3638, 0.0
      %v3788 = vmax.f32 %v3303, 0.0
      %v3789 = vmax.f32 %v3641, 0.0
      %v3790 = vmax.f32 %v3305, 0.0
      %v3791 = vmax.f32 %v3643, 0.0
      %v3792 = vmax.f32 %v3308, 0.0
      %v3793 = vmax.f32 %v3646, 0.0
      %v3794 = vmax.f32 %v3310, 0.0
      %v3795 = vmax.f32 %v3648, 0.0
      %v3796 = vmax.f32 %v3313, 0.0
      %v3797 = vmax.f32 %v3651, 0.0
      %v3798 = vmax.f32 %v3315, 0.0
      %v3799 = vmax.f32 %v3653, 0.0
      %v3800 = vmax.f32 %v3318, 0.0
      %v3801 = vmax.f32 %v3656, 0.0
      %v3802 = vmax.f32 %v3320, 0.0
      %v3803 = vmax.f32 %v3658, 0.0
      %v3804 = vmax.f32 %v3323, 0.0
      %v3805 = vmax.f32 %v3661, 0.0
      %v3806 = vmax.f32 %v3325, 0.0
      %v3807 = vmax.f32 %v3663, 0.0
      %v3808 = vmax.f32 %v3328, 0.0
      %v3809 = vmax.f32 %v3666, 0.0
      %v3810 = vmax.f32 %v3330, 0.0
      %v3811 = vmax.f32 %v3668, 0.0
      %v3812 = vmax.f32 %v3333, 0.0
      %v3813 = vmax.f32 %v3671, 0.0
      %v3814 = vmax.f32 %v3335, 0.0
      %v3815 = vmax.f32 %v3673, 0.0
      %v3816 = vmax.f32 %v3338, 0.0
      %v3817 = vmax.f32 %v3676, 0.0
      %v3818 = vmax.f32 %v3340, 0.0
      %v3819 = vmax.f32 %v3678, 0.0
      %v3820 = vmax.f32 %v3343, 0.0
      %v3821 = vmax.f32 %v3681, 0.0
      %v3822 = vmax.f32 %v3345, 0.0
      %v3823 = vmax.f32 %v3683, 0.0
      %v3824 = vmax.f32 %v3348, 0.0
      %v3825 = vmax.f32 %v3686, 0.0
      %v3826 = vmax.f32 %v3350, 0.0
      %v3827 = vmax.f32 %v3688, 0.0
      %v3828 = vmax.f32 %v3353, 0.0
      %v3829 = vmax.f32 %v3691, 0.0
      %v3830 = vmax.f32 %v3355, 0.0
      %v3831 = vmax.f32 %v3693, 0.0
      %v3832 = vmax.f32 %v3358, 0.0
      %v3833 = vmax.f32 %v3696, 0.0
      %v3834 = vmax.f32 %v3360, 0.0
      %v3835 = vmax.f32 %v3698, 0.0
      %v3836 = vmax.f32 %v3363, 0.0
      %v3837 = vmax.f32 %v3701, 0.0
      %v3838 = vmax.f32 %v3365, 0.0
      %v3839 = vmax.f32 %v3703, 0.0
      %v3840 = vmax.f32 %v3368, 0.0
      %v3841 = vmax.f32 %v3706, 0.0
      %v3842 = vmax.f32 %v3370, 0.0
      %v3843 = vmax.f32 %v3708, 0.0
      %v3844 = vmax.f32 %v3373, 0.0
      %v3845 = vmax.f32 %v3711, 0.0
      %v3846 = vmax.f32 %v3375, 0.0
      %v3847 = vmax.f32 %v3713, 0.0
      %v3848 = vmax.f32 %v3378, 0.0
      %v3849 = vmax.f32 %v3716, 0.0
      %v3850 = vmax.f32 %v3380, 0.0
      %v3851 = vmax.f32 %v3718, 0.0
      %v3852 = vmax.f32 %v3383, 0.0
      %v3853 = vmax.f32 %v3721, 0.0
      %v3854 = vmax.f32 %v3385, 0.0
      %v3855 = vmax.f32 %v3723, 0.0
      %v3856 = vmax.f32 %v3388, 0.0
      %v3857 = vmax.f32 %v3726, 0.0
      %v3858 = vmax.f32 %v3390, 0.0
      %v3859 = vmax.f32 %v3728, 0.0
      %v3860 = vmax.f32 %v3393, 0.0
      %v3861 = vmax.f32 %v3731, 0.0
      %v3862 = vmax.f32 %v3395, 0.0
      %v3863 = vmax.f32 %v3733, 0.0
      %v3864 = vmax.f32 %v3398, 0.0
      %v3865 = vmax.f32 %v3736, 0.0
      %v3866 = vmax.f32 %v3400, 0.0
      %v3867 = vmax.f32 %v3738, 0.0
      %v3868 = vpack.c.bf16 %v3742, %v3740
      %v3869 = vpack.c.bf16 %v3743, %v3741
      %v3870 = vpack.c.bf16 %v3746, %v3744
      %v3871 = vpack.c.bf16 %v3747, %v3745
      %v3872 = vpack.c.bf16 %v3750, %v3748
      %v3873 = vpack.c.bf16 %v3751, %v3749
      %v3874 = vpack.c.bf16 %v3754, %v3752
      %v3875 = vpack.c.bf16 %v3755, %v3753
      %v3876 = vpack.c.bf16 %v3758, %v3756
      %v3877 = vpack.c.bf16 %v3759, %v3757
      %v3878 = vpack.c.bf16 %v3762, %v3760
      %v3879 = vpack.c.bf16 %v3763, %v3761
      %v3880 = vpack.c.bf16 %v3766, %v3764
      %v3881 = vpack.c.bf16 %v3767, %v3765
      %v3882 = vpack.c.bf16 %v3770, %v3768
      %v3883 = vpack.c.bf16 %v3771, %v3769
      %v3884 = vpack.c.bf16 %v3774, %v3772
      %v3885 = vpack.c.bf16 %v3775, %v3773
      %v3886 = vpack.c.bf16 %v3778, %v3776
      %v3887 = vpack.c.bf16 %v3779, %v3777
      %v3888 = vpack.c.bf16 %v3782, %v3780
      %v3889 = vpack.c.bf16 %v3783, %v3781
      %v3890 = vpack.c.bf16 %v3786, %v3784
      %v3891 = vpack.c.bf16 %v3787, %v3785
      %v3892 = vpack.c.bf16 %v3790, %v3788
      %v3893 = vpack.c.bf16 %v3791, %v3789
      %v3894 = vpack.c.bf16 %v3794, %v3792
      %v3895 = vpack.c.bf16 %v3795, %v3793
      %v3896 = vpack.c.bf16 %v3798, %v3796
      %v3897 = vpack.c.bf16 %v3799, %v3797
      %v3898 = vpack.c.bf16 %v3802, %v3800
      %v3899 = vpack.c.bf16 %v3803, %v3801
      %v3900 = vpack.c.bf16 %v3806, %v3804
      %v3901 = vpack.c.bf16 %v3807, %v3805
      %v3902 = vpack.c.bf16 %v3810, %v3808
      %v3903 = vpack.c.bf16 %v3811, %v3809
      %v3904 = vpack.c.bf16 %v3814, %v3812
      %v3905 = vpack.c.bf16 %v3815, %v3813
      %v3906 = vpack.c.bf16 %v3818, %v3816
      %v3907 = vpack.c.bf16 %v3819, %v3817
      %v3908 = vpack.c.bf16 %v3822, %v3820
      %v3909 = vpack.c.bf16 %v3823, %v3821
      %v3910 = vpack.c.bf16 %v3826, %v3824
      %v3911 = vpack.c.bf16 %v3827, %v3825
      %v3912 = vpack.c.bf16 %v3830, %v3828
      %v3913 = vpack.c.bf16 %v3831, %v3829
      %v3914 = vpack.c.bf16 %v3834, %v3832
      %v3915 = vpack.c.bf16 %v3835, %v3833
      %v3916 = vpack.c.bf16 %v3838, %v3836
      %v3917 = vpack.c.bf16 %v3839, %v3837
      %v3918 = vpack.c.bf16 %v3842, %v3840
      %v3919 = vpack.c.bf16 %v3843, %v3841
      %v3920 = vpack.c.bf16 %v3846, %v3844
      %v3921 = vpack.c.bf16 %v3847, %v3845
      %v3922 = vpack.c.bf16 %v3850, %v3848
      %v3923 = vpack.c.bf16 %v3851, %v3849
      %v3924 = vpack.c.bf16 %v3854, %v3852
      %v3925 = vpack.c.bf16 %v3855, %v3853
      %v3926 = vpack.c.bf16 %v3858, %v3856
      %v3927 = vpack.c.bf16 %v3859, %v3857
      %v3928 = vpack.c.bf16 %v3862, %v3860
      %v3929 = vpack.c.bf16 %v3863, %v3861
      %v3930 = vpack.c.bf16 %v3866, %v3864
      %v3931 = vpack.c.bf16 %v3867, %v3865
      %s3932 = scalar_lea.vmem %s5, 512
      %v3933 = vld [vmem:[%s3932] sm:$0xff]
      %v3934 = vld [vmem:[%s3932 + $0x8] sm:$0xff]
      %v3935 = vld [vmem:[%s3932 + $0x10] sm:$0xff]
      %v3936 = vld [vmem:[%s3932 + $0x18] sm:$0xff]
      %v3937 = vld [vmem:[%s3932 + $0x20] sm:$0xff]
      %v3938 = vld [vmem:[%s3932 + $0x28] sm:$0xff]
      %v3939 = vld [vmem:[%s3932 + $0x30] sm:$0xff]
      %v3940 = vld [vmem:[%s3932 + $0x38] sm:$0xff]
      %v3941 = vld [vmem:[%s3932 + $0x40] sm:$0xff]
      %v3942 = vld [vmem:[%s3932 + $0x48] sm:$0xff]
      %v3943 = vld [vmem:[%s3932 + $0x50] sm:$0xff]
      %v3944 = vld [vmem:[%s3932 + $0x58] sm:$0xff]
      %v3945 = vld [vmem:[%s3932 + $0x60] sm:$0xff]
      %v3946 = vld [vmem:[%s3932 + $0x68] sm:$0xff]
      %v3947 = vld [vmem:[%s3932 + $0x70] sm:$0xff]
      %v3948 = vld [vmem:[%s3932 + $0x78] sm:$0xff]
      %v3949 = vld [vmem:[%s3932 + $0x80] sm:$0xff]
      %v3950 = vld [vmem:[%s3932 + $0x88] sm:$0xff]
      %v3951 = vld [vmem:[%s3932 + $0x90] sm:$0xff]
      %v3952 = vld [vmem:[%s3932 + $0x98] sm:$0xff]
      %v3953 = vld [vmem:[%s3932 + $0xa0] sm:$0xff]
      %v3954 = vld [vmem:[%s3932 + $0xa8] sm:$0xff]
      %v3955 = vld [vmem:[%s3932 + $0xb0] sm:$0xff]
      %v3956 = vld [vmem:[%s3932 + $0xb8] sm:$0xff]
      %v3957 = vld [vmem:[%s3932 + $0xc0] sm:$0xff]
      %v3958 = vld [vmem:[%s3932 + $0xc8] sm:$0xff]
      %v3959 = vld [vmem:[%s3932 + $0xd0] sm:$0xff]
      %v3960 = vld [vmem:[%s3932 + $0xd8] sm:$0xff]
      %v3961 = vld [vmem:[%s3932 + $0xe0] sm:$0xff]
      %v3962 = vld [vmem:[%s3932 + $0xe8] sm:$0xff]
      %v3963 = vld [vmem:[%s3932 + $0xf0] sm:$0xff]
      %v3964 = vld [vmem:[%s3932 + $0xf8] sm:$0xff]
      %s3965 = scalar_lea.vmem %s6, 4
      %v3966 = vld [vmem:[%s3965] sm:$0x3]
      %v3968 = vperm.slane %v3966, 0
      %v3969 = vperm.slane %v3966, 1
      %v4004 = vunpack.c.l.b16 %v3933
      %v4005 = vunpack.c.h.b16 %v3933
      %v4006 = vunpack.c.l.b16 %v3934
      %v4007 = vunpack.c.h.b16 %v3934
      %v4008 = vunpack.c.l.b16 %v3935
      %v4009 = vunpack.c.h.b16 %v3935
      %v4010 = vunpack.c.l.b16 %v3936
      %v4011 = vunpack.c.h.b16 %v3936
      %v4012 = vunpack.c.l.b16 %v3937
      %v4013 = vunpack.c.h.b16 %v3937
      %v4014 = vunpack.c.l.b16 %v3938
      %v4015 = vunpack.c.h.b16 %v3938
      %v4016 = vunpack.c.l.b16 %v3939
      %v4017 = vunpack.c.h.b16 %v3939
      %v4018 = vunpack.c.l.b16 %v3940
      %v4019 = vunpack.c.h.b16 %v3940
      %v4020 = vunpack.c.l.b16 %v3941
      %v4021 = vunpack.c.h.b16 %v3941
      %v4022 = vunpack.c.l.b16 %v3942
      %v4023 = vunpack.c.h.b16 %v3942
      %v4024 = vunpack.c.l.b16 %v3943
      %v4025 = vunpack.c.h.b16 %v3943
      %v4026 = vunpack.c.l.b16 %v3944
      %v4027 = vunpack.c.h.b16 %v3944
      %v4028 = vunpack.c.l.b16 %v3945
      %v4029 = vunpack.c.h.b16 %v3945
      %v4030 = vunpack.c.l.b16 %v3946
      %v4031 = vunpack.c.h.b16 %v3946
      %v4032 = vunpack.c.l.b16 %v3947
      %v4033 = vunpack.c.h.b16 %v3947
      %v4034 = vunpack.c.l.b16 %v3948
      %v4035 = vunpack.c.h.b16 %v3948
      %v4036 = vunpack.c.l.b16 %v3949
      %v4037 = vunpack.c.h.b16 %v3949
      %v4038 = vunpack.c.l.b16 %v3950
      %v4039 = vunpack.c.h.b16 %v3950
      %v4040 = vunpack.c.l.b16 %v3951
      %v4041 = vunpack.c.h.b16 %v3951
      %v4042 = vunpack.c.l.b16 %v3952
      %v4043 = vunpack.c.h.b16 %v3952
      %v4044 = vunpack.c.l.b16 %v3953
      %v4045 = vunpack.c.h.b16 %v3953
      %v4046 = vunpack.c.l.b16 %v3954
      %v4047 = vunpack.c.h.b16 %v3954
      %v4048 = vunpack.c.l.b16 %v3955
      %v4049 = vunpack.c.h.b16 %v3955
      %v4050 = vunpack.c.l.b16 %v3956
      %v4051 = vunpack.c.h.b16 %v3956
      %v4052 = vunpack.c.l.b16 %v3957
      %v4053 = vunpack.c.h.b16 %v3957
      %v4054 = vunpack.c.l.b16 %v3958
      %v4055 = vunpack.c.h.b16 %v3958
      %v4056 = vunpack.c.l.b16 %v3959
      %v4057 = vunpack.c.h.b16 %v3959
      %v4058 = vunpack.c.l.b16 %v3960
      %v4059 = vunpack.c.h.b16 %v3960
      %v4060 = vunpack.c.l.b16 %v3961
      %v4061 = vunpack.c.h.b16 %v3961
      %v4062 = vunpack.c.l.b16 %v3962
      %v4063 = vunpack.c.h.b16 %v3962
      %v4064 = vunpack.c.l.b16 %v3963
      %v4065 = vunpack.c.h.b16 %v3963
      %v4066 = vunpack.c.l.b16 %v3964
      %v4067 = vunpack.c.h.b16 %v3964
      %v4068 = vpack.c.b16 %v4006, %v4004
      %v4069 = vpack.c.b16 %v4007, %v4005
      %v4070 = vpack.c.b16 %v4010, %v4008
      %v4071 = vpack.c.b16 %v4011, %v4009
      %v4072 = vpack.c.b16 %v4014, %v4012
      %v4073 = vpack.c.b16 %v4015, %v4013
      %v4074 = vpack.c.b16 %v4018, %v4016
      %v4075 = vpack.c.b16 %v4019, %v4017
      %v4076 = vpack.c.b16 %v4022, %v4020
      %v4077 = vpack.c.b16 %v4023, %v4021
      %v4078 = vpack.c.b16 %v4026, %v4024
      %v4079 = vpack.c.b16 %v4027, %v4025
      %v4080 = vpack.c.b16 %v4030, %v4028
      %v4081 = vpack.c.b16 %v4031, %v4029
      %v4082 = vpack.c.b16 %v4034, %v4032
      %v4083 = vpack.c.b16 %v4035, %v4033
      %v4084 = vpack.c.b16 %v4038, %v4036
      %v4085 = vpack.c.b16 %v4039, %v4037
      %v4086 = vpack.c.b16 %v4042, %v4040
      %v4087 = vpack.c.b16 %v4043, %v4041
      %v4088 = vpack.c.b16 %v4046, %v4044
      %v4089 = vpack.c.b16 %v4047, %v4045
      %v4090 = vpack.c.b16 %v4050, %v4048
      %v4091 = vpack.c.b16 %v4051, %v4049
      %v4092 = vpack.c.b16 %v4054, %v4052
      %v4093 = vpack.c.b16 %v4055, %v4053
      %v4094 = vpack.c.b16 %v4058, %v4056
      %v4095 = vpack.c.b16 %v4059, %v4057
      %v4096 = vpack.c.b16 %v4062, %v4060
      %v4097 = vpack.c.b16 %v4063, %v4061
      %v4098 = vpack.c.b16 %v4066, %v4064
      %v4099 = vpack.c.b16 %v4067, %v4065
      %4132 = vmatpush.bf16.msra.mxu0 %v4082
      %4133 = vmatpush.bf16.msra.mxu0 %v4080
      %4134 = vmatpush.bf16.msra.mxu0 %v4078
      %4135 = vmatpush.bf16.msra.mxu0 %v4076
      %4136 = vmatpush.bf16.msra.mxu0 %v4074
      %4137 = vmatpush.bf16.msra.mxu0 %v4072
      %4138 = vmatpush.bf16.msra.mxu0 %v4070
      %4139 = vmatpush.bf16.msra.mxu0 %v4068
      %4140 = vmatmul.bf16.gmra.mxu0 %v3868
      %v4141 = vpop.f32.mrf.mxu0
      %v4142 = vadd.f32 %v3968, %v4141
      %v4143 = vpop.f32.mrf.mxu0
      %v4144 = vadd.f32 %v3968, %v4143
      %4145 = vmatmul.bf16.gmra.mxu0 %v3870
      %v4146 = vpop.f32.mrf.mxu0
      %v4147 = vadd.f32 %v3968, %v4146
      %v4148 = vpop.f32.mrf.mxu0
      %v4149 = vadd.f32 %v3968, %v4148
      %4150 = vmatmul.bf16.gmra.mxu0 %v3872
      %v4151 = vpop.f32.mrf.mxu0
      %v4152 = vadd.f32 %v3968, %v4151
      %v4153 = vpop.f32.mrf.mxu0
      %v4154 = vadd.f32 %v3968, %v4153
      %4155 = vmatmul.bf16.gmra.mxu0 %v3874
      %v4156 = vpop.f32.mrf.mxu0
      %v4157 = vadd.f32 %v3968, %v4156
      %v4158 = vpop.f32.mrf.mxu0
      %v4159 = vadd.f32 %v3968, %v4158
      %4160 = vmatmul.bf16.gmra.mxu0 %v3876
      %v4161 = vpop.f32.mrf.mxu0
      %v4162 = vadd.f32 %v3968, %v4161
      %v4163 = vpop.f32.mrf.mxu0
      %v4164 = vadd.f32 %v3968, %v4163
      %4165 = vmatmul.bf16.gmra.mxu0 %v3878
      %v4166 = vpop.f32.mrf.mxu0
      %v4167 = vadd.f32 %v3968, %v4166
      %v4168 = vpop.f32.mrf.mxu0
      %v4169 = vadd.f32 %v3968, %v4168
      %4170 = vmatmul.bf16.gmra.mxu0 %v3880
      %v4171 = vpop.f32.mrf.mxu0
      %v4172 = vadd.f32 %v3968, %v4171
      %v4173 = vpop.f32.mrf.mxu0
      %v4174 = vadd.f32 %v3968, %v4173
      %4175 = vmatmul.bf16.gmra.mxu0 %v3882
      %v4176 = vpop.f32.mrf.mxu0
      %v4177 = vadd.f32 %v3968, %v4176
      %v4178 = vpop.f32.mrf.mxu0
      %v4179 = vadd.f32 %v3968, %v4178
      %4180 = vmatmul.bf16.gmra.mxu0 %v3884
      %v4181 = vpop.f32.mrf.mxu0
      %v4182 = vadd.f32 %v3968, %v4181
      %v4183 = vpop.f32.mrf.mxu0
      %v4184 = vadd.f32 %v3968, %v4183
      %4185 = vmatmul.bf16.gmra.mxu0 %v3886
      %v4186 = vpop.f32.mrf.mxu0
      %v4187 = vadd.f32 %v3968, %v4186
      %v4188 = vpop.f32.mrf.mxu0
      %v4189 = vadd.f32 %v3968, %v4188
      %4190 = vmatmul.bf16.gmra.mxu0 %v3888
      %v4191 = vpop.f32.mrf.mxu0
      %v4192 = vadd.f32 %v3968, %v4191
      %v4193 = vpop.f32.mrf.mxu0
      %v4194 = vadd.f32 %v3968, %v4193
      %4195 = vmatmul.bf16.gmra.mxu0 %v3890
      %v4196 = vpop.f32.mrf.mxu0
      %v4197 = vadd.f32 %v3968, %v4196
      %v4198 = vpop.f32.mrf.mxu0
      %v4199 = vadd.f32 %v3968, %v4198
      %4200 = vmatmul.bf16.gmra.mxu0 %v3892
      %v4201 = vpop.f32.mrf.mxu0
      %v4202 = vadd.f32 %v3968, %v4201
      %v4203 = vpop.f32.mrf.mxu0
      %v4204 = vadd.f32 %v3968, %v4203
      %4205 = vmatmul.bf16.gmra.mxu0 %v3894
      %v4206 = vpop.f32.mrf.mxu0
      %v4207 = vadd.f32 %v3968, %v4206
      %v4208 = vpop.f32.mrf.mxu0
      %v4209 = vadd.f32 %v3968, %v4208
      %4210 = vmatmul.bf16.gmra.mxu0 %v3896
      %v4211 = vpop.f32.mrf.mxu0
      %v4212 = vadd.f32 %v3968, %v4211
      %v4213 = vpop.f32.mrf.mxu0
      %v4214 = vadd.f32 %v3968, %v4213
      %4215 = vmatmul.bf16.gmra.mxu0 %v3898
      %v4216 = vpop.f32.mrf.mxu0
      %v4217 = vadd.f32 %v3968, %v4216
      %v4218 = vpop.f32.mrf.mxu0
      %v4219 = vadd.f32 %v3968, %v4218
      %4220 = vmatmul.bf16.gmra.mxu0 %v3900
      %v4221 = vpop.f32.mrf.mxu0
      %v4222 = vadd.f32 %v3968, %v4221
      %v4223 = vpop.f32.mrf.mxu0
      %v4224 = vadd.f32 %v3968, %v4223
      %4225 = vmatmul.bf16.gmra.mxu0 %v3902
      %v4226 = vpop.f32.mrf.mxu0
      %v4227 = vadd.f32 %v3968, %v4226
      %v4228 = vpop.f32.mrf.mxu0
      %v4229 = vadd.f32 %v3968, %v4228
      %4230 = vmatmul.bf16.gmra.mxu0 %v3904
      %v4231 = vpop.f32.mrf.mxu0
      %v4232 = vadd.f32 %v3968, %v4231
      %v4233 = vpop.f32.mrf.mxu0
      %v4234 = vadd.f32 %v3968, %v4233
      %4235 = vmatmul.bf16.gmra.mxu0 %v3906
      %v4236 = vpop.f32.mrf.mxu0
      %v4237 = vadd.f32 %v3968, %v4236
      %v4238 = vpop.f32.mrf.mxu0
      %v4239 = vadd.f32 %v3968, %v4238
      %4240 = vmatmul.bf16.gmra.mxu0 %v3908
      %v4241 = vpop.f32.mrf.mxu0
      %v4242 = vadd.f32 %v3968, %v4241
      %v4243 = vpop.f32.mrf.mxu0
      %v4244 = vadd.f32 %v3968, %v4243
      %4245 = vmatmul.bf16.gmra.mxu0 %v3910
      %v4246 = vpop.f32.mrf.mxu0
      %v4247 = vadd.f32 %v3968, %v4246
      %v4248 = vpop.f32.mrf.mxu0
      %v4249 = vadd.f32 %v3968, %v4248
      %4250 = vmatmul.bf16.gmra.mxu0 %v3912
      %v4251 = vpop.f32.mrf.mxu0
      %v4252 = vadd.f32 %v3968, %v4251
      %v4253 = vpop.f32.mrf.mxu0
      %v4254 = vadd.f32 %v3968, %v4253
      %4255 = vmatmul.bf16.gmra.mxu0 %v3914
      %v4256 = vpop.f32.mrf.mxu0
      %v4257 = vadd.f32 %v3968, %v4256
      %v4258 = vpop.f32.mrf.mxu0
      %v4259 = vadd.f32 %v3968, %v4258
      %4260 = vmatmul.bf16.gmra.mxu0 %v3916
      %v4261 = vpop.f32.mrf.mxu0
      %v4262 = vadd.f32 %v3968, %v4261
      %v4263 = vpop.f32.mrf.mxu0
      %v4264 = vadd.f32 %v3968, %v4263
      %4265 = vmatmul.bf16.gmra.mxu0 %v3918
      %v4266 = vpop.f32.mrf.mxu0
      %v4267 = vadd.f32 %v3968, %v4266
      %v4268 = vpop.f32.mrf.mxu0
      %v4269 = vadd.f32 %v3968, %v4268
      %4270 = vmatmul.bf16.gmra.mxu0 %v3920
      %v4271 = vpop.f32.mrf.mxu0
      %v4272 = vadd.f32 %v3968, %v4271
      %v4273 = vpop.f32.mrf.mxu0
      %v4274 = vadd.f32 %v3968, %v4273
      %4275 = vmatmul.bf16.gmra.mxu0 %v3922
      %v4276 = vpop.f32.mrf.mxu0
      %v4277 = vadd.f32 %v3968, %v4276
      %v4278 = vpop.f32.mrf.mxu0
      %v4279 = vadd.f32 %v3968, %v4278
      %4280 = vmatmul.bf16.gmra.mxu0 %v3924
      %v4281 = vpop.f32.mrf.mxu0
      %v4282 = vadd.f32 %v3968, %v4281
      %v4283 = vpop.f32.mrf.mxu0
      %v4284 = vadd.f32 %v3968, %v4283
      %4285 = vmatmul.bf16.gmra.mxu0 %v3926
      %v4286 = vpop.f32.mrf.mxu0
      %v4287 = vadd.f32 %v3968, %v4286
      %v4288 = vpop.f32.mrf.mxu0
      %v4289 = vadd.f32 %v3968, %v4288
      %4290 = vmatmul.bf16.gmra.mxu0 %v3928
      %v4291 = vpop.f32.mrf.mxu0
      %v4292 = vadd.f32 %v3968, %v4291
      %v4293 = vpop.f32.mrf.mxu0
      %v4294 = vadd.f32 %v3968, %v4293
      %4295 = vmatmul.bf16.gmra.mxu0 %v3930
      %v4296 = vpop.f32.mrf.mxu0
      %v4297 = vadd.f32 %v3968, %v4296
      %v4298 = vpop.f32.mrf.mxu0
      %v4299 = vadd.f32 %v3968, %v4298
      %4300 = vdwg.mxu0
      %4301 = vmatpush.bf16.msra.mxu0 %v4098
      %4302 = vmatpush.bf16.msra.mxu0 %v4096
      %4303 = vmatpush.bf16.msra.mxu0 %v4094
      %4304 = vmatpush.bf16.msra.mxu0 %v4092
      %4305 = vmatpush.bf16.msra.mxu0 %v4090
      %4306 = vmatpush.bf16.msra.mxu0 %v4088
      %4307 = vmatpush.bf16.msra.mxu0 %v4086
      %4308 = vmatpush.bf16.msra.mxu0 %v4084
      %4309 = vmatmul.bf16.gmra.mxu0 %v3869
      %v4310 = vpop.f32.mrf.mxu0
      %v4311 = vadd.f32 %v4142, %v4310
      %v4312 = vpop.f32.mrf.mxu0
      %v4313 = vadd.f32 %v4144, %v4312
      %4314 = vmatmul.bf16.gmra.mxu0 %v3871
      %v4315 = vpop.f32.mrf.mxu0
      %v4316 = vadd.f32 %v4147, %v4315
      %v4317 = vpop.f32.mrf.mxu0
      %v4318 = vadd.f32 %v4149, %v4317
      %4319 = vmatmul.bf16.gmra.mxu0 %v3873
      %v4320 = vpop.f32.mrf.mxu0
      %v4321 = vadd.f32 %v4152, %v4320
      %v4322 = vpop.f32.mrf.mxu0
      %v4323 = vadd.f32 %v4154, %v4322
      %4324 = vmatmul.bf16.gmra.mxu0 %v3875
      %v4325 = vpop.f32.mrf.mxu0
      %v4326 = vadd.f32 %v4157, %v4325
      %v4327 = vpop.f32.mrf.mxu0
      %v4328 = vadd.f32 %v4159, %v4327
      %4329 = vmatmul.bf16.gmra.mxu0 %v3877
      %v4330 = vpop.f32.mrf.mxu0
      %v4331 = vadd.f32 %v4162, %v4330
      %v4332 = vpop.f32.mrf.mxu0
      %v4333 = vadd.f32 %v4164, %v4332
      %4334 = vmatmul.bf16.gmra.mxu0 %v3879
      %v4335 = vpop.f32.mrf.mxu0
      %v4336 = vadd.f32 %v4167, %v4335
      %v4337 = vpop.f32.mrf.mxu0
      %v4338 = vadd.f32 %v4169, %v4337
      %4339 = vmatmul.bf16.gmra.mxu0 %v3881
      %v4340 = vpop.f32.mrf.mxu0
      %v4341 = vadd.f32 %v4172, %v4340
      %v4342 = vpop.f32.mrf.mxu0
      %v4343 = vadd.f32 %v4174, %v4342
      %4344 = vmatmul.bf16.gmra.mxu0 %v3883
      %v4345 = vpop.f32.mrf.mxu0
      %v4346 = vadd.f32 %v4177, %v4345
      %v4347 = vpop.f32.mrf.mxu0
      %v4348 = vadd.f32 %v4179, %v4347
      %4349 = vmatmul.bf16.gmra.mxu0 %v3885
      %v4350 = vpop.f32.mrf.mxu0
      %v4351 = vadd.f32 %v4182, %v4350
      %v4352 = vpop.f32.mrf.mxu0
      %v4353 = vadd.f32 %v4184, %v4352
      %4354 = vmatmul.bf16.gmra.mxu0 %v3887
      %v4355 = vpop.f32.mrf.mxu0
      %v4356 = vadd.f32 %v4187, %v4355
      %v4357 = vpop.f32.mrf.mxu0
      %v4358 = vadd.f32 %v4189, %v4357
      %4359 = vmatmul.bf16.gmra.mxu0 %v3889
      %v4360 = vpop.f32.mrf.mxu0
      %v4361 = vadd.f32 %v4192, %v4360
      %v4362 = vpop.f32.mrf.mxu0
      %v4363 = vadd.f32 %v4194, %v4362
      %4364 = vmatmul.bf16.gmra.mxu0 %v3891
      %v4365 = vpop.f32.mrf.mxu0
      %v4366 = vadd.f32 %v4197, %v4365
      %v4367 = vpop.f32.mrf.mxu0
      %v4368 = vadd.f32 %v4199, %v4367
      %4369 = vmatmul.bf16.gmra.mxu0 %v3893
      %v4370 = vpop.f32.mrf.mxu0
      %v4371 = vadd.f32 %v4202, %v4370
      %v4372 = vpop.f32.mrf.mxu0
      %v4373 = vadd.f32 %v4204, %v4372
      %4374 = vmatmul.bf16.gmra.mxu0 %v3895
      %v4375 = vpop.f32.mrf.mxu0
      %v4376 = vadd.f32 %v4207, %v4375
      %v4377 = vpop.f32.mrf.mxu0
      %v4378 = vadd.f32 %v4209, %v4377
      %4379 = vmatmul.bf16.gmra.mxu0 %v3897
      %v4380 = vpop.f32.mrf.mxu0
      %v4381 = vadd.f32 %v4212, %v4380
      %v4382 = vpop.f32.mrf.mxu0
      %v4383 = vadd.f32 %v4214, %v4382
      %4384 = vmatmul.bf16.gmra.mxu0 %v3899
      %v4385 = vpop.f32.mrf.mxu0
      %v4386 = vadd.f32 %v4217, %v4385
      %v4387 = vpop.f32.mrf.mxu0
      %v4388 = vadd.f32 %v4219, %v4387
      %4389 = vmatmul.bf16.gmra.mxu0 %v3901
      %v4390 = vpop.f32.mrf.mxu0
      %v4391 = vadd.f32 %v4222, %v4390
      %v4392 = vpop.f32.mrf.mxu0
      %v4393 = vadd.f32 %v4224, %v4392
      %4394 = vmatmul.bf16.gmra.mxu0 %v3903
      %v4395 = vpop.f32.mrf.mxu0
      %v4396 = vadd.f32 %v4227, %v4395
      %v4397 = vpop.f32.mrf.mxu0
      %v4398 = vadd.f32 %v4229, %v4397
      %4399 = vmatmul.bf16.gmra.mxu0 %v3905
      %v4400 = vpop.f32.mrf.mxu0
      %v4401 = vadd.f32 %v4232, %v4400
      %v4402 = vpop.f32.mrf.mxu0
      %v4403 = vadd.f32 %v4234, %v4402
      %4404 = vmatmul.bf16.gmra.mxu0 %v3907
      %v4405 = vpop.f32.mrf.mxu0
      %v4406 = vadd.f32 %v4237, %v4405
      %v4407 = vpop.f32.mrf.mxu0
      %v4408 = vadd.f32 %v4239, %v4407
      %4409 = vmatmul.bf16.gmra.mxu0 %v3909
      %v4410 = vpop.f32.mrf.mxu0
      %v4411 = vadd.f32 %v4242, %v4410
      %v4412 = vpop.f32.mrf.mxu0
      %v4413 = vadd.f32 %v4244, %v4412
      %4414 = vmatmul.bf16.gmra.mxu0 %v3911
      %v4415 = vpop.f32.mrf.mxu0
      %v4416 = vadd.f32 %v4247, %v4415
      %v4417 = vpop.f32.mrf.mxu0
      %v4418 = vadd.f32 %v4249, %v4417
      %4419 = vmatmul.bf16.gmra.mxu0 %v3913
      %v4420 = vpop.f32.mrf.mxu0
      %v4421 = vadd.f32 %v4252, %v4420
      %v4422 = vpop.f32.mrf.mxu0
      %v4423 = vadd.f32 %v4254, %v4422
      %4424 = vmatmul.bf16.gmra.mxu0 %v3915
      %v4425 = vpop.f32.mrf.mxu0
      %v4426 = vadd.f32 %v4257, %v4425
      %v4427 = vpop.f32.mrf.mxu0
      %v4428 = vadd.f32 %v4259, %v4427
      %4429 = vmatmul.bf16.gmra.mxu0 %v3917
      %v4430 = vpop.f32.mrf.mxu0
      %v4431 = vadd.f32 %v4262, %v4430
      %v4432 = vpop.f32.mrf.mxu0
      %v4433 = vadd.f32 %v4264, %v4432
      %4434 = vmatmul.bf16.gmra.mxu0 %v3919
      %v4435 = vpop.f32.mrf.mxu0
      %v4436 = vadd.f32 %v4267, %v4435
      %v4437 = vpop.f32.mrf.mxu0
      %v4438 = vadd.f32 %v4269, %v4437
      %4439 = vmatmul.bf16.gmra.mxu0 %v3921
      %v4440 = vpop.f32.mrf.mxu0
      %v4441 = vadd.f32 %v4272, %v4440
      %v4442 = vpop.f32.mrf.mxu0
      %v4443 = vadd.f32 %v4274, %v4442
      %4444 = vmatmul.bf16.gmra.mxu0 %v3923
      %v4445 = vpop.f32.mrf.mxu0
      %v4446 = vadd.f32 %v4277, %v4445
      %v4447 = vpop.f32.mrf.mxu0
      %v4448 = vadd.f32 %v4279, %v4447
      %4449 = vmatmul.bf16.gmra.mxu0 %v3925
      %v4450 = vpop.f32.mrf.mxu0
      %v4451 = vadd.f32 %v4282, %v4450
      %v4452 = vpop.f32.mrf.mxu0
      %v4453 = vadd.f32 %v4284, %v4452
      %4454 = vmatmul.bf16.gmra.mxu0 %v3927
      %v4455 = vpop.f32.mrf.mxu0
      %v4456 = vadd.f32 %v4287, %v4455
      %v4457 = vpop.f32.mrf.mxu0
      %v4458 = vadd.f32 %v4289, %v4457
      %4459 = vmatmul.bf16.gmra.mxu0 %v3929
      %v4460 = vpop.f32.mrf.mxu0
      %v4461 = vadd.f32 %v4292, %v4460
      %v4462 = vpop.f32.mrf.mxu0
      %v4463 = vadd.f32 %v4294, %v4462
      %4464 = vmatmul.bf16.gmra.mxu0 %v3931
      %v4465 = vpop.f32.mrf.mxu0
      %v4466 = vadd.f32 %v4297, %v4465
      %v4467 = vpop.f32.mrf.mxu0
      %v4468 = vadd.f32 %v4299, %v4467
      %4469 = vdwg.mxu0
      %4470 = vmatpush.bf16.msra.mxu0 %v4083
      %4471 = vmatpush.bf16.msra.mxu0 %v4081
      %4472 = vmatpush.bf16.msra.mxu0 %v4079
      %4473 = vmatpush.bf16.msra.mxu0 %v4077
      %4474 = vmatpush.bf16.msra.mxu0 %v4075
      %4475 = vmatpush.bf16.msra.mxu0 %v4073
      %4476 = vmatpush.bf16.msra.mxu0 %v4071
      %4477 = vmatpush.bf16.msra.mxu0 %v4069
      %4478 = vmatmul.bf16.gmra.mxu0 %v3868
      %v4479 = vpop.f32.mrf.mxu0
      %v4480 = vadd.f32 %v3969, %v4479
      %v4481 = vpop.f32.mrf.mxu0
      %v4482 = vadd.f32 %v3969, %v4481
      %4483 = vmatmul.bf16.gmra.mxu0 %v3870
      %v4484 = vpop.f32.mrf.mxu0
      %v4485 = vadd.f32 %v3969, %v4484
      %v4486 = vpop.f32.mrf.mxu0
      %v4487 = vadd.f32 %v3969, %v4486
      %4488 = vmatmul.bf16.gmra.mxu0 %v3872
      %v4489 = vpop.f32.mrf.mxu0
      %v4490 = vadd.f32 %v3969, %v4489
      %v4491 = vpop.f32.mrf.mxu0
      %v4492 = vadd.f32 %v3969, %v4491
      %4493 = vmatmul.bf16.gmra.mxu0 %v3874
      %v4494 = vpop.f32.mrf.mxu0
      %v4495 = vadd.f32 %v3969, %v4494
      %v4496 = vpop.f32.mrf.mxu0
      %v4497 = vadd.f32 %v3969, %v4496
      %4498 = vmatmul.bf16.gmra.mxu0 %v3876
      %v4499 = vpop.f32.mrf.mxu0
      %v4500 = vadd.f32 %v3969, %v4499
      %v4501 = vpop.f32.mrf.mxu0
      %v4502 = vadd.f32 %v3969, %v4501
      %4503 = vmatmul.bf16.gmra.mxu0 %v3878
      %v4504 = vpop.f32.mrf.mxu0
      %v4505 = vadd.f32 %v3969, %v4504
      %v4506 = vpop.f32.mrf.mxu0
      %v4507 = vadd.f32 %v3969, %v4506
      %4508 = vmatmul.bf16.gmra.mxu0 %v3880
      %v4509 = vpop.f32.mrf.mxu0
      %v4510 = vadd.f32 %v3969, %v4509
      %v4511 = vpop.f32.mrf.mxu0
      %v4512 = vadd.f32 %v3969, %v4511
      %4513 = vmatmul.bf16.gmra.mxu0 %v3882
      %v4514 = vpop.f32.mrf.mxu0
      %v4515 = vadd.f32 %v3969, %v4514
      %v4516 = vpop.f32.mrf.mxu0
      %v4517 = vadd.f32 %v3969, %v4516
      %4518 = vmatmul.bf16.gmra.mxu0 %v3884
      %v4519 = vpop.f32.mrf.mxu0
      %v4520 = vadd.f32 %v3969, %v4519
      %v4521 = vpop.f32.mrf.mxu0
      %v4522 = vadd.f32 %v3969, %v4521
      %4523 = vmatmul.bf16.gmra.mxu0 %v3886
      %v4524 = vpop.f32.mrf.mxu0
      %v4525 = vadd.f32 %v3969, %v4524
      %v4526 = vpop.f32.mrf.mxu0
      %v4527 = vadd.f32 %v3969, %v4526
      %4528 = vmatmul.bf16.gmra.mxu0 %v3888
      %v4529 = vpop.f32.mrf.mxu0
      %v4530 = vadd.f32 %v3969, %v4529
      %v4531 = vpop.f32.mrf.mxu0
      %v4532 = vadd.f32 %v3969, %v4531
      %4533 = vmatmul.bf16.gmra.mxu0 %v3890
      %v4534 = vpop.f32.mrf.mxu0
      %v4535 = vadd.f32 %v3969, %v4534
      %v4536 = vpop.f32.mrf.mxu0
      %v4537 = vadd.f32 %v3969, %v4536
      %4538 = vmatmul.bf16.gmra.mxu0 %v3892
      %v4539 = vpop.f32.mrf.mxu0
      %v4540 = vadd.f32 %v3969, %v4539
      %v4541 = vpop.f32.mrf.mxu0
      %v4542 = vadd.f32 %v3969, %v4541
      %4543 = vmatmul.bf16.gmra.mxu0 %v3894
      %v4544 = vpop.f32.mrf.mxu0
      %v4545 = vadd.f32 %v3969, %v4544
      %v4546 = vpop.f32.mrf.mxu0
      %v4547 = vadd.f32 %v3969, %v4546
      %4548 = vmatmul.bf16.gmra.mxu0 %v3896
      %v4549 = vpop.f32.mrf.mxu0
      %v4550 = vadd.f32 %v3969, %v4549
      %v4551 = vpop.f32.mrf.mxu0
      %v4552 = vadd.f32 %v3969, %v4551
      %4553 = vmatmul.bf16.gmra.mxu0 %v3898
      %v4554 = vpop.f32.mrf.mxu0
      %v4555 = vadd.f32 %v3969, %v4554
      %v4556 = vpop.f32.mrf.mxu0
      %v4557 = vadd.f32 %v3969, %v4556
      %4558 = vmatmul.bf16.gmra.mxu0 %v3900
      %v4559 = vpop.f32.mrf.mxu0
      %v4560 = vadd.f32 %v3969, %v4559
      %v4561 = vpop.f32.mrf.mxu0
      %v4562 = vadd.f32 %v3969, %v4561
      %4563 = vmatmul.bf16.gmra.mxu0 %v3902
      %v4564 = vpop.f32.mrf.mxu0
      %v4565 = vadd.f32 %v3969, %v4564
      %v4566 = vpop.f32.mrf.mxu0
      %v4567 = vadd.f32 %v3969, %v4566
      %4568 = vmatmul.bf16.gmra.mxu0 %v3904
      %v4569 = vpop.f32.mrf.mxu0
      %v4570 = vadd.f32 %v3969, %v4569
      %v4571 = vpop.f32.mrf.mxu0
      %v4572 = vadd.f32 %v3969, %v4571
      %4573 = vmatmul.bf16.gmra.mxu0 %v3906
      %v4574 = vpop.f32.mrf.mxu0
      %v4575 = vadd.f32 %v3969, %v4574
      %v4576 = vpop.f32.mrf.mxu0
      %v4577 = vadd.f32 %v3969, %v4576
      %4578 = vmatmul.bf16.gmra.mxu0 %v3908
      %v4579 = vpop.f32.mrf.mxu0
      %v4580 = vadd.f32 %v3969, %v4579
      %v4581 = vpop.f32.mrf.mxu0
      %v4582 = vadd.f32 %v3969, %v4581
      %4583 = vmatmul.bf16.gmra.mxu0 %v3910
      %v4584 = vpop.f32.mrf.mxu0
      %v4585 = vadd.f32 %v3969, %v4584
      %v4586 = vpop.f32.mrf.mxu0
      %v4587 = vadd.f32 %v3969, %v4586
      %4588 = vmatmul.bf16.gmra.mxu0 %v3912
      %v4589 = vpop.f32.mrf.mxu0
      %v4590 = vadd.f32 %v3969, %v4589
      %v4591 = vpop.f32.mrf.mxu0
      %v4592 = vadd.f32 %v3969, %v4591
      %4593 = vmatmul.bf16.gmra.mxu0 %v3914
      %v4594 = vpop.f32.mrf.mxu0
      %v4595 = vadd.f32 %v3969, %v4594
      %v4596 = vpop.f32.mrf.mxu0
      %v4597 = vadd.f32 %v3969, %v4596
      %4598 = vmatmul.bf16.gmra.mxu0 %v3916
      %v4599 = vpop.f32.mrf.mxu0
      %v4600 = vadd.f32 %v3969, %v4599
      %v4601 = vpop.f32.mrf.mxu0
      %v4602 = vadd.f32 %v3969, %v4601
      %4603 = vmatmul.bf16.gmra.mxu0 %v3918
      %v4604 = vpop.f32.mrf.mxu0
      %v4605 = vadd.f32 %v3969, %v4604
      %v4606 = vpop.f32.mrf.mxu0
      %v4607 = vadd.f32 %v3969, %v4606
      %4608 = vmatmul.bf16.gmra.mxu0 %v3920
      %v4609 = vpop.f32.mrf.mxu0
      %v4610 = vadd.f32 %v3969, %v4609
      %v4611 = vpop.f32.mrf.mxu0
      %v4612 = vadd.f32 %v3969, %v4611
      %4613 = vmatmul.bf16.gmra.mxu0 %v3922
      %v4614 = vpop.f32.mrf.mxu0
      %v4615 = vadd.f32 %v3969, %v4614
      %v4616 = vpop.f32.mrf.mxu0
      %v4617 = vadd.f32 %v3969, %v4616
      %4618 = vmatmul.bf16.gmra.mxu0 %v3924
      %v4619 = vpop.f32.mrf.mxu0
      %v4620 = vadd.f32 %v3969, %v4619
      %v4621 = vpop.f32.mrf.mxu0
      %v4622 = vadd.f32 %v3969, %v4621
      %4623 = vmatmul.bf16.gmra.mxu0 %v3926
      %v4624 = vpop.f32.mrf.mxu0
      %v4625 = vadd.f32 %v3969, %v4624
      %v4626 = vpop.f32.mrf.mxu0
      %v4627 = vadd.f32 %v3969, %v4626
      %4628 = vmatmul.bf16.gmra.mxu0 %v3928
      %v4629 = vpop.f32.mrf.mxu0
      %v4630 = vadd.f32 %v3969, %v4629
      %v4631 = vpop.f32.mrf.mxu0
      %v4632 = vadd.f32 %v3969, %v4631
      %4633 = vmatmul.bf16.gmra.mxu0 %v3930
      %v4634 = vpop.f32.mrf.mxu0
      %v4635 = vadd.f32 %v3969, %v4634
      %v4636 = vpop.f32.mrf.mxu0
      %v4637 = vadd.f32 %v3969, %v4636
      %4638 = vdwg.mxu0
      %4639 = vmatpush.bf16.msra.mxu0 %v4099
      %4640 = vmatpush.bf16.msra.mxu0 %v4097
      %4641 = vmatpush.bf16.msra.mxu0 %v4095
      %4642 = vmatpush.bf16.msra.mxu0 %v4093
      %4643 = vmatpush.bf16.msra.mxu0 %v4091
      %4644 = vmatpush.bf16.msra.mxu0 %v4089
      %4645 = vmatpush.bf16.msra.mxu0 %v4087
      %4646 = vmatpush.bf16.msra.mxu0 %v4085
      %4647 = vmatmul.bf16.gmra.mxu0 %v3869
      %v4648 = vpop.f32.mrf.mxu0
      %v4649 = vadd.f32 %v4480, %v4648
      %v4650 = vpop.f32.mrf.mxu0
      %v4651 = vadd.f32 %v4482, %v4650
      %4652 = vmatmul.bf16.gmra.mxu0 %v3871
      %v4653 = vpop.f32.mrf.mxu0
      %v4654 = vadd.f32 %v4485, %v4653
      %v4655 = vpop.f32.mrf.mxu0
      %v4656 = vadd.f32 %v4487, %v4655
      %4657 = vmatmul.bf16.gmra.mxu0 %v3873
      %v4658 = vpop.f32.mrf.mxu0
      %v4659 = vadd.f32 %v4490, %v4658
      %v4660 = vpop.f32.mrf.mxu0
      %v4661 = vadd.f32 %v4492, %v4660
      %4662 = vmatmul.bf16.gmra.mxu0 %v3875
      %v4663 = vpop.f32.mrf.mxu0
      %v4664 = vadd.f32 %v4495, %v4663
      %v4665 = vpop.f32.mrf.mxu0
      %v4666 = vadd.f32 %v4497, %v4665
      %4667 = vmatmul.bf16.gmra.mxu0 %v3877
      %v4668 = vpop.f32.mrf.mxu0
      %v4669 = vadd.f32 %v4500, %v4668
      %v4670 = vpop.f32.mrf.mxu0
      %v4671 = vadd.f32 %v4502, %v4670
      %4672 = vmatmul.bf16.gmra.mxu0 %v3879
      %v4673 = vpop.f32.mrf.mxu0
      %v4674 = vadd.f32 %v4505, %v4673
      %v4675 = vpop.f32.mrf.mxu0
      %v4676 = vadd.f32 %v4507, %v4675
      %4677 = vmatmul.bf16.gmra.mxu0 %v3881
      %v4678 = vpop.f32.mrf.mxu0
      %v4679 = vadd.f32 %v4510, %v4678
      %v4680 = vpop.f32.mrf.mxu0
      %v4681 = vadd.f32 %v4512, %v4680
      %4682 = vmatmul.bf16.gmra.mxu0 %v3883
      %v4683 = vpop.f32.mrf.mxu0
      %v4684 = vadd.f32 %v4515, %v4683
      %v4685 = vpop.f32.mrf.mxu0
      %v4686 = vadd.f32 %v4517, %v4685
      %4687 = vmatmul.bf16.gmra.mxu0 %v3885
      %v4688 = vpop.f32.mrf.mxu0
      %v4689 = vadd.f32 %v4520, %v4688
      %v4690 = vpop.f32.mrf.mxu0
      %v4691 = vadd.f32 %v4522, %v4690
      %4692 = vmatmul.bf16.gmra.mxu0 %v3887
      %v4693 = vpop.f32.mrf.mxu0
      %v4694 = vadd.f32 %v4525, %v4693
      %v4695 = vpop.f32.mrf.mxu0
      %v4696 = vadd.f32 %v4527, %v4695
      %4697 = vmatmul.bf16.gmra.mxu0 %v3889
      %v4698 = vpop.f32.mrf.mxu0
      %v4699 = vadd.f32 %v4530, %v4698
      %v4700 = vpop.f32.mrf.mxu0
      %v4701 = vadd.f32 %v4532, %v4700
      %4702 = vmatmul.bf16.gmra.mxu0 %v3891
      %v4703 = vpop.f32.mrf.mxu0
      %v4704 = vadd.f32 %v4535, %v4703
      %v4705 = vpop.f32.mrf.mxu0
      %v4706 = vadd.f32 %v4537, %v4705
      %4707 = vmatmul.bf16.gmra.mxu0 %v3893
      %v4708 = vpop.f32.mrf.mxu0
      %v4709 = vadd.f32 %v4540, %v4708
      %v4710 = vpop.f32.mrf.mxu0
      %v4711 = vadd.f32 %v4542, %v4710
      %4712 = vmatmul.bf16.gmra.mxu0 %v3895
      %v4713 = vpop.f32.mrf.mxu0
      %v4714 = vadd.f32 %v4545, %v4713
      %v4715 = vpop.f32.mrf.mxu0
      %v4716 = vadd.f32 %v4547, %v4715
      %4717 = vmatmul.bf16.gmra.mxu0 %v3897
      %v4718 = vpop.f32.mrf.mxu0
      %v4719 = vadd.f32 %v4550, %v4718
      %v4720 = vpop.f32.mrf.mxu0
      %v4721 = vadd.f32 %v4552, %v4720
      %4722 = vmatmul.bf16.gmra.mxu0 %v3899
      %v4723 = vpop.f32.mrf.mxu0
      %v4724 = vadd.f32 %v4555, %v4723
      %v4725 = vpop.f32.mrf.mxu0
      %v4726 = vadd.f32 %v4557, %v4725
      %4727 = vmatmul.bf16.gmra.mxu0 %v3901
      %v4728 = vpop.f32.mrf.mxu0
      %v4729 = vadd.f32 %v4560, %v4728
      %v4730 = vpop.f32.mrf.mxu0
      %v4731 = vadd.f32 %v4562, %v4730
      %4732 = vmatmul.bf16.gmra.mxu0 %v3903
      %v4733 = vpop.f32.mrf.mxu0
      %v4734 = vadd.f32 %v4565, %v4733
      %v4735 = vpop.f32.mrf.mxu0
      %v4736 = vadd.f32 %v4567, %v4735
      %4737 = vmatmul.bf16.gmra.mxu0 %v3905
      %v4738 = vpop.f32.mrf.mxu0
      %v4739 = vadd.f32 %v4570, %v4738
      %v4740 = vpop.f32.mrf.mxu0
      %v4741 = vadd.f32 %v4572, %v4740
      %4742 = vmatmul.bf16.gmra.mxu0 %v3907
      %v4743 = vpop.f32.mrf.mxu0
      %v4744 = vadd.f32 %v4575, %v4743
      %v4745 = vpop.f32.mrf.mxu0
      %v4746 = vadd.f32 %v4577, %v4745
      %4747 = vmatmul.bf16.gmra.mxu0 %v3909
      %v4748 = vpop.f32.mrf.mxu0
      %v4749 = vadd.f32 %v4580, %v4748
      %v4750 = vpop.f32.mrf.mxu0
      %v4751 = vadd.f32 %v4582, %v4750
      %4752 = vmatmul.bf16.gmra.mxu0 %v3911
      %v4753 = vpop.f32.mrf.mxu0
      %v4754 = vadd.f32 %v4585, %v4753
      %v4755 = vpop.f32.mrf.mxu0
      %v4756 = vadd.f32 %v4587, %v4755
      %4757 = vmatmul.bf16.gmra.mxu0 %v3913
      %v4758 = vpop.f32.mrf.mxu0
      %v4759 = vadd.f32 %v4590, %v4758
      %v4760 = vpop.f32.mrf.mxu0
      %v4761 = vadd.f32 %v4592, %v4760
      %4762 = vmatmul.bf16.gmra.mxu0 %v3915
      %v4763 = vpop.f32.mrf.mxu0
      %v4764 = vadd.f32 %v4595, %v4763
      %v4765 = vpop.f32.mrf.mxu0
      %v4766 = vadd.f32 %v4597, %v4765
      %4767 = vmatmul.bf16.gmra.mxu0 %v3917
      %v4768 = vpop.f32.mrf.mxu0
      %v4769 = vadd.f32 %v4600, %v4768
      %v4770 = vpop.f32.mrf.mxu0
      %v4771 = vadd.f32 %v4602, %v4770
      %4772 = vmatmul.bf16.gmra.mxu0 %v3919
      %v4773 = vpop.f32.mrf.mxu0
      %v4774 = vadd.f32 %v4605, %v4773
      %v4775 = vpop.f32.mrf.mxu0
      %v4776 = vadd.f32 %v4607, %v4775
      %4777 = vmatmul.bf16.gmra.mxu0 %v3921
      %v4778 = vpop.f32.mrf.mxu0
      %v4779 = vadd.f32 %v4610, %v4778
      %v4780 = vpop.f32.mrf.mxu0
      %v4781 = vadd.f32 %v4612, %v4780
      %4782 = vmatmul.bf16.gmra.mxu0 %v3923
      %v4783 = vpop.f32.mrf.mxu0
      %v4784 = vadd.f32 %v4615, %v4783
      %v4785 = vpop.f32.mrf.mxu0
      %v4786 = vadd.f32 %v4617, %v4785
      %4787 = vmatmul.bf16.gmra.mxu0 %v3925
      %v4788 = vpop.f32.mrf.mxu0
      %v4789 = vadd.f32 %v4620, %v4788
      %v4790 = vpop.f32.mrf.mxu0
      %v4791 = vadd.f32 %v4622, %v4790
      %4792 = vmatmul.bf16.gmra.mxu0 %v3927
      %v4793 = vpop.f32.mrf.mxu0
      %v4794 = vadd.f32 %v4625, %v4793
      %v4795 = vpop.f32.mrf.mxu0
      %v4796 = vadd.f32 %v4627, %v4795
      %4797 = vmatmul.bf16.gmra.mxu0 %v3929
      %v4798 = vpop.f32.mrf.mxu0
      %v4799 = vadd.f32 %v4630, %v4798
      %v4800 = vpop.f32.mrf.mxu0
      %v4801 = vadd.f32 %v4632, %v4800
      %4802 = vmatmul.bf16.gmra.mxu0 %v3931
      %v4803 = vpop.f32.mrf.mxu0
      %v4804 = vadd.f32 %v4635, %v4803
      %v4805 = vpop.f32.mrf.mxu0
      %v4806 = vadd.f32 %v4637, %v4805
      %4807 = vdwg.mxu0
      %v4808 = vmax.f32 %v4311, 0.0
      %v4809 = vmax.f32 %v4649, 0.0
      %v4810 = vmax.f32 %v4313, 0.0
      %v4811 = vmax.f32 %v4651, 0.0
      %v4812 = vmax.f32 %v4316, 0.0
      %v4813 = vmax.f32 %v4654, 0.0
      %v4814 = vmax.f32 %v4318, 0.0
      %v4815 = vmax.f32 %v4656, 0.0
      %v4816 = vmax.f32 %v4321, 0.0
      %v4817 = vmax.f32 %v4659, 0.0
      %v4818 = vmax.f32 %v4323, 0.0
      %v4819 = vmax.f32 %v4661, 0.0
      %v4820 = vmax.f32 %v4326, 0.0
      %v4821 = vmax.f32 %v4664, 0.0
      %v4822 = vmax.f32 %v4328, 0.0
      %v4823 = vmax.f32 %v4666, 0.0
      %v4824 = vmax.f32 %v4331, 0.0
      %v4825 = vmax.f32 %v4669, 0.0
      %v4826 = vmax.f32 %v4333, 0.0
      %v4827 = vmax.f32 %v4671, 0.0
      %v4828 = vmax.f32 %v4336, 0.0
      %v4829 = vmax.f32 %v4674, 0.0
      %v4830 = vmax.f32 %v4338, 0.0
      %v4831 = vmax.f32 %v4676, 0.0
      %v4832 = vmax.f32 %v4341, 0.0
      %v4833 = vmax.f32 %v4679, 0.0
      %v4834 = vmax.f32 %v4343, 0.0
      %v4835 = vmax.f32 %v4681, 0.0
      %v4836 = vmax.f32 %v4346, 0.0
      %v4837 = vmax.f32 %v4684, 0.0
      %v4838 = vmax.f32 %v4348, 0.0
      %v4839 = vmax.f32 %v4686, 0.0
      %v4840 = vmax.f32 %v4351, 0.0
      %v4841 = vmax.f32 %v4689, 0.0
      %v4842 = vmax.f32 %v4353, 0.0
      %v4843 = vmax.f32 %v4691, 0.0
      %v4844 = vmax.f32 %v4356, 0.0
      %v4845 = vmax.f32 %v4694, 0.0
      %v4846 = vmax.f32 %v4358, 0.0
      %v4847 = vmax.f32 %v4696, 0.0
      %v4848 = vmax.f32 %v4361, 0.0
      %v4849 = vmax.f32 %v4699, 0.0
      %v4850 = vmax.f32 %v4363, 0.0
      %v4851 = vmax.f32 %v4701, 0.0
      %v4852 = vmax.f32 %v4366, 0.0
      %v4853 = vmax.f32 %v4704, 0.0
      %v4854 = vmax.f32 %v4368, 0.0
      %v4855 = vmax.f32 %v4706, 0.0
      %v4856 = vmax.f32 %v4371, 0.0
      %v4857 = vmax.f32 %v4709, 0.0
      %v4858 = vmax.f32 %v4373, 0.0
      %v4859 = vmax.f32 %v4711, 0.0
      %v4860 = vmax.f32 %v4376, 0.0
      %v4861 = vmax.f32 %v4714, 0.0
      %v4862 = vmax.f32 %v4378, 0.0
      %v4863 = vmax.f32 %v4716, 0.0
      %v4864 = vmax.f32 %v4381, 0.0
      %v4865 = vmax.f32 %v4719, 0.0
      %v4866 = vmax.f32 %v4383, 0.0
      %v4867 = vmax.f32 %v4721, 0.0
      %v4868 = vmax.f32 %v4386, 0.0
      %v4869 = vmax.f32 %v4724, 0.0
      %v4870 = vmax.f32 %v4388, 0.0
      %v4871 = vmax.f32 %v4726, 0.0
      %v4872 = vmax.f32 %v4391, 0.0
      %v4873 = vmax.f32 %v4729, 0.0
      %v4874 = vmax.f32 %v4393, 0.0
      %v4875 = vmax.f32 %v4731, 0.0
      %v4876 = vmax.f32 %v4396, 0.0
      %v4877 = vmax.f32 %v4734, 0.0
      %v4878 = vmax.f32 %v4398, 0.0
      %v4879 = vmax.f32 %v4736, 0.0
      %v4880 = vmax.f32 %v4401, 0.0
      %v4881 = vmax.f32 %v4739, 0.0
      %v4882 = vmax.f32 %v4403, 0.0
      %v4883 = vmax.f32 %v4741, 0.0
      %v4884 = vmax.f32 %v4406, 0.0
      %v4885 = vmax.f32 %v4744, 0.0
      %v4886 = vmax.f32 %v4408, 0.0
      %v4887 = vmax.f32 %v4746, 0.0
      %v4888 = vmax.f32 %v4411, 0.0
      %v4889 = vmax.f32 %v4749, 0.0
      %v4890 = vmax.f32 %v4413, 0.0
      %v4891 = vmax.f32 %v4751, 0.0
      %v4892 = vmax.f32 %v4416, 0.0
      %v4893 = vmax.f32 %v4754, 0.0
      %v4894 = vmax.f32 %v4418, 0.0
      %v4895 = vmax.f32 %v4756, 0.0
      %v4896 = vmax.f32 %v4421, 0.0
      %v4897 = vmax.f32 %v4759, 0.0
      %v4898 = vmax.f32 %v4423, 0.0
      %v4899 = vmax.f32 %v4761, 0.0
      %v4900 = vmax.f32 %v4426, 0.0
      %v4901 = vmax.f32 %v4764, 0.0
      %v4902 = vmax.f32 %v4428, 0.0
      %v4903 = vmax.f32 %v4766, 0.0
      %v4904 = vmax.f32 %v4431, 0.0
      %v4905 = vmax.f32 %v4769, 0.0
      %v4906 = vmax.f32 %v4433, 0.0
      %v4907 = vmax.f32 %v4771, 0.0
      %v4908 = vmax.f32 %v4436, 0.0
      %v4909 = vmax.f32 %v4774, 0.0
      %v4910 = vmax.f32 %v4438, 0.0
      %v4911 = vmax.f32 %v4776, 0.0
      %v4912 = vmax.f32 %v4441, 0.0
      %v4913 = vmax.f32 %v4779, 0.0
      %v4914 = vmax.f32 %v4443, 0.0
      %v4915 = vmax.f32 %v4781, 0.0
      %v4916 = vmax.f32 %v4446, 0.0
      %v4917 = vmax.f32 %v4784, 0.0
      %v4918 = vmax.f32 %v4448, 0.0
      %v4919 = vmax.f32 %v4786, 0.0
      %v4920 = vmax.f32 %v4451, 0.0
      %v4921 = vmax.f32 %v4789, 0.0
      %v4922 = vmax.f32 %v4453, 0.0
      %v4923 = vmax.f32 %v4791, 0.0
      %v4924 = vmax.f32 %v4456, 0.0
      %v4925 = vmax.f32 %v4794, 0.0
      %v4926 = vmax.f32 %v4458, 0.0
      %v4927 = vmax.f32 %v4796, 0.0
      %v4928 = vmax.f32 %v4461, 0.0
      %v4929 = vmax.f32 %v4799, 0.0
      %v4930 = vmax.f32 %v4463, 0.0
      %v4931 = vmax.f32 %v4801, 0.0
      %v4932 = vmax.f32 %v4466, 0.0
      %v4933 = vmax.f32 %v4804, 0.0
      %v4934 = vmax.f32 %v4468, 0.0
      %v4935 = vmax.f32 %v4806, 0.0
      %v4936 = vpack.c.bf16 %v4810, %v4808
      %v4937 = vpack.c.bf16 %v4811, %v4809
      %v4938 = vpack.c.bf16 %v4814, %v4812
      %v4939 = vpack.c.bf16 %v4815, %v4813
      %v4940 = vpack.c.bf16 %v4818, %v4816
      %v4941 = vpack.c.bf16 %v4819, %v4817
      %v4942 = vpack.c.bf16 %v4822, %v4820
      %v4943 = vpack.c.bf16 %v4823, %v4821
      %v4944 = vpack.c.bf16 %v4826, %v4824
      %v4945 = vpack.c.bf16 %v4827, %v4825
      %v4946 = vpack.c.bf16 %v4830, %v4828
      %v4947 = vpack.c.bf16 %v4831, %v4829
      %v4948 = vpack.c.bf16 %v4834, %v4832
      %v4949 = vpack.c.bf16 %v4835, %v4833
      %v4950 = vpack.c.bf16 %v4838, %v4836
      %v4951 = vpack.c.bf16 %v4839, %v4837
      %v4952 = vpack.c.bf16 %v4842, %v4840
      %v4953 = vpack.c.bf16 %v4843, %v4841
      %v4954 = vpack.c.bf16 %v4846, %v4844
      %v4955 = vpack.c.bf16 %v4847, %v4845
      %v4956 = vpack.c.bf16 %v4850, %v4848
      %v4957 = vpack.c.bf16 %v4851, %v4849
      %v4958 = vpack.c.bf16 %v4854, %v4852
      %v4959 = vpack.c.bf16 %v4855, %v4853
      %v4960 = vpack.c.bf16 %v4858, %v4856
      %v4961 = vpack.c.bf16 %v4859, %v4857
      %v4962 = vpack.c.bf16 %v4862, %v4860
      %v4963 = vpack.c.bf16 %v4863, %v4861
      %v4964 = vpack.c.bf16 %v4866, %v4864
      %v4965 = vpack.c.bf16 %v4867, %v4865
      %v4966 = vpack.c.bf16 %v4870, %v4868
      %v4967 = vpack.c.bf16 %v4871, %v4869
      %v4968 = vpack.c.bf16 %v4874, %v4872
      %v4969 = vpack.c.bf16 %v4875, %v4873
      %v4970 = vpack.c.bf16 %v4878, %v4876
      %v4971 = vpack.c.bf16 %v4879, %v4877
      %v4972 = vpack.c.bf16 %v4882, %v4880
      %v4973 = vpack.c.bf16 %v4883, %v4881
      %v4974 = vpack.c.bf16 %v4886, %v4884
      %v4975 = vpack.c.bf16 %v4887, %v4885
      %v4976 = vpack.c.bf16 %v4890, %v4888
      %v4977 = vpack.c.bf16 %v4891, %v4889
      %v4978 = vpack.c.bf16 %v4894, %v4892
      %v4979 = vpack.c.bf16 %v4895, %v4893
      %v4980 = vpack.c.bf16 %v4898, %v4896
      %v4981 = vpack.c.bf16 %v4899, %v4897
      %v4982 = vpack.c.bf16 %v4902, %v4900
      %v4983 = vpack.c.bf16 %v4903, %v4901
      %v4984 = vpack.c.bf16 %v4906, %v4904
      %v4985 = vpack.c.bf16 %v4907, %v4905
      %v4986 = vpack.c.bf16 %v4910, %v4908
      %v4987 = vpack.c.bf16 %v4911, %v4909
      %v4988 = vpack.c.bf16 %v4914, %v4912
      %v4989 = vpack.c.bf16 %v4915, %v4913
      %v4990 = vpack.c.bf16 %v4918, %v4916
      %v4991 = vpack.c.bf16 %v4919, %v4917
      %v4992 = vpack.c.bf16 %v4922, %v4920
      %v4993 = vpack.c.bf16 %v4923, %v4921
      %v4994 = vpack.c.bf16 %v4926, %v4924
      %v4995 = vpack.c.bf16 %v4927, %v4925
      %v4996 = vpack.c.bf16 %v4930, %v4928
      %v4997 = vpack.c.bf16 %v4931, %v4929
      %v4998 = vpack.c.bf16 %v4934, %v4932
      %v4999 = vpack.c.bf16 %v4935, %v4933
      %s5000 = scalar_lea.vmem %s5, 768
      %v5001 = vld [vmem:[%s5000] sm:$0xff]
      %v5002 = vld [vmem:[%s5000 + $0x8] sm:$0xff]
      %v5003 = vld [vmem:[%s5000 + $0x10] sm:$0xff]
      %v5004 = vld [vmem:[%s5000 + $0x18] sm:$0xff]
      %v5005 = vld [vmem:[%s5000 + $0x20] sm:$0xff]
      %v5006 = vld [vmem:[%s5000 + $0x28] sm:$0xff]
      %v5007 = vld [vmem:[%s5000 + $0x30] sm:$0xff]
      %v5008 = vld [vmem:[%s5000 + $0x38] sm:$0xff]
      %v5009 = vld [vmem:[%s5000 + $0x40] sm:$0xff]
      %v5010 = vld [vmem:[%s5000 + $0x48] sm:$0xff]
      %v5011 = vld [vmem:[%s5000 + $0x50] sm:$0xff]
      %v5012 = vld [vmem:[%s5000 + $0x58] sm:$0xff]
      %v5013 = vld [vmem:[%s5000 + $0x60] sm:$0xff]
      %v5014 = vld [vmem:[%s5000 + $0x68] sm:$0xff]
      %v5015 = vld [vmem:[%s5000 + $0x70] sm:$0xff]
      %v5016 = vld [vmem:[%s5000 + $0x78] sm:$0xff]
      %v5017 = vld [vmem:[%s5000 + $0x80] sm:$0xff]
      %v5018 = vld [vmem:[%s5000 + $0x88] sm:$0xff]
      %v5019 = vld [vmem:[%s5000 + $0x90] sm:$0xff]
      %v5020 = vld [vmem:[%s5000 + $0x98] sm:$0xff]
      %v5021 = vld [vmem:[%s5000 + $0xa0] sm:$0xff]
      %v5022 = vld [vmem:[%s5000 + $0xa8] sm:$0xff]
      %v5023 = vld [vmem:[%s5000 + $0xb0] sm:$0xff]
      %v5024 = vld [vmem:[%s5000 + $0xb8] sm:$0xff]
      %v5025 = vld [vmem:[%s5000 + $0xc0] sm:$0xff]
      %v5026 = vld [vmem:[%s5000 + $0xc8] sm:$0xff]
      %v5027 = vld [vmem:[%s5000 + $0xd0] sm:$0xff]
      %v5028 = vld [vmem:[%s5000 + $0xd8] sm:$0xff]
      %v5029 = vld [vmem:[%s5000 + $0xe0] sm:$0xff]
      %v5030 = vld [vmem:[%s5000 + $0xe8] sm:$0xff]
      %v5031 = vld [vmem:[%s5000 + $0xf0] sm:$0xff]
      %v5032 = vld [vmem:[%s5000 + $0xf8] sm:$0xff]
      %s5033 = scalar_lea.vmem %s6, 6
      %v5034 = vld [vmem:[%s5033] sm:$0x3]
      %v5036 = vperm.slane %v5034, 0
      %v5037 = vperm.slane %v5034, 1
      %v5072 = vunpack.c.l.b16 %v5001
      %v5073 = vunpack.c.h.b16 %v5001
      %v5074 = vunpack.c.l.b16 %v5002
      %v5075 = vunpack.c.h.b16 %v5002
      %v5076 = vunpack.c.l.b16 %v5003
      %v5077 = vunpack.c.h.b16 %v5003
      %v5078 = vunpack.c.l.b16 %v5004
      %v5079 = vunpack.c.h.b16 %v5004
      %v5080 = vunpack.c.l.b16 %v5005
      %v5081 = vunpack.c.h.b16 %v5005
      %v5082 = vunpack.c.l.b16 %v5006
      %v5083 = vunpack.c.h.b16 %v5006
      %v5084 = vunpack.c.l.b16 %v5007
      %v5085 = vunpack.c.h.b16 %v5007
      %v5086 = vunpack.c.l.b16 %v5008
      %v5087 = vunpack.c.h.b16 %v5008
      %v5088 = vunpack.c.l.b16 %v5009
      %v5089 = vunpack.c.h.b16 %v5009
      %v5090 = vunpack.c.l.b16 %v5010
      %v5091 = vunpack.c.h.b16 %v5010
      %v5092 = vunpack.c.l.b16 %v5011
      %v5093 = vunpack.c.h.b16 %v5011
      %v5094 = vunpack.c.l.b16 %v5012
      %v5095 = vunpack.c.h.b16 %v5012
      %v5096 = vunpack.c.l.b16 %v5013
      %v5097 = vunpack.c.h.b16 %v5013
      %v5098 = vunpack.c.l.b16 %v5014
      %v5099 = vunpack.c.h.b16 %v5014
      %v5100 = vunpack.c.l.b16 %v5015
      %v5101 = vunpack.c.h.b16 %v5015
      %v5102 = vunpack.c.l.b16 %v5016
      %v5103 = vunpack.c.h.b16 %v5016
      %v5104 = vunpack.c.l.b16 %v5017
      %v5105 = vunpack.c.h.b16 %v5017
      %v5106 = vunpack.c.l.b16 %v5018
      %v5107 = vunpack.c.h.b16 %v5018
      %v5108 = vunpack.c.l.b16 %v5019
      %v5109 = vunpack.c.h.b16 %v5019
      %v5110 = vunpack.c.l.b16 %v5020
      %v5111 = vunpack.c.h.b16 %v5020
      %v5112 = vunpack.c.l.b16 %v5021
      %v5113 = vunpack.c.h.b16 %v5021
      %v5114 = vunpack.c.l.b16 %v5022
      %v5115 = vunpack.c.h.b16 %v5022
      %v5116 = vunpack.c.l.b16 %v5023
      %v5117 = vunpack.c.h.b16 %v5023
      %v5118 = vunpack.c.l.b16 %v5024
      %v5119 = vunpack.c.h.b16 %v5024
      %v5120 = vunpack.c.l.b16 %v5025
      %v5121 = vunpack.c.h.b16 %v5025
      %v5122 = vunpack.c.l.b16 %v5026
      %v5123 = vunpack.c.h.b16 %v5026
      %v5124 = vunpack.c.l.b16 %v5027
      %v5125 = vunpack.c.h.b16 %v5027
      %v5126 = vunpack.c.l.b16 %v5028
      %v5127 = vunpack.c.h.b16 %v5028
      %v5128 = vunpack.c.l.b16 %v5029
      %v5129 = vunpack.c.h.b16 %v5029
      %v5130 = vunpack.c.l.b16 %v5030
      %v5131 = vunpack.c.h.b16 %v5030
      %v5132 = vunpack.c.l.b16 %v5031
      %v5133 = vunpack.c.h.b16 %v5031
      %v5134 = vunpack.c.l.b16 %v5032
      %v5135 = vunpack.c.h.b16 %v5032
      %v5136 = vpack.c.b16 %v5074, %v5072
      %v5137 = vpack.c.b16 %v5075, %v5073
      %v5138 = vpack.c.b16 %v5078, %v5076
      %v5139 = vpack.c.b16 %v5079, %v5077
      %v5140 = vpack.c.b16 %v5082, %v5080
      %v5141 = vpack.c.b16 %v5083, %v5081
      %v5142 = vpack.c.b16 %v5086, %v5084
      %v5143 = vpack.c.b16 %v5087, %v5085
      %v5144 = vpack.c.b16 %v5090, %v5088
      %v5145 = vpack.c.b16 %v5091, %v5089
      %v5146 = vpack.c.b16 %v5094, %v5092
      %v5147 = vpack.c.b16 %v5095, %v5093
      %v5148 = vpack.c.b16 %v5098, %v5096
      %v5149 = vpack.c.b16 %v5099, %v5097
      %v5150 = vpack.c.b16 %v5102, %v5100
      %v5151 = vpack.c.b16 %v5103, %v5101
      %v5152 = vpack.c.b16 %v5106, %v5104
      %v5153 = vpack.c.b16 %v5107, %v5105
      %v5154 = vpack.c.b16 %v5110, %v5108
      %v5155 = vpack.c.b16 %v5111, %v5109
      %v5156 = vpack.c.b16 %v5114, %v5112
      %v5157 = vpack.c.b16 %v5115, %v5113
      %v5158 = vpack.c.b16 %v5118, %v5116
      %v5159 = vpack.c.b16 %v5119, %v5117
      %v5160 = vpack.c.b16 %v5122, %v5120
      %v5161 = vpack.c.b16 %v5123, %v5121
      %v5162 = vpack.c.b16 %v5126, %v5124
      %v5163 = vpack.c.b16 %v5127, %v5125
      %v5164 = vpack.c.b16 %v5130, %v5128
      %v5165 = vpack.c.b16 %v5131, %v5129
      %v5166 = vpack.c.b16 %v5134, %v5132
      %v5167 = vpack.c.b16 %v5135, %v5133
      %5200 = vmatpush.bf16.msra.mxu0 %v5150
      %5201 = vmatpush.bf16.msra.mxu0 %v5148
      %5202 = vmatpush.bf16.msra.mxu0 %v5146
      %5203 = vmatpush.bf16.msra.mxu0 %v5144
      %5204 = vmatpush.bf16.msra.mxu0 %v5142
      %5205 = vmatpush.bf16.msra.mxu0 %v5140
      %5206 = vmatpush.bf16.msra.mxu0 %v5138
      %5207 = vmatpush.bf16.msra.mxu0 %v5136
      %5208 = vmatmul.bf16.gmra.mxu0 %v4936
      %v5209 = vpop.f32.mrf.mxu0
      %v5210 = vadd.f32 %v5036, %v5209
      %v5211 = vpop.f32.mrf.mxu0
      %v5212 = vadd.f32 %v5036, %v5211
      %5213 = vmatmul.bf16.gmra.mxu0 %v4938
      %v5214 = vpop.f32.mrf.mxu0
      %v5215 = vadd.f32 %v5036, %v5214
      %v5216 = vpop.f32.mrf.mxu0
      %v5217 = vadd.f32 %v5036, %v5216
      %5218 = vmatmul.bf16.gmra.mxu0 %v4940
      %v5219 = vpop.f32.mrf.mxu0
      %v5220 = vadd.f32 %v5036, %v5219
      %v5221 = vpop.f32.mrf.mxu0
      %v5222 = vadd.f32 %v5036, %v5221
      %5223 = vmatmul.bf16.gmra.mxu0 %v4942
      %v5224 = vpop.f32.mrf.mxu0
      %v5225 = vadd.f32 %v5036, %v5224
      %v5226 = vpop.f32.mrf.mxu0
      %v5227 = vadd.f32 %v5036, %v5226
      %5228 = vmatmul.bf16.gmra.mxu0 %v4944
      %v5229 = vpop.f32.mrf.mxu0
      %v5230 = vadd.f32 %v5036, %v5229
      %v5231 = vpop.f32.mrf.mxu0
      %v5232 = vadd.f32 %v5036, %v5231
      %5233 = vmatmul.bf16.gmra.mxu0 %v4946
      %v5234 = vpop.f32.mrf.mxu0
      %v5235 = vadd.f32 %v5036, %v5234
      %v5236 = vpop.f32.mrf.mxu0
      %v5237 = vadd.f32 %v5036, %v5236
      %5238 = vmatmul.bf16.gmra.mxu0 %v4948
      %v5239 = vpop.f32.mrf.mxu0
      %v5240 = vadd.f32 %v5036, %v5239
      %v5241 = vpop.f32.mrf.mxu0
      %v5242 = vadd.f32 %v5036, %v5241
      %5243 = vmatmul.bf16.gmra.mxu0 %v4950
      %v5244 = vpop.f32.mrf.mxu0
      %v5245 = vadd.f32 %v5036, %v5244
      %v5246 = vpop.f32.mrf.mxu0
      %v5247 = vadd.f32 %v5036, %v5246
      %5248 = vmatmul.bf16.gmra.mxu0 %v4952
      %v5249 = vpop.f32.mrf.mxu0
      %v5250 = vadd.f32 %v5036, %v5249
      %v5251 = vpop.f32.mrf.mxu0
      %v5252 = vadd.f32 %v5036, %v5251
      %5253 = vmatmul.bf16.gmra.mxu0 %v4954
      %v5254 = vpop.f32.mrf.mxu0
      %v5255 = vadd.f32 %v5036, %v5254
      %v5256 = vpop.f32.mrf.mxu0
      %v5257 = vadd.f32 %v5036, %v5256
      %5258 = vmatmul.bf16.gmra.mxu0 %v4956
      %v5259 = vpop.f32.mrf.mxu0
      %v5260 = vadd.f32 %v5036, %v5259
      %v5261 = vpop.f32.mrf.mxu0
      %v5262 = vadd.f32 %v5036, %v5261
      %5263 = vmatmul.bf16.gmra.mxu0 %v4958
      %v5264 = vpop.f32.mrf.mxu0
      %v5265 = vadd.f32 %v5036, %v5264
      %v5266 = vpop.f32.mrf.mxu0
      %v5267 = vadd.f32 %v5036, %v5266
      %5268 = vmatmul.bf16.gmra.mxu0 %v4960
      %v5269 = vpop.f32.mrf.mxu0
      %v5270 = vadd.f32 %v5036, %v5269
      %v5271 = vpop.f32.mrf.mxu0
      %v5272 = vadd.f32 %v5036, %v5271
      %5273 = vmatmul.bf16.gmra.mxu0 %v4962
      %v5274 = vpop.f32.mrf.mxu0
      %v5275 = vadd.f32 %v5036, %v5274
      %v5276 = vpop.f32.mrf.mxu0
      %v5277 = vadd.f32 %v5036, %v5276
      %5278 = vmatmul.bf16.gmra.mxu0 %v4964
      %v5279 = vpop.f32.mrf.mxu0
      %v5280 = vadd.f32 %v5036, %v5279
      %v5281 = vpop.f32.mrf.mxu0
      %v5282 = vadd.f32 %v5036, %v5281
      %5283 = vmatmul.bf16.gmra.mxu0 %v4966
      %v5284 = vpop.f32.mrf.mxu0
      %v5285 = vadd.f32 %v5036, %v5284
      %v5286 = vpop.f32.mrf.mxu0
      %v5287 = vadd.f32 %v5036, %v5286
      %5288 = vmatmul.bf16.gmra.mxu0 %v4968
      %v5289 = vpop.f32.mrf.mxu0
      %v5290 = vadd.f32 %v5036, %v5289
      %v5291 = vpop.f32.mrf.mxu0
      %v5292 = vadd.f32 %v5036, %v5291
      %5293 = vmatmul.bf16.gmra.mxu0 %v4970
      %v5294 = vpop.f32.mrf.mxu0
      %v5295 = vadd.f32 %v5036, %v5294
      %v5296 = vpop.f32.mrf.mxu0
      %v5297 = vadd.f32 %v5036, %v5296
      %5298 = vmatmul.bf16.gmra.mxu0 %v4972
      %v5299 = vpop.f32.mrf.mxu0
      %v5300 = vadd.f32 %v5036, %v5299
      %v5301 = vpop.f32.mrf.mxu0
      %v5302 = vadd.f32 %v5036, %v5301
      %5303 = vmatmul.bf16.gmra.mxu0 %v4974
      %v5304 = vpop.f32.mrf.mxu0
      %v5305 = vadd.f32 %v5036, %v5304
      %v5306 = vpop.f32.mrf.mxu0
      %v5307 = vadd.f32 %v5036, %v5306
      %5308 = vmatmul.bf16.gmra.mxu0 %v4976
      %v5309 = vpop.f32.mrf.mxu0
      %v5310 = vadd.f32 %v5036, %v5309
      %v5311 = vpop.f32.mrf.mxu0
      %v5312 = vadd.f32 %v5036, %v5311
      %5313 = vmatmul.bf16.gmra.mxu0 %v4978
      %v5314 = vpop.f32.mrf.mxu0
      %v5315 = vadd.f32 %v5036, %v5314
      %v5316 = vpop.f32.mrf.mxu0
      %v5317 = vadd.f32 %v5036, %v5316
      %5318 = vmatmul.bf16.gmra.mxu0 %v4980
      %v5319 = vpop.f32.mrf.mxu0
      %v5320 = vadd.f32 %v5036, %v5319
      %v5321 = vpop.f32.mrf.mxu0
      %v5322 = vadd.f32 %v5036, %v5321
      %5323 = vmatmul.bf16.gmra.mxu0 %v4982
      %v5324 = vpop.f32.mrf.mxu0
      %v5325 = vadd.f32 %v5036, %v5324
      %v5326 = vpop.f32.mrf.mxu0
      %v5327 = vadd.f32 %v5036, %v5326
      %5328 = vmatmul.bf16.gmra.mxu0 %v4984
      %v5329 = vpop.f32.mrf.mxu0
      %v5330 = vadd.f32 %v5036, %v5329
      %v5331 = vpop.f32.mrf.mxu0
      %v5332 = vadd.f32 %v5036, %v5331
      %5333 = vmatmul.bf16.gmra.mxu0 %v4986
      %v5334 = vpop.f32.mrf.mxu0
      %v5335 = vadd.f32 %v5036, %v5334
      %v5336 = vpop.f32.mrf.mxu0
      %v5337 = vadd.f32 %v5036, %v5336
      %5338 = vmatmul.bf16.gmra.mxu0 %v4988
      %v5339 = vpop.f32.mrf.mxu0
      %v5340 = vadd.f32 %v5036, %v5339
      %v5341 = vpop.f32.mrf.mxu0
      %v5342 = vadd.f32 %v5036, %v5341
      %5343 = vmatmul.bf16.gmra.mxu0 %v4990
      %v5344 = vpop.f32.mrf.mxu0
      %v5345 = vadd.f32 %v5036, %v5344
      %v5346 = vpop.f32.mrf.mxu0
      %v5347 = vadd.f32 %v5036, %v5346
      %5348 = vmatmul.bf16.gmra.mxu0 %v4992
      %v5349 = vpop.f32.mrf.mxu0
      %v5350 = vadd.f32 %v5036, %v5349
      %v5351 = vpop.f32.mrf.mxu0
      %v5352 = vadd.f32 %v5036, %v5351
      %5353 = vmatmul.bf16.gmra.mxu0 %v4994
      %v5354 = vpop.f32.mrf.mxu0
      %v5355 = vadd.f32 %v5036, %v5354
      %v5356 = vpop.f32.mrf.mxu0
      %v5357 = vadd.f32 %v5036, %v5356
      %5358 = vmatmul.bf16.gmra.mxu0 %v4996
      %v5359 = vpop.f32.mrf.mxu0
      %v5360 = vadd.f32 %v5036, %v5359
      %v5361 = vpop.f32.mrf.mxu0
      %v5362 = vadd.f32 %v5036, %v5361
      %5363 = vmatmul.bf16.gmra.mxu0 %v4998
      %v5364 = vpop.f32.mrf.mxu0
      %v5365 = vadd.f32 %v5036, %v5364
      %v5366 = vpop.f32.mrf.mxu0
      %v5367 = vadd.f32 %v5036, %v5366
      %5368 = vdwg.mxu0
      %5369 = vmatpush.bf16.msra.mxu0 %v5166
      %5370 = vmatpush.bf16.msra.mxu0 %v5164
      %5371 = vmatpush.bf16.msra.mxu0 %v5162
      %5372 = vmatpush.bf16.msra.mxu0 %v5160
      %5373 = vmatpush.bf16.msra.mxu0 %v5158
      %5374 = vmatpush.bf16.msra.mxu0 %v5156
      %5375 = vmatpush.bf16.msra.mxu0 %v5154
      %5376 = vmatpush.bf16.msra.mxu0 %v5152
      %5377 = vmatmul.bf16.gmra.mxu0 %v4937
      %v5378 = vpop.f32.mrf.mxu0
      %v5379 = vadd.f32 %v5210, %v5378
      %v5380 = vpop.f32.mrf.mxu0
      %v5381 = vadd.f32 %v5212, %v5380
      %5382 = vmatmul.bf16.gmra.mxu0 %v4939
      %v5383 = vpop.f32.mrf.mxu0
      %v5384 = vadd.f32 %v5215, %v5383
      %v5385 = vpop.f32.mrf.mxu0
      %v5386 = vadd.f32 %v5217, %v5385
      %5387 = vmatmul.bf16.gmra.mxu0 %v4941
      %v5388 = vpop.f32.mrf.mxu0
      %v5389 = vadd.f32 %v5220, %v5388
      %v5390 = vpop.f32.mrf.mxu0
      %v5391 = vadd.f32 %v5222, %v5390
      %5392 = vmatmul.bf16.gmra.mxu0 %v4943
      %v5393 = vpop.f32.mrf.mxu0
      %v5394 = vadd.f32 %v5225, %v5393
      %v5395 = vpop.f32.mrf.mxu0
      %v5396 = vadd.f32 %v5227, %v5395
      %5397 = vmatmul.bf16.gmra.mxu0 %v4945
      %v5398 = vpop.f32.mrf.mxu0
      %v5399 = vadd.f32 %v5230, %v5398
      %v5400 = vpop.f32.mrf.mxu0
      %v5401 = vadd.f32 %v5232, %v5400
      %5402 = vmatmul.bf16.gmra.mxu0 %v4947
      %v5403 = vpop.f32.mrf.mxu0
      %v5404 = vadd.f32 %v5235, %v5403
      %v5405 = vpop.f32.mrf.mxu0
      %v5406 = vadd.f32 %v5237, %v5405
      %5407 = vmatmul.bf16.gmra.mxu0 %v4949
      %v5408 = vpop.f32.mrf.mxu0
      %v5409 = vadd.f32 %v5240, %v5408
      %v5410 = vpop.f32.mrf.mxu0
      %v5411 = vadd.f32 %v5242, %v5410
      %5412 = vmatmul.bf16.gmra.mxu0 %v4951
      %v5413 = vpop.f32.mrf.mxu0
      %v5414 = vadd.f32 %v5245, %v5413
      %v5415 = vpop.f32.mrf.mxu0
      %v5416 = vadd.f32 %v5247, %v5415
      %5417 = vmatmul.bf16.gmra.mxu0 %v4953
      %v5418 = vpop.f32.mrf.mxu0
      %v5419 = vadd.f32 %v5250, %v5418
      %v5420 = vpop.f32.mrf.mxu0
      %v5421 = vadd.f32 %v5252, %v5420
      %5422 = vmatmul.bf16.gmra.mxu0 %v4955
      %v5423 = vpop.f32.mrf.mxu0
      %v5424 = vadd.f32 %v5255, %v5423
      %v5425 = vpop.f32.mrf.mxu0
      %v5426 = vadd.f32 %v5257, %v5425
      %5427 = vmatmul.bf16.gmra.mxu0 %v4957
      %v5428 = vpop.f32.mrf.mxu0
      %v5429 = vadd.f32 %v5260, %v5428
      %v5430 = vpop.f32.mrf.mxu0
      %v5431 = vadd.f32 %v5262, %v5430
      %5432 = vmatmul.bf16.gmra.mxu0 %v4959
      %v5433 = vpop.f32.mrf.mxu0
      %v5434 = vadd.f32 %v5265, %v5433
      %v5435 = vpop.f32.mrf.mxu0
      %v5436 = vadd.f32 %v5267, %v5435
      %5437 = vmatmul.bf16.gmra.mxu0 %v4961
      %v5438 = vpop.f32.mrf.mxu0
      %v5439 = vadd.f32 %v5270, %v5438
      %v5440 = vpop.f32.mrf.mxu0
      %v5441 = vadd.f32 %v5272, %v5440
      %5442 = vmatmul.bf16.gmra.mxu0 %v4963
      %v5443 = vpop.f32.mrf.mxu0
      %v5444 = vadd.f32 %v5275, %v5443
      %v5445 = vpop.f32.mrf.mxu0
      %v5446 = vadd.f32 %v5277, %v5445
      %5447 = vmatmul.bf16.gmra.mxu0 %v4965
      %v5448 = vpop.f32.mrf.mxu0
      %v5449 = vadd.f32 %v5280, %v5448
      %v5450 = vpop.f32.mrf.mxu0
      %v5451 = vadd.f32 %v5282, %v5450
      %5452 = vmatmul.bf16.gmra.mxu0 %v4967
      %v5453 = vpop.f32.mrf.mxu0
      %v5454 = vadd.f32 %v5285, %v5453
      %v5455 = vpop.f32.mrf.mxu0
      %v5456 = vadd.f32 %v5287, %v5455
      %5457 = vmatmul.bf16.gmra.mxu0 %v4969
      %v5458 = vpop.f32.mrf.mxu0
      %v5459 = vadd.f32 %v5290, %v5458
      %v5460 = vpop.f32.mrf.mxu0
      %v5461 = vadd.f32 %v5292, %v5460
      %5462 = vmatmul.bf16.gmra.mxu0 %v4971
      %v5463 = vpop.f32.mrf.mxu0
      %v5464 = vadd.f32 %v5295, %v5463
      %v5465 = vpop.f32.mrf.mxu0
      %v5466 = vadd.f32 %v5297, %v5465
      %5467 = vmatmul.bf16.gmra.mxu0 %v4973
      %v5468 = vpop.f32.mrf.mxu0
      %v5469 = vadd.f32 %v5300, %v5468
      %v5470 = vpop.f32.mrf.mxu0
      %v5471 = vadd.f32 %v5302, %v5470
      %5472 = vmatmul.bf16.gmra.mxu0 %v4975
      %v5473 = vpop.f32.mrf.mxu0
      %v5474 = vadd.f32 %v5305, %v5473
      %v5475 = vpop.f32.mrf.mxu0
      %v5476 = vadd.f32 %v5307, %v5475
      %5477 = vmatmul.bf16.gmra.mxu0 %v4977
      %v5478 = vpop.f32.mrf.mxu0
      %v5479 = vadd.f32 %v5310, %v5478
      %v5480 = vpop.f32.mrf.mxu0
      %v5481 = vadd.f32 %v5312, %v5480
      %5482 = vmatmul.bf16.gmra.mxu0 %v4979
      %v5483 = vpop.f32.mrf.mxu0
      %v5484 = vadd.f32 %v5315, %v5483
      %v5485 = vpop.f32.mrf.mxu0
      %v5486 = vadd.f32 %v5317, %v5485
      %5487 = vmatmul.bf16.gmra.mxu0 %v4981
      %v5488 = vpop.f32.mrf.mxu0
      %v5489 = vadd.f32 %v5320, %v5488
      %v5490 = vpop.f32.mrf.mxu0
      %v5491 = vadd.f32 %v5322, %v5490
      %5492 = vmatmul.bf16.gmra.mxu0 %v4983
      %v5493 = vpop.f32.mrf.mxu0
      %v5494 = vadd.f32 %v5325, %v5493
      %v5495 = vpop.f32.mrf.mxu0
      %v5496 = vadd.f32 %v5327, %v5495
      %5497 = vmatmul.bf16.gmra.mxu0 %v4985
      %v5498 = vpop.f32.mrf.mxu0
      %v5499 = vadd.f32 %v5330, %v5498
      %v5500 = vpop.f32.mrf.mxu0
      %v5501 = vadd.f32 %v5332, %v5500
      %5502 = vmatmul.bf16.gmra.mxu0 %v4987
      %v5503 = vpop.f32.mrf.mxu0
      %v5504 = vadd.f32 %v5335, %v5503
      %v5505 = vpop.f32.mrf.mxu0
      %v5506 = vadd.f32 %v5337, %v5505
      %5507 = vmatmul.bf16.gmra.mxu0 %v4989
      %v5508 = vpop.f32.mrf.mxu0
      %v5509 = vadd.f32 %v5340, %v5508
      %v5510 = vpop.f32.mrf.mxu0
      %v5511 = vadd.f32 %v5342, %v5510
      %5512 = vmatmul.bf16.gmra.mxu0 %v4991
      %v5513 = vpop.f32.mrf.mxu0
      %v5514 = vadd.f32 %v5345, %v5513
      %v5515 = vpop.f32.mrf.mxu0
      %v5516 = vadd.f32 %v5347, %v5515
      %5517 = vmatmul.bf16.gmra.mxu0 %v4993
      %v5518 = vpop.f32.mrf.mxu0
      %v5519 = vadd.f32 %v5350, %v5518
      %v5520 = vpop.f32.mrf.mxu0
      %v5521 = vadd.f32 %v5352, %v5520
      %5522 = vmatmul.bf16.gmra.mxu0 %v4995
      %v5523 = vpop.f32.mrf.mxu0
      %v5524 = vadd.f32 %v5355, %v5523
      %v5525 = vpop.f32.mrf.mxu0
      %v5526 = vadd.f32 %v5357, %v5525
      %5527 = vmatmul.bf16.gmra.mxu0 %v4997
      %v5528 = vpop.f32.mrf.mxu0
      %v5529 = vadd.f32 %v5360, %v5528
      %v5530 = vpop.f32.mrf.mxu0
      %v5531 = vadd.f32 %v5362, %v5530
      %5532 = vmatmul.bf16.gmra.mxu0 %v4999
      %v5533 = vpop.f32.mrf.mxu0
      %v5534 = vadd.f32 %v5365, %v5533
      %v5535 = vpop.f32.mrf.mxu0
      %v5536 = vadd.f32 %v5367, %v5535
      %5537 = vdwg.mxu0
      %5538 = vmatpush.bf16.msra.mxu0 %v5151
      %5539 = vmatpush.bf16.msra.mxu0 %v5149
      %5540 = vmatpush.bf16.msra.mxu0 %v5147
      %5541 = vmatpush.bf16.msra.mxu0 %v5145
      %5542 = vmatpush.bf16.msra.mxu0 %v5143
      %5543 = vmatpush.bf16.msra.mxu0 %v5141
      %5544 = vmatpush.bf16.msra.mxu0 %v5139
      %5545 = vmatpush.bf16.msra.mxu0 %v5137
      %5546 = vmatmul.bf16.gmra.mxu0 %v4936
      %v5547 = vpop.f32.mrf.mxu0
      %v5548 = vadd.f32 %v5037, %v5547
      %v5549 = vpop.f32.mrf.mxu0
      %v5550 = vadd.f32 %v5037, %v5549
      %5551 = vmatmul.bf16.gmra.mxu0 %v4938
      %v5552 = vpop.f32.mrf.mxu0
      %v5553 = vadd.f32 %v5037, %v5552
      %v5554 = vpop.f32.mrf.mxu0
      %v5555 = vadd.f32 %v5037, %v5554
      %5556 = vmatmul.bf16.gmra.mxu0 %v4940
      %v5557 = vpop.f32.mrf.mxu0
      %v5558 = vadd.f32 %v5037, %v5557
      %v5559 = vpop.f32.mrf.mxu0
      %v5560 = vadd.f32 %v5037, %v5559
      %5561 = vmatmul.bf16.gmra.mxu0 %v4942
      %v5562 = vpop.f32.mrf.mxu0
      %v5563 = vadd.f32 %v5037, %v5562
      %v5564 = vpop.f32.mrf.mxu0
      %v5565 = vadd.f32 %v5037, %v5564
      %5566 = vmatmul.bf16.gmra.mxu0 %v4944
      %v5567 = vpop.f32.mrf.mxu0
      %v5568 = vadd.f32 %v5037, %v5567
      %v5569 = vpop.f32.mrf.mxu0
      %v5570 = vadd.f32 %v5037, %v5569
      %5571 = vmatmul.bf16.gmra.mxu0 %v4946
      %v5572 = vpop.f32.mrf.mxu0
      %v5573 = vadd.f32 %v5037, %v5572
      %v5574 = vpop.f32.mrf.mxu0
      %v5575 = vadd.f32 %v5037, %v5574
      %5576 = vmatmul.bf16.gmra.mxu0 %v4948
      %v5577 = vpop.f32.mrf.mxu0
      %v5578 = vadd.f32 %v5037, %v5577
      %v5579 = vpop.f32.mrf.mxu0
      %v5580 = vadd.f32 %v5037, %v5579
      %5581 = vmatmul.bf16.gmra.mxu0 %v4950
      %v5582 = vpop.f32.mrf.mxu0
      %v5583 = vadd.f32 %v5037, %v5582
      %v5584 = vpop.f32.mrf.mxu0
      %v5585 = vadd.f32 %v5037, %v5584
      %5586 = vmatmul.bf16.gmra.mxu0 %v4952
      %v5587 = vpop.f32.mrf.mxu0
      %v5588 = vadd.f32 %v5037, %v5587
      %v5589 = vpop.f32.mrf.mxu0
      %v5590 = vadd.f32 %v5037, %v5589
      %5591 = vmatmul.bf16.gmra.mxu0 %v4954
      %v5592 = vpop.f32.mrf.mxu0
      %v5593 = vadd.f32 %v5037, %v5592
      %v5594 = vpop.f32.mrf.mxu0
      %v5595 = vadd.f32 %v5037, %v5594
      %5596 = vmatmul.bf16.gmra.mxu0 %v4956
      %v5597 = vpop.f32.mrf.mxu0
      %v5598 = vadd.f32 %v5037, %v5597
      %v5599 = vpop.f32.mrf.mxu0
      %v5600 = vadd.f32 %v5037, %v5599
      %5601 = vmatmul.bf16.gmra.mxu0 %v4958
      %v5602 = vpop.f32.mrf.mxu0
      %v5603 = vadd.f32 %v5037, %v5602
      %v5604 = vpop.f32.mrf.mxu0
      %v5605 = vadd.f32 %v5037, %v5604
      %5606 = vmatmul.bf16.gmra.mxu0 %v4960
      %v5607 = vpop.f32.mrf.mxu0
      %v5608 = vadd.f32 %v5037, %v5607
      %v5609 = vpop.f32.mrf.mxu0
      %v5610 = vadd.f32 %v5037, %v5609
      %5611 = vmatmul.bf16.gmra.mxu0 %v4962
      %v5612 = vpop.f32.mrf.mxu0
      %v5613 = vadd.f32 %v5037, %v5612
      %v5614 = vpop.f32.mrf.mxu0
      %v5615 = vadd.f32 %v5037, %v5614
      %5616 = vmatmul.bf16.gmra.mxu0 %v4964
      %v5617 = vpop.f32.mrf.mxu0
      %v5618 = vadd.f32 %v5037, %v5617
      %v5619 = vpop.f32.mrf.mxu0
      %v5620 = vadd.f32 %v5037, %v5619
      %5621 = vmatmul.bf16.gmra.mxu0 %v4966
      %v5622 = vpop.f32.mrf.mxu0
      %v5623 = vadd.f32 %v5037, %v5622
      %v5624 = vpop.f32.mrf.mxu0
      %v5625 = vadd.f32 %v5037, %v5624
      %5626 = vmatmul.bf16.gmra.mxu0 %v4968
      %v5627 = vpop.f32.mrf.mxu0
      %v5628 = vadd.f32 %v5037, %v5627
      %v5629 = vpop.f32.mrf.mxu0
      %v5630 = vadd.f32 %v5037, %v5629
      %5631 = vmatmul.bf16.gmra.mxu0 %v4970
      %v5632 = vpop.f32.mrf.mxu0
      %v5633 = vadd.f32 %v5037, %v5632
      %v5634 = vpop.f32.mrf.mxu0
      %v5635 = vadd.f32 %v5037, %v5634
      %5636 = vmatmul.bf16.gmra.mxu0 %v4972
      %v5637 = vpop.f32.mrf.mxu0
      %v5638 = vadd.f32 %v5037, %v5637
      %v5639 = vpop.f32.mrf.mxu0
      %v5640 = vadd.f32 %v5037, %v5639
      %5641 = vmatmul.bf16.gmra.mxu0 %v4974
      %v5642 = vpop.f32.mrf.mxu0
      %v5643 = vadd.f32 %v5037, %v5642
      %v5644 = vpop.f32.mrf.mxu0
      %v5645 = vadd.f32 %v5037, %v5644
      %5646 = vmatmul.bf16.gmra.mxu0 %v4976
      %v5647 = vpop.f32.mrf.mxu0
      %v5648 = vadd.f32 %v5037, %v5647
      %v5649 = vpop.f32.mrf.mxu0
      %v5650 = vadd.f32 %v5037, %v5649
      %5651 = vmatmul.bf16.gmra.mxu0 %v4978
      %v5652 = vpop.f32.mrf.mxu0
      %v5653 = vadd.f32 %v5037, %v5652
      %v5654 = vpop.f32.mrf.mxu0
      %v5655 = vadd.f32 %v5037, %v5654
      %5656 = vmatmul.bf16.gmra.mxu0 %v4980
      %v5657 = vpop.f32.mrf.mxu0
      %v5658 = vadd.f32 %v5037, %v5657
      %v5659 = vpop.f32.mrf.mxu0
      %v5660 = vadd.f32 %v5037, %v5659
      %5661 = vmatmul.bf16.gmra.mxu0 %v4982
      %v5662 = vpop.f32.mrf.mxu0
      %v5663 = vadd.f32 %v5037, %v5662
      %v5664 = vpop.f32.mrf.mxu0
      %v5665 = vadd.f32 %v5037, %v5664
      %5666 = vmatmul.bf16.gmra.mxu0 %v4984
      %v5667 = vpop.f32.mrf.mxu0
      %v5668 = vadd.f32 %v5037, %v5667
      %v5669 = vpop.f32.mrf.mxu0
      %v5670 = vadd.f32 %v5037, %v5669
      %5671 = vmatmul.bf16.gmra.mxu0 %v4986
      %v5672 = vpop.f32.mrf.mxu0
      %v5673 = vadd.f32 %v5037, %v5672
      %v5674 = vpop.f32.mrf.mxu0
      %v5675 = vadd.f32 %v5037, %v5674
      %5676 = vmatmul.bf16.gmra.mxu0 %v4988
      %v5677 = vpop.f32.mrf.mxu0
      %v5678 = vadd.f32 %v5037, %v5677
      %v5679 = vpop.f32.mrf.mxu0
      %v5680 = vadd.f32 %v5037, %v5679
      %5681 = vmatmul.bf16.gmra.mxu0 %v4990
      %v5682 = vpop.f32.mrf.mxu0
      %v5683 = vadd.f32 %v5037, %v5682
      %v5684 = vpop.f32.mrf.mxu0
      %v5685 = vadd.f32 %v5037, %v5684
      %5686 = vmatmul.bf16.gmra.mxu0 %v4992
      %v5687 = vpop.f32.mrf.mxu0
      %v5688 = vadd.f32 %v5037, %v5687
      %v5689 = vpop.f32.mrf.mxu0
      %v5690 = vadd.f32 %v5037, %v5689
      %5691 = vmatmul.bf16.gmra.mxu0 %v4994
      %v5692 = vpop.f32.mrf.mxu0
      %v5693 = vadd.f32 %v5037, %v5692
      %v5694 = vpop.f32.mrf.mxu0
      %v5695 = vadd.f32 %v5037, %v5694
      %5696 = vmatmul.bf16.gmra.mxu0 %v4996
      %v5697 = vpop.f32.mrf.mxu0
      %v5698 = vadd.f32 %v5037, %v5697
      %v5699 = vpop.f32.mrf.mxu0
      %v5700 = vadd.f32 %v5037, %v5699
      %5701 = vmatmul.bf16.gmra.mxu0 %v4998
      %v5702 = vpop.f32.mrf.mxu0
      %v5703 = vadd.f32 %v5037, %v5702
      %v5704 = vpop.f32.mrf.mxu0
      %v5705 = vadd.f32 %v5037, %v5704
      %5706 = vdwg.mxu0
      %5707 = vmatpush.bf16.msra.mxu0 %v5167
      %5708 = vmatpush.bf16.msra.mxu0 %v5165
      %5709 = vmatpush.bf16.msra.mxu0 %v5163
      %5710 = vmatpush.bf16.msra.mxu0 %v5161
      %5711 = vmatpush.bf16.msra.mxu0 %v5159
      %5712 = vmatpush.bf16.msra.mxu0 %v5157
      %5713 = vmatpush.bf16.msra.mxu0 %v5155
      %5714 = vmatpush.bf16.msra.mxu0 %v5153
      %5715 = vmatmul.bf16.gmra.mxu0 %v4937
      %v5716 = vpop.f32.mrf.mxu0
      %v5717 = vadd.f32 %v5548, %v5716
      %v5718 = vpop.f32.mrf.mxu0
      %v5719 = vadd.f32 %v5550, %v5718
      %5720 = vmatmul.bf16.gmra.mxu0 %v4939
      %v5721 = vpop.f32.mrf.mxu0
      %v5722 = vadd.f32 %v5553, %v5721
      %v5723 = vpop.f32.mrf.mxu0
      %v5724 = vadd.f32 %v5555, %v5723
      %5725 = vmatmul.bf16.gmra.mxu0 %v4941
      %v5726 = vpop.f32.mrf.mxu0
      %v5727 = vadd.f32 %v5558, %v5726
      %v5728 = vpop.f32.mrf.mxu0
      %v5729 = vadd.f32 %v5560, %v5728
      %5730 = vmatmul.bf16.gmra.mxu0 %v4943
      %v5731 = vpop.f32.mrf.mxu0
      %v5732 = vadd.f32 %v5563, %v5731
      %v5733 = vpop.f32.mrf.mxu0
      %v5734 = vadd.f32 %v5565, %v5733
      %5735 = vmatmul.bf16.gmra.mxu0 %v4945
      %v5736 = vpop.f32.mrf.mxu0
      %v5737 = vadd.f32 %v5568, %v5736
      %v5738 = vpop.f32.mrf.mxu0
      %v5739 = vadd.f32 %v5570, %v5738
      %5740 = vmatmul.bf16.gmra.mxu0 %v4947
      %v5741 = vpop.f32.mrf.mxu0
      %v5742 = vadd.f32 %v5573, %v5741
      %v5743 = vpop.f32.mrf.mxu0
      %v5744 = vadd.f32 %v5575, %v5743
      %5745 = vmatmul.bf16.gmra.mxu0 %v4949
      %v5746 = vpop.f32.mrf.mxu0
      %v5747 = vadd.f32 %v5578, %v5746
      %v5748 = vpop.f32.mrf.mxu0
      %v5749 = vadd.f32 %v5580, %v5748
      %5750 = vmatmul.bf16.gmra.mxu0 %v4951
      %v5751 = vpop.f32.mrf.mxu0
      %v5752 = vadd.f32 %v5583, %v5751
      %v5753 = vpop.f32.mrf.mxu0
      %v5754 = vadd.f32 %v5585, %v5753
      %5755 = vmatmul.bf16.gmra.mxu0 %v4953
      %v5756 = vpop.f32.mrf.mxu0
      %v5757 = vadd.f32 %v5588, %v5756
      %v5758 = vpop.f32.mrf.mxu0
      %v5759 = vadd.f32 %v5590, %v5758
      %5760 = vmatmul.bf16.gmra.mxu0 %v4955
      %v5761 = vpop.f32.mrf.mxu0
      %v5762 = vadd.f32 %v5593, %v5761
      %v5763 = vpop.f32.mrf.mxu0
      %v5764 = vadd.f32 %v5595, %v5763
      %5765 = vmatmul.bf16.gmra.mxu0 %v4957
      %v5766 = vpop.f32.mrf.mxu0
      %v5767 = vadd.f32 %v5598, %v5766
      %v5768 = vpop.f32.mrf.mxu0
      %v5769 = vadd.f32 %v5600, %v5768
      %5770 = vmatmul.bf16.gmra.mxu0 %v4959
      %v5771 = vpop.f32.mrf.mxu0
      %v5772 = vadd.f32 %v5603, %v5771
      %v5773 = vpop.f32.mrf.mxu0
      %v5774 = vadd.f32 %v5605, %v5773
      %5775 = vmatmul.bf16.gmra.mxu0 %v4961
      %v5776 = vpop.f32.mrf.mxu0
      %v5777 = vadd.f32 %v5608, %v5776
      %v5778 = vpop.f32.mrf.mxu0
      %v5779 = vadd.f32 %v5610, %v5778
      %5780 = vmatmul.bf16.gmra.mxu0 %v4963
      %v5781 = vpop.f32.mrf.mxu0
      %v5782 = vadd.f32 %v5613, %v5781
      %v5783 = vpop.f32.mrf.mxu0
      %v5784 = vadd.f32 %v5615, %v5783
      %5785 = vmatmul.bf16.gmra.mxu0 %v4965
      %v5786 = vpop.f32.mrf.mxu0
      %v5787 = vadd.f32 %v5618, %v5786
      %v5788 = vpop.f32.mrf.mxu0
      %v5789 = vadd.f32 %v5620, %v5788
      %5790 = vmatmul.bf16.gmra.mxu0 %v4967
      %v5791 = vpop.f32.mrf.mxu0
      %v5792 = vadd.f32 %v5623, %v5791
      %v5793 = vpop.f32.mrf.mxu0
      %v5794 = vadd.f32 %v5625, %v5793
      %5795 = vmatmul.bf16.gmra.mxu0 %v4969
      %v5796 = vpop.f32.mrf.mxu0
      %v5797 = vadd.f32 %v5628, %v5796
      %v5798 = vpop.f32.mrf.mxu0
      %v5799 = vadd.f32 %v5630, %v5798
      %5800 = vmatmul.bf16.gmra.mxu0 %v4971
      %v5801 = vpop.f32.mrf.mxu0
      %v5802 = vadd.f32 %v5633, %v5801
      %v5803 = vpop.f32.mrf.mxu0
      %v5804 = vadd.f32 %v5635, %v5803
      %5805 = vmatmul.bf16.gmra.mxu0 %v4973
      %v5806 = vpop.f32.mrf.mxu0
      %v5807 = vadd.f32 %v5638, %v5806
      %v5808 = vpop.f32.mrf.mxu0
      %v5809 = vadd.f32 %v5640, %v5808
      %5810 = vmatmul.bf16.gmra.mxu0 %v4975
      %v5811 = vpop.f32.mrf.mxu0
      %v5812 = vadd.f32 %v5643, %v5811
      %v5813 = vpop.f32.mrf.mxu0
      %v5814 = vadd.f32 %v5645, %v5813
      %5815 = vmatmul.bf16.gmra.mxu0 %v4977
      %v5816 = vpop.f32.mrf.mxu0
      %v5817 = vadd.f32 %v5648, %v5816
      %v5818 = vpop.f32.mrf.mxu0
      %v5819 = vadd.f32 %v5650, %v5818
      %5820 = vmatmul.bf16.gmra.mxu0 %v4979
      %v5821 = vpop.f32.mrf.mxu0
      %v5822 = vadd.f32 %v5653, %v5821
      %v5823 = vpop.f32.mrf.mxu0
      %v5824 = vadd.f32 %v5655, %v5823
      %5825 = vmatmul.bf16.gmra.mxu0 %v4981
      %v5826 = vpop.f32.mrf.mxu0
      %v5827 = vadd.f32 %v5658, %v5826
      %v5828 = vpop.f32.mrf.mxu0
      %v5829 = vadd.f32 %v5660, %v5828
      %5830 = vmatmul.bf16.gmra.mxu0 %v4983
      %v5831 = vpop.f32.mrf.mxu0
      %v5832 = vadd.f32 %v5663, %v5831
      %v5833 = vpop.f32.mrf.mxu0
      %v5834 = vadd.f32 %v5665, %v5833
      %5835 = vmatmul.bf16.gmra.mxu0 %v4985
      %v5836 = vpop.f32.mrf.mxu0
      %v5837 = vadd.f32 %v5668, %v5836
      %v5838 = vpop.f32.mrf.mxu0
      %v5839 = vadd.f32 %v5670, %v5838
      %5840 = vmatmul.bf16.gmra.mxu0 %v4987
      %v5841 = vpop.f32.mrf.mxu0
      %v5842 = vadd.f32 %v5673, %v5841
      %v5843 = vpop.f32.mrf.mxu0
      %v5844 = vadd.f32 %v5675, %v5843
      %5845 = vmatmul.bf16.gmra.mxu0 %v4989
      %v5846 = vpop.f32.mrf.mxu0
      %v5847 = vadd.f32 %v5678, %v5846
      %v5848 = vpop.f32.mrf.mxu0
      %v5849 = vadd.f32 %v5680, %v5848
      %5850 = vmatmul.bf16.gmra.mxu0 %v4991
      %v5851 = vpop.f32.mrf.mxu0
      %v5852 = vadd.f32 %v5683, %v5851
      %v5853 = vpop.f32.mrf.mxu0
      %v5854 = vadd.f32 %v5685, %v5853
      %5855 = vmatmul.bf16.gmra.mxu0 %v4993
      %v5856 = vpop.f32.mrf.mxu0
      %v5857 = vadd.f32 %v5688, %v5856
      %v5858 = vpop.f32.mrf.mxu0
      %v5859 = vadd.f32 %v5690, %v5858
      %5860 = vmatmul.bf16.gmra.mxu0 %v4995
      %v5861 = vpop.f32.mrf.mxu0
      %v5862 = vadd.f32 %v5693, %v5861
      %v5863 = vpop.f32.mrf.mxu0
      %v5864 = vadd.f32 %v5695, %v5863
      %5865 = vmatmul.bf16.gmra.mxu0 %v4997
      %v5866 = vpop.f32.mrf.mxu0
      %v5867 = vadd.f32 %v5698, %v5866
      %v5868 = vpop.f32.mrf.mxu0
      %v5869 = vadd.f32 %v5700, %v5868
      %5870 = vmatmul.bf16.gmra.mxu0 %v4999
      %v5871 = vpop.f32.mrf.mxu0
      %v5872 = vadd.f32 %v5703, %v5871
      %v5873 = vpop.f32.mrf.mxu0
      %v5874 = vadd.f32 %v5705, %v5873
      %5875 = vdwg.mxu0
      %v5876 = vmax.f32 %v5379, 0.0
      %v5877 = vmax.f32 %v5717, 0.0
      %v5878 = vmax.f32 %v5381, 0.0
      %v5879 = vmax.f32 %v5719, 0.0
      %v5880 = vmax.f32 %v5384, 0.0
      %v5881 = vmax.f32 %v5722, 0.0
      %v5882 = vmax.f32 %v5386, 0.0
      %v5883 = vmax.f32 %v5724, 0.0
      %v5884 = vmax.f32 %v5389, 0.0
      %v5885 = vmax.f32 %v5727, 0.0
      %v5886 = vmax.f32 %v5391, 0.0
      %v5887 = vmax.f32 %v5729, 0.0
      %v5888 = vmax.f32 %v5394, 0.0
      %v5889 = vmax.f32 %v5732, 0.0
      %v5890 = vmax.f32 %v5396, 0.0
      %v5891 = vmax.f32 %v5734, 0.0
      %v5892 = vmax.f32 %v5399, 0.0
      %v5893 = vmax.f32 %v5737, 0.0
      %v5894 = vmax.f32 %v5401, 0.0
      %v5895 = vmax.f32 %v5739, 0.0
      %v5896 = vmax.f32 %v5404, 0.0
      %v5897 = vmax.f32 %v5742, 0.0
      %v5898 = vmax.f32 %v5406, 0.0
      %v5899 = vmax.f32 %v5744, 0.0
      %v5900 = vmax.f32 %v5409, 0.0
      %v5901 = vmax.f32 %v5747, 0.0
      %v5902 = vmax.f32 %v5411, 0.0
      %v5903 = vmax.f32 %v5749, 0.0
      %v5904 = vmax.f32 %v5414, 0.0
      %v5905 = vmax.f32 %v5752, 0.0
      %v5906 = vmax.f32 %v5416, 0.0
      %v5907 = vmax.f32 %v5754, 0.0
      %v5908 = vmax.f32 %v5419, 0.0
      %v5909 = vmax.f32 %v5757, 0.0
      %v5910 = vmax.f32 %v5421, 0.0
      %v5911 = vmax.f32 %v5759, 0.0
      %v5912 = vmax.f32 %v5424, 0.0
      %v5913 = vmax.f32 %v5762, 0.0
      %v5914 = vmax.f32 %v5426, 0.0
      %v5915 = vmax.f32 %v5764, 0.0
      %v5916 = vmax.f32 %v5429, 0.0
      %v5917 = vmax.f32 %v5767, 0.0
      %v5918 = vmax.f32 %v5431, 0.0
      %v5919 = vmax.f32 %v5769, 0.0
      %v5920 = vmax.f32 %v5434, 0.0
      %v5921 = vmax.f32 %v5772, 0.0
      %v5922 = vmax.f32 %v5436, 0.0
      %v5923 = vmax.f32 %v5774, 0.0
      %v5924 = vmax.f32 %v5439, 0.0
      %v5925 = vmax.f32 %v5777, 0.0
      %v5926 = vmax.f32 %v5441, 0.0
      %v5927 = vmax.f32 %v5779, 0.0
      %v5928 = vmax.f32 %v5444, 0.0
      %v5929 = vmax.f32 %v5782, 0.0
      %v5930 = vmax.f32 %v5446, 0.0
      %v5931 = vmax.f32 %v5784, 0.0
      %v5932 = vmax.f32 %v5449, 0.0
      %v5933 = vmax.f32 %v5787, 0.0
      %v5934 = vmax.f32 %v5451, 0.0
      %v5935 = vmax.f32 %v5789, 0.0
      %v5936 = vmax.f32 %v5454, 0.0
      %v5937 = vmax.f32 %v5792, 0.0
      %v5938 = vmax.f32 %v5456, 0.0
      %v5939 = vmax.f32 %v5794, 0.0
      %v5940 = vmax.f32 %v5459, 0.0
      %v5941 = vmax.f32 %v5797, 0.0
      %v5942 = vmax.f32 %v5461, 0.0
      %v5943 = vmax.f32 %v5799, 0.0
      %v5944 = vmax.f32 %v5464, 0.0
      %v5945 = vmax.f32 %v5802, 0.0
      %v5946 = vmax.f32 %v5466, 0.0
      %v5947 = vmax.f32 %v5804, 0.0
      %v5948 = vmax.f32 %v5469, 0.0
      %v5949 = vmax.f32 %v5807, 0.0
      %v5950 = vmax.f32 %v5471, 0.0
      %v5951 = vmax.f32 %v5809, 0.0
      %v5952 = vmax.f32 %v5474, 0.0
      %v5953 = vmax.f32 %v5812, 0.0
      %v5954 = vmax.f32 %v5476, 0.0
      %v5955 = vmax.f32 %v5814, 0.0
      %v5956 = vmax.f32 %v5479, 0.0
      %v5957 = vmax.f32 %v5817, 0.0
      %v5958 = vmax.f32 %v5481, 0.0
      %v5959 = vmax.f32 %v5819, 0.0
      %v5960 = vmax.f32 %v5484, 0.0
      %v5961 = vmax.f32 %v5822, 0.0
      %v5962 = vmax.f32 %v5486, 0.0
      %v5963 = vmax.f32 %v5824, 0.0
      %v5964 = vmax.f32 %v5489, 0.0
      %v5965 = vmax.f32 %v5827, 0.0
      %v5966 = vmax.f32 %v5491, 0.0
      %v5967 = vmax.f32 %v5829, 0.0
      %v5968 = vmax.f32 %v5494, 0.0
      %v5969 = vmax.f32 %v5832, 0.0
      %v5970 = vmax.f32 %v5496, 0.0
      %v5971 = vmax.f32 %v5834, 0.0
      %v5972 = vmax.f32 %v5499, 0.0
      %v5973 = vmax.f32 %v5837, 0.0
      %v5974 = vmax.f32 %v5501, 0.0
      %v5975 = vmax.f32 %v5839, 0.0
      %v5976 = vmax.f32 %v5504, 0.0
      %v5977 = vmax.f32 %v5842, 0.0
      %v5978 = vmax.f32 %v5506, 0.0
      %v5979 = vmax.f32 %v5844, 0.0
      %v5980 = vmax.f32 %v5509, 0.0
      %v5981 = vmax.f32 %v5847, 0.0
      %v5982 = vmax.f32 %v5511, 0.0
      %v5983 = vmax.f32 %v5849, 0.0
      %v5984 = vmax.f32 %v5514, 0.0
      %v5985 = vmax.f32 %v5852, 0.0
      %v5986 = vmax.f32 %v5516, 0.0
      %v5987 = vmax.f32 %v5854, 0.0
      %v5988 = vmax.f32 %v5519, 0.0
      %v5989 = vmax.f32 %v5857, 0.0
      %v5990 = vmax.f32 %v5521, 0.0
      %v5991 = vmax.f32 %v5859, 0.0
      %v5992 = vmax.f32 %v5524, 0.0
      %v5993 = vmax.f32 %v5862, 0.0
      %v5994 = vmax.f32 %v5526, 0.0
      %v5995 = vmax.f32 %v5864, 0.0
      %v5996 = vmax.f32 %v5529, 0.0
      %v5997 = vmax.f32 %v5867, 0.0
      %v5998 = vmax.f32 %v5531, 0.0
      %v5999 = vmax.f32 %v5869, 0.0
      %v6000 = vmax.f32 %v5534, 0.0
      %v6001 = vmax.f32 %v5872, 0.0
      %v6002 = vmax.f32 %v5536, 0.0
      %v6003 = vmax.f32 %v5874, 0.0
      %v6004 = vpack.c.bf16 %v5878, %v5876
      %v6005 = vpack.c.bf16 %v5879, %v5877
      %v6006 = vpack.c.bf16 %v5882, %v5880
      %v6007 = vpack.c.bf16 %v5883, %v5881
      %v6008 = vpack.c.bf16 %v5886, %v5884
      %v6009 = vpack.c.bf16 %v5887, %v5885
      %v6010 = vpack.c.bf16 %v5890, %v5888
      %v6011 = vpack.c.bf16 %v5891, %v5889
      %v6012 = vpack.c.bf16 %v5894, %v5892
      %v6013 = vpack.c.bf16 %v5895, %v5893
      %v6014 = vpack.c.bf16 %v5898, %v5896
      %v6015 = vpack.c.bf16 %v5899, %v5897
      %v6016 = vpack.c.bf16 %v5902, %v5900
      %v6017 = vpack.c.bf16 %v5903, %v5901
      %v6018 = vpack.c.bf16 %v5906, %v5904
      %v6019 = vpack.c.bf16 %v5907, %v5905
      %v6020 = vpack.c.bf16 %v5910, %v5908
      %v6021 = vpack.c.bf16 %v5911, %v5909
      %v6022 = vpack.c.bf16 %v5914, %v5912
      %v6023 = vpack.c.bf16 %v5915, %v5913
      %v6024 = vpack.c.bf16 %v5918, %v5916
      %v6025 = vpack.c.bf16 %v5919, %v5917
      %v6026 = vpack.c.bf16 %v5922, %v5920
      %v6027 = vpack.c.bf16 %v5923, %v5921
      %v6028 = vpack.c.bf16 %v5926, %v5924
      %v6029 = vpack.c.bf16 %v5927, %v5925
      %v6030 = vpack.c.bf16 %v5930, %v5928
      %v6031 = vpack.c.bf16 %v5931, %v5929
      %v6032 = vpack.c.bf16 %v5934, %v5932
      %v6033 = vpack.c.bf16 %v5935, %v5933
      %v6034 = vpack.c.bf16 %v5938, %v5936
      %v6035 = vpack.c.bf16 %v5939, %v5937
      %v6036 = vpack.c.bf16 %v5942, %v5940
      %v6037 = vpack.c.bf16 %v5943, %v5941
      %v6038 = vpack.c.bf16 %v5946, %v5944
      %v6039 = vpack.c.bf16 %v5947, %v5945
      %v6040 = vpack.c.bf16 %v5950, %v5948
      %v6041 = vpack.c.bf16 %v5951, %v5949
      %v6042 = vpack.c.bf16 %v5954, %v5952
      %v6043 = vpack.c.bf16 %v5955, %v5953
      %v6044 = vpack.c.bf16 %v5958, %v5956
      %v6045 = vpack.c.bf16 %v5959, %v5957
      %v6046 = vpack.c.bf16 %v5962, %v5960
      %v6047 = vpack.c.bf16 %v5963, %v5961
      %v6048 = vpack.c.bf16 %v5966, %v5964
      %v6049 = vpack.c.bf16 %v5967, %v5965
      %v6050 = vpack.c.bf16 %v5970, %v5968
      %v6051 = vpack.c.bf16 %v5971, %v5969
      %v6052 = vpack.c.bf16 %v5974, %v5972
      %v6053 = vpack.c.bf16 %v5975, %v5973
      %v6054 = vpack.c.bf16 %v5978, %v5976
      %v6055 = vpack.c.bf16 %v5979, %v5977
      %v6056 = vpack.c.bf16 %v5982, %v5980
      %v6057 = vpack.c.bf16 %v5983, %v5981
      %v6058 = vpack.c.bf16 %v5986, %v5984
      %v6059 = vpack.c.bf16 %v5987, %v5985
      %v6060 = vpack.c.bf16 %v5990, %v5988
      %v6061 = vpack.c.bf16 %v5991, %v5989
      %v6062 = vpack.c.bf16 %v5994, %v5992
      %v6063 = vpack.c.bf16 %v5995, %v5993
      %v6064 = vpack.c.bf16 %v5998, %v5996
      %v6065 = vpack.c.bf16 %v5999, %v5997
      %v6066 = vpack.c.bf16 %v6002, %v6000
      %v6067 = vpack.c.bf16 %v6003, %v6001
      %s6068 = scalar_lea.vmem %s5, 1024
      %v6069 = vld [vmem:[%s6068] sm:$0xff]
      %v6070 = vld [vmem:[%s6068 + $0x8] sm:$0xff]
      %v6071 = vld [vmem:[%s6068 + $0x10] sm:$0xff]
      %v6072 = vld [vmem:[%s6068 + $0x18] sm:$0xff]
      %v6073 = vld [vmem:[%s6068 + $0x20] sm:$0xff]
      %v6074 = vld [vmem:[%s6068 + $0x28] sm:$0xff]
      %v6075 = vld [vmem:[%s6068 + $0x30] sm:$0xff]
      %v6076 = vld [vmem:[%s6068 + $0x38] sm:$0xff]
      %v6077 = vld [vmem:[%s6068 + $0x40] sm:$0xff]
      %v6078 = vld [vmem:[%s6068 + $0x48] sm:$0xff]
      %v6079 = vld [vmem:[%s6068 + $0x50] sm:$0xff]
      %v6080 = vld [vmem:[%s6068 + $0x58] sm:$0xff]
      %v6081 = vld [vmem:[%s6068 + $0x60] sm:$0xff]
      %v6082 = vld [vmem:[%s6068 + $0x68] sm:$0xff]
      %v6083 = vld [vmem:[%s6068 + $0x70] sm:$0xff]
      %v6084 = vld [vmem:[%s6068 + $0x78] sm:$0xff]
      %v6085 = vld [vmem:[%s6068 + $0x80] sm:$0xff]
      %v6086 = vld [vmem:[%s6068 + $0x88] sm:$0xff]
      %v6087 = vld [vmem:[%s6068 + $0x90] sm:$0xff]
      %v6088 = vld [vmem:[%s6068 + $0x98] sm:$0xff]
      %v6089 = vld [vmem:[%s6068 + $0xa0] sm:$0xff]
      %v6090 = vld [vmem:[%s6068 + $0xa8] sm:$0xff]
      %v6091 = vld [vmem:[%s6068 + $0xb0] sm:$0xff]
      %v6092 = vld [vmem:[%s6068 + $0xb8] sm:$0xff]
      %v6093 = vld [vmem:[%s6068 + $0xc0] sm:$0xff]
      %v6094 = vld [vmem:[%s6068 + $0xc8] sm:$0xff]
      %v6095 = vld [vmem:[%s6068 + $0xd0] sm:$0xff]
      %v6096 = vld [vmem:[%s6068 + $0xd8] sm:$0xff]
      %v6097 = vld [vmem:[%s6068 + $0xe0] sm:$0xff]
      %v6098 = vld [vmem:[%s6068 + $0xe8] sm:$0xff]
      %v6099 = vld [vmem:[%s6068 + $0xf0] sm:$0xff]
      %v6100 = vld [vmem:[%s6068 + $0xf8] sm:$0xff]
      %s6101 = scalar_lea.vmem %s6, 8
      %v6102 = vld [vmem:[%s6101] sm:$0x3]
      %v6104 = vperm.slane %v6102, 0
      %v6105 = vperm.slane %v6102, 1
      %v6140 = vunpack.c.l.b16 %v6069
      %v6141 = vunpack.c.h.b16 %v6069
      %v6142 = vunpack.c.l.b16 %v6070
      %v6143 = vunpack.c.h.b16 %v6070
      %v6144 = vunpack.c.l.b16 %v6071
      %v6145 = vunpack.c.h.b16 %v6071
      %v6146 = vunpack.c.l.b16 %v6072
      %v6147 = vunpack.c.h.b16 %v6072
      %v6148 = vunpack.c.l.b16 %v6073
      %v6149 = vunpack.c.h.b16 %v6073
      %v6150 = vunpack.c.l.b16 %v6074
      %v6151 = vunpack.c.h.b16 %v6074
      %v6152 = vunpack.c.l.b16 %v6075
      %v6153 = vunpack.c.h.b16 %v6075
      %v6154 = vunpack.c.l.b16 %v6076
      %v6155 = vunpack.c.h.b16 %v6076
      %v6156 = vunpack.c.l.b16 %v6077
      %v6157 = vunpack.c.h.b16 %v6077
      %v6158 = vunpack.c.l.b16 %v6078
      %v6159 = vunpack.c.h.b16 %v6078
      %v6160 = vunpack.c.l.b16 %v6079
      %v6161 = vunpack.c.h.b16 %v6079
      %v6162 = vunpack.c.l.b16 %v6080
      %v6163 = vunpack.c.h.b16 %v6080
      %v6164 = vunpack.c.l.b16 %v6081
      %v6165 = vunpack.c.h.b16 %v6081
      %v6166 = vunpack.c.l.b16 %v6082
      %v6167 = vunpack.c.h.b16 %v6082
      %v6168 = vunpack.c.l.b16 %v6083
      %v6169 = vunpack.c.h.b16 %v6083
      %v6170 = vunpack.c.l.b16 %v6084
      %v6171 = vunpack.c.h.b16 %v6084
      %v6172 = vunpack.c.l.b16 %v6085
      %v6173 = vunpack.c.h.b16 %v6085
      %v6174 = vunpack.c.l.b16 %v6086
      %v6175 = vunpack.c.h.b16 %v6086
      %v6176 = vunpack.c.l.b16 %v6087
      %v6177 = vunpack.c.h.b16 %v6087
      %v6178 = vunpack.c.l.b16 %v6088
      %v6179 = vunpack.c.h.b16 %v6088
      %v6180 = vunpack.c.l.b16 %v6089
      %v6181 = vunpack.c.h.b16 %v6089
      %v6182 = vunpack.c.l.b16 %v6090
      %v6183 = vunpack.c.h.b16 %v6090
      %v6184 = vunpack.c.l.b16 %v6091
      %v6185 = vunpack.c.h.b16 %v6091
      %v6186 = vunpack.c.l.b16 %v6092
      %v6187 = vunpack.c.h.b16 %v6092
      %v6188 = vunpack.c.l.b16 %v6093
      %v6189 = vunpack.c.h.b16 %v6093
      %v6190 = vunpack.c.l.b16 %v6094
      %v6191 = vunpack.c.h.b16 %v6094
      %v6192 = vunpack.c.l.b16 %v6095
      %v6193 = vunpack.c.h.b16 %v6095
      %v6194 = vunpack.c.l.b16 %v6096
      %v6195 = vunpack.c.h.b16 %v6096
      %v6196 = vunpack.c.l.b16 %v6097
      %v6197 = vunpack.c.h.b16 %v6097
      %v6198 = vunpack.c.l.b16 %v6098
      %v6199 = vunpack.c.h.b16 %v6098
      %v6200 = vunpack.c.l.b16 %v6099
      %v6201 = vunpack.c.h.b16 %v6099
      %v6202 = vunpack.c.l.b16 %v6100
      %v6203 = vunpack.c.h.b16 %v6100
      %v6204 = vpack.c.b16 %v6142, %v6140
      %v6205 = vpack.c.b16 %v6143, %v6141
      %v6206 = vpack.c.b16 %v6146, %v6144
      %v6207 = vpack.c.b16 %v6147, %v6145
      %v6208 = vpack.c.b16 %v6150, %v6148
      %v6209 = vpack.c.b16 %v6151, %v6149
      %v6210 = vpack.c.b16 %v6154, %v6152
      %v6211 = vpack.c.b16 %v6155, %v6153
      %v6212 = vpack.c.b16 %v6158, %v6156
      %v6213 = vpack.c.b16 %v6159, %v6157
      %v6214 = vpack.c.b16 %v6162, %v6160
      %v6215 = vpack.c.b16 %v6163, %v6161
      %v6216 = vpack.c.b16 %v6166, %v6164
      %v6217 = vpack.c.b16 %v6167, %v6165
      %v6218 = vpack.c.b16 %v6170, %v6168
      %v6219 = vpack.c.b16 %v6171, %v6169
      %v6220 = vpack.c.b16 %v6174, %v6172
      %v6221 = vpack.c.b16 %v6175, %v6173
      %v6222 = vpack.c.b16 %v6178, %v6176
      %v6223 = vpack.c.b16 %v6179, %v6177
      %v6224 = vpack.c.b16 %v6182, %v6180
      %v6225 = vpack.c.b16 %v6183, %v6181
      %v6226 = vpack.c.b16 %v6186, %v6184
      %v6227 = vpack.c.b16 %v6187, %v6185
      %v6228 = vpack.c.b16 %v6190, %v6188
      %v6229 = vpack.c.b16 %v6191, %v6189
      %v6230 = vpack.c.b16 %v6194, %v6192
      %v6231 = vpack.c.b16 %v6195, %v6193
      %v6232 = vpack.c.b16 %v6198, %v6196
      %v6233 = vpack.c.b16 %v6199, %v6197
      %v6234 = vpack.c.b16 %v6202, %v6200
      %v6235 = vpack.c.b16 %v6203, %v6201
      %6268 = vmatpush.bf16.msra.mxu0 %v6218
      %6269 = vmatpush.bf16.msra.mxu0 %v6216
      %6270 = vmatpush.bf16.msra.mxu0 %v6214
      %6271 = vmatpush.bf16.msra.mxu0 %v6212
      %6272 = vmatpush.bf16.msra.mxu0 %v6210
      %6273 = vmatpush.bf16.msra.mxu0 %v6208
      %6274 = vmatpush.bf16.msra.mxu0 %v6206
      %6275 = vmatpush.bf16.msra.mxu0 %v6204
      %6276 = vmatmul.bf16.gmra.mxu0 %v6004
      %v6277 = vpop.f32.mrf.mxu0
      %v6278 = vadd.f32 %v6104, %v6277
      %v6279 = vpop.f32.mrf.mxu0
      %v6280 = vadd.f32 %v6104, %v6279
      %6281 = vmatmul.bf16.gmra.mxu0 %v6006
      %v6282 = vpop.f32.mrf.mxu0
      %v6283 = vadd.f32 %v6104, %v6282
      %v6284 = vpop.f32.mrf.mxu0
      %v6285 = vadd.f32 %v6104, %v6284
      %6286 = vmatmul.bf16.gmra.mxu0 %v6008
      %v6287 = vpop.f32.mrf.mxu0
      %v6288 = vadd.f32 %v6104, %v6287
      %v6289 = vpop.f32.mrf.mxu0
      %v6290 = vadd.f32 %v6104, %v6289
      %6291 = vmatmul.bf16.gmra.mxu0 %v6010
      %v6292 = vpop.f32.mrf.mxu0
      %v6293 = vadd.f32 %v6104, %v6292
      %v6294 = vpop.f32.mrf.mxu0
      %v6295 = vadd.f32 %v6104, %v6294
      %6296 = vmatmul.bf16.gmra.mxu0 %v6012
      %v6297 = vpop.f32.mrf.mxu0
      %v6298 = vadd.f32 %v6104, %v6297
      %v6299 = vpop.f32.mrf.mxu0
      %v6300 = vadd.f32 %v6104, %v6299
      %6301 = vmatmul.bf16.gmra.mxu0 %v6014
      %v6302 = vpop.f32.mrf.mxu0
      %v6303 = vadd.f32 %v6104, %v6302
      %v6304 = vpop.f32.mrf.mxu0
      %v6305 = vadd.f32 %v6104, %v6304
      %6306 = vmatmul.bf16.gmra.mxu0 %v6016
      %v6307 = vpop.f32.mrf.mxu0
      %v6308 = vadd.f32 %v6104, %v6307
      %v6309 = vpop.f32.mrf.mxu0
      %v6310 = vadd.f32 %v6104, %v6309
      %6311 = vmatmul.bf16.gmra.mxu0 %v6018
      %v6312 = vpop.f32.mrf.mxu0
      %v6313 = vadd.f32 %v6104, %v6312
      %v6314 = vpop.f32.mrf.mxu0
      %v6315 = vadd.f32 %v6104, %v6314
      %6316 = vmatmul.bf16.gmra.mxu0 %v6020
      %v6317 = vpop.f32.mrf.mxu0
      %v6318 = vadd.f32 %v6104, %v6317
      %v6319 = vpop.f32.mrf.mxu0
      %v6320 = vadd.f32 %v6104, %v6319
      %6321 = vmatmul.bf16.gmra.mxu0 %v6022
      %v6322 = vpop.f32.mrf.mxu0
      %v6323 = vadd.f32 %v6104, %v6322
      %v6324 = vpop.f32.mrf.mxu0
      %v6325 = vadd.f32 %v6104, %v6324
      %6326 = vmatmul.bf16.gmra.mxu0 %v6024
      %v6327 = vpop.f32.mrf.mxu0
      %v6328 = vadd.f32 %v6104, %v6327
      %v6329 = vpop.f32.mrf.mxu0
      %v6330 = vadd.f32 %v6104, %v6329
      %6331 = vmatmul.bf16.gmra.mxu0 %v6026
      %v6332 = vpop.f32.mrf.mxu0
      %v6333 = vadd.f32 %v6104, %v6332
      %v6334 = vpop.f32.mrf.mxu0
      %v6335 = vadd.f32 %v6104, %v6334
      %6336 = vmatmul.bf16.gmra.mxu0 %v6028
      %v6337 = vpop.f32.mrf.mxu0
      %v6338 = vadd.f32 %v6104, %v6337
      %v6339 = vpop.f32.mrf.mxu0
      %v6340 = vadd.f32 %v6104, %v6339
      %6341 = vmatmul.bf16.gmra.mxu0 %v6030
      %v6342 = vpop.f32.mrf.mxu0
      %v6343 = vadd.f32 %v6104, %v6342
      %v6344 = vpop.f32.mrf.mxu0
      %v6345 = vadd.f32 %v6104, %v6344
      %6346 = vmatmul.bf16.gmra.mxu0 %v6032
      %v6347 = vpop.f32.mrf.mxu0
      %v6348 = vadd.f32 %v6104, %v6347
      %v6349 = vpop.f32.mrf.mxu0
      %v6350 = vadd.f32 %v6104, %v6349
      %6351 = vmatmul.bf16.gmra.mxu0 %v6034
      %v6352 = vpop.f32.mrf.mxu0
      %v6353 = vadd.f32 %v6104, %v6352
      %v6354 = vpop.f32.mrf.mxu0
      %v6355 = vadd.f32 %v6104, %v6354
      %6356 = vmatmul.bf16.gmra.mxu0 %v6036
      %v6357 = vpop.f32.mrf.mxu0
      %v6358 = vadd.f32 %v6104, %v6357
      %v6359 = vpop.f32.mrf.mxu0
      %v6360 = vadd.f32 %v6104, %v6359
      %6361 = vmatmul.bf16.gmra.mxu0 %v6038
      %v6362 = vpop.f32.mrf.mxu0
      %v6363 = vadd.f32 %v6104, %v6362
      %v6364 = vpop.f32.mrf.mxu0
      %v6365 = vadd.f32 %v6104, %v6364
      %6366 = vmatmul.bf16.gmra.mxu0 %v6040
      %v6367 = vpop.f32.mrf.mxu0
      %v6368 = vadd.f32 %v6104, %v6367
      %v6369 = vpop.f32.mrf.mxu0
      %v6370 = vadd.f32 %v6104, %v6369
      %6371 = vmatmul.bf16.gmra.mxu0 %v6042
      %v6372 = vpop.f32.mrf.mxu0
      %v6373 = vadd.f32 %v6104, %v6372
      %v6374 = vpop.f32.mrf.mxu0
      %v6375 = vadd.f32 %v6104, %v6374
      %6376 = vmatmul.bf16.gmra.mxu0 %v6044
      %v6377 = vpop.f32.mrf.mxu0
      %v6378 = vadd.f32 %v6104, %v6377
      %v6379 = vpop.f32.mrf.mxu0
      %v6380 = vadd.f32 %v6104, %v6379
      %6381 = vmatmul.bf16.gmra.mxu0 %v6046
      %v6382 = vpop.f32.mrf.mxu0
      %v6383 = vadd.f32 %v6104, %v6382
      %v6384 = vpop.f32.mrf.mxu0
      %v6385 = vadd.f32 %v6104, %v6384
      %6386 = vmatmul.bf16.gmra.mxu0 %v6048
      %v6387 = vpop.f32.mrf.mxu0
      %v6388 = vadd.f32 %v6104, %v6387
      %v6389 = vpop.f32.mrf.mxu0
      %v6390 = vadd.f32 %v6104, %v6389
      %6391 = vmatmul.bf16.gmra.mxu0 %v6050
      %v6392 = vpop.f32.mrf.mxu0
      %v6393 = vadd.f32 %v6104, %v6392
      %v6394 = vpop.f32.mrf.mxu0
      %v6395 = vadd.f32 %v6104, %v6394
      %6396 = vmatmul.bf16.gmra.mxu0 %v6052
      %v6397 = vpop.f32.mrf.mxu0
      %v6398 = vadd.f32 %v6104, %v6397
      %v6399 = vpop.f32.mrf.mxu0
      %v6400 = vadd.f32 %v6104, %v6399
      %6401 = vmatmul.bf16.gmra.mxu0 %v6054
      %v6402 = vpop.f32.mrf.mxu0
      %v6403 = vadd.f32 %v6104, %v6402
      %v6404 = vpop.f32.mrf.mxu0
      %v6405 = vadd.f32 %v6104, %v6404
      %6406 = vmatmul.bf16.gmra.mxu0 %v6056
      %v6407 = vpop.f32.mrf.mxu0
      %v6408 = vadd.f32 %v6104, %v6407
      %v6409 = vpop.f32.mrf.mxu0
      %v6410 = vadd.f32 %v6104, %v6409
      %6411 = vmatmul.bf16.gmra.mxu0 %v6058
      %v6412 = vpop.f32.mrf.mxu0
      %v6413 = vadd.f32 %v6104, %v6412
      %v6414 = vpop.f32.mrf.mxu0
      %v6415 = vadd.f32 %v6104, %v6414
      %6416 = vmatmul.bf16.gmra.mxu0 %v6060
      %v6417 = vpop.f32.mrf.mxu0
      %v6418 = vadd.f32 %v6104, %v6417
      %v6419 = vpop.f32.mrf.mxu0
      %v6420 = vadd.f32 %v6104, %v6419
      %6421 = vmatmul.bf16.gmra.mxu0 %v6062
      %v6422 = vpop.f32.mrf.mxu0
      %v6423 = vadd.f32 %v6104, %v6422
      %v6424 = vpop.f32.mrf.mxu0
      %v6425 = vadd.f32 %v6104, %v6424
      %6426 = vmatmul.bf16.gmra.mxu0 %v6064
      %v6427 = vpop.f32.mrf.mxu0
      %v6428 = vadd.f32 %v6104, %v6427
      %v6429 = vpop.f32.mrf.mxu0
      %v6430 = vadd.f32 %v6104, %v6429
      %6431 = vmatmul.bf16.gmra.mxu0 %v6066
      %v6432 = vpop.f32.mrf.mxu0
      %v6433 = vadd.f32 %v6104, %v6432
      %v6434 = vpop.f32.mrf.mxu0
      %v6435 = vadd.f32 %v6104, %v6434
      %6436 = vdwg.mxu0
      %6437 = vmatpush.bf16.msra.mxu0 %v6234
      %6438 = vmatpush.bf16.msra.mxu0 %v6232
      %6439 = vmatpush.bf16.msra.mxu0 %v6230
      %6440 = vmatpush.bf16.msra.mxu0 %v6228
      %6441 = vmatpush.bf16.msra.mxu0 %v6226
      %6442 = vmatpush.bf16.msra.mxu0 %v6224
      %6443 = vmatpush.bf16.msra.mxu0 %v6222
      %6444 = vmatpush.bf16.msra.mxu0 %v6220
      %6445 = vmatmul.bf16.gmra.mxu0 %v6005
      %v6446 = vpop.f32.mrf.mxu0
      %v6447 = vadd.f32 %v6278, %v6446
      %v6448 = vpop.f32.mrf.mxu0
      %v6449 = vadd.f32 %v6280, %v6448
      %6450 = vmatmul.bf16.gmra.mxu0 %v6007
      %v6451 = vpop.f32.mrf.mxu0
      %v6452 = vadd.f32 %v6283, %v6451
      %v6453 = vpop.f32.mrf.mxu0
      %v6454 = vadd.f32 %v6285, %v6453
      %6455 = vmatmul.bf16.gmra.mxu0 %v6009
      %v6456 = vpop.f32.mrf.mxu0
      %v6457 = vadd.f32 %v6288, %v6456
      %v6458 = vpop.f32.mrf.mxu0
      %v6459 = vadd.f32 %v6290, %v6458
      %6460 = vmatmul.bf16.gmra.mxu0 %v6011
      %v6461 = vpop.f32.mrf.mxu0
      %v6462 = vadd.f32 %v6293, %v6461
      %v6463 = vpop.f32.mrf.mxu0
      %v6464 = vadd.f32 %v6295, %v6463
      %6465 = vmatmul.bf16.gmra.mxu0 %v6013
      %v6466 = vpop.f32.mrf.mxu0
      %v6467 = vadd.f32 %v6298, %v6466
      %v6468 = vpop.f32.mrf.mxu0
      %v6469 = vadd.f32 %v6300, %v6468
      %6470 = vmatmul.bf16.gmra.mxu0 %v6015
      %v6471 = vpop.f32.mrf.mxu0
      %v6472 = vadd.f32 %v6303, %v6471
      %v6473 = vpop.f32.mrf.mxu0
      %v6474 = vadd.f32 %v6305, %v6473
      %6475 = vmatmul.bf16.gmra.mxu0 %v6017
      %v6476 = vpop.f32.mrf.mxu0
      %v6477 = vadd.f32 %v6308, %v6476
      %v6478 = vpop.f32.mrf.mxu0
      %v6479 = vadd.f32 %v6310, %v6478
      %6480 = vmatmul.bf16.gmra.mxu0 %v6019
      %v6481 = vpop.f32.mrf.mxu0
      %v6482 = vadd.f32 %v6313, %v6481
      %v6483 = vpop.f32.mrf.mxu0
      %v6484 = vadd.f32 %v6315, %v6483
      %6485 = vmatmul.bf16.gmra.mxu0 %v6021
      %v6486 = vpop.f32.mrf.mxu0
      %v6487 = vadd.f32 %v6318, %v6486
      %v6488 = vpop.f32.mrf.mxu0
      %v6489 = vadd.f32 %v6320, %v6488
      %6490 = vmatmul.bf16.gmra.mxu0 %v6023
      %v6491 = vpop.f32.mrf.mxu0
      %v6492 = vadd.f32 %v6323, %v6491
      %v6493 = vpop.f32.mrf.mxu0
      %v6494 = vadd.f32 %v6325, %v6493
      %6495 = vmatmul.bf16.gmra.mxu0 %v6025
      %v6496 = vpop.f32.mrf.mxu0
      %v6497 = vadd.f32 %v6328, %v6496
      %v6498 = vpop.f32.mrf.mxu0
      %v6499 = vadd.f32 %v6330, %v6498
      %6500 = vmatmul.bf16.gmra.mxu0 %v6027
      %v6501 = vpop.f32.mrf.mxu0
      %v6502 = vadd.f32 %v6333, %v6501
      %v6503 = vpop.f32.mrf.mxu0
      %v6504 = vadd.f32 %v6335, %v6503
      %6505 = vmatmul.bf16.gmra.mxu0 %v6029
      %v6506 = vpop.f32.mrf.mxu0
      %v6507 = vadd.f32 %v6338, %v6506
      %v6508 = vpop.f32.mrf.mxu0
      %v6509 = vadd.f32 %v6340, %v6508
      %6510 = vmatmul.bf16.gmra.mxu0 %v6031
      %v6511 = vpop.f32.mrf.mxu0
      %v6512 = vadd.f32 %v6343, %v6511
      %v6513 = vpop.f32.mrf.mxu0
      %v6514 = vadd.f32 %v6345, %v6513
      %6515 = vmatmul.bf16.gmra.mxu0 %v6033
      %v6516 = vpop.f32.mrf.mxu0
      %v6517 = vadd.f32 %v6348, %v6516
      %v6518 = vpop.f32.mrf.mxu0
      %v6519 = vadd.f32 %v6350, %v6518
      %6520 = vmatmul.bf16.gmra.mxu0 %v6035
      %v6521 = vpop.f32.mrf.mxu0
      %v6522 = vadd.f32 %v6353, %v6521
      %v6523 = vpop.f32.mrf.mxu0
      %v6524 = vadd.f32 %v6355, %v6523
      %6525 = vmatmul.bf16.gmra.mxu0 %v6037
      %v6526 = vpop.f32.mrf.mxu0
      %v6527 = vadd.f32 %v6358, %v6526
      %v6528 = vpop.f32.mrf.mxu0
      %v6529 = vadd.f32 %v6360, %v6528
      %6530 = vmatmul.bf16.gmra.mxu0 %v6039
      %v6531 = vpop.f32.mrf.mxu0
      %v6532 = vadd.f32 %v6363, %v6531
      %v6533 = vpop.f32.mrf.mxu0
      %v6534 = vadd.f32 %v6365, %v6533
      %6535 = vmatmul.bf16.gmra.mxu0 %v6041
      %v6536 = vpop.f32.mrf.mxu0
      %v6537 = vadd.f32 %v6368, %v6536
      %v6538 = vpop.f32.mrf.mxu0
      %v6539 = vadd.f32 %v6370, %v6538
      %6540 = vmatmul.bf16.gmra.mxu0 %v6043
      %v6541 = vpop.f32.mrf.mxu0
      %v6542 = vadd.f32 %v6373, %v6541
      %v6543 = vpop.f32.mrf.mxu0
      %v6544 = vadd.f32 %v6375, %v6543
      %6545 = vmatmul.bf16.gmra.mxu0 %v6045
      %v6546 = vpop.f32.mrf.mxu0
      %v6547 = vadd.f32 %v6378, %v6546
      %v6548 = vpop.f32.mrf.mxu0
      %v6549 = vadd.f32 %v6380, %v6548
      %6550 = vmatmul.bf16.gmra.mxu0 %v6047
      %v6551 = vpop.f32.mrf.mxu0
      %v6552 = vadd.f32 %v6383, %v6551
      %v6553 = vpop.f32.mrf.mxu0
      %v6554 = vadd.f32 %v6385, %v6553
      %6555 = vmatmul.bf16.gmra.mxu0 %v6049
      %v6556 = vpop.f32.mrf.mxu0
      %v6557 = vadd.f32 %v6388, %v6556
      %v6558 = vpop.f32.mrf.mxu0
      %v6559 = vadd.f32 %v6390, %v6558
      %6560 = vmatmul.bf16.gmra.mxu0 %v6051
      %v6561 = vpop.f32.mrf.mxu0
      %v6562 = vadd.f32 %v6393, %v6561
      %v6563 = vpop.f32.mrf.mxu0
      %v6564 = vadd.f32 %v6395, %v6563
      %6565 = vmatmul.bf16.gmra.mxu0 %v6053
      %v6566 = vpop.f32.mrf.mxu0
      %v6567 = vadd.f32 %v6398, %v6566
      %v6568 = vpop.f32.mrf.mxu0
      %v6569 = vadd.f32 %v6400, %v6568
      %6570 = vmatmul.bf16.gmra.mxu0 %v6055
      %v6571 = vpop.f32.mrf.mxu0
      %v6572 = vadd.f32 %v6403, %v6571
      %v6573 = vpop.f32.mrf.mxu0
      %v6574 = vadd.f32 %v6405, %v6573
      %6575 = vmatmul.bf16.gmra.mxu0 %v6057
      %v6576 = vpop.f32.mrf.mxu0
      %v6577 = vadd.f32 %v6408, %v6576
      %v6578 = vpop.f32.mrf.mxu0
      %v6579 = vadd.f32 %v6410, %v6578
      %6580 = vmatmul.bf16.gmra.mxu0 %v6059
      %v6581 = vpop.f32.mrf.mxu0
      %v6582 = vadd.f32 %v6413, %v6581
      %v6583 = vpop.f32.mrf.mxu0
      %v6584 = vadd.f32 %v6415, %v6583
      %6585 = vmatmul.bf16.gmra.mxu0 %v6061
      %v6586 = vpop.f32.mrf.mxu0
      %v6587 = vadd.f32 %v6418, %v6586
      %v6588 = vpop.f32.mrf.mxu0
      %v6589 = vadd.f32 %v6420, %v6588
      %6590 = vmatmul.bf16.gmra.mxu0 %v6063
      %v6591 = vpop.f32.mrf.mxu0
      %v6592 = vadd.f32 %v6423, %v6591
      %v6593 = vpop.f32.mrf.mxu0
      %v6594 = vadd.f32 %v6425, %v6593
      %6595 = vmatmul.bf16.gmra.mxu0 %v6065
      %v6596 = vpop.f32.mrf.mxu0
      %v6597 = vadd.f32 %v6428, %v6596
      %v6598 = vpop.f32.mrf.mxu0
      %v6599 = vadd.f32 %v6430, %v6598
      %6600 = vmatmul.bf16.gmra.mxu0 %v6067
      %v6601 = vpop.f32.mrf.mxu0
      %v6602 = vadd.f32 %v6433, %v6601
      %v6603 = vpop.f32.mrf.mxu0
      %v6604 = vadd.f32 %v6435, %v6603
      %6605 = vdwg.mxu0
      %6606 = vmatpush.bf16.msra.mxu0 %v6219
      %6607 = vmatpush.bf16.msra.mxu0 %v6217
      %6608 = vmatpush.bf16.msra.mxu0 %v6215
      %6609 = vmatpush.bf16.msra.mxu0 %v6213
      %6610 = vmatpush.bf16.msra.mxu0 %v6211
      %6611 = vmatpush.bf16.msra.mxu0 %v6209
      %6612 = vmatpush.bf16.msra.mxu0 %v6207
      %6613 = vmatpush.bf16.msra.mxu0 %v6205
      %6614 = vmatmul.bf16.gmra.mxu0 %v6004
      %v6615 = vpop.f32.mrf.mxu0
      %v6616 = vadd.f32 %v6105, %v6615
      %v6617 = vpop.f32.mrf.mxu0
      %v6618 = vadd.f32 %v6105, %v6617
      %6619 = vmatmul.bf16.gmra.mxu0 %v6006
      %v6620 = vpop.f32.mrf.mxu0
      %v6621 = vadd.f32 %v6105, %v6620
      %v6622 = vpop.f32.mrf.mxu0
      %v6623 = vadd.f32 %v6105, %v6622
      %6624 = vmatmul.bf16.gmra.mxu0 %v6008
      %v6625 = vpop.f32.mrf.mxu0
      %v6626 = vadd.f32 %v6105, %v6625
      %v6627 = vpop.f32.mrf.mxu0
      %v6628 = vadd.f32 %v6105, %v6627
      %6629 = vmatmul.bf16.gmra.mxu0 %v6010
      %v6630 = vpop.f32.mrf.mxu0
      %v6631 = vadd.f32 %v6105, %v6630
      %v6632 = vpop.f32.mrf.mxu0
      %v6633 = vadd.f32 %v6105, %v6632
      %6634 = vmatmul.bf16.gmra.mxu0 %v6012
      %v6635 = vpop.f32.mrf.mxu0
      %v6636 = vadd.f32 %v6105, %v6635
      %v6637 = vpop.f32.mrf.mxu0
      %v6638 = vadd.f32 %v6105, %v6637
      %6639 = vmatmul.bf16.gmra.mxu0 %v6014
      %v6640 = vpop.f32.mrf.mxu0
      %v6641 = vadd.f32 %v6105, %v6640
      %v6642 = vpop.f32.mrf.mxu0
      %v6643 = vadd.f32 %v6105, %v6642
      %6644 = vmatmul.bf16.gmra.mxu0 %v6016
      %v6645 = vpop.f32.mrf.mxu0
      %v6646 = vadd.f32 %v6105, %v6645
      %v6647 = vpop.f32.mrf.mxu0
      %v6648 = vadd.f32 %v6105, %v6647
      %6649 = vmatmul.bf16.gmra.mxu0 %v6018
      %v6650 = vpop.f32.mrf.mxu0
      %v6651 = vadd.f32 %v6105, %v6650
      %v6652 = vpop.f32.mrf.mxu0
      %v6653 = vadd.f32 %v6105, %v6652
      %6654 = vmatmul.bf16.gmra.mxu0 %v6020
      %v6655 = vpop.f32.mrf.mxu0
      %v6656 = vadd.f32 %v6105, %v6655
      %v6657 = vpop.f32.mrf.mxu0
      %v6658 = vadd.f32 %v6105, %v6657
      %6659 = vmatmul.bf16.gmra.mxu0 %v6022
      %v6660 = vpop.f32.mrf.mxu0
      %v6661 = vadd.f32 %v6105, %v6660
      %v6662 = vpop.f32.mrf.mxu0
      %v6663 = vadd.f32 %v6105, %v6662
      %6664 = vmatmul.bf16.gmra.mxu0 %v6024
      %v6665 = vpop.f32.mrf.mxu0
      %v6666 = vadd.f32 %v6105, %v6665
      %v6667 = vpop.f32.mrf.mxu0
      %v6668 = vadd.f32 %v6105, %v6667
      %6669 = vmatmul.bf16.gmra.mxu0 %v6026
      %v6670 = vpop.f32.mrf.mxu0
      %v6671 = vadd.f32 %v6105, %v6670
      %v6672 = vpop.f32.mrf.mxu0
      %v6673 = vadd.f32 %v6105, %v6672
      %6674 = vmatmul.bf16.gmra.mxu0 %v6028
      %v6675 = vpop.f32.mrf.mxu0
      %v6676 = vadd.f32 %v6105, %v6675
      %v6677 = vpop.f32.mrf.mxu0
      %v6678 = vadd.f32 %v6105, %v6677
      %6679 = vmatmul.bf16.gmra.mxu0 %v6030
      %v6680 = vpop.f32.mrf.mxu0
      %v6681 = vadd.f32 %v6105, %v6680
      %v6682 = vpop.f32.mrf.mxu0
      %v6683 = vadd.f32 %v6105, %v6682
      %6684 = vmatmul.bf16.gmra.mxu0 %v6032
      %v6685 = vpop.f32.mrf.mxu0
      %v6686 = vadd.f32 %v6105, %v6685
      %v6687 = vpop.f32.mrf.mxu0
      %v6688 = vadd.f32 %v6105, %v6687
      %6689 = vmatmul.bf16.gmra.mxu0 %v6034
      %v6690 = vpop.f32.mrf.mxu0
      %v6691 = vadd.f32 %v6105, %v6690
      %v6692 = vpop.f32.mrf.mxu0
      %v6693 = vadd.f32 %v6105, %v6692
      %6694 = vmatmul.bf16.gmra.mxu0 %v6036
      %v6695 = vpop.f32.mrf.mxu0
      %v6696 = vadd.f32 %v6105, %v6695
      %v6697 = vpop.f32.mrf.mxu0
      %v6698 = vadd.f32 %v6105, %v6697
      %6699 = vmatmul.bf16.gmra.mxu0 %v6038
      %v6700 = vpop.f32.mrf.mxu0
      %v6701 = vadd.f32 %v6105, %v6700
      %v6702 = vpop.f32.mrf.mxu0
      %v6703 = vadd.f32 %v6105, %v6702
      %6704 = vmatmul.bf16.gmra.mxu0 %v6040
      %v6705 = vpop.f32.mrf.mxu0
      %v6706 = vadd.f32 %v6105, %v6705
      %v6707 = vpop.f32.mrf.mxu0
      %v6708 = vadd.f32 %v6105, %v6707
      %6709 = vmatmul.bf16.gmra.mxu0 %v6042
      %v6710 = vpop.f32.mrf.mxu0
      %v6711 = vadd.f32 %v6105, %v6710
      %v6712 = vpop.f32.mrf.mxu0
      %v6713 = vadd.f32 %v6105, %v6712
      %6714 = vmatmul.bf16.gmra.mxu0 %v6044
      %v6715 = vpop.f32.mrf.mxu0
      %v6716 = vadd.f32 %v6105, %v6715
      %v6717 = vpop.f32.mrf.mxu0
      %v6718 = vadd.f32 %v6105, %v6717
      %6719 = vmatmul.bf16.gmra.mxu0 %v6046
      %v6720 = vpop.f32.mrf.mxu0
      %v6721 = vadd.f32 %v6105, %v6720
      %v6722 = vpop.f32.mrf.mxu0
      %v6723 = vadd.f32 %v6105, %v6722
      %6724 = vmatmul.bf16.gmra.mxu0 %v6048
      %v6725 = vpop.f32.mrf.mxu0
      %v6726 = vadd.f32 %v6105, %v6725
      %v6727 = vpop.f32.mrf.mxu0
      %v6728 = vadd.f32 %v6105, %v6727
      %6729 = vmatmul.bf16.gmra.mxu0 %v6050
      %v6730 = vpop.f32.mrf.mxu0
      %v6731 = vadd.f32 %v6105, %v6730
      %v6732 = vpop.f32.mrf.mxu0
      %v6733 = vadd.f32 %v6105, %v6732
      %6734 = vmatmul.bf16.gmra.mxu0 %v6052
      %v6735 = vpop.f32.mrf.mxu0
      %v6736 = vadd.f32 %v6105, %v6735
      %v6737 = vpop.f32.mrf.mxu0
      %v6738 = vadd.f32 %v6105, %v6737
      %6739 = vmatmul.bf16.gmra.mxu0 %v6054
      %v6740 = vpop.f32.mrf.mxu0
      %v6741 = vadd.f32 %v6105, %v6740
      %v6742 = vpop.f32.mrf.mxu0
      %v6743 = vadd.f32 %v6105, %v6742
      %6744 = vmatmul.bf16.gmra.mxu0 %v6056
      %v6745 = vpop.f32.mrf.mxu0
      %v6746 = vadd.f32 %v6105, %v6745
      %v6747 = vpop.f32.mrf.mxu0
      %v6748 = vadd.f32 %v6105, %v6747
      %6749 = vmatmul.bf16.gmra.mxu0 %v6058
      %v6750 = vpop.f32.mrf.mxu0
      %v6751 = vadd.f32 %v6105, %v6750
      %v6752 = vpop.f32.mrf.mxu0
      %v6753 = vadd.f32 %v6105, %v6752
      %6754 = vmatmul.bf16.gmra.mxu0 %v6060
      %v6755 = vpop.f32.mrf.mxu0
      %v6756 = vadd.f32 %v6105, %v6755
      %v6757 = vpop.f32.mrf.mxu0
      %v6758 = vadd.f32 %v6105, %v6757
      %6759 = vmatmul.bf16.gmra.mxu0 %v6062
      %v6760 = vpop.f32.mrf.mxu0
      %v6761 = vadd.f32 %v6105, %v6760
      %v6762 = vpop.f32.mrf.mxu0
      %v6763 = vadd.f32 %v6105, %v6762
      %6764 = vmatmul.bf16.gmra.mxu0 %v6064
      %v6765 = vpop.f32.mrf.mxu0
      %v6766 = vadd.f32 %v6105, %v6765
      %v6767 = vpop.f32.mrf.mxu0
      %v6768 = vadd.f32 %v6105, %v6767
      %6769 = vmatmul.bf16.gmra.mxu0 %v6066
      %v6770 = vpop.f32.mrf.mxu0
      %v6771 = vadd.f32 %v6105, %v6770
      %v6772 = vpop.f32.mrf.mxu0
      %v6773 = vadd.f32 %v6105, %v6772
      %6774 = vdwg.mxu0
      %6775 = vmatpush.bf16.msra.mxu0 %v6235
      %6776 = vmatpush.bf16.msra.mxu0 %v6233
      %6777 = vmatpush.bf16.msra.mxu0 %v6231
      %6778 = vmatpush.bf16.msra.mxu0 %v6229
      %6779 = vmatpush.bf16.msra.mxu0 %v6227
      %6780 = vmatpush.bf16.msra.mxu0 %v6225
      %6781 = vmatpush.bf16.msra.mxu0 %v6223
      %6782 = vmatpush.bf16.msra.mxu0 %v6221
      %6783 = vmatmul.bf16.gmra.mxu0 %v6005
      %v6784 = vpop.f32.mrf.mxu0
      %v6785 = vadd.f32 %v6616, %v6784
      %v6786 = vpop.f32.mrf.mxu0
      %v6787 = vadd.f32 %v6618, %v6786
      %6788 = vmatmul.bf16.gmra.mxu0 %v6007
      %v6789 = vpop.f32.mrf.mxu0
      %v6790 = vadd.f32 %v6621, %v6789
      %v6791 = vpop.f32.mrf.mxu0
      %v6792 = vadd.f32 %v6623, %v6791
      %6793 = vmatmul.bf16.gmra.mxu0 %v6009
      %v6794 = vpop.f32.mrf.mxu0
      %v6795 = vadd.f32 %v6626, %v6794
      %v6796 = vpop.f32.mrf.mxu0
      %v6797 = vadd.f32 %v6628, %v6796
      %6798 = vmatmul.bf16.gmra.mxu0 %v6011
      %v6799 = vpop.f32.mrf.mxu0
      %v6800 = vadd.f32 %v6631, %v6799
      %v6801 = vpop.f32.mrf.mxu0
      %v6802 = vadd.f32 %v6633, %v6801
      %6803 = vmatmul.bf16.gmra.mxu0 %v6013
      %v6804 = vpop.f32.mrf.mxu0
      %v6805 = vadd.f32 %v6636, %v6804
      %v6806 = vpop.f32.mrf.mxu0
      %v6807 = vadd.f32 %v6638, %v6806
      %6808 = vmatmul.bf16.gmra.mxu0 %v6015
      %v6809 = vpop.f32.mrf.mxu0
      %v6810 = vadd.f32 %v6641, %v6809
      %v6811 = vpop.f32.mrf.mxu0
      %v6812 = vadd.f32 %v6643, %v6811
      %6813 = vmatmul.bf16.gmra.mxu0 %v6017
      %v6814 = vpop.f32.mrf.mxu0
      %v6815 = vadd.f32 %v6646, %v6814
      %v6816 = vpop.f32.mrf.mxu0
      %v6817 = vadd.f32 %v6648, %v6816
      %6818 = vmatmul.bf16.gmra.mxu0 %v6019
      %v6819 = vpop.f32.mrf.mxu0
      %v6820 = vadd.f32 %v6651, %v6819
      %v6821 = vpop.f32.mrf.mxu0
      %v6822 = vadd.f32 %v6653, %v6821
      %6823 = vmatmul.bf16.gmra.mxu0 %v6021
      %v6824 = vpop.f32.mrf.mxu0
      %v6825 = vadd.f32 %v6656, %v6824
      %v6826 = vpop.f32.mrf.mxu0
      %v6827 = vadd.f32 %v6658, %v6826
      %6828 = vmatmul.bf16.gmra.mxu0 %v6023
      %v6829 = vpop.f32.mrf.mxu0
      %v6830 = vadd.f32 %v6661, %v6829
      %v6831 = vpop.f32.mrf.mxu0
      %v6832 = vadd.f32 %v6663, %v6831
      %6833 = vmatmul.bf16.gmra.mxu0 %v6025
      %v6834 = vpop.f32.mrf.mxu0
      %v6835 = vadd.f32 %v6666, %v6834
      %v6836 = vpop.f32.mrf.mxu0
      %v6837 = vadd.f32 %v6668, %v6836
      %6838 = vmatmul.bf16.gmra.mxu0 %v6027
      %v6839 = vpop.f32.mrf.mxu0
      %v6840 = vadd.f32 %v6671, %v6839
      %v6841 = vpop.f32.mrf.mxu0
      %v6842 = vadd.f32 %v6673, %v6841
      %6843 = vmatmul.bf16.gmra.mxu0 %v6029
      %v6844 = vpop.f32.mrf.mxu0
      %v6845 = vadd.f32 %v6676, %v6844
      %v6846 = vpop.f32.mrf.mxu0
      %v6847 = vadd.f32 %v6678, %v6846
      %6848 = vmatmul.bf16.gmra.mxu0 %v6031
      %v6849 = vpop.f32.mrf.mxu0
      %v6850 = vadd.f32 %v6681, %v6849
      %v6851 = vpop.f32.mrf.mxu0
      %v6852 = vadd.f32 %v6683, %v6851
      %6853 = vmatmul.bf16.gmra.mxu0 %v6033
      %v6854 = vpop.f32.mrf.mxu0
      %v6855 = vadd.f32 %v6686, %v6854
      %v6856 = vpop.f32.mrf.mxu0
      %v6857 = vadd.f32 %v6688, %v6856
      %6858 = vmatmul.bf16.gmra.mxu0 %v6035
      %v6859 = vpop.f32.mrf.mxu0
      %v6860 = vadd.f32 %v6691, %v6859
      %v6861 = vpop.f32.mrf.mxu0
      %v6862 = vadd.f32 %v6693, %v6861
      %6863 = vmatmul.bf16.gmra.mxu0 %v6037
      %v6864 = vpop.f32.mrf.mxu0
      %v6865 = vadd.f32 %v6696, %v6864
      %v6866 = vpop.f32.mrf.mxu0
      %v6867 = vadd.f32 %v6698, %v6866
      %6868 = vmatmul.bf16.gmra.mxu0 %v6039
      %v6869 = vpop.f32.mrf.mxu0
      %v6870 = vadd.f32 %v6701, %v6869
      %v6871 = vpop.f32.mrf.mxu0
      %v6872 = vadd.f32 %v6703, %v6871
      %6873 = vmatmul.bf16.gmra.mxu0 %v6041
      %v6874 = vpop.f32.mrf.mxu0
      %v6875 = vadd.f32 %v6706, %v6874
      %v6876 = vpop.f32.mrf.mxu0
      %v6877 = vadd.f32 %v6708, %v6876
      %6878 = vmatmul.bf16.gmra.mxu0 %v6043
      %v6879 = vpop.f32.mrf.mxu0
      %v6880 = vadd.f32 %v6711, %v6879
      %v6881 = vpop.f32.mrf.mxu0
      %v6882 = vadd.f32 %v6713, %v6881
      %6883 = vmatmul.bf16.gmra.mxu0 %v6045
      %v6884 = vpop.f32.mrf.mxu0
      %v6885 = vadd.f32 %v6716, %v6884
      %v6886 = vpop.f32.mrf.mxu0
      %v6887 = vadd.f32 %v6718, %v6886
      %6888 = vmatmul.bf16.gmra.mxu0 %v6047
      %v6889 = vpop.f32.mrf.mxu0
      %v6890 = vadd.f32 %v6721, %v6889
      %v6891 = vpop.f32.mrf.mxu0
      %v6892 = vadd.f32 %v6723, %v6891
      %6893 = vmatmul.bf16.gmra.mxu0 %v6049
      %v6894 = vpop.f32.mrf.mxu0
      %v6895 = vadd.f32 %v6726, %v6894
      %v6896 = vpop.f32.mrf.mxu0
      %v6897 = vadd.f32 %v6728, %v6896
      %6898 = vmatmul.bf16.gmra.mxu0 %v6051
      %v6899 = vpop.f32.mrf.mxu0
      %v6900 = vadd.f32 %v6731, %v6899
      %v6901 = vpop.f32.mrf.mxu0
      %v6902 = vadd.f32 %v6733, %v6901
      %6903 = vmatmul.bf16.gmra.mxu0 %v6053
      %v6904 = vpop.f32.mrf.mxu0
      %v6905 = vadd.f32 %v6736, %v6904
      %v6906 = vpop.f32.mrf.mxu0
      %v6907 = vadd.f32 %v6738, %v6906
      %6908 = vmatmul.bf16.gmra.mxu0 %v6055
      %v6909 = vpop.f32.mrf.mxu0
      %v6910 = vadd.f32 %v6741, %v6909
      %v6911 = vpop.f32.mrf.mxu0
      %v6912 = vadd.f32 %v6743, %v6911
      %6913 = vmatmul.bf16.gmra.mxu0 %v6057
      %v6914 = vpop.f32.mrf.mxu0
      %v6915 = vadd.f32 %v6746, %v6914
      %v6916 = vpop.f32.mrf.mxu0
      %v6917 = vadd.f32 %v6748, %v6916
      %6918 = vmatmul.bf16.gmra.mxu0 %v6059
      %v6919 = vpop.f32.mrf.mxu0
      %v6920 = vadd.f32 %v6751, %v6919
      %v6921 = vpop.f32.mrf.mxu0
      %v6922 = vadd.f32 %v6753, %v6921
      %6923 = vmatmul.bf16.gmra.mxu0 %v6061
      %v6924 = vpop.f32.mrf.mxu0
      %v6925 = vadd.f32 %v6756, %v6924
      %v6926 = vpop.f32.mrf.mxu0
      %v6927 = vadd.f32 %v6758, %v6926
      %6928 = vmatmul.bf16.gmra.mxu0 %v6063
      %v6929 = vpop.f32.mrf.mxu0
      %v6930 = vadd.f32 %v6761, %v6929
      %v6931 = vpop.f32.mrf.mxu0
      %v6932 = vadd.f32 %v6763, %v6931
      %6933 = vmatmul.bf16.gmra.mxu0 %v6065
      %v6934 = vpop.f32.mrf.mxu0
      %v6935 = vadd.f32 %v6766, %v6934
      %v6936 = vpop.f32.mrf.mxu0
      %v6937 = vadd.f32 %v6768, %v6936
      %6938 = vmatmul.bf16.gmra.mxu0 %v6067
      %v6939 = vpop.f32.mrf.mxu0
      %v6940 = vadd.f32 %v6771, %v6939
      %v6941 = vpop.f32.mrf.mxu0
      %v6942 = vadd.f32 %v6773, %v6941
      %6943 = vdwg.mxu0
      %v6944 = vmax.f32 %v6447, 0.0
      %v6945 = vmax.f32 %v6785, 0.0
      %v6946 = vmax.f32 %v6449, 0.0
      %v6947 = vmax.f32 %v6787, 0.0
      %v6948 = vmax.f32 %v6452, 0.0
      %v6949 = vmax.f32 %v6790, 0.0
      %v6950 = vmax.f32 %v6454, 0.0
      %v6951 = vmax.f32 %v6792, 0.0
      %v6952 = vmax.f32 %v6457, 0.0
      %v6953 = vmax.f32 %v6795, 0.0
      %v6954 = vmax.f32 %v6459, 0.0
      %v6955 = vmax.f32 %v6797, 0.0
      %v6956 = vmax.f32 %v6462, 0.0
      %v6957 = vmax.f32 %v6800, 0.0
      %v6958 = vmax.f32 %v6464, 0.0
      %v6959 = vmax.f32 %v6802, 0.0
      %v6960 = vmax.f32 %v6467, 0.0
      %v6961 = vmax.f32 %v6805, 0.0
      %v6962 = vmax.f32 %v6469, 0.0
      %v6963 = vmax.f32 %v6807, 0.0
      %v6964 = vmax.f32 %v6472, 0.0
      %v6965 = vmax.f32 %v6810, 0.0
      %v6966 = vmax.f32 %v6474, 0.0
      %v6967 = vmax.f32 %v6812, 0.0
      %v6968 = vmax.f32 %v6477, 0.0
      %v6969 = vmax.f32 %v6815, 0.0
      %v6970 = vmax.f32 %v6479, 0.0
      %v6971 = vmax.f32 %v6817, 0.0
      %v6972 = vmax.f32 %v6482, 0.0
      %v6973 = vmax.f32 %v6820, 0.0
      %v6974 = vmax.f32 %v6484, 0.0
      %v6975 = vmax.f32 %v6822, 0.0
      %v6976 = vmax.f32 %v6487, 0.0
      %v6977 = vmax.f32 %v6825, 0.0
      %v6978 = vmax.f32 %v6489, 0.0
      %v6979 = vmax.f32 %v6827, 0.0
      %v6980 = vmax.f32 %v6492, 0.0
      %v6981 = vmax.f32 %v6830, 0.0
      %v6982 = vmax.f32 %v6494, 0.0
      %v6983 = vmax.f32 %v6832, 0.0
      %v6984 = vmax.f32 %v6497, 0.0
      %v6985 = vmax.f32 %v6835, 0.0
      %v6986 = vmax.f32 %v6499, 0.0
      %v6987 = vmax.f32 %v6837, 0.0
      %v6988 = vmax.f32 %v6502, 0.0
      %v6989 = vmax.f32 %v6840, 0.0
      %v6990 = vmax.f32 %v6504, 0.0
      %v6991 = vmax.f32 %v6842, 0.0
      %v6992 = vmax.f32 %v6507, 0.0
      %v6993 = vmax.f32 %v6845, 0.0
      %v6994 = vmax.f32 %v6509, 0.0
      %v6995 = vmax.f32 %v6847, 0.0
      %v6996 = vmax.f32 %v6512, 0.0
      %v6997 = vmax.f32 %v6850, 0.0
      %v6998 = vmax.f32 %v6514, 0.0
      %v6999 = vmax.f32 %v6852, 0.0
      %v7000 = vmax.f32 %v6517, 0.0
      %v7001 = vmax.f32 %v6855, 0.0
      %v7002 = vmax.f32 %v6519, 0.0
      %v7003 = vmax.f32 %v6857, 0.0
      %v7004 = vmax.f32 %v6522, 0.0
      %v7005 = vmax.f32 %v6860, 0.0
      %v7006 = vmax.f32 %v6524, 0.0
      %v7007 = vmax.f32 %v6862, 0.0
      %v7008 = vmax.f32 %v6527, 0.0
      %v7009 = vmax.f32 %v6865, 0.0
      %v7010 = vmax.f32 %v6529, 0.0
      %v7011 = vmax.f32 %v6867, 0.0
      %v7012 = vmax.f32 %v6532, 0.0
      %v7013 = vmax.f32 %v6870, 0.0
      %v7014 = vmax.f32 %v6534, 0.0
      %v7015 = vmax.f32 %v6872, 0.0
      %v7016 = vmax.f32 %v6537, 0.0
      %v7017 = vmax.f32 %v6875, 0.0
      %v7018 = vmax.f32 %v6539, 0.0
      %v7019 = vmax.f32 %v6877, 0.0
      %v7020 = vmax.f32 %v6542, 0.0
      %v7021 = vmax.f32 %v6880, 0.0
      %v7022 = vmax.f32 %v6544, 0.0
      %v7023 = vmax.f32 %v6882, 0.0
      %v7024 = vmax.f32 %v6547, 0.0
      %v7025 = vmax.f32 %v6885, 0.0
      %v7026 = vmax.f32 %v6549, 0.0
      %v7027 = vmax.f32 %v6887, 0.0
      %v7028 = vmax.f32 %v6552, 0.0
      %v7029 = vmax.f32 %v6890, 0.0
      %v7030 = vmax.f32 %v6554, 0.0
      %v7031 = vmax.f32 %v6892, 0.0
      %v7032 = vmax.f32 %v6557, 0.0
      %v7033 = vmax.f32 %v6895, 0.0
      %v7034 = vmax.f32 %v6559, 0.0
      %v7035 = vmax.f32 %v6897, 0.0
      %v7036 = vmax.f32 %v6562, 0.0
      %v7037 = vmax.f32 %v6900, 0.0
      %v7038 = vmax.f32 %v6564, 0.0
      %v7039 = vmax.f32 %v6902, 0.0
      %v7040 = vmax.f32 %v6567, 0.0
      %v7041 = vmax.f32 %v6905, 0.0
      %v7042 = vmax.f32 %v6569, 0.0
      %v7043 = vmax.f32 %v6907, 0.0
      %v7044 = vmax.f32 %v6572, 0.0
      %v7045 = vmax.f32 %v6910, 0.0
      %v7046 = vmax.f32 %v6574, 0.0
      %v7047 = vmax.f32 %v6912, 0.0
      %v7048 = vmax.f32 %v6577, 0.0
      %v7049 = vmax.f32 %v6915, 0.0
      %v7050 = vmax.f32 %v6579, 0.0
      %v7051 = vmax.f32 %v6917, 0.0
      %v7052 = vmax.f32 %v6582, 0.0
      %v7053 = vmax.f32 %v6920, 0.0
      %v7054 = vmax.f32 %v6584, 0.0
      %v7055 = vmax.f32 %v6922, 0.0
      %v7056 = vmax.f32 %v6587, 0.0
      %v7057 = vmax.f32 %v6925, 0.0
      %v7058 = vmax.f32 %v6589, 0.0
      %v7059 = vmax.f32 %v6927, 0.0
      %v7060 = vmax.f32 %v6592, 0.0
      %v7061 = vmax.f32 %v6930, 0.0
      %v7062 = vmax.f32 %v6594, 0.0
      %v7063 = vmax.f32 %v6932, 0.0
      %v7064 = vmax.f32 %v6597, 0.0
      %v7065 = vmax.f32 %v6935, 0.0
      %v7066 = vmax.f32 %v6599, 0.0
      %v7067 = vmax.f32 %v6937, 0.0
      %v7068 = vmax.f32 %v6602, 0.0
      %v7069 = vmax.f32 %v6940, 0.0
      %v7070 = vmax.f32 %v6604, 0.0
      %v7071 = vmax.f32 %v6942, 0.0
      %v7072 = vpack.c.bf16 %v6946, %v6944
      %v7073 = vpack.c.bf16 %v6947, %v6945
      %v7074 = vpack.c.bf16 %v6950, %v6948
      %v7075 = vpack.c.bf16 %v6951, %v6949
      %v7076 = vpack.c.bf16 %v6954, %v6952
      %v7077 = vpack.c.bf16 %v6955, %v6953
      %v7078 = vpack.c.bf16 %v6958, %v6956
      %v7079 = vpack.c.bf16 %v6959, %v6957
      %v7080 = vpack.c.bf16 %v6962, %v6960
      %v7081 = vpack.c.bf16 %v6963, %v6961
      %v7082 = vpack.c.bf16 %v6966, %v6964
      %v7083 = vpack.c.bf16 %v6967, %v6965
      %v7084 = vpack.c.bf16 %v6970, %v6968
      %v7085 = vpack.c.bf16 %v6971, %v6969
      %v7086 = vpack.c.bf16 %v6974, %v6972
      %v7087 = vpack.c.bf16 %v6975, %v6973
      %v7088 = vpack.c.bf16 %v6978, %v6976
      %v7089 = vpack.c.bf16 %v6979, %v6977
      %v7090 = vpack.c.bf16 %v6982, %v6980
      %v7091 = vpack.c.bf16 %v6983, %v6981
      %v7092 = vpack.c.bf16 %v6986, %v6984
      %v7093 = vpack.c.bf16 %v6987, %v6985
      %v7094 = vpack.c.bf16 %v6990, %v6988
      %v7095 = vpack.c.bf16 %v6991, %v6989
      %v7096 = vpack.c.bf16 %v6994, %v6992
      %v7097 = vpack.c.bf16 %v6995, %v6993
      %v7098 = vpack.c.bf16 %v6998, %v6996
      %v7099 = vpack.c.bf16 %v6999, %v6997
      %v7100 = vpack.c.bf16 %v7002, %v7000
      %v7101 = vpack.c.bf16 %v7003, %v7001
      %v7102 = vpack.c.bf16 %v7006, %v7004
      %v7103 = vpack.c.bf16 %v7007, %v7005
      %v7104 = vpack.c.bf16 %v7010, %v7008
      %v7105 = vpack.c.bf16 %v7011, %v7009
      %v7106 = vpack.c.bf16 %v7014, %v7012
      %v7107 = vpack.c.bf16 %v7015, %v7013
      %v7108 = vpack.c.bf16 %v7018, %v7016
      %v7109 = vpack.c.bf16 %v7019, %v7017
      %v7110 = vpack.c.bf16 %v7022, %v7020
      %v7111 = vpack.c.bf16 %v7023, %v7021
      %v7112 = vpack.c.bf16 %v7026, %v7024
      %v7113 = vpack.c.bf16 %v7027, %v7025
      %v7114 = vpack.c.bf16 %v7030, %v7028
      %v7115 = vpack.c.bf16 %v7031, %v7029
      %v7116 = vpack.c.bf16 %v7034, %v7032
      %v7117 = vpack.c.bf16 %v7035, %v7033
      %v7118 = vpack.c.bf16 %v7038, %v7036
      %v7119 = vpack.c.bf16 %v7039, %v7037
      %v7120 = vpack.c.bf16 %v7042, %v7040
      %v7121 = vpack.c.bf16 %v7043, %v7041
      %v7122 = vpack.c.bf16 %v7046, %v7044
      %v7123 = vpack.c.bf16 %v7047, %v7045
      %v7124 = vpack.c.bf16 %v7050, %v7048
      %v7125 = vpack.c.bf16 %v7051, %v7049
      %v7126 = vpack.c.bf16 %v7054, %v7052
      %v7127 = vpack.c.bf16 %v7055, %v7053
      %v7128 = vpack.c.bf16 %v7058, %v7056
      %v7129 = vpack.c.bf16 %v7059, %v7057
      %v7130 = vpack.c.bf16 %v7062, %v7060
      %v7131 = vpack.c.bf16 %v7063, %v7061
      %v7132 = vpack.c.bf16 %v7066, %v7064
      %v7133 = vpack.c.bf16 %v7067, %v7065
      %v7134 = vpack.c.bf16 %v7070, %v7068
      %v7135 = vpack.c.bf16 %v7071, %v7069
      %s7136 = scalar_lea.vmem %s5, 1280
      %v7137 = vld [vmem:[%s7136] sm:$0xff]
      %v7138 = vld [vmem:[%s7136 + $0x8] sm:$0xff]
      %v7139 = vld [vmem:[%s7136 + $0x10] sm:$0xff]
      %v7140 = vld [vmem:[%s7136 + $0x18] sm:$0xff]
      %v7141 = vld [vmem:[%s7136 + $0x20] sm:$0xff]
      %v7142 = vld [vmem:[%s7136 + $0x28] sm:$0xff]
      %v7143 = vld [vmem:[%s7136 + $0x30] sm:$0xff]
      %v7144 = vld [vmem:[%s7136 + $0x38] sm:$0xff]
      %v7145 = vld [vmem:[%s7136 + $0x40] sm:$0xff]
      %v7146 = vld [vmem:[%s7136 + $0x48] sm:$0xff]
      %v7147 = vld [vmem:[%s7136 + $0x50] sm:$0xff]
      %v7148 = vld [vmem:[%s7136 + $0x58] sm:$0xff]
      %v7149 = vld [vmem:[%s7136 + $0x60] sm:$0xff]
      %v7150 = vld [vmem:[%s7136 + $0x68] sm:$0xff]
      %v7151 = vld [vmem:[%s7136 + $0x70] sm:$0xff]
      %v7152 = vld [vmem:[%s7136 + $0x78] sm:$0xff]
      %v7153 = vld [vmem:[%s7136 + $0x80] sm:$0xff]
      %v7154 = vld [vmem:[%s7136 + $0x88] sm:$0xff]
      %v7155 = vld [vmem:[%s7136 + $0x90] sm:$0xff]
      %v7156 = vld [vmem:[%s7136 + $0x98] sm:$0xff]
      %v7157 = vld [vmem:[%s7136 + $0xa0] sm:$0xff]
      %v7158 = vld [vmem:[%s7136 + $0xa8] sm:$0xff]
      %v7159 = vld [vmem:[%s7136 + $0xb0] sm:$0xff]
      %v7160 = vld [vmem:[%s7136 + $0xb8] sm:$0xff]
      %v7161 = vld [vmem:[%s7136 + $0xc0] sm:$0xff]
      %v7162 = vld [vmem:[%s7136 + $0xc8] sm:$0xff]
      %v7163 = vld [vmem:[%s7136 + $0xd0] sm:$0xff]
      %v7164 = vld [vmem:[%s7136 + $0xd8] sm:$0xff]
      %v7165 = vld [vmem:[%s7136 + $0xe0] sm:$0xff]
      %v7166 = vld [vmem:[%s7136 + $0xe8] sm:$0xff]
      %v7167 = vld [vmem:[%s7136 + $0xf0] sm:$0xff]
      %v7168 = vld [vmem:[%s7136 + $0xf8] sm:$0xff]
      %s7169 = scalar_lea.vmem %s6, 10
      %v7170 = vld [vmem:[%s7169] sm:$0x3]
      %v7172 = vperm.slane %v7170, 0
      %v7173 = vperm.slane %v7170, 1
      %v7208 = vunpack.c.l.b16 %v7137
      %v7209 = vunpack.c.h.b16 %v7137
      %v7210 = vunpack.c.l.b16 %v7138
      %v7211 = vunpack.c.h.b16 %v7138
      %v7212 = vunpack.c.l.b16 %v7139
      %v7213 = vunpack.c.h.b16 %v7139
      %v7214 = vunpack.c.l.b16 %v7140
      %v7215 = vunpack.c.h.b16 %v7140
      %v7216 = vunpack.c.l.b16 %v7141
      %v7217 = vunpack.c.h.b16 %v7141
      %v7218 = vunpack.c.l.b16 %v7142
      %v7219 = vunpack.c.h.b16 %v7142
      %v7220 = vunpack.c.l.b16 %v7143
      %v7221 = vunpack.c.h.b16 %v7143
      %v7222 = vunpack.c.l.b16 %v7144
      %v7223 = vunpack.c.h.b16 %v7144
      %v7224 = vunpack.c.l.b16 %v7145
      %v7225 = vunpack.c.h.b16 %v7145
      %v7226 = vunpack.c.l.b16 %v7146
      %v7227 = vunpack.c.h.b16 %v7146
      %v7228 = vunpack.c.l.b16 %v7147
      %v7229 = vunpack.c.h.b16 %v7147
      %v7230 = vunpack.c.l.b16 %v7148
      %v7231 = vunpack.c.h.b16 %v7148
      %v7232 = vunpack.c.l.b16 %v7149
      %v7233 = vunpack.c.h.b16 %v7149
      %v7234 = vunpack.c.l.b16 %v7150
      %v7235 = vunpack.c.h.b16 %v7150
      %v7236 = vunpack.c.l.b16 %v7151
      %v7237 = vunpack.c.h.b16 %v7151
      %v7238 = vunpack.c.l.b16 %v7152
      %v7239 = vunpack.c.h.b16 %v7152
      %v7240 = vunpack.c.l.b16 %v7153
      %v7241 = vunpack.c.h.b16 %v7153
      %v7242 = vunpack.c.l.b16 %v7154
      %v7243 = vunpack.c.h.b16 %v7154
      %v7244 = vunpack.c.l.b16 %v7155
      %v7245 = vunpack.c.h.b16 %v7155
      %v7246 = vunpack.c.l.b16 %v7156
      %v7247 = vunpack.c.h.b16 %v7156
      %v7248 = vunpack.c.l.b16 %v7157
      %v7249 = vunpack.c.h.b16 %v7157
      %v7250 = vunpack.c.l.b16 %v7158
      %v7251 = vunpack.c.h.b16 %v7158
      %v7252 = vunpack.c.l.b16 %v7159
      %v7253 = vunpack.c.h.b16 %v7159
      %v7254 = vunpack.c.l.b16 %v7160
      %v7255 = vunpack.c.h.b16 %v7160
      %v7256 = vunpack.c.l.b16 %v7161
      %v7257 = vunpack.c.h.b16 %v7161
      %v7258 = vunpack.c.l.b16 %v7162
      %v7259 = vunpack.c.h.b16 %v7162
      %v7260 = vunpack.c.l.b16 %v7163
      %v7261 = vunpack.c.h.b16 %v7163
      %v7262 = vunpack.c.l.b16 %v7164
      %v7263 = vunpack.c.h.b16 %v7164
      %v7264 = vunpack.c.l.b16 %v7165
      %v7265 = vunpack.c.h.b16 %v7165
      %v7266 = vunpack.c.l.b16 %v7166
      %v7267 = vunpack.c.h.b16 %v7166
      %v7268 = vunpack.c.l.b16 %v7167
      %v7269 = vunpack.c.h.b16 %v7167
      %v7270 = vunpack.c.l.b16 %v7168
      %v7271 = vunpack.c.h.b16 %v7168
      %v7272 = vpack.c.b16 %v7210, %v7208
      %v7273 = vpack.c.b16 %v7211, %v7209
      %v7274 = vpack.c.b16 %v7214, %v7212
      %v7275 = vpack.c.b16 %v7215, %v7213
      %v7276 = vpack.c.b16 %v7218, %v7216
      %v7277 = vpack.c.b16 %v7219, %v7217
      %v7278 = vpack.c.b16 %v7222, %v7220
      %v7279 = vpack.c.b16 %v7223, %v7221
      %v7280 = vpack.c.b16 %v7226, %v7224
      %v7281 = vpack.c.b16 %v7227, %v7225
      %v7282 = vpack.c.b16 %v7230, %v7228
      %v7283 = vpack.c.b16 %v7231, %v7229
      %v7284 = vpack.c.b16 %v7234, %v7232
      %v7285 = vpack.c.b16 %v7235, %v7233
      %v7286 = vpack.c.b16 %v7238, %v7236
      %v7287 = vpack.c.b16 %v7239, %v7237
      %v7288 = vpack.c.b16 %v7242, %v7240
      %v7289 = vpack.c.b16 %v7243, %v7241
      %v7290 = vpack.c.b16 %v7246, %v7244
      %v7291 = vpack.c.b16 %v7247, %v7245
      %v7292 = vpack.c.b16 %v7250, %v7248
      %v7293 = vpack.c.b16 %v7251, %v7249
      %v7294 = vpack.c.b16 %v7254, %v7252
      %v7295 = vpack.c.b16 %v7255, %v7253
      %v7296 = vpack.c.b16 %v7258, %v7256
      %v7297 = vpack.c.b16 %v7259, %v7257
      %v7298 = vpack.c.b16 %v7262, %v7260
      %v7299 = vpack.c.b16 %v7263, %v7261
      %v7300 = vpack.c.b16 %v7266, %v7264
      %v7301 = vpack.c.b16 %v7267, %v7265
      %v7302 = vpack.c.b16 %v7270, %v7268
      %v7303 = vpack.c.b16 %v7271, %v7269
      %7336 = vmatpush.bf16.msra.mxu0 %v7286
      %7337 = vmatpush.bf16.msra.mxu0 %v7284
      %7338 = vmatpush.bf16.msra.mxu0 %v7282
      %7339 = vmatpush.bf16.msra.mxu0 %v7280
      %7340 = vmatpush.bf16.msra.mxu0 %v7278
      %7341 = vmatpush.bf16.msra.mxu0 %v7276
      %7342 = vmatpush.bf16.msra.mxu0 %v7274
      %7343 = vmatpush.bf16.msra.mxu0 %v7272
      %7344 = vmatmul.bf16.gmra.mxu0 %v7072
      %v7345 = vpop.f32.mrf.mxu0
      %v7346 = vadd.f32 %v7172, %v7345
      %v7347 = vpop.f32.mrf.mxu0
      %v7348 = vadd.f32 %v7172, %v7347
      %7349 = vmatmul.bf16.gmra.mxu0 %v7074
      %v7350 = vpop.f32.mrf.mxu0
      %v7351 = vadd.f32 %v7172, %v7350
      %v7352 = vpop.f32.mrf.mxu0
      %v7353 = vadd.f32 %v7172, %v7352
      %7354 = vmatmul.bf16.gmra.mxu0 %v7076
      %v7355 = vpop.f32.mrf.mxu0
      %v7356 = vadd.f32 %v7172, %v7355
      %v7357 = vpop.f32.mrf.mxu0
      %v7358 = vadd.f32 %v7172, %v7357
      %7359 = vmatmul.bf16.gmra.mxu0 %v7078
      %v7360 = vpop.f32.mrf.mxu0
      %v7361 = vadd.f32 %v7172, %v7360
      %v7362 = vpop.f32.mrf.mxu0
      %v7363 = vadd.f32 %v7172, %v7362
      %7364 = vmatmul.bf16.gmra.mxu0 %v7080
      %v7365 = vpop.f32.mrf.mxu0
      %v7366 = vadd.f32 %v7172, %v7365
      %v7367 = vpop.f32.mrf.mxu0
      %v7368 = vadd.f32 %v7172, %v7367
      %7369 = vmatmul.bf16.gmra.mxu0 %v7082
      %v7370 = vpop.f32.mrf.mxu0
      %v7371 = vadd.f32 %v7172, %v7370
      %v7372 = vpop.f32.mrf.mxu0
      %v7373 = vadd.f32 %v7172, %v7372
      %7374 = vmatmul.bf16.gmra.mxu0 %v7084
      %v7375 = vpop.f32.mrf.mxu0
      %v7376 = vadd.f32 %v7172, %v7375
      %v7377 = vpop.f32.mrf.mxu0
      %v7378 = vadd.f32 %v7172, %v7377
      %7379 = vmatmul.bf16.gmra.mxu0 %v7086
      %v7380 = vpop.f32.mrf.mxu0
      %v7381 = vadd.f32 %v7172, %v7380
      %v7382 = vpop.f32.mrf.mxu0
      %v7383 = vadd.f32 %v7172, %v7382
      %7384 = vmatmul.bf16.gmra.mxu0 %v7088
      %v7385 = vpop.f32.mrf.mxu0
      %v7386 = vadd.f32 %v7172, %v7385
      %v7387 = vpop.f32.mrf.mxu0
      %v7388 = vadd.f32 %v7172, %v7387
      %7389 = vmatmul.bf16.gmra.mxu0 %v7090
      %v7390 = vpop.f32.mrf.mxu0
      %v7391 = vadd.f32 %v7172, %v7390
      %v7392 = vpop.f32.mrf.mxu0
      %v7393 = vadd.f32 %v7172, %v7392
      %7394 = vmatmul.bf16.gmra.mxu0 %v7092
      %v7395 = vpop.f32.mrf.mxu0
      %v7396 = vadd.f32 %v7172, %v7395
      %v7397 = vpop.f32.mrf.mxu0
      %v7398 = vadd.f32 %v7172, %v7397
      %7399 = vmatmul.bf16.gmra.mxu0 %v7094
      %v7400 = vpop.f32.mrf.mxu0
      %v7401 = vadd.f32 %v7172, %v7400
      %v7402 = vpop.f32.mrf.mxu0
      %v7403 = vadd.f32 %v7172, %v7402
      %7404 = vmatmul.bf16.gmra.mxu0 %v7096
      %v7405 = vpop.f32.mrf.mxu0
      %v7406 = vadd.f32 %v7172, %v7405
      %v7407 = vpop.f32.mrf.mxu0
      %v7408 = vadd.f32 %v7172, %v7407
      %7409 = vmatmul.bf16.gmra.mxu0 %v7098
      %v7410 = vpop.f32.mrf.mxu0
      %v7411 = vadd.f32 %v7172, %v7410
      %v7412 = vpop.f32.mrf.mxu0
      %v7413 = vadd.f32 %v7172, %v7412
      %7414 = vmatmul.bf16.gmra.mxu0 %v7100
      %v7415 = vpop.f32.mrf.mxu0
      %v7416 = vadd.f32 %v7172, %v7415
      %v7417 = vpop.f32.mrf.mxu0
      %v7418 = vadd.f32 %v7172, %v7417
      %7419 = vmatmul.bf16.gmra.mxu0 %v7102
      %v7420 = vpop.f32.mrf.mxu0
      %v7421 = vadd.f32 %v7172, %v7420
      %v7422 = vpop.f32.mrf.mxu0
      %v7423 = vadd.f32 %v7172, %v7422
      %7424 = vmatmul.bf16.gmra.mxu0 %v7104
      %v7425 = vpop.f32.mrf.mxu0
      %v7426 = vadd.f32 %v7172, %v7425
      %v7427 = vpop.f32.mrf.mxu0
      %v7428 = vadd.f32 %v7172, %v7427
      %7429 = vmatmul.bf16.gmra.mxu0 %v7106
      %v7430 = vpop.f32.mrf.mxu0
      %v7431 = vadd.f32 %v7172, %v7430
      %v7432 = vpop.f32.mrf.mxu0
      %v7433 = vadd.f32 %v7172, %v7432
      %7434 = vmatmul.bf16.gmra.mxu0 %v7108
      %v7435 = vpop.f32.mrf.mxu0
      %v7436 = vadd.f32 %v7172, %v7435
      %v7437 = vpop.f32.mrf.mxu0
      %v7438 = vadd.f32 %v7172, %v7437
      %7439 = vmatmul.bf16.gmra.mxu0 %v7110
      %v7440 = vpop.f32.mrf.mxu0
      %v7441 = vadd.f32 %v7172, %v7440
      %v7442 = vpop.f32.mrf.mxu0
      %v7443 = vadd.f32 %v7172, %v7442
      %7444 = vmatmul.bf16.gmra.mxu0 %v7112
      %v7445 = vpop.f32.mrf.mxu0
      %v7446 = vadd.f32 %v7172, %v7445
      %v7447 = vpop.f32.mrf.mxu0
      %v7448 = vadd.f32 %v7172, %v7447
      %7449 = vmatmul.bf16.gmra.mxu0 %v7114
      %v7450 = vpop.f32.mrf.mxu0
      %v7451 = vadd.f32 %v7172, %v7450
      %v7452 = vpop.f32.mrf.mxu0
      %v7453 = vadd.f32 %v7172, %v7452
      %7454 = vmatmul.bf16.gmra.mxu0 %v7116
      %v7455 = vpop.f32.mrf.mxu0
      %v7456 = vadd.f32 %v7172, %v7455
      %v7457 = vpop.f32.mrf.mxu0
      %v7458 = vadd.f32 %v7172, %v7457
      %7459 = vmatmul.bf16.gmra.mxu0 %v7118
      %v7460 = vpop.f32.mrf.mxu0
      %v7461 = vadd.f32 %v7172, %v7460
      %v7462 = vpop.f32.mrf.mxu0
      %v7463 = vadd.f32 %v7172, %v7462
      %7464 = vmatmul.bf16.gmra.mxu0 %v7120
      %v7465 = vpop.f32.mrf.mxu0
      %v7466 = vadd.f32 %v7172, %v7465
      %v7467 = vpop.f32.mrf.mxu0
      %v7468 = vadd.f32 %v7172, %v7467
      %7469 = vmatmul.bf16.gmra.mxu0 %v7122
      %v7470 = vpop.f32.mrf.mxu0
      %v7471 = vadd.f32 %v7172, %v7470
      %v7472 = vpop.f32.mrf.mxu0
      %v7473 = vadd.f32 %v7172, %v7472
      %7474 = vmatmul.bf16.gmra.mxu0 %v7124
      %v7475 = vpop.f32.mrf.mxu0
      %v7476 = vadd.f32 %v7172, %v7475
      %v7477 = vpop.f32.mrf.mxu0
      %v7478 = vadd.f32 %v7172, %v7477
      %7479 = vmatmul.bf16.gmra.mxu0 %v7126
      %v7480 = vpop.f32.mrf.mxu0
      %v7481 = vadd.f32 %v7172, %v7480
      %v7482 = vpop.f32.mrf.mxu0
      %v7483 = vadd.f32 %v7172, %v7482
      %7484 = vmatmul.bf16.gmra.mxu0 %v7128
      %v7485 = vpop.f32.mrf.mxu0
      %v7486 = vadd.f32 %v7172, %v7485
      %v7487 = vpop.f32.mrf.mxu0
      %v7488 = vadd.f32 %v7172, %v7487
      %7489 = vmatmul.bf16.gmra.mxu0 %v7130
      %v7490 = vpop.f32.mrf.mxu0
      %v7491 = vadd.f32 %v7172, %v7490
      %v7492 = vpop.f32.mrf.mxu0
      %v7493 = vadd.f32 %v7172, %v7492
      %7494 = vmatmul.bf16.gmra.mxu0 %v7132
      %v7495 = vpop.f32.mrf.mxu0
      %v7496 = vadd.f32 %v7172, %v7495
      %v7497 = vpop.f32.mrf.mxu0
      %v7498 = vadd.f32 %v7172, %v7497
      %7499 = vmatmul.bf16.gmra.mxu0 %v7134
      %v7500 = vpop.f32.mrf.mxu0
      %v7501 = vadd.f32 %v7172, %v7500
      %v7502 = vpop.f32.mrf.mxu0
      %v7503 = vadd.f32 %v7172, %v7502
      %7504 = vdwg.mxu0
      %7505 = vmatpush.bf16.msra.mxu0 %v7302
      %7506 = vmatpush.bf16.msra.mxu0 %v7300
      %7507 = vmatpush.bf16.msra.mxu0 %v7298
      %7508 = vmatpush.bf16.msra.mxu0 %v7296
      %7509 = vmatpush.bf16.msra.mxu0 %v7294
      %7510 = vmatpush.bf16.msra.mxu0 %v7292
      %7511 = vmatpush.bf16.msra.mxu0 %v7290
      %7512 = vmatpush.bf16.msra.mxu0 %v7288
      %7513 = vmatmul.bf16.gmra.mxu0 %v7073
      %v7514 = vpop.f32.mrf.mxu0
      %v7515 = vadd.f32 %v7346, %v7514
      %v7516 = vpop.f32.mrf.mxu0
      %v7517 = vadd.f32 %v7348, %v7516
      %7518 = vmatmul.bf16.gmra.mxu0 %v7075
      %v7519 = vpop.f32.mrf.mxu0
      %v7520 = vadd.f32 %v7351, %v7519
      %v7521 = vpop.f32.mrf.mxu0
      %v7522 = vadd.f32 %v7353, %v7521
      %7523 = vmatmul.bf16.gmra.mxu0 %v7077
      %v7524 = vpop.f32.mrf.mxu0
      %v7525 = vadd.f32 %v7356, %v7524
      %v7526 = vpop.f32.mrf.mxu0
      %v7527 = vadd.f32 %v7358, %v7526
      %7528 = vmatmul.bf16.gmra.mxu0 %v7079
      %v7529 = vpop.f32.mrf.mxu0
      %v7530 = vadd.f32 %v7361, %v7529
      %v7531 = vpop.f32.mrf.mxu0
      %v7532 = vadd.f32 %v7363, %v7531
      %7533 = vmatmul.bf16.gmra.mxu0 %v7081
      %v7534 = vpop.f32.mrf.mxu0
      %v7535 = vadd.f32 %v7366, %v7534
      %v7536 = vpop.f32.mrf.mxu0
      %v7537 = vadd.f32 %v7368, %v7536
      %7538 = vmatmul.bf16.gmra.mxu0 %v7083
      %v7539 = vpop.f32.mrf.mxu0
      %v7540 = vadd.f32 %v7371, %v7539
      %v7541 = vpop.f32.mrf.mxu0
      %v7542 = vadd.f32 %v7373, %v7541
      %7543 = vmatmul.bf16.gmra.mxu0 %v7085
      %v7544 = vpop.f32.mrf.mxu0
      %v7545 = vadd.f32 %v7376, %v7544
      %v7546 = vpop.f32.mrf.mxu0
      %v7547 = vadd.f32 %v7378, %v7546
      %7548 = vmatmul.bf16.gmra.mxu0 %v7087
      %v7549 = vpop.f32.mrf.mxu0
      %v7550 = vadd.f32 %v7381, %v7549
      %v7551 = vpop.f32.mrf.mxu0
      %v7552 = vadd.f32 %v7383, %v7551
      %7553 = vmatmul.bf16.gmra.mxu0 %v7089
      %v7554 = vpop.f32.mrf.mxu0
      %v7555 = vadd.f32 %v7386, %v7554
      %v7556 = vpop.f32.mrf.mxu0
      %v7557 = vadd.f32 %v7388, %v7556
      %7558 = vmatmul.bf16.gmra.mxu0 %v7091
      %v7559 = vpop.f32.mrf.mxu0
      %v7560 = vadd.f32 %v7391, %v7559
      %v7561 = vpop.f32.mrf.mxu0
      %v7562 = vadd.f32 %v7393, %v7561
      %7563 = vmatmul.bf16.gmra.mxu0 %v7093
      %v7564 = vpop.f32.mrf.mxu0
      %v7565 = vadd.f32 %v7396, %v7564
      %v7566 = vpop.f32.mrf.mxu0
      %v7567 = vadd.f32 %v7398, %v7566
      %7568 = vmatmul.bf16.gmra.mxu0 %v7095
      %v7569 = vpop.f32.mrf.mxu0
      %v7570 = vadd.f32 %v7401, %v7569
      %v7571 = vpop.f32.mrf.mxu0
      %v7572 = vadd.f32 %v7403, %v7571
      %7573 = vmatmul.bf16.gmra.mxu0 %v7097
      %v7574 = vpop.f32.mrf.mxu0
      %v7575 = vadd.f32 %v7406, %v7574
      %v7576 = vpop.f32.mrf.mxu0
      %v7577 = vadd.f32 %v7408, %v7576
      %7578 = vmatmul.bf16.gmra.mxu0 %v7099
      %v7579 = vpop.f32.mrf.mxu0
      %v7580 = vadd.f32 %v7411, %v7579
      %v7581 = vpop.f32.mrf.mxu0
      %v7582 = vadd.f32 %v7413, %v7581
      %7583 = vmatmul.bf16.gmra.mxu0 %v7101
      %v7584 = vpop.f32.mrf.mxu0
      %v7585 = vadd.f32 %v7416, %v7584
      %v7586 = vpop.f32.mrf.mxu0
      %v7587 = vadd.f32 %v7418, %v7586
      %7588 = vmatmul.bf16.gmra.mxu0 %v7103
      %v7589 = vpop.f32.mrf.mxu0
      %v7590 = vadd.f32 %v7421, %v7589
      %v7591 = vpop.f32.mrf.mxu0
      %v7592 = vadd.f32 %v7423, %v7591
      %7593 = vmatmul.bf16.gmra.mxu0 %v7105
      %v7594 = vpop.f32.mrf.mxu0
      %v7595 = vadd.f32 %v7426, %v7594
      %v7596 = vpop.f32.mrf.mxu0
      %v7597 = vadd.f32 %v7428, %v7596
      %7598 = vmatmul.bf16.gmra.mxu0 %v7107
      %v7599 = vpop.f32.mrf.mxu0
      %v7600 = vadd.f32 %v7431, %v7599
      %v7601 = vpop.f32.mrf.mxu0
      %v7602 = vadd.f32 %v7433, %v7601
      %7603 = vmatmul.bf16.gmra.mxu0 %v7109
      %v7604 = vpop.f32.mrf.mxu0
      %v7605 = vadd.f32 %v7436, %v7604
      %v7606 = vpop.f32.mrf.mxu0
      %v7607 = vadd.f32 %v7438, %v7606
      %7608 = vmatmul.bf16.gmra.mxu0 %v7111
      %v7609 = vpop.f32.mrf.mxu0
      %v7610 = vadd.f32 %v7441, %v7609
      %v7611 = vpop.f32.mrf.mxu0
      %v7612 = vadd.f32 %v7443, %v7611
      %7613 = vmatmul.bf16.gmra.mxu0 %v7113
      %v7614 = vpop.f32.mrf.mxu0
      %v7615 = vadd.f32 %v7446, %v7614
      %v7616 = vpop.f32.mrf.mxu0
      %v7617 = vadd.f32 %v7448, %v7616
      %7618 = vmatmul.bf16.gmra.mxu0 %v7115
      %v7619 = vpop.f32.mrf.mxu0
      %v7620 = vadd.f32 %v7451, %v7619
      %v7621 = vpop.f32.mrf.mxu0
      %v7622 = vadd.f32 %v7453, %v7621
      %7623 = vmatmul.bf16.gmra.mxu0 %v7117
      %v7624 = vpop.f32.mrf.mxu0
      %v7625 = vadd.f32 %v7456, %v7624
      %v7626 = vpop.f32.mrf.mxu0
      %v7627 = vadd.f32 %v7458, %v7626
      %7628 = vmatmul.bf16.gmra.mxu0 %v7119
      %v7629 = vpop.f32.mrf.mxu0
      %v7630 = vadd.f32 %v7461, %v7629
      %v7631 = vpop.f32.mrf.mxu0
      %v7632 = vadd.f32 %v7463, %v7631
      %7633 = vmatmul.bf16.gmra.mxu0 %v7121
      %v7634 = vpop.f32.mrf.mxu0
      %v7635 = vadd.f32 %v7466, %v7634
      %v7636 = vpop.f32.mrf.mxu0
      %v7637 = vadd.f32 %v7468, %v7636
      %7638 = vmatmul.bf16.gmra.mxu0 %v7123
      %v7639 = vpop.f32.mrf.mxu0
      %v7640 = vadd.f32 %v7471, %v7639
      %v7641 = vpop.f32.mrf.mxu0
      %v7642 = vadd.f32 %v7473, %v7641
      %7643 = vmatmul.bf16.gmra.mxu0 %v7125
      %v7644 = vpop.f32.mrf.mxu0
      %v7645 = vadd.f32 %v7476, %v7644
      %v7646 = vpop.f32.mrf.mxu0
      %v7647 = vadd.f32 %v7478, %v7646
      %7648 = vmatmul.bf16.gmra.mxu0 %v7127
      %v7649 = vpop.f32.mrf.mxu0
      %v7650 = vadd.f32 %v7481, %v7649
      %v7651 = vpop.f32.mrf.mxu0
      %v7652 = vadd.f32 %v7483, %v7651
      %7653 = vmatmul.bf16.gmra.mxu0 %v7129
      %v7654 = vpop.f32.mrf.mxu0
      %v7655 = vadd.f32 %v7486, %v7654
      %v7656 = vpop.f32.mrf.mxu0
      %v7657 = vadd.f32 %v7488, %v7656
      %7658 = vmatmul.bf16.gmra.mxu0 %v7131
      %v7659 = vpop.f32.mrf.mxu0
      %v7660 = vadd.f32 %v7491, %v7659
      %v7661 = vpop.f32.mrf.mxu0
      %v7662 = vadd.f32 %v7493, %v7661
      %7663 = vmatmul.bf16.gmra.mxu0 %v7133
      %v7664 = vpop.f32.mrf.mxu0
      %v7665 = vadd.f32 %v7496, %v7664
      %v7666 = vpop.f32.mrf.mxu0
      %v7667 = vadd.f32 %v7498, %v7666
      %7668 = vmatmul.bf16.gmra.mxu0 %v7135
      %v7669 = vpop.f32.mrf.mxu0
      %v7670 = vadd.f32 %v7501, %v7669
      %v7671 = vpop.f32.mrf.mxu0
      %v7672 = vadd.f32 %v7503, %v7671
      %7673 = vdwg.mxu0
      %7674 = vmatpush.bf16.msra.mxu0 %v7287
      %7675 = vmatpush.bf16.msra.mxu0 %v7285
      %7676 = vmatpush.bf16.msra.mxu0 %v7283
      %7677 = vmatpush.bf16.msra.mxu0 %v7281
      %7678 = vmatpush.bf16.msra.mxu0 %v7279
      %7679 = vmatpush.bf16.msra.mxu0 %v7277
      %7680 = vmatpush.bf16.msra.mxu0 %v7275
      %7681 = vmatpush.bf16.msra.mxu0 %v7273
      %7682 = vmatmul.bf16.gmra.mxu0 %v7072
      %v7683 = vpop.f32.mrf.mxu0
      %v7684 = vadd.f32 %v7173, %v7683
      %v7685 = vpop.f32.mrf.mxu0
      %v7686 = vadd.f32 %v7173, %v7685
      %7687 = vmatmul.bf16.gmra.mxu0 %v7074
      %v7688 = vpop.f32.mrf.mxu0
      %v7689 = vadd.f32 %v7173, %v7688
      %v7690 = vpop.f32.mrf.mxu0
      %v7691 = vadd.f32 %v7173, %v7690
      %7692 = vmatmul.bf16.gmra.mxu0 %v7076
      %v7693 = vpop.f32.mrf.mxu0
      %v7694 = vadd.f32 %v7173, %v7693
      %v7695 = vpop.f32.mrf.mxu0
      %v7696 = vadd.f32 %v7173, %v7695
      %7697 = vmatmul.bf16.gmra.mxu0 %v7078
      %v7698 = vpop.f32.mrf.mxu0
      %v7699 = vadd.f32 %v7173, %v7698
      %v7700 = vpop.f32.mrf.mxu0
      %v7701 = vadd.f32 %v7173, %v7700
      %7702 = vmatmul.bf16.gmra.mxu0 %v7080
      %v7703 = vpop.f32.mrf.mxu0
      %v7704 = vadd.f32 %v7173, %v7703
      %v7705 = vpop.f32.mrf.mxu0
      %v7706 = vadd.f32 %v7173, %v7705
      %7707 = vmatmul.bf16.gmra.mxu0 %v7082
      %v7708 = vpop.f32.mrf.mxu0
      %v7709 = vadd.f32 %v7173, %v7708
      %v7710 = vpop.f32.mrf.mxu0
      %v7711 = vadd.f32 %v7173, %v7710
      %7712 = vmatmul.bf16.gmra.mxu0 %v7084
      %v7713 = vpop.f32.mrf.mxu0
      %v7714 = vadd.f32 %v7173, %v7713
      %v7715 = vpop.f32.mrf.mxu0
      %v7716 = vadd.f32 %v7173, %v7715
      %7717 = vmatmul.bf16.gmra.mxu0 %v7086
      %v7718 = vpop.f32.mrf.mxu0
      %v7719 = vadd.f32 %v7173, %v7718
      %v7720 = vpop.f32.mrf.mxu0
      %v7721 = vadd.f32 %v7173, %v7720
      %7722 = vmatmul.bf16.gmra.mxu0 %v7088
      %v7723 = vpop.f32.mrf.mxu0
      %v7724 = vadd.f32 %v7173, %v7723
      %v7725 = vpop.f32.mrf.mxu0
      %v7726 = vadd.f32 %v7173, %v7725
      %7727 = vmatmul.bf16.gmra.mxu0 %v7090
      %v7728 = vpop.f32.mrf.mxu0
      %v7729 = vadd.f32 %v7173, %v7728
      %v7730 = vpop.f32.mrf.mxu0
      %v7731 = vadd.f32 %v7173, %v7730
      %7732 = vmatmul.bf16.gmra.mxu0 %v7092
      %v7733 = vpop.f32.mrf.mxu0
      %v7734 = vadd.f32 %v7173, %v7733
      %v7735 = vpop.f32.mrf.mxu0
      %v7736 = vadd.f32 %v7173, %v7735
      %7737 = vmatmul.bf16.gmra.mxu0 %v7094
      %v7738 = vpop.f32.mrf.mxu0
      %v7739 = vadd.f32 %v7173, %v7738
      %v7740 = vpop.f32.mrf.mxu0
      %v7741 = vadd.f32 %v7173, %v7740
      %7742 = vmatmul.bf16.gmra.mxu0 %v7096
      %v7743 = vpop.f32.mrf.mxu0
      %v7744 = vadd.f32 %v7173, %v7743
      %v7745 = vpop.f32.mrf.mxu0
      %v7746 = vadd.f32 %v7173, %v7745
      %7747 = vmatmul.bf16.gmra.mxu0 %v7098
      %v7748 = vpop.f32.mrf.mxu0
      %v7749 = vadd.f32 %v7173, %v7748
      %v7750 = vpop.f32.mrf.mxu0
      %v7751 = vadd.f32 %v7173, %v7750
      %7752 = vmatmul.bf16.gmra.mxu0 %v7100
      %v7753 = vpop.f32.mrf.mxu0
      %v7754 = vadd.f32 %v7173, %v7753
      %v7755 = vpop.f32.mrf.mxu0
      %v7756 = vadd.f32 %v7173, %v7755
      %7757 = vmatmul.bf16.gmra.mxu0 %v7102
      %v7758 = vpop.f32.mrf.mxu0
      %v7759 = vadd.f32 %v7173, %v7758
      %v7760 = vpop.f32.mrf.mxu0
      %v7761 = vadd.f32 %v7173, %v7760
      %7762 = vmatmul.bf16.gmra.mxu0 %v7104
      %v7763 = vpop.f32.mrf.mxu0
      %v7764 = vadd.f32 %v7173, %v7763
      %v7765 = vpop.f32.mrf.mxu0
      %v7766 = vadd.f32 %v7173, %v7765
      %7767 = vmatmul.bf16.gmra.mxu0 %v7106
      %v7768 = vpop.f32.mrf.mxu0
      %v7769 = vadd.f32 %v7173, %v7768
      %v7770 = vpop.f32.mrf.mxu0
      %v7771 = vadd.f32 %v7173, %v7770
      %7772 = vmatmul.bf16.gmra.mxu0 %v7108
      %v7773 = vpop.f32.mrf.mxu0
      %v7774 = vadd.f32 %v7173, %v7773
      %v7775 = vpop.f32.mrf.mxu0
      %v7776 = vadd.f32 %v7173, %v7775
      %7777 = vmatmul.bf16.gmra.mxu0 %v7110
      %v7778 = vpop.f32.mrf.mxu0
      %v7779 = vadd.f32 %v7173, %v7778
      %v7780 = vpop.f32.mrf.mxu0
      %v7781 = vadd.f32 %v7173, %v7780
      %7782 = vmatmul.bf16.gmra.mxu0 %v7112
      %v7783 = vpop.f32.mrf.mxu0
      %v7784 = vadd.f32 %v7173, %v7783
      %v7785 = vpop.f32.mrf.mxu0
      %v7786 = vadd.f32 %v7173, %v7785
      %7787 = vmatmul.bf16.gmra.mxu0 %v7114
      %v7788 = vpop.f32.mrf.mxu0
      %v7789 = vadd.f32 %v7173, %v7788
      %v7790 = vpop.f32.mrf.mxu0
      %v7791 = vadd.f32 %v7173, %v7790
      %7792 = vmatmul.bf16.gmra.mxu0 %v7116
      %v7793 = vpop.f32.mrf.mxu0
      %v7794 = vadd.f32 %v7173, %v7793
      %v7795 = vpop.f32.mrf.mxu0
      %v7796 = vadd.f32 %v7173, %v7795
      %7797 = vmatmul.bf16.gmra.mxu0 %v7118
      %v7798 = vpop.f32.mrf.mxu0
      %v7799 = vadd.f32 %v7173, %v7798
      %v7800 = vpop.f32.mrf.mxu0
      %v7801 = vadd.f32 %v7173, %v7800
      %7802 = vmatmul.bf16.gmra.mxu0 %v7120
      %v7803 = vpop.f32.mrf.mxu0
      %v7804 = vadd.f32 %v7173, %v7803
      %v7805 = vpop.f32.mrf.mxu0
      %v7806 = vadd.f32 %v7173, %v7805
      %7807 = vmatmul.bf16.gmra.mxu0 %v7122
      %v7808 = vpop.f32.mrf.mxu0
      %v7809 = vadd.f32 %v7173, %v7808
      %v7810 = vpop.f32.mrf.mxu0
      %v7811 = vadd.f32 %v7173, %v7810
      %7812 = vmatmul.bf16.gmra.mxu0 %v7124
      %v7813 = vpop.f32.mrf.mxu0
      %v7814 = vadd.f32 %v7173, %v7813
      %v7815 = vpop.f32.mrf.mxu0
      %v7816 = vadd.f32 %v7173, %v7815
      %7817 = vmatmul.bf16.gmra.mxu0 %v7126
      %v7818 = vpop.f32.mrf.mxu0
      %v7819 = vadd.f32 %v7173, %v7818
      %v7820 = vpop.f32.mrf.mxu0
      %v7821 = vadd.f32 %v7173, %v7820
      %7822 = vmatmul.bf16.gmra.mxu0 %v7128
      %v7823 = vpop.f32.mrf.mxu0
      %v7824 = vadd.f32 %v7173, %v7823
      %v7825 = vpop.f32.mrf.mxu0
      %v7826 = vadd.f32 %v7173, %v7825
      %7827 = vmatmul.bf16.gmra.mxu0 %v7130
      %v7828 = vpop.f32.mrf.mxu0
      %v7829 = vadd.f32 %v7173, %v7828
      %v7830 = vpop.f32.mrf.mxu0
      %v7831 = vadd.f32 %v7173, %v7830
      %7832 = vmatmul.bf16.gmra.mxu0 %v7132
      %v7833 = vpop.f32.mrf.mxu0
      %v7834 = vadd.f32 %v7173, %v7833
      %v7835 = vpop.f32.mrf.mxu0
      %v7836 = vadd.f32 %v7173, %v7835
      %7837 = vmatmul.bf16.gmra.mxu0 %v7134
      %v7838 = vpop.f32.mrf.mxu0
      %v7839 = vadd.f32 %v7173, %v7838
      %v7840 = vpop.f32.mrf.mxu0
      %v7841 = vadd.f32 %v7173, %v7840
      %7842 = vdwg.mxu0
      %7843 = vmatpush.bf16.msra.mxu0 %v7303
      %7844 = vmatpush.bf16.msra.mxu0 %v7301
      %7845 = vmatpush.bf16.msra.mxu0 %v7299
      %7846 = vmatpush.bf16.msra.mxu0 %v7297
      %7847 = vmatpush.bf16.msra.mxu0 %v7295
      %7848 = vmatpush.bf16.msra.mxu0 %v7293
      %7849 = vmatpush.bf16.msra.mxu0 %v7291
      %7850 = vmatpush.bf16.msra.mxu0 %v7289
      %7851 = vmatmul.bf16.gmra.mxu0 %v7073
      %v7852 = vpop.f32.mrf.mxu0
      %v7853 = vadd.f32 %v7684, %v7852
      %v7854 = vpop.f32.mrf.mxu0
      %v7855 = vadd.f32 %v7686, %v7854
      %7856 = vmatmul.bf16.gmra.mxu0 %v7075
      %v7857 = vpop.f32.mrf.mxu0
      %v7858 = vadd.f32 %v7689, %v7857
      %v7859 = vpop.f32.mrf.mxu0
      %v7860 = vadd.f32 %v7691, %v7859
      %7861 = vmatmul.bf16.gmra.mxu0 %v7077
      %v7862 = vpop.f32.mrf.mxu0
      %v7863 = vadd.f32 %v7694, %v7862
      %v7864 = vpop.f32.mrf.mxu0
      %v7865 = vadd.f32 %v7696, %v7864
      %7866 = vmatmul.bf16.gmra.mxu0 %v7079
      %v7867 = vpop.f32.mrf.mxu0
      %v7868 = vadd.f32 %v7699, %v7867
      %v7869 = vpop.f32.mrf.mxu0
      %v7870 = vadd.f32 %v7701, %v7869
      %7871 = vmatmul.bf16.gmra.mxu0 %v7081
      %v7872 = vpop.f32.mrf.mxu0
      %v7873 = vadd.f32 %v7704, %v7872
      %v7874 = vpop.f32.mrf.mxu0
      %v7875 = vadd.f32 %v7706, %v7874
      %7876 = vmatmul.bf16.gmra.mxu0 %v7083
      %v7877 = vpop.f32.mrf.mxu0
      %v7878 = vadd.f32 %v7709, %v7877
      %v7879 = vpop.f32.mrf.mxu0
      %v7880 = vadd.f32 %v7711, %v7879
      %7881 = vmatmul.bf16.gmra.mxu0 %v7085
      %v7882 = vpop.f32.mrf.mxu0
      %v7883 = vadd.f32 %v7714, %v7882
      %v7884 = vpop.f32.mrf.mxu0
      %v7885 = vadd.f32 %v7716, %v7884
      %7886 = vmatmul.bf16.gmra.mxu0 %v7087
      %v7887 = vpop.f32.mrf.mxu0
      %v7888 = vadd.f32 %v7719, %v7887
      %v7889 = vpop.f32.mrf.mxu0
      %v7890 = vadd.f32 %v7721, %v7889
      %7891 = vmatmul.bf16.gmra.mxu0 %v7089
      %v7892 = vpop.f32.mrf.mxu0
      %v7893 = vadd.f32 %v7724, %v7892
      %v7894 = vpop.f32.mrf.mxu0
      %v7895 = vadd.f32 %v7726, %v7894
      %7896 = vmatmul.bf16.gmra.mxu0 %v7091
      %v7897 = vpop.f32.mrf.mxu0
      %v7898 = vadd.f32 %v7729, %v7897
      %v7899 = vpop.f32.mrf.mxu0
      %v7900 = vadd.f32 %v7731, %v7899
      %7901 = vmatmul.bf16.gmra.mxu0 %v7093
      %v7902 = vpop.f32.mrf.mxu0
      %v7903 = vadd.f32 %v7734, %v7902
      %v7904 = vpop.f32.mrf.mxu0
      %v7905 = vadd.f32 %v7736, %v7904
      %7906 = vmatmul.bf16.gmra.mxu0 %v7095
      %v7907 = vpop.f32.mrf.mxu0
      %v7908 = vadd.f32 %v7739, %v7907
      %v7909 = vpop.f32.mrf.mxu0
      %v7910 = vadd.f32 %v7741, %v7909
      %7911 = vmatmul.bf16.gmra.mxu0 %v7097
      %v7912 = vpop.f32.mrf.mxu0
      %v7913 = vadd.f32 %v7744, %v7912
      %v7914 = vpop.f32.mrf.mxu0
      %v7915 = vadd.f32 %v7746, %v7914
      %7916 = vmatmul.bf16.gmra.mxu0 %v7099
      %v7917 = vpop.f32.mrf.mxu0
      %v7918 = vadd.f32 %v7749, %v7917
      %v7919 = vpop.f32.mrf.mxu0
      %v7920 = vadd.f32 %v7751, %v7919
      %7921 = vmatmul.bf16.gmra.mxu0 %v7101
      %v7922 = vpop.f32.mrf.mxu0
      %v7923 = vadd.f32 %v7754, %v7922
      %v7924 = vpop.f32.mrf.mxu0
      %v7925 = vadd.f32 %v7756, %v7924
      %7926 = vmatmul.bf16.gmra.mxu0 %v7103
      %v7927 = vpop.f32.mrf.mxu0
      %v7928 = vadd.f32 %v7759, %v7927
      %v7929 = vpop.f32.mrf.mxu0
      %v7930 = vadd.f32 %v7761, %v7929
      %7931 = vmatmul.bf16.gmra.mxu0 %v7105
      %v7932 = vpop.f32.mrf.mxu0
      %v7933 = vadd.f32 %v7764, %v7932
      %v7934 = vpop.f32.mrf.mxu0
      %v7935 = vadd.f32 %v7766, %v7934
      %7936 = vmatmul.bf16.gmra.mxu0 %v7107
      %v7937 = vpop.f32.mrf.mxu0
      %v7938 = vadd.f32 %v7769, %v7937
      %v7939 = vpop.f32.mrf.mxu0
      %v7940 = vadd.f32 %v7771, %v7939
      %7941 = vmatmul.bf16.gmra.mxu0 %v7109
      %v7942 = vpop.f32.mrf.mxu0
      %v7943 = vadd.f32 %v7774, %v7942
      %v7944 = vpop.f32.mrf.mxu0
      %v7945 = vadd.f32 %v7776, %v7944
      %7946 = vmatmul.bf16.gmra.mxu0 %v7111
      %v7947 = vpop.f32.mrf.mxu0
      %v7948 = vadd.f32 %v7779, %v7947
      %v7949 = vpop.f32.mrf.mxu0
      %v7950 = vadd.f32 %v7781, %v7949
      %7951 = vmatmul.bf16.gmra.mxu0 %v7113
      %v7952 = vpop.f32.mrf.mxu0
      %v7953 = vadd.f32 %v7784, %v7952
      %v7954 = vpop.f32.mrf.mxu0
      %v7955 = vadd.f32 %v7786, %v7954
      %7956 = vmatmul.bf16.gmra.mxu0 %v7115
      %v7957 = vpop.f32.mrf.mxu0
      %v7958 = vadd.f32 %v7789, %v7957
      %v7959 = vpop.f32.mrf.mxu0
      %v7960 = vadd.f32 %v7791, %v7959
      %7961 = vmatmul.bf16.gmra.mxu0 %v7117
      %v7962 = vpop.f32.mrf.mxu0
      %v7963 = vadd.f32 %v7794, %v7962
      %v7964 = vpop.f32.mrf.mxu0
      %v7965 = vadd.f32 %v7796, %v7964
      %7966 = vmatmul.bf16.gmra.mxu0 %v7119
      %v7967 = vpop.f32.mrf.mxu0
      %v7968 = vadd.f32 %v7799, %v7967
      %v7969 = vpop.f32.mrf.mxu0
      %v7970 = vadd.f32 %v7801, %v7969
      %7971 = vmatmul.bf16.gmra.mxu0 %v7121
      %v7972 = vpop.f32.mrf.mxu0
      %v7973 = vadd.f32 %v7804, %v7972
      %v7974 = vpop.f32.mrf.mxu0
      %v7975 = vadd.f32 %v7806, %v7974
      %7976 = vmatmul.bf16.gmra.mxu0 %v7123
      %v7977 = vpop.f32.mrf.mxu0
      %v7978 = vadd.f32 %v7809, %v7977
      %v7979 = vpop.f32.mrf.mxu0
      %v7980 = vadd.f32 %v7811, %v7979
      %7981 = vmatmul.bf16.gmra.mxu0 %v7125
      %v7982 = vpop.f32.mrf.mxu0
      %v7983 = vadd.f32 %v7814, %v7982
      %v7984 = vpop.f32.mrf.mxu0
      %v7985 = vadd.f32 %v7816, %v7984
      %7986 = vmatmul.bf16.gmra.mxu0 %v7127
      %v7987 = vpop.f32.mrf.mxu0
      %v7988 = vadd.f32 %v7819, %v7987
      %v7989 = vpop.f32.mrf.mxu0
      %v7990 = vadd.f32 %v7821, %v7989
      %7991 = vmatmul.bf16.gmra.mxu0 %v7129
      %v7992 = vpop.f32.mrf.mxu0
      %v7993 = vadd.f32 %v7824, %v7992
      %v7994 = vpop.f32.mrf.mxu0
      %v7995 = vadd.f32 %v7826, %v7994
      %7996 = vmatmul.bf16.gmra.mxu0 %v7131
      %v7997 = vpop.f32.mrf.mxu0
      %v7998 = vadd.f32 %v7829, %v7997
      %v7999 = vpop.f32.mrf.mxu0
      %v8000 = vadd.f32 %v7831, %v7999
      %8001 = vmatmul.bf16.gmra.mxu0 %v7133
      %v8002 = vpop.f32.mrf.mxu0
      %v8003 = vadd.f32 %v7834, %v8002
      %v8004 = vpop.f32.mrf.mxu0
      %v8005 = vadd.f32 %v7836, %v8004
      %8006 = vmatmul.bf16.gmra.mxu0 %v7135
      %v8007 = vpop.f32.mrf.mxu0
      %v8008 = vadd.f32 %v7839, %v8007
      %v8009 = vpop.f32.mrf.mxu0
      %v8010 = vadd.f32 %v7841, %v8009
      %8011 = vdwg.mxu0
      %v8012 = vmax.f32 %v7515, 0.0
      %v8013 = vmax.f32 %v7853, 0.0
      %v8014 = vmax.f32 %v7517, 0.0
      %v8015 = vmax.f32 %v7855, 0.0
      %v8016 = vmax.f32 %v7520, 0.0
      %v8017 = vmax.f32 %v7858, 0.0
      %v8018 = vmax.f32 %v7522, 0.0
      %v8019 = vmax.f32 %v7860, 0.0
      %v8020 = vmax.f32 %v7525, 0.0
      %v8021 = vmax.f32 %v7863, 0.0
      %v8022 = vmax.f32 %v7527, 0.0
      %v8023 = vmax.f32 %v7865, 0.0
      %v8024 = vmax.f32 %v7530, 0.0
      %v8025 = vmax.f32 %v7868, 0.0
      %v8026 = vmax.f32 %v7532, 0.0
      %v8027 = vmax.f32 %v7870, 0.0
      %v8028 = vmax.f32 %v7535, 0.0
      %v8029 = vmax.f32 %v7873, 0.0
      %v8030 = vmax.f32 %v7537, 0.0
      %v8031 = vmax.f32 %v7875, 0.0
      %v8032 = vmax.f32 %v7540, 0.0
      %v8033 = vmax.f32 %v7878, 0.0
      %v8034 = vmax.f32 %v7542, 0.0
      %v8035 = vmax.f32 %v7880, 0.0
      %v8036 = vmax.f32 %v7545, 0.0
      %v8037 = vmax.f32 %v7883, 0.0
      %v8038 = vmax.f32 %v7547, 0.0
      %v8039 = vmax.f32 %v7885, 0.0
      %v8040 = vmax.f32 %v7550, 0.0
      %v8041 = vmax.f32 %v7888, 0.0
      %v8042 = vmax.f32 %v7552, 0.0
      %v8043 = vmax.f32 %v7890, 0.0
      %v8044 = vmax.f32 %v7555, 0.0
      %v8045 = vmax.f32 %v7893, 0.0
      %v8046 = vmax.f32 %v7557, 0.0
      %v8047 = vmax.f32 %v7895, 0.0
      %v8048 = vmax.f32 %v7560, 0.0
      %v8049 = vmax.f32 %v7898, 0.0
      %v8050 = vmax.f32 %v7562, 0.0
      %v8051 = vmax.f32 %v7900, 0.0
      %v8052 = vmax.f32 %v7565, 0.0
      %v8053 = vmax.f32 %v7903, 0.0
      %v8054 = vmax.f32 %v7567, 0.0
      %v8055 = vmax.f32 %v7905, 0.0
      %v8056 = vmax.f32 %v7570, 0.0
      %v8057 = vmax.f32 %v7908, 0.0
      %v8058 = vmax.f32 %v7572, 0.0
      %v8059 = vmax.f32 %v7910, 0.0
      %v8060 = vmax.f32 %v7575, 0.0
      %v8061 = vmax.f32 %v7913, 0.0
      %v8062 = vmax.f32 %v7577, 0.0
      %v8063 = vmax.f32 %v7915, 0.0
      %v8064 = vmax.f32 %v7580, 0.0
      %v8065 = vmax.f32 %v7918, 0.0
      %v8066 = vmax.f32 %v7582, 0.0
      %v8067 = vmax.f32 %v7920, 0.0
      %v8068 = vmax.f32 %v7585, 0.0
      %v8069 = vmax.f32 %v7923, 0.0
      %v8070 = vmax.f32 %v7587, 0.0
      %v8071 = vmax.f32 %v7925, 0.0
      %v8072 = vmax.f32 %v7590, 0.0
      %v8073 = vmax.f32 %v7928, 0.0
      %v8074 = vmax.f32 %v7592, 0.0
      %v8075 = vmax.f32 %v7930, 0.0
      %v8076 = vmax.f32 %v7595, 0.0
      %v8077 = vmax.f32 %v7933, 0.0
      %v8078 = vmax.f32 %v7597, 0.0
      %v8079 = vmax.f32 %v7935, 0.0
      %v8080 = vmax.f32 %v7600, 0.0
      %v8081 = vmax.f32 %v7938, 0.0
      %v8082 = vmax.f32 %v7602, 0.0
      %v8083 = vmax.f32 %v7940, 0.0
      %v8084 = vmax.f32 %v7605, 0.0
      %v8085 = vmax.f32 %v7943, 0.0
      %v8086 = vmax.f32 %v7607, 0.0
      %v8087 = vmax.f32 %v7945, 0.0
      %v8088 = vmax.f32 %v7610, 0.0
      %v8089 = vmax.f32 %v7948, 0.0
      %v8090 = vmax.f32 %v7612, 0.0
      %v8091 = vmax.f32 %v7950, 0.0
      %v8092 = vmax.f32 %v7615, 0.0
      %v8093 = vmax.f32 %v7953, 0.0
      %v8094 = vmax.f32 %v7617, 0.0
      %v8095 = vmax.f32 %v7955, 0.0
      %v8096 = vmax.f32 %v7620, 0.0
      %v8097 = vmax.f32 %v7958, 0.0
      %v8098 = vmax.f32 %v7622, 0.0
      %v8099 = vmax.f32 %v7960, 0.0
      %v8100 = vmax.f32 %v7625, 0.0
      %v8101 = vmax.f32 %v7963, 0.0
      %v8102 = vmax.f32 %v7627, 0.0
      %v8103 = vmax.f32 %v7965, 0.0
      %v8104 = vmax.f32 %v7630, 0.0
      %v8105 = vmax.f32 %v7968, 0.0
      %v8106 = vmax.f32 %v7632, 0.0
      %v8107 = vmax.f32 %v7970, 0.0
      %v8108 = vmax.f32 %v7635, 0.0
      %v8109 = vmax.f32 %v7973, 0.0
      %v8110 = vmax.f32 %v7637, 0.0
      %v8111 = vmax.f32 %v7975, 0.0
      %v8112 = vmax.f32 %v7640, 0.0
      %v8113 = vmax.f32 %v7978, 0.0
      %v8114 = vmax.f32 %v7642, 0.0
      %v8115 = vmax.f32 %v7980, 0.0
      %v8116 = vmax.f32 %v7645, 0.0
      %v8117 = vmax.f32 %v7983, 0.0
      %v8118 = vmax.f32 %v7647, 0.0
      %v8119 = vmax.f32 %v7985, 0.0
      %v8120 = vmax.f32 %v7650, 0.0
      %v8121 = vmax.f32 %v7988, 0.0
      %v8122 = vmax.f32 %v7652, 0.0
      %v8123 = vmax.f32 %v7990, 0.0
      %v8124 = vmax.f32 %v7655, 0.0
      %v8125 = vmax.f32 %v7993, 0.0
      %v8126 = vmax.f32 %v7657, 0.0
      %v8127 = vmax.f32 %v7995, 0.0
      %v8128 = vmax.f32 %v7660, 0.0
      %v8129 = vmax.f32 %v7998, 0.0
      %v8130 = vmax.f32 %v7662, 0.0
      %v8131 = vmax.f32 %v8000, 0.0
      %v8132 = vmax.f32 %v7665, 0.0
      %v8133 = vmax.f32 %v8003, 0.0
      %v8134 = vmax.f32 %v7667, 0.0
      %v8135 = vmax.f32 %v8005, 0.0
      %v8136 = vmax.f32 %v7670, 0.0
      %v8137 = vmax.f32 %v8008, 0.0
      %v8138 = vmax.f32 %v7672, 0.0
      %v8139 = vmax.f32 %v8010, 0.0
      %v8140 = vpack.c.bf16 %v8014, %v8012
      %v8141 = vpack.c.bf16 %v8015, %v8013
      %v8142 = vpack.c.bf16 %v8018, %v8016
      %v8143 = vpack.c.bf16 %v8019, %v8017
      %v8144 = vpack.c.bf16 %v8022, %v8020
      %v8145 = vpack.c.bf16 %v8023, %v8021
      %v8146 = vpack.c.bf16 %v8026, %v8024
      %v8147 = vpack.c.bf16 %v8027, %v8025
      %v8148 = vpack.c.bf16 %v8030, %v8028
      %v8149 = vpack.c.bf16 %v8031, %v8029
      %v8150 = vpack.c.bf16 %v8034, %v8032
      %v8151 = vpack.c.bf16 %v8035, %v8033
      %v8152 = vpack.c.bf16 %v8038, %v8036
      %v8153 = vpack.c.bf16 %v8039, %v8037
      %v8154 = vpack.c.bf16 %v8042, %v8040
      %v8155 = vpack.c.bf16 %v8043, %v8041
      %v8156 = vpack.c.bf16 %v8046, %v8044
      %v8157 = vpack.c.bf16 %v8047, %v8045
      %v8158 = vpack.c.bf16 %v8050, %v8048
      %v8159 = vpack.c.bf16 %v8051, %v8049
      %v8160 = vpack.c.bf16 %v8054, %v8052
      %v8161 = vpack.c.bf16 %v8055, %v8053
      %v8162 = vpack.c.bf16 %v8058, %v8056
      %v8163 = vpack.c.bf16 %v8059, %v8057
      %v8164 = vpack.c.bf16 %v8062, %v8060
      %v8165 = vpack.c.bf16 %v8063, %v8061
      %v8166 = vpack.c.bf16 %v8066, %v8064
      %v8167 = vpack.c.bf16 %v8067, %v8065
      %v8168 = vpack.c.bf16 %v8070, %v8068
      %v8169 = vpack.c.bf16 %v8071, %v8069
      %v8170 = vpack.c.bf16 %v8074, %v8072
      %v8171 = vpack.c.bf16 %v8075, %v8073
      %v8172 = vpack.c.bf16 %v8078, %v8076
      %v8173 = vpack.c.bf16 %v8079, %v8077
      %v8174 = vpack.c.bf16 %v8082, %v8080
      %v8175 = vpack.c.bf16 %v8083, %v8081
      %v8176 = vpack.c.bf16 %v8086, %v8084
      %v8177 = vpack.c.bf16 %v8087, %v8085
      %v8178 = vpack.c.bf16 %v8090, %v8088
      %v8179 = vpack.c.bf16 %v8091, %v8089
      %v8180 = vpack.c.bf16 %v8094, %v8092
      %v8181 = vpack.c.bf16 %v8095, %v8093
      %v8182 = vpack.c.bf16 %v8098, %v8096
      %v8183 = vpack.c.bf16 %v8099, %v8097
      %v8184 = vpack.c.bf16 %v8102, %v8100
      %v8185 = vpack.c.bf16 %v8103, %v8101
      %v8186 = vpack.c.bf16 %v8106, %v8104
      %v8187 = vpack.c.bf16 %v8107, %v8105
      %v8188 = vpack.c.bf16 %v8110, %v8108
      %v8189 = vpack.c.bf16 %v8111, %v8109
      %v8190 = vpack.c.bf16 %v8114, %v8112
      %v8191 = vpack.c.bf16 %v8115, %v8113
      %v8192 = vpack.c.bf16 %v8118, %v8116
      %v8193 = vpack.c.bf16 %v8119, %v8117
      %v8194 = vpack.c.bf16 %v8122, %v8120
      %v8195 = vpack.c.bf16 %v8123, %v8121
      %v8196 = vpack.c.bf16 %v8126, %v8124
      %v8197 = vpack.c.bf16 %v8127, %v8125
      %v8198 = vpack.c.bf16 %v8130, %v8128
      %v8199 = vpack.c.bf16 %v8131, %v8129
      %v8200 = vpack.c.bf16 %v8134, %v8132
      %v8201 = vpack.c.bf16 %v8135, %v8133
      %v8202 = vpack.c.bf16 %v8138, %v8136
      %v8203 = vpack.c.bf16 %v8139, %v8137
      %v8204 = vld [vmem:[%s7] sm:$0xf]
      %v8205 = vld [vmem:[%s7 + $0x4] sm:$0xf]
      %v8206 = vld [vmem:[%s7 + $0x8] sm:$0xf]
      %v8207 = vld [vmem:[%s7 + $0xc] sm:$0xf]
      %v8208 = vld [vmem:[%s7 + $0x10] sm:$0xf]
      %v8209 = vld [vmem:[%s7 + $0x14] sm:$0xf]
      %v8210 = vld [vmem:[%s7 + $0x18] sm:$0xf]
      %v8211 = vld [vmem:[%s7 + $0x1c] sm:$0xf]
      %v8212 = vld [vmem:[%s7 + $0x20] sm:$0xf]
      %v8213 = vld [vmem:[%s7 + $0x24] sm:$0xf]
      %v8214 = vld [vmem:[%s7 + $0x28] sm:$0xf]
      %v8215 = vld [vmem:[%s7 + $0x2c] sm:$0xf]
      %v8216 = vld [vmem:[%s7 + $0x30] sm:$0xf]
      %v8217 = vld [vmem:[%s7 + $0x34] sm:$0xf]
      %v8218 = vld [vmem:[%s7 + $0x38] sm:$0xf]
      %v8219 = vld [vmem:[%s7 + $0x3c] sm:$0xf]
      %v8220 = vld [vmem:[%s7 + $0x40] sm:$0xf]
      %v8221 = vld [vmem:[%s7 + $0x44] sm:$0xf]
      %v8222 = vld [vmem:[%s7 + $0x48] sm:$0xf]
      %v8223 = vld [vmem:[%s7 + $0x4c] sm:$0xf]
      %v8224 = vld [vmem:[%s7 + $0x50] sm:$0xf]
      %v8225 = vld [vmem:[%s7 + $0x54] sm:$0xf]
      %v8226 = vld [vmem:[%s7 + $0x58] sm:$0xf]
      %v8227 = vld [vmem:[%s7 + $0x5c] sm:$0xf]
      %v8228 = vld [vmem:[%s7 + $0x60] sm:$0xf]
      %v8229 = vld [vmem:[%s7 + $0x64] sm:$0xf]
      %v8230 = vld [vmem:[%s7 + $0x68] sm:$0xf]
      %v8231 = vld [vmem:[%s7 + $0x6c] sm:$0xf]
      %v8232 = vld [vmem:[%s7 + $0x70] sm:$0xf]
      %v8233 = vld [vmem:[%s7 + $0x74] sm:$0xf]
      %v8234 = vld [vmem:[%s7 + $0x78] sm:$0xf]
      %v8235 = vld [vmem:[%s7 + $0x7c] sm:$0xf]
      %v8236 = vld [vmem:[%s8] sm:$0x1]
      %v8238 = vperm.slane %v8236, 0
      %v8272 = vunpack.c.l.b16 %v8204
      %v8273 = vunpack.c.l.b16 %v8205
      %v8274 = vunpack.c.l.b16 %v8206
      %v8275 = vunpack.c.l.b16 %v8207
      %v8276 = vunpack.c.l.b16 %v8208
      %v8277 = vunpack.c.l.b16 %v8209
      %v8278 = vunpack.c.l.b16 %v8210
      %v8279 = vunpack.c.l.b16 %v8211
      %v8280 = vunpack.c.l.b16 %v8212
      %v8281 = vunpack.c.l.b16 %v8213
      %v8282 = vunpack.c.l.b16 %v8214
      %v8283 = vunpack.c.l.b16 %v8215
      %v8284 = vunpack.c.l.b16 %v8216
      %v8285 = vunpack.c.l.b16 %v8217
      %v8286 = vunpack.c.l.b16 %v8218
      %v8287 = vunpack.c.l.b16 %v8219
      %v8288 = vunpack.c.l.b16 %v8220
      %v8289 = vunpack.c.l.b16 %v8221
      %v8290 = vunpack.c.l.b16 %v8222
      %v8291 = vunpack.c.l.b16 %v8223
      %v8292 = vunpack.c.l.b16 %v8224
      %v8293 = vunpack.c.l.b16 %v8225
      %v8294 = vunpack.c.l.b16 %v8226
      %v8295 = vunpack.c.l.b16 %v8227
      %v8296 = vunpack.c.l.b16 %v8228
      %v8297 = vunpack.c.l.b16 %v8229
      %v8298 = vunpack.c.l.b16 %v8230
      %v8299 = vunpack.c.l.b16 %v8231
      %v8300 = vunpack.c.l.b16 %v8232
      %v8301 = vunpack.c.l.b16 %v8233
      %v8302 = vunpack.c.l.b16 %v8234
      %v8303 = vunpack.c.l.b16 %v8235
      %v8304 = vpack.c.b16 %v8273, %v8272
      %v8305 = vpack.c.b16 %v8275, %v8274
      %v8306 = vpack.c.b16 %v8277, %v8276
      %v8307 = vpack.c.b16 %v8279, %v8278
      %v8308 = vpack.c.b16 %v8281, %v8280
      %v8309 = vpack.c.b16 %v8283, %v8282
      %v8310 = vpack.c.b16 %v8285, %v8284
      %v8311 = vpack.c.b16 %v8287, %v8286
      %v8312 = vpack.c.b16 %v8289, %v8288
      %v8313 = vpack.c.b16 %v8291, %v8290
      %v8314 = vpack.c.b16 %v8293, %v8292
      %v8315 = vpack.c.b16 %v8295, %v8294
      %v8316 = vpack.c.b16 %v8297, %v8296
      %v8317 = vpack.c.b16 %v8299, %v8298
      %v8318 = vpack.c.b16 %v8301, %v8300
      %v8319 = vpack.c.b16 %v8303, %v8302
      %8336 = vmatpush.bf16.msra.mxu0 %v8311
      %8337 = vmatpush.bf16.msra.mxu0 %v8310
      %8338 = vmatpush.bf16.msra.mxu0 %v8309
      %8339 = vmatpush.bf16.msra.mxu0 %v8308
      %8340 = vmatpush.bf16.msra.mxu0 %v8307
      %8341 = vmatpush.bf16.msra.mxu0 %v8306
      %8342 = vmatpush.bf16.msra.mxu0 %v8305
      %8343 = vmatpush.bf16.msra.mxu0 %v8304
      %8344 = vmatmul.bf16.gmra.mxu0 %v8140
      %v8345 = vpop.f32.mrf.mxu0
      %v8346 = vadd.f32 %v8238, %v8345
      %v8347 = vpop.f32.mrf.mxu0
      %v8348 = vadd.f32 %v8238, %v8347
      %8349 = vmatmul.bf16.gmra.mxu0 %v8142
      %v8350 = vpop.f32.mrf.mxu0
      %v8351 = vadd.f32 %v8238, %v8350
      %v8352 = vpop.f32.mrf.mxu0
      %v8353 = vadd.f32 %v8238, %v8352
      %8354 = vmatmul.bf16.gmra.mxu0 %v8144
      %v8355 = vpop.f32.mrf.mxu0
      %v8356 = vadd.f32 %v8238, %v8355
      %v8357 = vpop.f32.mrf.mxu0
      %v8358 = vadd.f32 %v8238, %v8357
      %8359 = vmatmul.bf16.gmra.mxu0 %v8146
      %v8360 = vpop.f32.mrf.mxu0
      %v8361 = vadd.f32 %v8238, %v8360
      %v8362 = vpop.f32.mrf.mxu0
      %v8363 = vadd.f32 %v8238, %v8362
      %8364 = vmatmul.bf16.gmra.mxu0 %v8148
      %v8365 = vpop.f32.mrf.mxu0
      %v8366 = vadd.f32 %v8238, %v8365
      %v8367 = vpop.f32.mrf.mxu0
      %v8368 = vadd.f32 %v8238, %v8367
      %8369 = vmatmul.bf16.gmra.mxu0 %v8150
      %v8370 = vpop.f32.mrf.mxu0
      %v8371 = vadd.f32 %v8238, %v8370
      %v8372 = vpop.f32.mrf.mxu0
      %v8373 = vadd.f32 %v8238, %v8372
      %8374 = vmatmul.bf16.gmra.mxu0 %v8152
      %v8375 = vpop.f32.mrf.mxu0
      %v8376 = vadd.f32 %v8238, %v8375
      %v8377 = vpop.f32.mrf.mxu0
      %v8378 = vadd.f32 %v8238, %v8377
      %8379 = vmatmul.bf16.gmra.mxu0 %v8154
      %v8380 = vpop.f32.mrf.mxu0
      %v8381 = vadd.f32 %v8238, %v8380
      %v8382 = vpop.f32.mrf.mxu0
      %v8383 = vadd.f32 %v8238, %v8382
      %8384 = vmatmul.bf16.gmra.mxu0 %v8156
      %v8385 = vpop.f32.mrf.mxu0
      %v8386 = vadd.f32 %v8238, %v8385
      %v8387 = vpop.f32.mrf.mxu0
      %v8388 = vadd.f32 %v8238, %v8387
      %8389 = vmatmul.bf16.gmra.mxu0 %v8158
      %v8390 = vpop.f32.mrf.mxu0
      %v8391 = vadd.f32 %v8238, %v8390
      %v8392 = vpop.f32.mrf.mxu0
      %v8393 = vadd.f32 %v8238, %v8392
      %8394 = vmatmul.bf16.gmra.mxu0 %v8160
      %v8395 = vpop.f32.mrf.mxu0
      %v8396 = vadd.f32 %v8238, %v8395
      %v8397 = vpop.f32.mrf.mxu0
      %v8398 = vadd.f32 %v8238, %v8397
      %8399 = vmatmul.bf16.gmra.mxu0 %v8162
      %v8400 = vpop.f32.mrf.mxu0
      %v8401 = vadd.f32 %v8238, %v8400
      %v8402 = vpop.f32.mrf.mxu0
      %v8403 = vadd.f32 %v8238, %v8402
      %8404 = vmatmul.bf16.gmra.mxu0 %v8164
      %v8405 = vpop.f32.mrf.mxu0
      %v8406 = vadd.f32 %v8238, %v8405
      %v8407 = vpop.f32.mrf.mxu0
      %v8408 = vadd.f32 %v8238, %v8407
      %8409 = vmatmul.bf16.gmra.mxu0 %v8166
      %v8410 = vpop.f32.mrf.mxu0
      %v8411 = vadd.f32 %v8238, %v8410
      %v8412 = vpop.f32.mrf.mxu0
      %v8413 = vadd.f32 %v8238, %v8412
      %8414 = vmatmul.bf16.gmra.mxu0 %v8168
      %v8415 = vpop.f32.mrf.mxu0
      %v8416 = vadd.f32 %v8238, %v8415
      %v8417 = vpop.f32.mrf.mxu0
      %v8418 = vadd.f32 %v8238, %v8417
      %8419 = vmatmul.bf16.gmra.mxu0 %v8170
      %v8420 = vpop.f32.mrf.mxu0
      %v8421 = vadd.f32 %v8238, %v8420
      %v8422 = vpop.f32.mrf.mxu0
      %v8423 = vadd.f32 %v8238, %v8422
      %8424 = vmatmul.bf16.gmra.mxu0 %v8172
      %v8425 = vpop.f32.mrf.mxu0
      %v8426 = vadd.f32 %v8238, %v8425
      %v8427 = vpop.f32.mrf.mxu0
      %v8428 = vadd.f32 %v8238, %v8427
      %8429 = vmatmul.bf16.gmra.mxu0 %v8174
      %v8430 = vpop.f32.mrf.mxu0
      %v8431 = vadd.f32 %v8238, %v8430
      %v8432 = vpop.f32.mrf.mxu0
      %v8433 = vadd.f32 %v8238, %v8432
      %8434 = vmatmul.bf16.gmra.mxu0 %v8176
      %v8435 = vpop.f32.mrf.mxu0
      %v8436 = vadd.f32 %v8238, %v8435
      %v8437 = vpop.f32.mrf.mxu0
      %v8438 = vadd.f32 %v8238, %v8437
      %8439 = vmatmul.bf16.gmra.mxu0 %v8178
      %v8440 = vpop.f32.mrf.mxu0
      %v8441 = vadd.f32 %v8238, %v8440
      %v8442 = vpop.f32.mrf.mxu0
      %v8443 = vadd.f32 %v8238, %v8442
      %8444 = vmatmul.bf16.gmra.mxu0 %v8180
      %v8445 = vpop.f32.mrf.mxu0
      %v8446 = vadd.f32 %v8238, %v8445
      %v8447 = vpop.f32.mrf.mxu0
      %v8448 = vadd.f32 %v8238, %v8447
      %8449 = vmatmul.bf16.gmra.mxu0 %v8182
      %v8450 = vpop.f32.mrf.mxu0
      %v8451 = vadd.f32 %v8238, %v8450
      %v8452 = vpop.f32.mrf.mxu0
      %v8453 = vadd.f32 %v8238, %v8452
      %8454 = vmatmul.bf16.gmra.mxu0 %v8184
      %v8455 = vpop.f32.mrf.mxu0
      %v8456 = vadd.f32 %v8238, %v8455
      %v8457 = vpop.f32.mrf.mxu0
      %v8458 = vadd.f32 %v8238, %v8457
      %8459 = vmatmul.bf16.gmra.mxu0 %v8186
      %v8460 = vpop.f32.mrf.mxu0
      %v8461 = vadd.f32 %v8238, %v8460
      %v8462 = vpop.f32.mrf.mxu0
      %v8463 = vadd.f32 %v8238, %v8462
      %8464 = vmatmul.bf16.gmra.mxu0 %v8188
      %v8465 = vpop.f32.mrf.mxu0
      %v8466 = vadd.f32 %v8238, %v8465
      %v8467 = vpop.f32.mrf.mxu0
      %v8468 = vadd.f32 %v8238, %v8467
      %8469 = vmatmul.bf16.gmra.mxu0 %v8190
      %v8470 = vpop.f32.mrf.mxu0
      %v8471 = vadd.f32 %v8238, %v8470
      %v8472 = vpop.f32.mrf.mxu0
      %v8473 = vadd.f32 %v8238, %v8472
      %8474 = vmatmul.bf16.gmra.mxu0 %v8192
      %v8475 = vpop.f32.mrf.mxu0
      %v8476 = vadd.f32 %v8238, %v8475
      %v8477 = vpop.f32.mrf.mxu0
      %v8478 = vadd.f32 %v8238, %v8477
      %8479 = vmatmul.bf16.gmra.mxu0 %v8194
      %v8480 = vpop.f32.mrf.mxu0
      %v8481 = vadd.f32 %v8238, %v8480
      %v8482 = vpop.f32.mrf.mxu0
      %v8483 = vadd.f32 %v8238, %v8482
      %8484 = vmatmul.bf16.gmra.mxu0 %v8196
      %v8485 = vpop.f32.mrf.mxu0
      %v8486 = vadd.f32 %v8238, %v8485
      %v8487 = vpop.f32.mrf.mxu0
      %v8488 = vadd.f32 %v8238, %v8487
      %8489 = vmatmul.bf16.gmra.mxu0 %v8198
      %v8490 = vpop.f32.mrf.mxu0
      %v8491 = vadd.f32 %v8238, %v8490
      %v8492 = vpop.f32.mrf.mxu0
      %v8493 = vadd.f32 %v8238, %v8492
      %8494 = vmatmul.bf16.gmra.mxu0 %v8200
      %v8495 = vpop.f32.mrf.mxu0
      %v8496 = vadd.f32 %v8238, %v8495
      %v8497 = vpop.f32.mrf.mxu0
      %v8498 = vadd.f32 %v8238, %v8497
      %8499 = vmatmul.bf16.gmra.mxu0 %v8202
      %v8500 = vpop.f32.mrf.mxu0
      %v8501 = vadd.f32 %v8238, %v8500
      %v8502 = vpop.f32.mrf.mxu0
      %v8503 = vadd.f32 %v8238, %v8502
      %8504 = vdwg.mxu0
      %8505 = vmatpush.bf16.msra.mxu0 %v8319
      %8506 = vmatpush.bf16.msra.mxu0 %v8318
      %8507 = vmatpush.bf16.msra.mxu0 %v8317
      %8508 = vmatpush.bf16.msra.mxu0 %v8316
      %8509 = vmatpush.bf16.msra.mxu0 %v8315
      %8510 = vmatpush.bf16.msra.mxu0 %v8314
      %8511 = vmatpush.bf16.msra.mxu0 %v8313
      %8512 = vmatpush.bf16.msra.mxu0 %v8312
      %8513 = vmatmul.bf16.gmra.mxu0 %v8141
      %v8514 = vpop.f32.mrf.mxu0
      %v8515 = vadd.f32 %v8346, %v8514
      %v8516 = vpop.f32.mrf.mxu0
      %v8517 = vadd.f32 %v8348, %v8516
      %8518 = vmatmul.bf16.gmra.mxu0 %v8143
      %v8519 = vpop.f32.mrf.mxu0
      %v8520 = vadd.f32 %v8351, %v8519
      %v8521 = vpop.f32.mrf.mxu0
      %v8522 = vadd.f32 %v8353, %v8521
      %8523 = vmatmul.bf16.gmra.mxu0 %v8145
      %v8524 = vpop.f32.mrf.mxu0
      %v8525 = vadd.f32 %v8356, %v8524
      %v8526 = vpop.f32.mrf.mxu0
      %v8527 = vadd.f32 %v8358, %v8526
      %8528 = vmatmul.bf16.gmra.mxu0 %v8147
      %v8529 = vpop.f32.mrf.mxu0
      %v8530 = vadd.f32 %v8361, %v8529
      %v8531 = vpop.f32.mrf.mxu0
      %v8532 = vadd.f32 %v8363, %v8531
      %8533 = vmatmul.bf16.gmra.mxu0 %v8149
      %v8534 = vpop.f32.mrf.mxu0
      %v8535 = vadd.f32 %v8366, %v8534
      %v8536 = vpop.f32.mrf.mxu0
      %v8537 = vadd.f32 %v8368, %v8536
      %8538 = vmatmul.bf16.gmra.mxu0 %v8151
      %v8539 = vpop.f32.mrf.mxu0
      %v8540 = vadd.f32 %v8371, %v8539
      %v8541 = vpop.f32.mrf.mxu0
      %v8542 = vadd.f32 %v8373, %v8541
      %8543 = vmatmul.bf16.gmra.mxu0 %v8153
      %v8544 = vpop.f32.mrf.mxu0
      %v8545 = vadd.f32 %v8376, %v8544
      %v8546 = vpop.f32.mrf.mxu0
      %v8547 = vadd.f32 %v8378, %v8546
      %8548 = vmatmul.bf16.gmra.mxu0 %v8155
      %v8549 = vpop.f32.mrf.mxu0
      %v8550 = vadd.f32 %v8381, %v8549
      %v8551 = vpop.f32.mrf.mxu0
      %v8552 = vadd.f32 %v8383, %v8551
      %8553 = vmatmul.bf16.gmra.mxu0 %v8157
      %v8554 = vpop.f32.mrf.mxu0
      %v8555 = vadd.f32 %v8386, %v8554
      %v8556 = vpop.f32.mrf.mxu0
      %v8557 = vadd.f32 %v8388, %v8556
      %8558 = vmatmul.bf16.gmra.mxu0 %v8159
      %v8559 = vpop.f32.mrf.mxu0
      %v8560 = vadd.f32 %v8391, %v8559
      %v8561 = vpop.f32.mrf.mxu0
      %v8562 = vadd.f32 %v8393, %v8561
      %8563 = vmatmul.bf16.gmra.mxu0 %v8161
      %v8564 = vpop.f32.mrf.mxu0
      %v8565 = vadd.f32 %v8396, %v8564
      %v8566 = vpop.f32.mrf.mxu0
      %v8567 = vadd.f32 %v8398, %v8566
      %8568 = vmatmul.bf16.gmra.mxu0 %v8163
      %v8569 = vpop.f32.mrf.mxu0
      %v8570 = vadd.f32 %v8401, %v8569
      %v8571 = vpop.f32.mrf.mxu0
      %v8572 = vadd.f32 %v8403, %v8571
      %8573 = vmatmul.bf16.gmra.mxu0 %v8165
      %v8574 = vpop.f32.mrf.mxu0
      %v8575 = vadd.f32 %v8406, %v8574
      %v8576 = vpop.f32.mrf.mxu0
      %v8577 = vadd.f32 %v8408, %v8576
      %8578 = vmatmul.bf16.gmra.mxu0 %v8167
      %v8579 = vpop.f32.mrf.mxu0
      %v8580 = vadd.f32 %v8411, %v8579
      %v8581 = vpop.f32.mrf.mxu0
      %v8582 = vadd.f32 %v8413, %v8581
      %8583 = vmatmul.bf16.gmra.mxu0 %v8169
      %v8584 = vpop.f32.mrf.mxu0
      %v8585 = vadd.f32 %v8416, %v8584
      %v8586 = vpop.f32.mrf.mxu0
      %v8587 = vadd.f32 %v8418, %v8586
      %8588 = vmatmul.bf16.gmra.mxu0 %v8171
      %v8589 = vpop.f32.mrf.mxu0
      %v8590 = vadd.f32 %v8421, %v8589
      %v8591 = vpop.f32.mrf.mxu0
      %v8592 = vadd.f32 %v8423, %v8591
      %8593 = vmatmul.bf16.gmra.mxu0 %v8173
      %v8594 = vpop.f32.mrf.mxu0
      %v8595 = vadd.f32 %v8426, %v8594
      %v8596 = vpop.f32.mrf.mxu0
      %v8597 = vadd.f32 %v8428, %v8596
      %8598 = vmatmul.bf16.gmra.mxu0 %v8175
      %v8599 = vpop.f32.mrf.mxu0
      %v8600 = vadd.f32 %v8431, %v8599
      %v8601 = vpop.f32.mrf.mxu0
      %v8602 = vadd.f32 %v8433, %v8601
      %8603 = vmatmul.bf16.gmra.mxu0 %v8177
      %v8604 = vpop.f32.mrf.mxu0
      %v8605 = vadd.f32 %v8436, %v8604
      %v8606 = vpop.f32.mrf.mxu0
      %v8607 = vadd.f32 %v8438, %v8606
      %8608 = vmatmul.bf16.gmra.mxu0 %v8179
      %v8609 = vpop.f32.mrf.mxu0
      %v8610 = vadd.f32 %v8441, %v8609
      %v8611 = vpop.f32.mrf.mxu0
      %v8612 = vadd.f32 %v8443, %v8611
      %8613 = vmatmul.bf16.gmra.mxu0 %v8181
      %v8614 = vpop.f32.mrf.mxu0
      %v8615 = vadd.f32 %v8446, %v8614
      %v8616 = vpop.f32.mrf.mxu0
      %v8617 = vadd.f32 %v8448, %v8616
      %8618 = vmatmul.bf16.gmra.mxu0 %v8183
      %v8619 = vpop.f32.mrf.mxu0
      %v8620 = vadd.f32 %v8451, %v8619
      %v8621 = vpop.f32.mrf.mxu0
      %v8622 = vadd.f32 %v8453, %v8621
      %8623 = vmatmul.bf16.gmra.mxu0 %v8185
      %v8624 = vpop.f32.mrf.mxu0
      %v8625 = vadd.f32 %v8456, %v8624
      %v8626 = vpop.f32.mrf.mxu0
      %v8627 = vadd.f32 %v8458, %v8626
      %8628 = vmatmul.bf16.gmra.mxu0 %v8187
      %v8629 = vpop.f32.mrf.mxu0
      %v8630 = vadd.f32 %v8461, %v8629
      %v8631 = vpop.f32.mrf.mxu0
      %v8632 = vadd.f32 %v8463, %v8631
      %8633 = vmatmul.bf16.gmra.mxu0 %v8189
      %v8634 = vpop.f32.mrf.mxu0
      %v8635 = vadd.f32 %v8466, %v8634
      %v8636 = vpop.f32.mrf.mxu0
      %v8637 = vadd.f32 %v8468, %v8636
      %8638 = vmatmul.bf16.gmra.mxu0 %v8191
      %v8639 = vpop.f32.mrf.mxu0
      %v8640 = vadd.f32 %v8471, %v8639
      %v8641 = vpop.f32.mrf.mxu0
      %v8642 = vadd.f32 %v8473, %v8641
      %8643 = vmatmul.bf16.gmra.mxu0 %v8193
      %v8644 = vpop.f32.mrf.mxu0
      %v8645 = vadd.f32 %v8476, %v8644
      %v8646 = vpop.f32.mrf.mxu0
      %v8647 = vadd.f32 %v8478, %v8646
      %8648 = vmatmul.bf16.gmra.mxu0 %v8195
      %v8649 = vpop.f32.mrf.mxu0
      %v8650 = vadd.f32 %v8481, %v8649
      %v8651 = vpop.f32.mrf.mxu0
      %v8652 = vadd.f32 %v8483, %v8651
      %8653 = vmatmul.bf16.gmra.mxu0 %v8197
      %v8654 = vpop.f32.mrf.mxu0
      %v8655 = vadd.f32 %v8486, %v8654
      %v8656 = vpop.f32.mrf.mxu0
      %v8657 = vadd.f32 %v8488, %v8656
      %8658 = vmatmul.bf16.gmra.mxu0 %v8199
      %v8659 = vpop.f32.mrf.mxu0
      %v8660 = vadd.f32 %v8491, %v8659
      %v8661 = vpop.f32.mrf.mxu0
      %v8662 = vadd.f32 %v8493, %v8661
      %8663 = vmatmul.bf16.gmra.mxu0 %v8201
      %v8664 = vpop.f32.mrf.mxu0
      %v8665 = vadd.f32 %v8496, %v8664
      %v8666 = vpop.f32.mrf.mxu0
      %v8667 = vadd.f32 %v8498, %v8666
      %8668 = vmatmul.bf16.gmra.mxu0 %v8203
      %v8669 = vpop.f32.mrf.mxu0
      %v8670 = vadd.f32 %v8501, %v8669
      %v8671 = vpop.f32.mrf.mxu0
      %v8672 = vadd.f32 %v8503, %v8671
      %8673 = vdwg.mxu0
      %8674 = vst [vmem:[%s356] sm:$0xff] %v8515
      %8675 = vst [vmem:[%s356 + $0x8] sm:$0xff] %v8517
      %8676 = vst [vmem:[%s356 + $0x10] sm:$0xff] %v8520
      %8677 = vst [vmem:[%s356 + $0x18] sm:$0xff] %v8522
      %8678 = vst [vmem:[%s356 + $0x20] sm:$0xff] %v8525
      %8679 = vst [vmem:[%s356 + $0x28] sm:$0xff] %v8527
      %8680 = vst [vmem:[%s356 + $0x30] sm:$0xff] %v8530
      %8681 = vst [vmem:[%s356 + $0x38] sm:$0xff] %v8532
      %8682 = vst [vmem:[%s356 + $0x40] sm:$0xff] %v8535
      %8683 = vst [vmem:[%s356 + $0x48] sm:$0xff] %v8537
      %8684 = vst [vmem:[%s356 + $0x50] sm:$0xff] %v8540
      %8685 = vst [vmem:[%s356 + $0x58] sm:$0xff] %v8542
      %8686 = vst [vmem:[%s356 + $0x60] sm:$0xff] %v8545
      %8687 = vst [vmem:[%s356 + $0x68] sm:$0xff] %v8547
      %8688 = vst [vmem:[%s356 + $0x70] sm:$0xff] %v8550
      %8689 = vst [vmem:[%s356 + $0x78] sm:$0xff] %v8552
      %8690 = vst [vmem:[%s356 + $0x80] sm:$0xff] %v8555
      %8691 = vst [vmem:[%s356 + $0x88] sm:$0xff] %v8557
      %8692 = vst [vmem:[%s356 + $0x90] sm:$0xff] %v8560
      %8693 = vst [vmem:[%s356 + $0x98] sm:$0xff] %v8562
      %8694 = vst [vmem:[%s356 + $0xa0] sm:$0xff] %v8565
      %8695 = vst [vmem:[%s356 + $0xa8] sm:$0xff] %v8567
      %8696 = vst [vmem:[%s356 + $0xb0] sm:$0xff] %v8570
      %8697 = vst [vmem:[%s356 + $0xb8] sm:$0xff] %v8572
      %8698 = vst [vmem:[%s356 + $0xc0] sm:$0xff] %v8575
      %8699 = vst [vmem:[%s356 + $0xc8] sm:$0xff] %v8577
      %8700 = vst [vmem:[%s356 + $0xd0] sm:$0xff] %v8580
      %8701 = vst [vmem:[%s356 + $0xd8] sm:$0xff] %v8582
      %8702 = vst [vmem:[%s356 + $0xe0] sm:$0xff] %v8585
      %8703 = vst [vmem:[%s356 + $0xe8] sm:$0xff] %v8587
      %8704 = vst [vmem:[%s356 + $0xf0] sm:$0xff] %v8590
      %8705 = vst [vmem:[%s356 + $0xf8] sm:$0xff] %v8592
      %8706 = vst [vmem:[%s356 + $0x100] sm:$0xff] %v8595
      %8707 = vst [vmem:[%s356 + $0x108] sm:$0xff] %v8597
      %8708 = vst [vmem:[%s356 + $0x110] sm:$0xff] %v8600
      %8709 = vst [vmem:[%s356 + $0x118] sm:$0xff] %v8602
      %8710 = vst [vmem:[%s356 + $0x120] sm:$0xff] %v8605
      %8711 = vst [vmem:[%s356 + $0x128] sm:$0xff] %v8607
      %8712 = vst [vmem:[%s356 + $0x130] sm:$0xff] %v8610
      %8713 = vst [vmem:[%s356 + $0x138] sm:$0xff] %v8612
      %8714 = vst [vmem:[%s356 + $0x140] sm:$0xff] %v8615
      %8715 = vst [vmem:[%s356 + $0x148] sm:$0xff] %v8617
      %8716 = vst [vmem:[%s356 + $0x150] sm:$0xff] %v8620
      %8717 = vst [vmem:[%s356 + $0x158] sm:$0xff] %v8622
      %8718 = vst [vmem:[%s356 + $0x160] sm:$0xff] %v8625
      %8719 = vst [vmem:[%s356 + $0x168] sm:$0xff] %v8627
      %8720 = vst [vmem:[%s356 + $0x170] sm:$0xff] %v8630
      %8721 = vst [vmem:[%s356 + $0x178] sm:$0xff] %v8632
      %8722 = vst [vmem:[%s356 + $0x180] sm:$0xff] %v8635
      %8723 = vst [vmem:[%s356 + $0x188] sm:$0xff] %v8637
      %8724 = vst [vmem:[%s356 + $0x190] sm:$0xff] %v8640
      %8725 = vst [vmem:[%s356 + $0x198] sm:$0xff] %v8642
      %8726 = vst [vmem:[%s356 + $0x1a0] sm:$0xff] %v8645
      %8727 = vst [vmem:[%s356 + $0x1a8] sm:$0xff] %v8647
      %8728 = vst [vmem:[%s356 + $0x1b0] sm:$0xff] %v8650
      %8729 = vst [vmem:[%s356 + $0x1b8] sm:$0xff] %v8652
      %8730 = vst [vmem:[%s356 + $0x1c0] sm:$0xff] %v8655
      %8731 = vst [vmem:[%s356 + $0x1c8] sm:$0xff] %v8657
      %8732 = vst [vmem:[%s356 + $0x1d0] sm:$0xff] %v8660
      %8733 = vst [vmem:[%s356 + $0x1d8] sm:$0xff] %v8662
      %8734 = vst [vmem:[%s356 + $0x1e0] sm:$0xff] %v8665
      %8735 = vst [vmem:[%s356 + $0x1e8] sm:$0xff] %v8667
      %8736 = vst [vmem:[%s356 + $0x1f0] sm:$0xff] %v8670
      %8737 = vst [vmem:[%s356 + $0x1f8] sm:$0xff] %v8672
      %v8738 = vadd.f32 %v8515, %v359
      %v8739 = vadd.f32 %v8517, %v360
      %v8740 = vadd.f32 %v8520, %v361
      %v8741 = vadd.f32 %v8522, %v362
      %v8742 = vadd.f32 %v8525, %v363
      %v8743 = vadd.f32 %v8527, %v364
      %v8744 = vadd.f32 %v8530, %v365
      %v8745 = vadd.f32 %v8532, %v366
      %v8746 = vadd.f32 %v8535, %v367
      %v8747 = vadd.f32 %v8537, %v368
      %v8748 = vadd.f32 %v8540, %v369
      %v8749 = vadd.f32 %v8542, %v370
      %v8750 = vadd.f32 %v8545, %v371
      %v8751 = vadd.f32 %v8547, %v372
      %v8752 = vadd.f32 %v8550, %v373
      %v8753 = vadd.f32 %v8552, %v374
      %v8754 = vadd.f32 %v8555, %v375
      %v8755 = vadd.f32 %v8557, %v376
      %v8756 = vadd.f32 %v8560, %v377
      %v8757 = vadd.f32 %v8562, %v378
      %v8758 = vadd.f32 %v8565, %v379
      %v8759 = vadd.f32 %v8567, %v380
      %v8760 = vadd.f32 %v8570, %v381
      %v8761 = vadd.f32 %v8572, %v382
      %v8762 = vadd.f32 %v8575, %v383
      %v8763 = vadd.f32 %v8577, %v384
      %v8764 = vadd.f32 %v8580, %v385
      %v8765 = vadd.f32 %v8582, %v386
      %v8766 = vadd.f32 %v8585, %v387
      %v8767 = vadd.f32 %v8587, %v388
      %v8768 = vadd.f32 %v8590, %v389
      %v8769 = vadd.f32 %v8592, %v390
      %v8770 = vadd.f32 %v8595, %v391
      %v8771 = vadd.f32 %v8597, %v392
      %v8772 = vadd.f32 %v8600, %v393
      %v8773 = vadd.f32 %v8602, %v394
      %v8774 = vadd.f32 %v8605, %v395
      %v8775 = vadd.f32 %v8607, %v396
      %v8776 = vadd.f32 %v8610, %v397
      %v8777 = vadd.f32 %v8612, %v398
      %v8778 = vadd.f32 %v8615, %v399
      %v8779 = vadd.f32 %v8617, %v400
      %v8780 = vadd.f32 %v8620, %v401
      %v8781 = vadd.f32 %v8622, %v402
      %v8782 = vadd.f32 %v8625, %v403
      %v8783 = vadd.f32 %v8627, %v404
      %v8784 = vadd.f32 %v8630, %v405
      %v8785 = vadd.f32 %v8632, %v406
      %v8786 = vadd.f32 %v8635, %v407
      %v8787 = vadd.f32 %v8637, %v408
      %v8788 = vadd.f32 %v8640, %v409
      %v8789 = vadd.f32 %v8642, %v410
      %v8790 = vadd.f32 %v8645, %v411
      %v8791 = vadd.f32 %v8647, %v412
      %v8792 = vadd.f32 %v8650, %v413
      %v8793 = vadd.f32 %v8652, %v414
      %v8794 = vadd.f32 %v8655, %v415
      %v8795 = vadd.f32 %v8657, %v416
      %v8796 = vadd.f32 %v8660, %v417
      %v8797 = vadd.f32 %v8662, %v418
      %v8798 = vadd.f32 %v8665, %v419
      %v8799 = vadd.f32 %v8667, %v420
      %v8800 = vadd.f32 %v8670, %v421
      %v8801 = vadd.f32 %v8672, %v422
      %vm8802 = vcmask 23552
      %8803 = vst.msk [vmem:[%s356] sm:$0xff] %vm8802, %v8738
      %8804 = vst.msk [vmem:[%s356 + $0x8] sm:$0xff] %vm8802, %v8739
      %8805 = vst.msk [vmem:[%s356 + $0x10] sm:$0xff] %vm8802, %v8740
      %8806 = vst.msk [vmem:[%s356 + $0x18] sm:$0xff] %vm8802, %v8741
      %8807 = vst.msk [vmem:[%s356 + $0x20] sm:$0xff] %vm8802, %v8742
      %8808 = vst.msk [vmem:[%s356 + $0x28] sm:$0xff] %vm8802, %v8743
      %8809 = vst.msk [vmem:[%s356 + $0x30] sm:$0xff] %vm8802, %v8744
      %8810 = vst.msk [vmem:[%s356 + $0x38] sm:$0xff] %vm8802, %v8745
      %8811 = vst.msk [vmem:[%s356 + $0x40] sm:$0xff] %vm8802, %v8746
      %8812 = vst.msk [vmem:[%s356 + $0x48] sm:$0xff] %vm8802, %v8747
      %8813 = vst.msk [vmem:[%s356 + $0x50] sm:$0xff] %vm8802, %v8748
      %8814 = vst.msk [vmem:[%s356 + $0x58] sm:$0xff] %vm8802, %v8749
      %8815 = vst.msk [vmem:[%s356 + $0x60] sm:$0xff] %vm8802, %v8750
      %8816 = vst.msk [vmem:[%s356 + $0x68] sm:$0xff] %vm8802, %v8751
      %8817 = vst.msk [vmem:[%s356 + $0x70] sm:$0xff] %vm8802, %v8752
      %8818 = vst.msk [vmem:[%s356 + $0x78] sm:$0xff] %vm8802, %v8753
      %8819 = vst.msk [vmem:[%s356 + $0x80] sm:$0xff] %vm8802, %v8754
      %8820 = vst.msk [vmem:[%s356 + $0x88] sm:$0xff] %vm8802, %v8755
      %8821 = vst.msk [vmem:[%s356 + $0x90] sm:$0xff] %vm8802, %v8756
      %8822 = vst.msk [vmem:[%s356 + $0x98] sm:$0xff] %vm8802, %v8757
      %8823 = vst.msk [vmem:[%s356 + $0xa0] sm:$0xff] %vm8802, %v8758
      %8824 = vst.msk [vmem:[%s356 + $0xa8] sm:$0xff] %vm8802, %v8759
      %8825 = vst.msk [vmem:[%s356 + $0xb0] sm:$0xff] %vm8802, %v8760
      %8826 = vst.msk [vmem:[%s356 + $0xb8] sm:$0xff] %vm8802, %v8761
      %8827 = vst.msk [vmem:[%s356 + $0xc0] sm:$0xff] %vm8802, %v8762
      %8828 = vst.msk [vmem:[%s356 + $0xc8] sm:$0xff] %vm8802, %v8763
      %8829 = vst.msk [vmem:[%s356 + $0xd0] sm:$0xff] %vm8802, %v8764
      %8830 = vst.msk [vmem:[%s356 + $0xd8] sm:$0xff] %vm8802, %v8765
      %8831 = vst.msk [vmem:[%s356 + $0xe0] sm:$0xff] %vm8802, %v8766
      %8832 = vst.msk [vmem:[%s356 + $0xe8] sm:$0xff] %vm8802, %v8767
      %8833 = vst.msk [vmem:[%s356 + $0xf0] sm:$0xff] %vm8802, %v8768
      %8834 = vst.msk [vmem:[%s356 + $0xf8] sm:$0xff] %vm8802, %v8769
      %8835 = vst.msk [vmem:[%s356 + $0x100] sm:$0xff] %vm8802, %v8770
      %8836 = vst.msk [vmem:[%s356 + $0x108] sm:$0xff] %vm8802, %v8771
      %8837 = vst.msk [vmem:[%s356 + $0x110] sm:$0xff] %vm8802, %v8772
      %8838 = vst.msk [vmem:[%s356 + $0x118] sm:$0xff] %vm8802, %v8773
      %8839 = vst.msk [vmem:[%s356 + $0x120] sm:$0xff] %vm8802, %v8774
      %8840 = vst.msk [vmem:[%s356 + $0x128] sm:$0xff] %vm8802, %v8775
      %8841 = vst.msk [vmem:[%s356 + $0x130] sm:$0xff] %vm8802, %v8776
      %8842 = vst.msk [vmem:[%s356 + $0x138] sm:$0xff] %vm8802, %v8777
      %8843 = vst.msk [vmem:[%s356 + $0x140] sm:$0xff] %vm8802, %v8778
      %8844 = vst.msk [vmem:[%s356 + $0x148] sm:$0xff] %vm8802, %v8779
      %8845 = vst.msk [vmem:[%s356 + $0x150] sm:$0xff] %vm8802, %v8780
      %8846 = vst.msk [vmem:[%s356 + $0x158] sm:$0xff] %vm8802, %v8781
      %8847 = vst.msk [vmem:[%s356 + $0x160] sm:$0xff] %vm8802, %v8782
      %8848 = vst.msk [vmem:[%s356 + $0x168] sm:$0xff] %vm8802, %v8783
      %8849 = vst.msk [vmem:[%s356 + $0x170] sm:$0xff] %vm8802, %v8784
      %8850 = vst.msk [vmem:[%s356 + $0x178] sm:$0xff] %vm8802, %v8785
      %8851 = vst.msk [vmem:[%s356 + $0x180] sm:$0xff] %vm8802, %v8786
      %8852 = vst.msk [vmem:[%s356 + $0x188] sm:$0xff] %vm8802, %v8787
      %8853 = vst.msk [vmem:[%s356 + $0x190] sm:$0xff] %vm8802, %v8788
      %8854 = vst.msk [vmem:[%s356 + $0x198] sm:$0xff] %vm8802, %v8789
      %8855 = vst.msk [vmem:[%s356 + $0x1a0] sm:$0xff] %vm8802, %v8790
      %8856 = vst.msk [vmem:[%s356 + $0x1a8] sm:$0xff] %vm8802, %v8791
      %8857 = vst.msk [vmem:[%s356 + $0x1b0] sm:$0xff] %vm8802, %v8792
      %8858 = vst.msk [vmem:[%s356 + $0x1b8] sm:$0xff] %vm8802, %v8793
      %8859 = vst.msk [vmem:[%s356 + $0x1c0] sm:$0xff] %vm8802, %v8794
      %8860 = vst.msk [vmem:[%s356 + $0x1c8] sm:$0xff] %vm8802, %v8795
      %8861 = vst.msk [vmem:[%s356 + $0x1d0] sm:$0xff] %vm8802, %v8796
      %8862 = vst.msk [vmem:[%s356 + $0x1d8] sm:$0xff] %vm8802, %v8797
      %8863 = vst.msk [vmem:[%s356 + $0x1e0] sm:$0xff] %vm8802, %v8798
      %8864 = vst.msk [vmem:[%s356 + $0x1e8] sm:$0xff] %vm8802, %v8799
      %8865 = vst.msk [vmem:[%s356 + $0x1f0] sm:$0xff] %vm8802, %v8800
      %8866 = vst.msk [vmem:[%s356 + $0x1f8] sm:$0xff] %vm8802, %v8801
      %s8867 = smul.u32 64, %s20
      %p8868 = scmp.lt.s32.totalorder %s8867, 255
      %s8869 = scalar_select %p8868, %s8867, 255
      %s8870 = smul.addr %s8869, 8
      %s8871 = scalar_lea.vmem %s9, %s8870
      // Predicated region
      $region57: #{deformation_forward.1} parent=55 // pred_check
        %p8872 = pneg %p237
      $region58: #{deformation_forward.1} parent=55 // pred_check_branch
        %8874 = sbr.rel (%p8872) target = $region60
      $region59: #{deformation_forward.1} parent=55 // pred_region
        %s8875 = smul.u32 64, %s20
      $region60: #{deformation_forward.1} parent=55 // pred_fallthru
        _
    $region56: #{deformation_forward.1} parent=5 // pred_fallthru
      _
    %p8876 = scmp.le.s32.totalorder 2, %s15
    // Predicated region
    $region61: #{deformation_forward.1} parent=5 // pred_check
      %p8877 = pneg %p8876
    $region62: #{deformation_forward.1} parent=5 // pred_check_branch
      %8879 = sbr.rel (%p8877) target = $region64
    $region63: #{deformation_forward.1} parent=5 // pred_region
      %s8880 = ssub.s32 %s15, 2
      // Predicated region
      $region65: #{deformation_forward.1} parent=63 // pred_check
        %p8881 = pneg %p243
      $region66: #{deformation_forward.1} parent=63 // pred_check_branch
        %8883 = sbr.rel (%p8881) target = $region68
      $region67: #{deformation_forward.1} parent=63 // pred_region
        %s8884 = smul.u32 64, %s21
        %p8885 = scmp.lt.s32.totalorder %s8884, 255
        %s8886 = scalar_select %p8885, %s8884, 255
        %s8887 = smul.addr %s8886, 8
        %s8888 = scalar_lea.vmem %s9, %s8887
      $region68: #{deformation_forward.1} parent=63 // pred_fallthru
        _
    $region64: #{deformation_forward.1} parent=5 // pred_fallthru
      _
  $region6: #{deformation_forward.1} parent=0 // loop_footer
    %s19 = sadd.s32 1, %s15
  $region7: #{deformation_forward.1} parent=0 // loop_footer_branch
    %14 = sbr.rel target = $region3
  $region8: #{deformation_forward.1} parent=0 // loop_exit
    _

</llo_original>
